<compile_context>
chip_gen: v5e
topology: v5e:2x2
jax: 0.10.0
libtpu: 0.0.40
codegen_flags: <defaults>
</compile_context>

<pallas_src>
import functools

import jax
import jax.numpy as jnp
from jax.experimental import pallas as pl
from jax.experimental.pallas import tpu as pltpu


# ----------------------------------------------------------------------------
# Fused bidirectional LSTM layer kernel.
#   grid = ()  (single invocation, everything resident in VMEM)
#   x_ref   : (T*B, D)   time-major flattened inputs (row t*B + b = token (b,t))
#   len_ref : (B, 1)     int32 sequence lengths
#   wih_ref : (D, 8H)    [W_ih_fwd | W_ih_bwd]
#   whh_ref : (2H, 8H)   block-diag([W_hh_fwd, W_hh_bwd])
#   b_ref   : (1, 8H)    [b_fwd | b_bwd]  (b_ih + b_hh already fused)
#   out_ref : (T, B, 2H) [h_fwd | h_bwd], zeros at padded positions
# ----------------------------------------------------------------------------
def _bilstm_kernel(x_ref, len_ref, wih_ref, whh_ref, b_ref, out_ref,
                   gx_scr, h_scr, cf_scr, cb_scr, of_scr, ob_scr,
                   *, seq_len, batch):
    T, B = seq_len, batch
    H = whh_ref.shape[0] // 2       # hidden size per direction
    G = 4 * H                       # per-direction gate width

    # ---- phase 1: hoisted input projection for BOTH directions, one matmul.
    gx_scr[...] = (jnp.dot(x_ref[...], wih_ref[...],
                           preferred_element_type=jnp.float32) + b_ref[...])

    # ---- init recurrent state.
    h_scr[...] = jnp.zeros_like(h_scr)      # (B, 2H) = [h_fwd | h_bwd]
    cf_scr[...] = jnp.zeros_like(cf_scr)    # (B, H)
    cb_scr[...] = jnp.zeros_like(cb_scr)    # (B, H)
    lens = len_ref[...]                     # (B, 1) int32

    # ---- phase 2: fused fwd/bwd recurrence, single in-kernel time loop.
    # Forward direction walks t = 0..T-1; backward walks T-1..0 via sb = T-1-s.
    # pack_padded_sequence semantics: state frozen / output zero past length.
    def step(s, carry):
        sb = (T - 1) - s            # backward direction's logical time index

        # Recurrent contribution for both directions: (B, 2H) @ (2H, 8H).
        gh = jnp.dot(h_scr[...], whh_ref[...], preferred_element_type=jnp.float32)

        gx_f = gx_scr[pl.ds(s * B, B), :]    # (B, 8H) precomputed slab @ time s
        gx_b = gx_scr[pl.ds(sb * B, B), :]   # (B, 8H) precomputed slab @ time sb

        g_f = gx_f[:, 0:G] + gh[:, 0:G]          # forward gates  (i, f, g, o)
        g_b = gx_b[:, G:2 * G] + gh[:, G:2 * G]  # backward gates (i, f, g, o)

        def cell(g, c_prev):
            i = jax.nn.sigmoid(g[:, 0:H])
            f = jax.nn.sigmoid(g[:, H:2 * H])
            gg = jnp.tanh(g[:, 2 * H:3 * H])
            o = jax.nn.sigmoid(g[:, 3 * H:4 * H])
            c_new = f * c_prev + i * gg
            return o * jnp.tanh(c_new), c_new

        hf_new, cf_new = cell(g_f, cf_scr[...])
        hb_new, cb_new = cell(g_b, cb_scr[...])

        mask_f = lens > s           # (B, 1)
        mask_b = lens > sb          # (B, 1)

        cf_scr[...] = jnp.where(mask_f, cf_new, cf_scr[...])
        cb_scr[...] = jnp.where(mask_b, cb_new, cb_scr[...])
        h_prev = h_scr[...]
        h_scr[...] = jnp.concatenate(
            [jnp.where(mask_f, hf_new, h_prev[:, 0:H]),
             jnp.where(mask_b, hb_new, h_prev[:, H:2 * H])], axis=1)

        # Stage outputs (zeros at padded positions); backward lands un-reversed.
        of_scr[s] = jnp.where(mask_f, hf_new, 0.0)
        ob_scr[sb] = jnp.where(mask_b, hb_new, 0.0)
        return carry

    jax.lax.fori_loop(0, T, step, 0, unroll=True)

    # ---- single concatenated store of the (fwd | bwd) output.
    out_ref[...] = jnp.concatenate([of_scr[...], ob_scr[...]], axis=2)


def fused_bilstm(x2d, len_col, p, T, B):
    """x2d: (T*B, D) time-major flat; returns (T, B, 2H)."""
    H = p['w_hh'].shape[0] // 2
    kernel = functools.partial(_bilstm_kernel, seq_len=T, batch=B)
    # NOTE: at production sizes, tile the batch axis with a grid and raise
    # vmem_limit_bytes; at these shapes everything fits comfortably in VMEM.
    return pl.pallas_call(
        kernel,
        out_shape=jax.ShapeDtypeStruct((T, B, 2 * H), jnp.float32),
        scratch_shapes=[
            pltpu.VMEM((T * B, 8 * H), jnp.float32),   # gx: hoisted x@W_ih (+b)
            pltpu.VMEM((B, 2 * H), jnp.float32),       # h = [h_fwd | h_bwd]
            pltpu.VMEM((B, H), jnp.float32),           # c fwd
            pltpu.VMEM((B, H), jnp.float32),           # c bwd
            pltpu.VMEM((T, B, H), jnp.float32),        # fwd output staging
            pltpu.VMEM((T, B, H), jnp.float32),        # bwd output staging
        ],
    )(x2d, len_col, p['w_ih'], p['w_hh'], p['b'])


# ----------------------------------------------------------------------------
# Classifier (Linear) kernel — single VMEM-resident matmul + bias.
# (At scale: tile M with a parallel grid and pad N to 128 lanes; trivial here.)
# ----------------------------------------------------------------------------
def _linear_kernel(x_ref, w_ref, b_ref, o_ref):
    o_ref[...] = (jnp.dot(x_ref[...], w_ref[...], preferred_element_type=jnp.float32)
                  + b_ref[...]).astype(o_ref.dtype)


def linear(x2d, w, b):
    M = x2d.shape[0]
    N = w.shape[1]
    return pl.pallas_call(
        _linear_kernel,
        out_shape=jax.ShapeDtypeStruct((M, N), jnp.float32),
    )(x2d, w, b.reshape(1, N))


# ----------------------------------------------------------------------------
# Full forward pass (repr_type='a'), time-major end-to-end.
# ----------------------------------------------------------------------------
def bilstm_tagger_forward(params, x_ids, lengths):
    B, T = x_ids.shape
    len_col = lengths.reshape(B, 1).astype(jnp.int32)

    # Embedding gather produced directly time-major: row t*B+b <-> token (b, t).
    emb2d = jnp.take(params['embedding'], x_ids.T.reshape(-1), axis=0)   # (T*B, E)

    out1 = fused_bilstm(emb2d, len_col, params['lstm1'], T, B)           # (T, B, 2H)
    out2 = fused_bilstm(out1.reshape(T * B, -1), len_col,
                        params['lstm2'], T, B)                           # (T, B, 2H)

    # nn.Dropout is identity at inference.  TODO(synk): train-mode dropout not modeled.
    logits = linear(out2.reshape(T * B, -1), params['w_cls'], params['b_cls'])
    return jnp.transpose(logits.reshape(T, B, -1), (1, 0, 2))            # (B, T, tags)


# ----------------------------------------------------------------------------
# Deterministic parameter init (mirrors nn.Embedding / nn.LSTM / nn.Linear).
# LSTM weights are stored pre-fused for the kernel:
#   w_ih = [W_ih_fwd | W_ih_bwd]            (in_dim, 8H)
#   w_hh = block_diag(W_hh_fwd, W_hh_bwd)   (2H, 8H)
#   b    = [b_fwd | b_bwd]                  (1, 8H)   (b_ih + b_hh fused)
# Gate order within each direction is PyTorch's i, f, g, o.
# ----------------------------------------------------------------------------
def init_params(key, vocab_size, tagset_size, emb_dim, hidden_dim):
    H = hidden_dim
    keys = iter(jax.random.split(key, 32))

    def uni(k, shape, scale):
        return jax.random.uniform(k, shape, jnp.float32, -scale, scale)

    def lstm_dir(in_dim):
        s = 1.0 / (H ** 0.5)
        w_ih = uni(next(keys), (in_dim, 4 * H), s)     # weight_ih_l0.T
        w_hh = uni(next(keys), (H, 4 * H), s)          # weight_hh_l0.T
        b = uni(next(keys), (4 * H,), s) + uni(next(keys), (4 * H,), s)
        return w_ih, w_hh, b

    def fused_bilstm_params(in_dim):
        wif, whf, bf = lstm_dir(in_dim)
        wib, whb, bb = lstm_dir(in_dim)
        zeros = jnp.zeros((H, 4 * H), jnp.float32)
        return dict(
            w_ih=jnp.concatenate([wif, wib], axis=1),                      # (in, 8H)
            w_hh=jnp.concatenate(
                [jnp.concatenate([whf, zeros], axis=1),
                 jnp.concatenate([zeros, whb], axis=1)], axis=0),          # (2H, 8H)
            b=jnp.concatenate([bf, bb]).reshape(1, 8 * H),                 # (1, 8H)
        )

    s_cls = 1.0 / ((2 * H) ** 0.5)
    return dict(
        embedding=jax.random.normal(next(keys), (vocab_size, emb_dim), jnp.float32),
        lstm1=fused_bilstm_params(emb_dim),
        lstm2=fused_bilstm_params(2 * H),
        w_cls=uni(next(keys), (2 * H, tagset_size), s_cls),
        b_cls=uni(next(keys), (tagset_size,), s_cls),
    )


if __name__ == "__main__":
    VOCAB, TAGS, EMB, HID = 100, 16, 32, 32
    B, T = 2, 8

    key = jax.random.PRNGKey(0)
    k_param, k_x = jax.random.split(key)
    params = init_params(k_param, VOCAB, TAGS, EMB, HID)

    x_ids = jax.random.randint(k_x, (B, T), 0, VOCAB, dtype=jnp.int32)
    lengths = jnp.array([T, 5], dtype=jnp.int32)   # max(lengths) == T, as pad_packed returns

    logits = jax.jit(bilstm_tagger_forward)(params, x_ids, lengths)
    jax.block_until_ready(logits)
    assert logits.shape == (B, T, TAGS) and logits.dtype == jnp.float32
    print("KERNEL_OK")
</pallas_src>

<mosaic_0001>
module attributes {stable_mosaic.version = 11 : i64} {
  func.func @_linear_kernel(%arg0: memref<16x64xf32, #tpu.memory_space<vmem>>, %arg1: memref<64x16xf32, #tpu.memory_space<vmem>>, %arg2: memref<1x16xf32, #tpu.memory_space<vmem>>, %arg3: memref<16x16xf32, #tpu.memory_space<vmem>>) attributes {dimension_semantics = [], scalar_prefetch = 0 : i64, scratch_operands = 0 : i64, tpu.core_type = #tpu.core_type<tc>} {
    %c0 = arith.constant 0 : index
    %c0_0 = arith.constant 0 : index
    %0 = vector.load %arg0[%c0, %c0_0] : memref<16x64xf32, #tpu.memory_space<vmem>>, vector<16x64xf32>
    %c0_1 = arith.constant 0 : index
    %c0_2 = arith.constant 0 : index
    %1 = vector.load %arg1[%c0_1, %c0_2] : memref<64x16xf32, #tpu.memory_space<vmem>>, vector<64x16xf32>
    %cst = arith.constant dense<0.000000e+00> : vector<16x16xf32>
    %2 = tpu.matmul %0, %1, %cst {dimension_numbers = #tpu.dot_dimension_numbers<[1], [0], [0], [1], [0, 0, 1, 1], [], []>} : vector<16x64xf32>, vector<64x16xf32>, vector<16x16xf32> -> vector<16x16xf32>
    %c0_3 = arith.constant 0 : index
    %c0_4 = arith.constant 0 : index
    %3 = vector.load %arg2[%c0_3, %c0_4] : memref<1x16xf32, #tpu.memory_space<vmem>>, vector<1x16xf32>
    %4 = vector.broadcast %3 : vector<1x16xf32> to vector<16x16xf32>
    %5 = arith.addf %2, %4 : vector<16x16xf32>
    %c0_5 = arith.constant 0 : index
    %c0_6 = arith.constant 0 : index
    %6 = vector.load %arg3[%c0_5, %c0_6] : memref<16x16xf32, #tpu.memory_space<vmem>>, vector<16x16xf32>
    tpu.vector_store %arg3[%c0_5, %c0_6], %5 {strides = array<i32>} : memref<16x16xf32, #tpu.memory_space<vmem>>, vector<16x16xf32>,
    return
  }
}

module attributes {stable_mosaic.version = 11 : i64} {
  func.func @_bilstm_kernel(%arg0: memref<16x64xf32, #tpu.memory_space<vmem>>, %arg1: memref<2x1xi32, #tpu.memory_space<vmem>>, %arg2: memref<64x256xf32, #tpu.memory_space<vmem>>, %arg3: memref<64x256xf32, #tpu.memory_space<vmem>>, %arg4: memref<1x256xf32, #tpu.memory_space<vmem>>, %arg5: memref<8x2x64xf32, #tpu.memory_space<vmem>>, %arg6: memref<16x256xf32, #tpu.memory_space<vmem>>, %arg7: memref<2x64xf32, #tpu.memory_space<vmem>>, %arg8: memref<2x32xf32, #tpu.memory_space<vmem>>, %arg9: memref<2x32xf32, #tpu.memory_space<vmem>>, %arg10: memref<8x2x32xf32, #tpu.memory_space<vmem>>, %arg11: memref<8x2x32xf32, #tpu.memory_space<vmem>>) attributes {dimension_semantics = [], scalar_prefetch = 0 : i64, scratch_operands = 6 : i64, tpu.core_type = #tpu.core_type<tc>} {
    %c0 = arith.constant 0 : index
    %c0_0 = arith.constant 0 : index
    %0 = vector.load %arg0[%c0, %c0_0] : memref<16x64xf32, #tpu.memory_space<vmem>>, vector<16x64xf32>
    %c0_1 = arith.constant 0 : index
    %c0_2 = arith.constant 0 : index
    %1 = vector.load %arg2[%c0_1, %c0_2] : memref<64x256xf32, #tpu.memory_space<vmem>>, vector<64x256xf32>
    %cst = arith.constant dense<0.000000e+00> : vector<16x256xf32>
    %2 = tpu.matmul %0, %1, %cst {dimension_numbers = #tpu.dot_dimension_numbers<[1], [0], [0], [1], [0, 0, 1, 1], [], []>} : vector<16x64xf32>, vector<64x256xf32>, vector<16x256xf32> -> vector<16x256xf32>
    %c0_3 = arith.constant 0 : index
    %c0_4 = arith.constant 0 : index
    %3 = vector.load %arg4[%c0_3, %c0_4] : memref<1x256xf32, #tpu.memory_space<vmem>>, vector<1x256xf32>
    %4 = vector.broadcast %3 : vector<1x256xf32> to vector<16x256xf32>
    %5 = arith.addf %2, %4 : vector<16x256xf32>
    %c0_5 = arith.constant 0 : index
    %c0_6 = arith.constant 0 : index
    %6 = vector.load %arg6[%c0_5, %c0_6] : memref<16x256xf32, #tpu.memory_space<vmem>>, vector<16x256xf32>
    tpu.vector_store %arg6[%c0_5, %c0_6], %5 {strides = array<i32>} : memref<16x256xf32, #tpu.memory_space<vmem>>, vector<16x256xf32>,
    %cst_7 = arith.constant 0.000000e+00 : f32
    %7 = vector.broadcast %cst_7 : f32 to vector<2x64xf32>
    %c0_8 = arith.constant 0 : index
    %c0_9 = arith.constant 0 : index
    %8 = vector.load %arg7[%c0_8, %c0_9] : memref<2x64xf32, #tpu.memory_space<vmem>>, vector<2x64xf32>
    tpu.vector_store %arg7[%c0_8, %c0_9], %7 {strides = array<i32>} : memref<2x64xf32, #tpu.memory_space<vmem>>, vector<2x64xf32>,
    %cst_10 = arith.constant 0.000000e+00 : f32
    %9 = vector.broadcast %cst_10 : f32 to vector<2x32xf32>
    %c0_11 = arith.constant 0 : index
    %c0_12 = arith.constant 0 : index
    %10 = vector.load %arg8[%c0_11, %c0_12] : memref<2x32xf32, #tpu.memory_space<vmem>>, vector<2x32xf32>
    tpu.vector_store %arg8[%c0_11, %c0_12], %9 {strides = array<i32>} : memref<2x32xf32, #tpu.memory_space<vmem>>, vector<2x32xf32>,
    %cst_13 = arith.constant 0.000000e+00 : f32
    %11 = vector.broadcast %cst_13 : f32 to vector<2x32xf32>
    %c0_14 = arith.constant 0 : index
    %c0_15 = arith.constant 0 : index
    %12 = vector.load %arg9[%c0_14, %c0_15] : memref<2x32xf32, #tpu.memory_space<vmem>>, vector<2x32xf32>
    tpu.vector_store %arg9[%c0_14, %c0_15], %11 {strides = array<i32>} : memref<2x32xf32, #tpu.memory_space<vmem>>, vector<2x32xf32>,
    %c0_16 = arith.constant 0 : index
    %c0_17 = arith.constant 0 : index
    %13 = vector.load %arg1[%c0_16, %c0_17] : memref<2x1xi32, #tpu.memory_space<vmem>>, vector<2x1xi32>
    %c0_i32 = arith.constant 0 : i32
    %c7_i32 = arith.constant 7 : i32
    %14 = arith.subi %c7_i32, %c0_i32 : i32
    %c0_18 = arith.constant 0 : index
    %c0_19 = arith.constant 0 : index
    %15 = vector.load %arg7[%c0_18, %c0_19] : memref<2x64xf32, #tpu.memory_space<vmem>>, vector<2x64xf32>
    %c0_20 = arith.constant 0 : index
    %c0_21 = arith.constant 0 : index
    %16 = vector.load %arg3[%c0_20, %c0_21] : memref<64x256xf32, #tpu.memory_space<vmem>>, vector<64x256xf32>
    %cst_22 = arith.constant dense<0.000000e+00> : vector<2x256xf32>
    %17 = tpu.matmul %15, %16, %cst_22 {dimension_numbers = #tpu.dot_dimension_numbers<[1], [0], [0], [1], [0, 0, 1, 1], [], []>} : vector<2x64xf32>, vector<64x256xf32>, vector<2x256xf32> -> vector<2x256xf32>
    %c2_i32 = arith.constant 2 : i32
    %18 = arith.muli %c0_i32, %c2_i32 : i32
    %19 = arith.index_cast %18 : i32 to index
    %c0_23 = arith.constant 0 : index
    %20 = vector.load %arg6[%19, %c0_23] : memref<16x256xf32, #tpu.memory_space<vmem>>, vector<2x256xf32>
    %c2_i32_24 = arith.constant 2 : i32
    %21 = arith.muli %14, %c2_i32_24 : i32
    %22 = arith.index_cast %21 : i32 to index
    %c0_25 = arith.constant 0 : index
    %23 = vector.load %arg6[%22, %c0_25] : memref<16x256xf32, #tpu.memory_space<vmem>>, vector<2x256xf32>
    %24 = vector.extract_strided_slice %20 {offsets = [0, 0], sizes = [2, 128], strides = [1, 1]} : vector<2x256xf32> to vector<2x128xf32>
    %25 = vector.extract_strided_slice %17 {offsets = [0, 0], sizes = [2, 128], strides = [1, 1]} : vector<2x256xf32> to vector<2x128xf32>
    %26 = arith.addf %24, %25 : vector<2x128xf32>
    %27 = vector.extract_strided_slice %23 {offsets = [0, 128], sizes = [2, 128], strides = [1, 1]} : vector<2x256xf32> to vector<2x128xf32>
    %28 = vector.extract_strided_slice %17 {offsets = [0, 128], sizes = [2, 128], strides = [1, 1]} : vector<2x256xf32> to vector<2x128xf32>
    %29 = arith.addf %27, %28 : vector<2x128xf32>
    %c0_26 = arith.constant 0 : index
    %c0_27 = arith.constant 0 : index
    %30 = vector.load %arg8[%c0_26, %c0_27] : memref<2x32xf32, #tpu.memory_space<vmem>>, vector<2x32xf32>
    %31 = vector.extract_strided_slice %26 {offsets = [0, 0], sizes = [2, 32], strides = [1, 1]} : vector<2x128xf32> to vector<2x32xf32>
    %32 = arith.negf %31 : vector<2x32xf32>
    %33 = math.exp %32 : vector<2x32xf32>
    %cst_28 = arith.constant 1.000000e+00 : f32
    %34 = vector.broadcast %cst_28 : f32 to vector<2x32xf32>
    %35 = arith.addf %34, %33 : vector<2x32xf32>
    %36 = arith.divf %34, %35 : vector<2x32xf32>
    %37 = vector.extract_strided_slice %26 {offsets = [0, 32], sizes = [2, 32], strides = [1, 1]} : vector<2x128xf32> to vector<2x32xf32>
    %38 = arith.negf %37 : vector<2x32xf32>
    %39 = math.exp %38 : vector<2x32xf32>
    %cst_29 = arith.constant 1.000000e+00 : f32
    %40 = vector.broadcast %cst_29 : f32 to vector<2x32xf32>
    %41 = arith.addf %40, %39 : vector<2x32xf32>
    %42 = arith.divf %40, %41 : vector<2x32xf32>
    %43 = vector.extract_strided_slice %26 {offsets = [0, 64], sizes = [2, 32], strides = [1, 1]} : vector<2x128xf32> to vector<2x32xf32>
    %44 = math.tanh %43 : vector<2x32xf32>
    %45 = vector.extract_strided_slice %26 {offsets = [0, 96], sizes = [2, 32], strides = [1, 1]} : vector<2x128xf32> to vector<2x32xf32>
    %46 = arith.negf %45 : vector<2x32xf32>
    %47 = math.exp %46 : vector<2x32xf32>
    %cst_30 = arith.constant 1.000000e+00 : f32
    %48 = vector.broadcast %cst_30 : f32 to vector<2x32xf32>
    %49 = arith.addf %48, %47 : vector<2x32xf32>
    %50 = arith.divf %48, %49 : vector<2x32xf32>
    %51 = arith.mulf %42, %30 : vector<2x32xf32>
    %52 = arith.mulf %36, %44 : vector<2x32xf32>
    %53 = arith.addf %51, %52 : vector<2x32xf32>
    %54 = math.tanh %53 : vector<2x32xf32>
    %55 = arith.mulf %50, %54 : vector<2x32xf32>
    %c0_31 = arith.constant 0 : index
    %c0_32 = arith.constant 0 : index
    %56 = vector.load %arg9[%c0_31, %c0_32] : memref<2x32xf32, #tpu.memory_space<vmem>>, vector<2x32xf32>
    %57 = vector.extract_strided_slice %29 {offsets = [0, 0], sizes = [2, 32], strides = [1, 1]} : vector<2x128xf32> to vector<2x32xf32>
    %58 = arith.negf %57 : vector<2x32xf32>
    %59 = math.exp %58 : vector<2x32xf32>
    %cst_33 = arith.constant 1.000000e+00 : f32
    %60 = vector.broadcast %cst_33 : f32 to vector<2x32xf32>
    %61 = arith.addf %60, %59 : vector<2x32xf32>
    %62 = arith.divf %60, %61 : vector<2x32xf32>
    %63 = vector.extract_strided_slice %29 {offsets = [0, 32], sizes = [2, 32], strides = [1, 1]} : vector<2x128xf32> to vector<2x32xf32>
    %64 = arith.negf %63 : vector<2x32xf32>
    %65 = math.exp %64 : vector<2x32xf32>
    %cst_34 = arith.constant 1.000000e+00 : f32
    %66 = vector.broadcast %cst_34 : f32 to vector<2x32xf32>
    %67 = arith.addf %66, %65 : vector<2x32xf32>
    %68 = arith.divf %66, %67 : vector<2x32xf32>
    %69 = vector.extract_strided_slice %29 {offsets = [0, 64], sizes = [2, 32], strides = [1, 1]} : vector<2x128xf32> to vector<2x32xf32>
    %70 = math.tanh %69 : vector<2x32xf32>
    %71 = vector.extract_strided_slice %29 {offsets = [0, 96], sizes = [2, 32], strides = [1, 1]} : vector<2x128xf32> to vector<2x32xf32>
    %72 = arith.negf %71 : vector<2x32xf32>
    %73 = math.exp %72 : vector<2x32xf32>
    %cst_35 = arith.constant 1.000000e+00 : f32
    %74 = vector.broadcast %cst_35 : f32 to vector<2x32xf32>
    %75 = arith.addf %74, %73 : vector<2x32xf32>
    %76 = arith.divf %74, %75 : vector<2x32xf32>
    %77 = arith.mulf %68, %56 : vector<2x32xf32>
    %78 = arith.mulf %62, %70 : vector<2x32xf32>
    %79 = arith.addf %77, %78 : vector<2x32xf32>
    %80 = math.tanh %79 : vector<2x32xf32>
    %81 = arith.mulf %76, %80 : vector<2x32xf32>
    %82 = vector.broadcast %c0_i32 : i32 to vector<2x1xi32>
    %83 = arith.cmpi sgt, %13, %82 : vector<2x1xi32>
    %84 = vector.broadcast %14 : i32 to vector<2x1xi32>
    %85 = arith.cmpi sgt, %13, %84 : vector<2x1xi32>
    %c0_36 = arith.constant 0 : index
    %c0_37 = arith.constant 0 : index
    %86 = vector.load %arg8[%c0_36, %c0_37] : memref<2x32xf32, #tpu.memory_space<vmem>>, vector<2x32xf32>
    %87 = vector.shape_cast %83 : vector<2x1xi1> to vector<2x1xi1>
    %88 = vector.broadcast %87 : vector<2x1xi1> to vector<2x32xi1>
    %89 = arith.select %88, %53, %86 : vector<2x32xi1>, vector<2x32xf32>
    %c0_38 = arith.constant 0 : index
    %c0_39 = arith.constant 0 : index
    %90 = vector.load %arg8[%c0_38, %c0_39] : memref<2x32xf32, #tpu.memory_space<vmem>>, vector<2x32xf32>
    tpu.vector_store %arg8[%c0_38, %c0_39], %89 {strides = array<i32>} : memref<2x32xf32, #tpu.memory_space<vmem>>, vector<2x32xf32>,
    %c0_40 = arith.constant 0 : index
    %c0_41 = arith.constant 0 : index
    %91 = vector.load %arg9[%c0_40, %c0_41] : memref<2x32xf32, #tpu.memory_space<vmem>>, vector<2x32xf32>
    %92 = vector.shape_cast %85 : vector<2x1xi1> to vector<2x1xi1>
    %93 = vector.broadcast %92 : vector<2x1xi1> to vector<2x32xi1>
    %94 = arith.select %93, %79, %91 : vector<2x32xi1>, vector<2x32xf32>
    %c0_42 = arith.constant 0 : index
    %c0_43 = arith.constant 0 : index
    %95 = vector.load %arg9[%c0_42, %c0_43] : memref<2x32xf32, #tpu.memory_space<vmem>>, vector<2x32xf32>
    tpu.vector_store %arg9[%c0_42, %c0_43], %94 {strides = array<i32>} : memref<2x32xf32, #tpu.memory_space<vmem>>, vector<2x32xf32>,
    %c0_44 = arith.constant 0 : index
    %c0_45 = arith.constant 0 : index
    %96 = vector.load %arg7[%c0_44, %c0_45] : memref<2x64xf32, #tpu.memory_space<vmem>>, vector<2x64xf32>
    %97 = vector.extract_strided_slice %96 {offsets = [0, 0], sizes = [2, 32], strides = [1, 1]} : vector<2x64xf32> to vector<2x32xf32>
    %98 = vector.shape_cast %83 : vector<2x1xi1> to vector<2x1xi1>
    %99 = vector.broadcast %98 : vector<2x1xi1> to vector<2x32xi1>
    %100 = arith.select %99, %55, %97 : vector<2x32xi1>, vector<2x32xf32>
    %101 = vector.extract_strided_slice %96 {offsets = [0, 32], sizes = [2, 32], strides = [1, 1]} : vector<2x64xf32> to vector<2x32xf32>
    %102 = vector.shape_cast %85 : vector<2x1xi1> to vector<2x1xi1>
    %103 = vector.broadcast %102 : vector<2x1xi1> to vector<2x32xi1>
    %104 = arith.select %103, %81, %101 : vector<2x32xi1>, vector<2x32xf32>
    %105 = tpu.concatenate %100, %104 in 1 : vector<2x32xf32>, vector<2x32xf32> -> vector<2x64xf32>
    %c0_46 = arith.constant 0 : index
    %c0_47 = arith.constant 0 : index
    %106 = vector.load %arg7[%c0_46, %c0_47] : memref<2x64xf32, #tpu.memory_space<vmem>>, vector<2x64xf32>
    tpu.vector_store %arg7[%c0_46, %c0_47], %105 {strides = array<i32>} : memref<2x64xf32, #tpu.memory_space<vmem>>, vector<2x64xf32>,
    %cst_48 = arith.constant 0.000000e+00 : f32
    %107 = vector.shape_cast %83 : vector<2x1xi1> to vector<2x1xi1>
    %108 = vector.broadcast %107 : vector<2x1xi1> to vector<2x32xi1>
    %109 = vector.broadcast %cst_48 : f32 to vector<2x32xf32>
    %110 = arith.select %108, %55, %109 : vector<2x32xi1>, vector<2x32xf32>
    %111 = arith.index_cast %c0_i32 : i32 to index
    %c0_49 = arith.constant 0 : index
    %c0_50 = arith.constant 0 : index
    %112 = vector.load %arg10[%111, %c0_49, %c0_50] : memref<8x2x32xf32, #tpu.memory_space<vmem>>, vector<1x2x32xf32>
    %113 = vector.shape_cast %112 : vector<1x2x32xf32> to vector<2x32xf32>
    %114 = vector.shape_cast %110 : vector<2x32xf32> to vector<1x2x32xf32>
    tpu.vector_store %arg10[%111, %c0_49, %c0_50], %114 {strides = array<i32>} : memref<8x2x32xf32, #tpu.memory_space<vmem>>, vector<1x2x32xf32>,
    %cst_51 = arith.constant 0.000000e+00 : f32
    %115 = vector.shape_cast %85 : vector<2x1xi1> to vector<2x1xi1>
    %116 = vector.broadcast %115 : vector<2x1xi1> to vector<2x32xi1>
    %117 = vector.broadcast %cst_51 : f32 to vector<2x32xf32>
    %118 = arith.select %116, %81, %117 : vector<2x32xi1>, vector<2x32xf32>
    %119 = arith.index_cast %14 : i32 to index
    %c0_52 = arith.constant 0 : index
    %c0_53 = arith.constant 0 : index
    %120 = vector.load %arg11[%119, %c0_52, %c0_53] : memref<8x2x32xf32, #tpu.memory_space<vmem>>, vector<1x2x32xf32>
    %121 = vector.shape_cast %120 : vector<1x2x32xf32> to vector<2x32xf32>
    %122 = vector.shape_cast %118 : vector<2x32xf32> to vector<1x2x32xf32>
    tpu.vector_store %arg11[%119, %c0_52, %c0_53], %122 {strides = array<i32>} : memref<8x2x32xf32, #tpu.memory_space<vmem>>, vector<1x2x32xf32>,
    %c1_i32 = arith.constant 1 : i32
    %c7_i32_54 = arith.constant 7 : i32
    %123 = arith.subi %c7_i32_54, %c1_i32 : i32
    %c0_55 = arith.constant 0 : index
    %c0_56 = arith.constant 0 : index
    %124 = vector.load %arg7[%c0_55, %c0_56] : memref<2x64xf32, #tpu.memory_space<vmem>>, vector<2x64xf32>
    %c0_57 = arith.constant 0 : index
    %c0_58 = arith.constant 0 : index
    %125 = vector.load %arg3[%c0_57, %c0_58] : memref<64x256xf32, #tpu.memory_space<vmem>>, vector<64x256xf32>
    %cst_59 = arith.constant dense<0.000000e+00> : vector<2x256xf32>
    %126 = tpu.matmul %124, %125, %cst_59 {dimension_numbers = #tpu.dot_dimension_numbers<[1], [0], [0], [1], [0, 0, 1, 1], [], []>} : vector<2x64xf32>, vector<64x256xf32>, vector<2x256xf32> -> vector<2x256xf32>
    %c2_i32_60 = arith.constant 2 : i32
    %127 = arith.muli %c1_i32, %c2_i32_60 : i32
    %128 = arith.index_cast %127 : i32 to index
    %c0_61 = arith.constant 0 : index
    %129 = vector.load %arg6[%128, %c0_61] : memref<16x256xf32, #tpu.memory_space<vmem>>, vector<2x256xf32>
    %c2_i32_62 = arith.constant 2 : i32
    %130 = arith.muli %123, %c2_i32_62 : i32
    %131 = arith.index_cast %130 : i32 to index
    %c0_63 = arith.constant 0 : index
    %132 = vector.load %arg6[%131, %c0_63] : memref<16x256xf32, #tpu.memory_space<vmem>>, vector<2x256xf32>
    %133 = vector.extract_strided_slice %129 {offsets = [0, 0], sizes = [2, 128], strides = [1, 1]} : vector<2x256xf32> to vector<2x128xf32>
    %134 = vector.extract_strided_slice %126 {offsets = [0, 0], sizes = [2, 128], strides = [1, 1]} : vector<2x256xf32> to vector<2x128xf32>
    %135 = arith.addf %133, %134 : vector<2x128xf32>
    %136 = vector.extract_strided_slice %132 {offsets = [0, 128], sizes = [2, 128], strides = [1, 1]} : vector<2x256xf32> to vector<2x128xf32>
    %137 = vector.extract_strided_slice %126 {offsets = [0, 128], sizes = [2, 128], strides = [1, 1]} : vector<2x256xf32> to vector<2x128xf32>
    %138 = arith.addf %136, %137 : vector<2x128xf32>
    %c0_64 = arith.constant 0 : index
    %c0_65 = arith.constant 0 : index
    %139 = vector.load %arg8[%c0_64, %c0_65] : memref<2x32xf32, #tpu.memory_space<vmem>>, vector<2x32xf32>
    %140 = vector.extract_strided_slice %135 {offsets = [0, 0], sizes = [2, 32], strides = [1, 1]} : vector<2x128xf32> to vector<2x32xf32>
    %141 = arith.negf %140 : vector<2x32xf32>
    %142 = math.exp %141 : vector<2x32xf32>
    %cst_66 = arith.constant 1.000000e+00 : f32
    %143 = vector.broadcast %cst_66 : f32 to vector<2x32xf32>
    %144 = arith.addf %143, %142 : vector<2x32xf32>
    %145 = arith.divf %143, %144 : vector<2x32xf32>
    %146 = vector.extract_strided_slice %135 {offsets = [0, 32], sizes = [2, 32], strides = [1, 1]} : vector<2x128xf32> to vector<2x32xf32>
    %147 = arith.negf %146 : vector<2x32xf32>
    %148 = math.exp %147 : vector<2x32xf32>
    %cst_67 = arith.constant 1.000000e+00 : f32
    %149 = vector.broadcast %cst_67 : f32 to vector<2x32xf32>
    %150 = arith.addf %149, %148 : vector<2x32xf32>
    %151 = arith.divf %149, %150 : vector<2x32xf32>
    %152 = vector.extract_strided_slice %135 {offsets = [0, 64], sizes = [2, 32], strides = [1, 1]} : vector<2x128xf32> to vector<2x32xf32>
    %153 = math.tanh %152 : vector<2x32xf32>
    %154 = vector.extract_strided_slice %135 {offsets = [0, 96], sizes = [2, 32], strides = [1, 1]} : vector<2x128xf32> to vector<2x32xf32>
    %155 = arith.negf %154 : vector<2x32xf32>
    %156 = math.exp %155 : vector<2x32xf32>
    %cst_68 = arith.constant 1.000000e+00 : f32
    %157 = vector.broadcast %cst_68 : f32 to vector<2x32xf32>
    %158 = arith.addf %157, %156 : vector<2x32xf32>
    %159 = arith.divf %157, %158 : vector<2x32xf32>
    %160 = arith.mulf %151, %139 : vector<2x32xf32>
    %161 = arith.mulf %145, %153 : vector<2x32xf32>
    %162 = arith.addf %160, %161 : vector<2x32xf32>
    %163 = math.tanh %162 : vector<2x32xf32>
    %164 = arith.mulf %159, %163 : vector<2x32xf32>
    %c0_69 = arith.constant 0 : index
    %c0_70 = arith.constant 0 : index
    %165 = vector.load %arg9[%c0_69, %c0_70] : memref<2x32xf32, #tpu.memory_space<vmem>>, vector<2x32xf32>
    %166 = vector.extract_strided_slice %138 {offsets = [0, 0], sizes = [2, 32], strides = [1, 1]} : vector<2x128xf32> to vector<2x32xf32>
    %167 = arith.negf %166 : vector<2x32xf32>
    %168 = math.exp %167 : vector<2x32xf32>
    %cst_71 = arith.constant 1.000000e+00 : f32
    %169 = vector.broadcast %cst_71 : f32 to vector<2x32xf32>
    %170 = arith.addf %169, %168 : vector<2x32xf32>
    %171 = arith.divf %169, %170 : vector<2x32xf32>
    %172 = vector.extract_strided_slice %138 {offsets = [0, 32], sizes = [2, 32], strides = [1, 1]} : vector<2x128xf32> to vector<2x32xf32>
    %173 = arith.negf %172 : vector<2x32xf32>
    %174 = math.exp %173 : vector<2x32xf32>
    %cst_72 = arith.constant 1.000000e+00 : f32
    %175 = vector.broadcast %cst_72 : f32 to vector<2x32xf32>
    %176 = arith.addf %175, %174 : vector<2x32xf32>
    %177 = arith.divf %175, %176 : vector<2x32xf32>
    %178 = vector.extract_strided_slice %138 {offsets = [0, 64], sizes = [2, 32], strides = [1, 1]} : vector<2x128xf32> to vector<2x32xf32>
    %179 = math.tanh %178 : vector<2x32xf32>
    %180 = vector.extract_strided_slice %138 {offsets = [0, 96], sizes = [2, 32], strides = [1, 1]} : vector<2x128xf32> to vector<2x32xf32>
    %181 = arith.negf %180 : vector<2x32xf32>
    %182 = math.exp %181 : vector<2x32xf32>
    %cst_73 = arith.constant 1.000000e+00 : f32
    %183 = vector.broadcast %cst_73 : f32 to vector<2x32xf32>
    %184 = arith.addf %183, %182 : vector<2x32xf32>
    %185 = arith.divf %183, %184 : vector<2x32xf32>
    %186 = arith.mulf %177, %165 : vector<2x32xf32>
    %187 = arith.mulf %171, %179 : vector<2x32xf32>
    %188 = arith.addf %186, %187 : vector<2x32xf32>
    %189 = math.tanh %188 : vector<2x32xf32>
    %190 = arith.mulf %185, %189 : vector<2x32xf32>
    %191 = vector.broadcast %c1_i32 : i32 to vector<2x1xi32>
    %192 = arith.cmpi sgt, %13, %191 : vector<2x1xi32>
    %193 = vector.broadcast %123 : i32 to vector<2x1xi32>
    %194 = arith.cmpi sgt, %13, %193 : vector<2x1xi32>
    %c0_74 = arith.constant 0 : index
    %c0_75 = arith.constant 0 : index
    %195 = vector.load %arg8[%c0_74, %c0_75] : memref<2x32xf32, #tpu.memory_space<vmem>>, vector<2x32xf32>
    %196 = vector.shape_cast %192 : vector<2x1xi1> to vector<2x1xi1>
    %197 = vector.broadcast %196 : vector<2x1xi1> to vector<2x32xi1>
    %198 = arith.select %197, %162, %195 : vector<2x32xi1>, vector<2x32xf32>
    %c0_76 = arith.constant 0 : index
    %c0_77 = arith.constant 0 : index
    %199 = vector.load %arg8[%c0_76, %c0_77] : memref<2x32xf32, #tpu.memory_space<vmem>>, vector<2x32xf32>
    tpu.vector_store %arg8[%c0_76, %c0_77], %198 {strides = array<i32>} : memref<2x32xf32, #tpu.memory_space<vmem>>, vector<2x32xf32>,
    %c0_78 = arith.constant 0 : index
    %c0_79 = arith.constant 0 : index
    %200 = vector.load %arg9[%c0_78, %c0_79] : memref<2x32xf32, #tpu.memory_space<vmem>>, vector<2x32xf32>
    %201 = vector.shape_cast %194 : vector<2x1xi1> to vector<2x1xi1>
    %202 = vector.broadcast %201 : vector<2x1xi1> to vector<2x32xi1>
    %203 = arith.select %202, %188, %200 : vector<2x32xi1>, vector<2x32xf32>
    %c0_80 = arith.constant 0 : index
    %c0_81 = arith.constant 0 : index
    %204 = vector.load %arg9[%c0_80, %c0_81] : memref<2x32xf32, #tpu.memory_space<vmem>>, vector<2x32xf32>
    tpu.vector_store %arg9[%c0_80, %c0_81], %203 {strides = array<i32>} : memref<2x32xf32, #tpu.memory_space<vmem>>, vector<2x32xf32>,
    %c0_82 = arith.constant 0 : index
    %c0_83 = arith.constant 0 : index
    %205 = vector.load %arg7[%c0_82, %c0_83] : memref<2x64xf32, #tpu.memory_space<vmem>>, vector<2x64xf32>
    %206 = vector.extract_strided_slice %205 {offsets = [0, 0], sizes = [2, 32], strides = [1, 1]} : vector<2x64xf32> to vector<2x32xf32>
    %207 = vector.shape_cast %192 : vector<2x1xi1> to vector<2x1xi1>
    %208 = vector.broadcast %207 : vector<2x1xi1> to vector<2x32xi1>
    %209 = arith.select %208, %164, %206 : vector<2x32xi1>, vector<2x32xf32>
    %210 = vector.extract_strided_slice %205 {offsets = [0, 32], sizes = [2, 32], strides = [1, 1]} : vector<2x64xf32> to vector<2x32xf32>
    %211 = vector.shape_cast %194 : vector<2x1xi1> to vector<2x1xi1>
    %212 = vector.broadcast %211 : vector<2x1xi1> to vector<2x32xi1>
    %213 = arith.select %212, %190, %210 : vector<2x32xi1>, vector<2x32xf32>
    %214 = tpu.concatenate %209, %213 in 1 : vector<2x32xf32>, vector<2x32xf32> -> vector<2x64xf32>
    %c0_84 = arith.constant 0 : index
    %c0_85 = arith.constant 0 : index
    %215 = vector.load %arg7[%c0_84, %c0_85] : memref<2x64xf32, #tpu.memory_space<vmem>>, vector<2x64xf32>
    tpu.vector_store %arg7[%c0_84, %c0_85], %214 {strides = array<i32>} : memref<2x64xf32, #tpu.memory_space<vmem>>, vector<2x64xf32>,
    %cst_86 = arith.constant 0.000000e+00 : f32
    %216 = vector.shape_cast %192 : vector<2x1xi1> to vector<2x1xi1>
    %217 = vector.broadcast %216 : vector<2x1xi1> to vector<2x32xi1>
    %218 = vector.broadcast %cst_86 : f32 to vector<2x32xf32>
    %219 = arith.select %217, %164, %218 : vector<2x32xi1>, vector<2x32xf32>
    %220 = arith.index_cast %c1_i32 : i32 to index
    %c0_87 = arith.constant 0 : index
    %c0_88 = arith.constant 0 : index
    %221 = vector.load %arg10[%220, %c0_87, %c0_88] : memref<8x2x32xf32, #tpu.memory_space<vmem>>, vector<1x2x32xf32>
    %222 = vector.shape_cast %221 : vector<1x2x32xf32> to vector<2x32xf32>
    %223 = vector.shape_cast %219 : vector<2x32xf32> to vector<1x2x32xf32>
    tpu.vector_store %arg10[%220, %c0_87, %c0_88], %223 {strides = array<i32>} : memref<8x2x32xf32, #tpu.memory_space<vmem>>, vector<1x2x32xf32>,
    %cst_89 = arith.constant 0.000000e+00 : f32
    %224 = vector.shape_cast %194 : vector<2x1xi1> to vector<2x1xi1>
    %225 = vector.broadcast %224 : vector<2x1xi1> to vector<2x32xi1>
    %226 = vector.broadcast %cst_89 : f32 to vector<2x32xf32>
    %227 = arith.select %225, %190, %226 : vector<2x32xi1>, vector<2x32xf32>
    %228 = arith.index_cast %123 : i32 to index
    %c0_90 = arith.constant 0 : index
    %c0_91 = arith.constant 0 : index
    %229 = vector.load %arg11[%228, %c0_90, %c0_91] : memref<8x2x32xf32, #tpu.memory_space<vmem>>, vector<1x2x32xf32>
    %230 = vector.shape_cast %229 : vector<1x2x32xf32> to vector<2x32xf32>
    %231 = vector.shape_cast %227 : vector<2x32xf32> to vector<1x2x32xf32>
    tpu.vector_store %arg11[%228, %c0_90, %c0_91], %231 {strides = array<i32>} : memref<8x2x32xf32, #tpu.memory_space<vmem>>, vector<1x2x32xf32>,
    %c2_i32_92 = arith.constant 2 : i32
    %c7_i32_93 = arith.constant 7 : i32
    %232 = arith.subi %c7_i32_93, %c2_i32_92 : i32
    %c0_94 = arith.constant 0 : index
    %c0_95 = arith.constant 0 : index
    %233 = vector.load %arg7[%c0_94, %c0_95] : memref<2x64xf32, #tpu.memory_space<vmem>>, vector<2x64xf32>
    %c0_96 = arith.constant 0 : index
    %c0_97 = arith.constant 0 : index
    %234 = vector.load %arg3[%c0_96, %c0_97] : memref<64x256xf32, #tpu.memory_space<vmem>>, vector<64x256xf32>
    %cst_98 = arith.constant dense<0.000000e+00> : vector<2x256xf32>
    %235 = tpu.matmul %233, %234, %cst_98 {dimension_numbers = #tpu.dot_dimension_numbers<[1], [0], [0], [1], [0, 0, 1, 1], [], []>} : vector<2x64xf32>, vector<64x256xf32>, vector<2x256xf32> -> vector<2x256xf32>
    %c2_i32_99 = arith.constant 2 : i32
    %236 = arith.muli %c2_i32_92, %c2_i32_99 : i32
    %237 = arith.index_cast %236 : i32 to index
    %c0_100 = arith.constant 0 : index
    %238 = vector.load %arg6[%237, %c0_100] : memref<16x256xf32, #tpu.memory_space<vmem>>, vector<2x256xf32>
    %c2_i32_101 = arith.constant 2 : i32
    %239 = arith.muli %232, %c2_i32_101 : i32
    %240 = arith.index_cast %239 : i32 to index
    %c0_102 = arith.constant 0 : index
    %241 = vector.load %arg6[%240, %c0_102] : memref<16x256xf32, #tpu.memory_space<vmem>>, vector<2x256xf32>
    %242 = vector.extract_strided_slice %238 {offsets = [0, 0], sizes = [2, 128], strides = [1, 1]} : vector<2x256xf32> to vector<2x128xf32>
    %243 = vector.extract_strided_slice %235 {offsets = [0, 0], sizes = [2, 128], strides = [1, 1]} : vector<2x256xf32> to vector<2x128xf32>
    %244 = arith.addf %242, %243 : vector<2x128xf32>
    %245 = vector.extract_strided_slice %241 {offsets = [0, 128], sizes = [2, 128], strides = [1, 1]} : vector<2x256xf32> to vector<2x128xf32>
    %246 = vector.extract_strided_slice %235 {offsets = [0, 128], sizes = [2, 128], strides = [1, 1]} : vector<2x256xf32> to vector<2x128xf32>
    %247 = arith.addf %245, %246 : vector<2x128xf32>
    %c0_103 = arith.constant 0 : index
    %c0_104 = arith.constant 0 : index
    %248 = vector.load %arg8[%c0_103, %c0_104] : memref<2x32xf32, #tpu.memory_space<vmem>>, vector<2x32xf32>
    %249 = vector.extract_strided_slice %244 {offsets = [0, 0], sizes = [2, 32], strides = [1, 1]} : vector<2x128xf32> to vector<2x32xf32>
    %250 = arith.negf %249 : vector<2x32xf32>
    %251 = math.exp %250 : vector<2x32xf32>
    %cst_105 = arith.constant 1.000000e+00 : f32
    %252 = vector.broadcast %cst_105 : f32 to vector<2x32xf32>
    %253 = arith.addf %252, %251 : vector<2x32xf32>
    %254 = arith.divf %252, %253 : vector<2x32xf32>
    %255 = vector.extract_strided_slice %244 {offsets = [0, 32], sizes = [2, 32], strides = [1, 1]} : vector<2x128xf32> to vector<2x32xf32>
    %256 = arith.negf %255 : vector<2x32xf32>
    %257 = math.exp %256 : vector<2x32xf32>
    %cst_106 = arith.constant 1.000000e+00 : f32
    %258 = vector.broadcast %cst_106 : f32 to vector<2x32xf32>
    %259 = arith.addf %258, %257 : vector<2x32xf32>
    %260 = arith.divf %258, %259 : vector<2x32xf32>
    %261 = vector.extract_strided_slice %244 {offsets = [0, 64], sizes = [2, 32], strides = [1, 1]} : vector<2x128xf32> to vector<2x32xf32>
    %262 = math.tanh %261 : vector<2x32xf32>
    %263 = vector.extract_strided_slice %244 {offsets = [0, 96], sizes = [2, 32], strides = [1, 1]} : vector<2x128xf32> to vector<2x32xf32>
    %264 = arith.negf %263 : vector<2x32xf32>
    %265 = math.exp %264 : vector<2x32xf32>
    %cst_107 = arith.constant 1.000000e+00 : f32
    %266 = vector.broadcast %cst_107 : f32 to vector<2x32xf32>
    %267 = arith.addf %266, %265 : vector<2x32xf32>
    %268 = arith.divf %266, %267 : vector<2x32xf32>
    %269 = arith.mulf %260, %248 : vector<2x32xf32>
    %270 = arith.mulf %254, %262 : vector<2x32xf32>
    %271 = arith.addf %269, %270 : vector<2x32xf32>
    %272 = math.tanh %271 : vector<2x32xf32>
    %273 = arith.mulf %268, %272 : vector<2x32xf32>
    %c0_108 = arith.constant 0 : index
    %c0_109 = arith.constant 0 : index
    %274 = vector.load %arg9[%c0_108, %c0_109] : memref<2x32xf32, #tpu.memory_space<vmem>>, vector<2x32xf32>
    %275 = vector.extract_strided_slice %247 {offsets = [0, 0], sizes = [2, 32], strides = [1, 1]} : vector<2x128xf32> to vector<2x32xf32>
    %276 = arith.negf %275 : vector<2x32xf32>
    %277 = math.exp %276 : vector<2x32xf32>
    %cst_110 = arith.constant 1.000000e+00 : f32
    %278 = vector.broadcast %cst_110 : f32 to vector<2x32xf32>
    %279 = arith.addf %278, %277 : vector<2x32xf32>
    %280 = arith.divf %278, %279 : vector<2x32xf32>
    %281 = vector.extract_strided_slice %247 {offsets = [0, 32], sizes = [2, 32], strides = [1, 1]} : vector<2x128xf32> to vector<2x32xf32>
    %282 = arith.negf %281 : vector<2x32xf32>
    %283 = math.exp %282 : vector<2x32xf32>
    %cst_111 = arith.constant 1.000000e+00 : f32
    %284 = vector.broadcast %cst_111 : f32 to vector<2x32xf32>
    %285 = arith.addf %284, %283 : vector<2x32xf32>
    %286 = arith.divf %284, %285 : vector<2x32xf32>
    %287 = vector.extract_strided_slice %247 {offsets = [0, 64], sizes = [2, 32], strides = [1, 1]} : vector<2x128xf32> to vector<2x32xf32>
    %288 = math.tanh %287 : vector<2x32xf32>
    %289 = vector.extract_strided_slice %247 {offsets = [0, 96], sizes = [2, 32], strides = [1, 1]} : vector<2x128xf32> to vector<2x32xf32>
    %290 = arith.negf %289 : vector<2x32xf32>
    %291 = math.exp %290 : vector<2x32xf32>
    %cst_112 = arith.constant 1.000000e+00 : f32
    %292 = vector.broadcast %cst_112 : f32 to vector<2x32xf32>
    %293 = arith.addf %292, %291 : vector<2x32xf32>
    %294 = arith.divf %292, %293 : vector<2x32xf32>
    %295 = arith.mulf %286, %274 : vector<2x32xf32>
    %296 = arith.mulf %280, %288 : vector<2x32xf32>
    %297 = arith.addf %295, %296 : vector<2x32xf32>
    %298 = math.tanh %297 : vector<2x32xf32>
    %299 = arith.mulf %294, %298 : vector<2x32xf32>
    %300 = vector.broadcast %c2_i32_92 : i32 to vector<2x1xi32>
    %301 = arith.cmpi sgt, %13, %300 : vector<2x1xi32>
    %302 = vector.broadcast %232 : i32 to vector<2x1xi32>
    %303 = arith.cmpi sgt, %13, %302 : vector<2x1xi32>
    %c0_113 = arith.constant 0 : index
    %c0_114 = arith.constant 0 : index
    %304 = vector.load %arg8[%c0_113, %c0_114] : memref<2x32xf32, #tpu.memory_space<vmem>>, vector<2x32xf32>
    %305 = vector.shape_cast %301 : vector<2x1xi1> to vector<2x1xi1>
    %306 = vector.broadcast %305 : vector<2x1xi1> to vector<2x32xi1>
    %307 = arith.select %306, %271, %304 : vector<2x32xi1>, vector<2x32xf32>
    %c0_115 = arith.constant 0 : index
    %c0_116 = arith.constant 0 : index
    %308 = vector.load %arg8[%c0_115, %c0_116] : memref<2x32xf32, #tpu.memory_space<vmem>>, vector<2x32xf32>
    tpu.vector_store %arg8[%c0_115, %c0_116], %307 {strides = array<i32>} : memref<2x32xf32, #tpu.memory_space<vmem>>, vector<2x32xf32>,
    %c0_117 = arith.constant 0 : index
    %c0_118 = arith.constant 0 : index
    %309 = vector.load %arg9[%c0_117, %c0_118] : memref<2x32xf32, #tpu.memory_space<vmem>>, vector<2x32xf32>
    %310 = vector.shape_cast %303 : vector<2x1xi1> to vector<2x1xi1>
    %311 = vector.broadcast %310 : vector<2x1xi1> to vector<2x32xi1>
    %312 = arith.select %311, %297, %309 : vector<2x32xi1>, vector<2x32xf32>
    %c0_119 = arith.constant 0 : index
    %c0_120 = arith.constant 0 : index
    %313 = vector.load %arg9[%c0_119, %c0_120] : memref<2x32xf32, #tpu.memory_space<vmem>>, vector<2x32xf32>
    tpu.vector_store %arg9[%c0_119, %c0_120], %312 {strides = array<i32>} : memref<2x32xf32, #tpu.memory_space<vmem>>, vector<2x32xf32>,
    %c0_121 = arith.constant 0 : index
    %c0_122 = arith.constant 0 : index
    %314 = vector.load %arg7[%c0_121, %c0_122] : memref<2x64xf32, #tpu.memory_space<vmem>>, vector<2x64xf32>
    %315 = vector.extract_strided_slice %314 {offsets = [0, 0], sizes = [2, 32], strides = [1, 1]} : vector<2x64xf32> to vector<2x32xf32>
    %316 = vector.shape_cast %301 : vector<2x1xi1> to vector<2x1xi1>
    %317 = vector.broadcast %316 : vector<2x1xi1> to vector<2x32xi1>
    %318 = arith.select %317, %273, %315 : vector<2x32xi1>, vector<2x32xf32>
    %319 = vector.extract_strided_slice %314 {offsets = [0, 32], sizes = [2, 32], strides = [1, 1]} : vector<2x64xf32> to vector<2x32xf32>
    %320 = vector.shape_cast %303 : vector<2x1xi1> to vector<2x1xi1>
    %321 = vector.broadcast %320 : vector<2x1xi1> to vector<2x32xi1>
    %322 = arith.select %321, %299, %319 : vector<2x32xi1>, vector<2x32xf32>
    %323 = tpu.concatenate %318, %322 in 1 : vector<2x32xf32>, vector<2x32xf32> -> vector<2x64xf32>
    %c0_123 = arith.constant 0 : index
    %c0_124 = arith.constant 0 : index
    %324 = vector.load %arg7[%c0_123, %c0_124] : memref<2x64xf32, #tpu.memory_space<vmem>>, vector<2x64xf32>
    tpu.vector_store %arg7[%c0_123, %c0_124], %323 {strides = array<i32>} : memref<2x64xf32, #tpu.memory_space<vmem>>, vector<2x64xf32>,
    %cst_125 = arith.constant 0.000000e+00 : f32
    %325 = vector.shape_cast %301 : vector<2x1xi1> to vector<2x1xi1>
    %326 = vector.broadcast %325 : vector<2x1xi1> to vector<2x32xi1>
    %327 = vector.broadcast %cst_125 : f32 to vector<2x32xf32>
    %328 = arith.select %326, %273, %327 : vector<2x32xi1>, vector<2x32xf32>
    %329 = arith.index_cast %c2_i32_92 : i32 to index
    %c0_126 = arith.constant 0 : index
    %c0_127 = arith.constant 0 : index
    %330 = vector.load %arg10[%329, %c0_126, %c0_127] : memref<8x2x32xf32, #tpu.memory_space<vmem>>, vector<1x2x32xf32>
    %331 = vector.shape_cast %330 : vector<1x2x32xf32> to vector<2x32xf32>
    %332 = vector.shape_cast %328 : vector<2x32xf32> to vector<1x2x32xf32>
    tpu.vector_store %arg10[%329, %c0_126, %c0_127], %332 {strides = array<i32>} : memref<8x2x32xf32, #tpu.memory_space<vmem>>, vector<1x2x32xf32>,
    %cst_128 = arith.constant 0.000000e+00 : f32
    %333 = vector.shape_cast %303 : vector<2x1xi1> to vector<2x1xi1>
    %334 = vector.broadcast %333 : vector<2x1xi1> to vector<2x32xi1>
    %335 = vector.broadcast %cst_128 : f32 to vector<2x32xf32>
    %336 = arith.select %334, %299, %335 : vector<2x32xi1>, vector<2x32xf32>
    %337 = arith.index_cast %232 : i32 to index
    %c0_129 = arith.constant 0 : index
    %c0_130 = arith.constant 0 : index
    %338 = vector.load %arg11[%337, %c0_129, %c0_130] : memref<8x2x32xf32, #tpu.memory_space<vmem>>, vector<1x2x32xf32>
    %339 = vector.shape_cast %338 : vector<1x2x32xf32> to vector<2x32xf32>
    %340 = vector.shape_cast %336 : vector<2x32xf32> to vector<1x2x32xf32>
    tpu.vector_store %arg11[%337, %c0_129, %c0_130], %340 {strides = array<i32>} : memref<8x2x32xf32, #tpu.memory_space<vmem>>, vector<1x2x32xf32>,
    %c3_i32 = arith.constant 3 : i32
    %c7_i32_131 = arith.constant 7 : i32
    %341 = arith.subi %c7_i32_131, %c3_i32 : i32
    %c0_132 = arith.constant 0 : index
    %c0_133 = arith.constant 0 : index
    %342 = vector.load %arg7[%c0_132, %c0_133] : memref<2x64xf32, #tpu.memory_space<vmem>>, vector<2x64xf32>
    %c0_134 = arith.constant 0 : index
    %c0_135 = arith.constant 0 : index
    %343 = vector.load %arg3[%c0_134, %c0_135] : memref<64x256xf32, #tpu.memory_space<vmem>>, vector<64x256xf32>
    %cst_136 = arith.constant dense<0.000000e+00> : vector<2x256xf32>
    %344 = tpu.matmul %342, %343, %cst_136 {dimension_numbers = #tpu.dot_dimension_numbers<[1], [0], [0], [1], [0, 0, 1, 1], [], []>} : vector<2x64xf32>, vector<64x256xf32>, vector<2x256xf32> -> vector<2x256xf32>
    %c2_i32_137 = arith.constant 2 : i32
    %345 = arith.muli %c3_i32, %c2_i32_137 : i32
    %346 = arith.index_cast %345 : i32 to index
    %c0_138 = arith.constant 0 : index
    %347 = vector.load %arg6[%346, %c0_138] : memref<16x256xf32, #tpu.memory_space<vmem>>, vector<2x256xf32>
    %c2_i32_139 = arith.constant 2 : i32
    %348 = arith.muli %341, %c2_i32_139 : i32
    %349 = arith.index_cast %348 : i32 to index
    %c0_140 = arith.constant 0 : index
    %350 = vector.load %arg6[%349, %c0_140] : memref<16x256xf32, #tpu.memory_space<vmem>>, vector<2x256xf32>
    %351 = vector.extract_strided_slice %347 {offsets = [0, 0], sizes = [2, 128], strides = [1, 1]} : vector<2x256xf32> to vector<2x128xf32>
    %352 = vector.extract_strided_slice %344 {offsets = [0, 0], sizes = [2, 128], strides = [1, 1]} : vector<2x256xf32> to vector<2x128xf32>
    %353 = arith.addf %351, %352 : vector<2x128xf32>
    %354 = vector.extract_strided_slice %350 {offsets = [0, 128], sizes = [2, 128], strides = [1, 1]} : vector<2x256xf32> to vector<2x128xf32>
    %355 = vector.extract_strided_slice %344 {offsets = [0, 128], sizes = [2, 128], strides = [1, 1]} : vector<2x256xf32> to vector<2x128xf32>
    %356 = arith.addf %354, %355 : vector<2x128xf32>
    %c0_141 = arith.constant 0 : index
    %c0_142 = arith.constant 0 : index
    %357 = vector.load %arg8[%c0_141, %c0_142] : memref<2x32xf32, #tpu.memory_space<vmem>>, vector<2x32xf32>
    %358 = vector.extract_strided_slice %353 {offsets = [0, 0], sizes = [2, 32], strides = [1, 1]} : vector<2x128xf32> to vector<2x32xf32>
    %359 = arith.negf %358 : vector<2x32xf32>
    %360 = math.exp %359 : vector<2x32xf32>
    %cst_143 = arith.constant 1.000000e+00 : f32
    %361 = vector.broadcast %cst_143 : f32 to vector<2x32xf32>
    %362 = arith.addf %361, %360 : vector<2x32xf32>
    %363 = arith.divf %361, %362 : vector<2x32xf32>
    %364 = vector.extract_strided_slice %353 {offsets = [0, 32], sizes = [2, 32], strides = [1, 1]} : vector<2x128xf32> to vector<2x32xf32>
    %365 = arith.negf %364 : vector<2x32xf32>
    %366 = math.exp %365 : vector<2x32xf32>
    %cst_144 = arith.constant 1.000000e+00 : f32
    %367 = vector.broadcast %cst_144 : f32 to vector<2x32xf32>
    %368 = arith.addf %367, %366 : vector<2x32xf32>
    %369 = arith.divf %367, %368 : vector<2x32xf32>
    %370 = vector.extract_strided_slice %353 {offsets = [0, 64], sizes = [2, 32], strides = [1, 1]} : vector<2x128xf32> to vector<2x32xf32>
    %371 = math.tanh %370 : vector<2x32xf32>
    %372 = vector.extract_strided_slice %353 {offsets = [0, 96], sizes = [2, 32], strides = [1, 1]} : vector<2x128xf32> to vector<2x32xf32>
    %373 = arith.negf %372 : vector<2x32xf32>
    %374 = math.exp %373 : vector<2x32xf32>
    %cst_145 = arith.constant 1.000000e+00 : f32
    %375 = vector.broadcast %cst_145 : f32 to vector<2x32xf32>
    %376 = arith.addf %375, %374 : vector<2x32xf32>
    %377 = arith.divf %375, %376 : vector<2x32xf32>
    %378 = arith.mulf %369, %357 : vector<2x32xf32>
    %379 = arith.mulf %363, %371 : vector<2x32xf32>
    %380 = arith.addf %378, %379 : vector<2x32xf32>
    %381 = math.tanh %380 : vector<2x32xf32>
    %382 = arith.mulf %377, %381 : vector<2x32xf32>
    %c0_146 = arith.constant 0 : index
    %c0_147 = arith.constant 0 : index
    %383 = vector.load %arg9[%c0_146, %c0_147] : memref<2x32xf32, #tpu.memory_space<vmem>>, vector<2x32xf32>
    %384 = vector.extract_strided_slice %356 {offsets = [0, 0], sizes = [2, 32], strides = [1, 1]} : vector<2x128xf32> to vector<2x32xf32>
    %385 = arith.negf %384 : vector<2x32xf32>
    %386 = math.exp %385 : vector<2x32xf32>
    %cst_148 = arith.constant 1.000000e+00 : f32
    %387 = vector.broadcast %cst_148 : f32 to vector<2x32xf32>
    %388 = arith.addf %387, %386 : vector<2x32xf32>
    %389 = arith.divf %387, %388 : vector<2x32xf32>
    %390 = vector.extract_strided_slice %356 {offsets = [0, 32], sizes = [2, 32], strides = [1, 1]} : vector<2x128xf32> to vector<2x32xf32>
    %391 = arith.negf %390 : vector<2x32xf32>
    %392 = math.exp %391 : vector<2x32xf32>
    %cst_149 = arith.constant 1.000000e+00 : f32
    %393 = vector.broadcast %cst_149 : f32 to vector<2x32xf32>
    %394 = arith.addf %393, %392 : vector<2x32xf32>
    %395 = arith.divf %393, %394 : vector<2x32xf32>
    %396 = vector.extract_strided_slice %356 {offsets = [0, 64], sizes = [2, 32], strides = [1, 1]} : vector<2x128xf32> to vector<2x32xf32>
    %397 = math.tanh %396 : vector<2x32xf32>
    %398 = vector.extract_strided_slice %356 {offsets = [0, 96], sizes = [2, 32], strides = [1, 1]} : vector<2x128xf32> to vector<2x32xf32>
    %399 = arith.negf %398 : vector<2x32xf32>
    %400 = math.exp %399 : vector<2x32xf32>
    %cst_150 = arith.constant 1.000000e+00 : f32
    %401 = vector.broadcast %cst_150 : f32 to vector<2x32xf32>
    %402 = arith.addf %401, %400 : vector<2x32xf32>
    %403 = arith.divf %401, %402 : vector<2x32xf32>
    %404 = arith.mulf %395, %383 : vector<2x32xf32>
    %405 = arith.mulf %389, %397 : vector<2x32xf32>
    %406 = arith.addf %404, %405 : vector<2x32xf32>
    %407 = math.tanh %406 : vector<2x32xf32>
    %408 = arith.mulf %403, %407 : vector<2x32xf32>
    %409 = vector.broadcast %c3_i32 : i32 to vector<2x1xi32>
    %410 = arith.cmpi sgt, %13, %409 : vector<2x1xi32>
    %411 = vector.broadcast %341 : i32 to vector<2x1xi32>
    %412 = arith.cmpi sgt, %13, %411 : vector<2x1xi32>
    %c0_151 = arith.constant 0 : index
    %c0_152 = arith.constant 0 : index
    %413 = vector.load %arg8[%c0_151, %c0_152] : memref<2x32xf32, #tpu.memory_space<vmem>>, vector<2x32xf32>
    %414 = vector.shape_cast %410 : vector<2x1xi1> to vector<2x1xi1>
    %415 = vector.broadcast %414 : vector<2x1xi1> to vector<2x32xi1>
    %416 = arith.select %415, %380, %413 : vector<2x32xi1>, vector<2x32xf32>
    %c0_153 = arith.constant 0 : index
    %c0_154 = arith.constant 0 : index
    %417 = vector.load %arg8[%c0_153, %c0_154] : memref<2x32xf32, #tpu.memory_space<vmem>>, vector<2x32xf32>
    tpu.vector_store %arg8[%c0_153, %c0_154], %416 {strides = array<i32>} : memref<2x32xf32, #tpu.memory_space<vmem>>, vector<2x32xf32>,
    %c0_155 = arith.constant 0 : index
    %c0_156 = arith.constant 0 : index
    %418 = vector.load %arg9[%c0_155, %c0_156] : memref<2x32xf32, #tpu.memory_space<vmem>>, vector<2x32xf32>
    %419 = vector.shape_cast %412 : vector<2x1xi1> to vector<2x1xi1>
    %420 = vector.broadcast %419 : vector<2x1xi1> to vector<2x32xi1>
    %421 = arith.select %420, %406, %418 : vector<2x32xi1>, vector<2x32xf32>
    %c0_157 = arith.constant 0 : index
    %c0_158 = arith.constant 0 : index
    %422 = vector.load %arg9[%c0_157, %c0_158] : memref<2x32xf32, #tpu.memory_space<vmem>>, vector<2x32xf32>
    tpu.vector_store %arg9[%c0_157, %c0_158], %421 {strides = array<i32>} : memref<2x32xf32, #tpu.memory_space<vmem>>, vector<2x32xf32>,
    %c0_159 = arith.constant 0 : index
    %c0_160 = arith.constant 0 : index
    %423 = vector.load %arg7[%c0_159, %c0_160] : memref<2x64xf32, #tpu.memory_space<vmem>>, vector<2x64xf32>
    %424 = vector.extract_strided_slice %423 {offsets = [0, 0], sizes = [2, 32], strides = [1, 1]} : vector<2x64xf32> to vector<2x32xf32>
    %425 = vector.shape_cast %410 : vector<2x1xi1> to vector<2x1xi1>
    %426 = vector.broadcast %425 : vector<2x1xi1> to vector<2x32xi1>
    %427 = arith.select %426, %382, %424 : vector<2x32xi1>, vector<2x32xf32>
    %428 = vector.extract_strided_slice %423 {offsets = [0, 32], sizes = [2, 32], strides = [1, 1]} : vector<2x64xf32> to vector<2x32xf32>
    %429 = vector.shape_cast %412 : vector<2x1xi1> to vector<2x1xi1>
    %430 = vector.broadcast %429 : vector<2x1xi1> to vector<2x32xi1>
    %431 = arith.select %430, %408, %428 : vector<2x32xi1>, vector<2x32xf32>
    %432 = tpu.concatenate %427, %431 in 1 : vector<2x32xf32>, vector<2x32xf32> -> vector<2x64xf32>
    %c0_161 = arith.constant 0 : index
    %c0_162 = arith.constant 0 : index
    %433 = vector.load %arg7[%c0_161, %c0_162] : memref<2x64xf32, #tpu.memory_space<vmem>>, vector<2x64xf32>
    tpu.vector_store %arg7[%c0_161, %c0_162], %432 {strides = array<i32>} : memref<2x64xf32, #tpu.memory_space<vmem>>, vector<2x64xf32>,
    %cst_163 = arith.constant 0.000000e+00 : f32
    %434 = vector.shape_cast %410 : vector<2x1xi1> to vector<2x1xi1>
    %435 = vector.broadcast %434 : vector<2x1xi1> to vector<2x32xi1>
    %436 = vector.broadcast %cst_163 : f32 to vector<2x32xf32>
    %437 = arith.select %435, %382, %436 : vector<2x32xi1>, vector<2x32xf32>
    %438 = arith.index_cast %c3_i32 : i32 to index
    %c0_164 = arith.constant 0 : index
    %c0_165 = arith.constant 0 : index
    %439 = vector.load %arg10[%438, %c0_164, %c0_165] : memref<8x2x32xf32, #tpu.memory_space<vmem>>, vector<1x2x32xf32>
    %440 = vector.shape_cast %439 : vector<1x2x32xf32> to vector<2x32xf32>
    %441 = vector.shape_cast %437 : vector<2x32xf32> to vector<1x2x32xf32>
    tpu.vector_store %arg10[%438, %c0_164, %c0_165], %441 {strides = array<i32>} : memref<8x2x32xf32, #tpu.memory_space<vmem>>, vector<1x2x32xf32>,
    %cst_166 = arith.constant 0.000000e+00 : f32
    %442 = vector.shape_cast %412 : vector<2x1xi1> to vector<2x1xi1>
    %443 = vector.broadcast %442 : vector<2x1xi1> to vector<2x32xi1>
    %444 = vector.broadcast %cst_166 : f32 to vector<2x32xf32>
    %445 = arith.select %443, %408, %444 : vector<2x32xi1>, vector<2x32xf32>
    %446 = arith.index_cast %341 : i32 to index
    %c0_167 = arith.constant 0 : index
    %c0_168 = arith.constant 0 : index
    %447 = vector.load %arg11[%446, %c0_167, %c0_168] : memref<8x2x32xf32, #tpu.memory_space<vmem>>, vector<1x2x32xf32>
    %448 = vector.shape_cast %447 : vector<1x2x32xf32> to vector<2x32xf32>
    %449 = vector.shape_cast %445 : vector<2x32xf32> to vector<1x2x32xf32>
    tpu.vector_store %arg11[%446, %c0_167, %c0_168], %449 {strides = array<i32>} : memref<8x2x32xf32, #tpu.memory_space<vmem>>, vector<1x2x32xf32>,
    %c4_i32 = arith.constant 4 : i32
    %c7_i32_169 = arith.constant 7 : i32
    %450 = arith.subi %c7_i32_169, %c4_i32 : i32
    %c0_170 = arith.constant 0 : index
    %c0_171 = arith.constant 0 : index
    %451 = vector.load %arg7[%c0_170, %c0_171] : memref<2x64xf32, #tpu.memory_space<vmem>>, vector<2x64xf32>
    %c0_172 = arith.constant 0 : index
    %c0_173 = arith.constant 0 : index
    %452 = vector.load %arg3[%c0_172, %c0_173] : memref<64x256xf32, #tpu.memory_space<vmem>>, vector<64x256xf32>
    %cst_174 = arith.constant dense<0.000000e+00> : vector<2x256xf32>
    %453 = tpu.matmul %451, %452, %cst_174 {dimension_numbers = #tpu.dot_dimension_numbers<[1], [0], [0], [1], [0, 0, 1, 1], [], []>} : vector<2x64xf32>, vector<64x256xf32>, vector<2x256xf32> -> vector<2x256xf32>
    %c2_i32_175 = arith.constant 2 : i32
    %454 = arith.muli %c4_i32, %c2_i32_175 : i32
    %455 = arith.index_cast %454 : i32 to index
    %c0_176 = arith.constant 0 : index
    %456 = vector.load %arg6[%455, %c0_176] : memref<16x256xf32, #tpu.memory_space<vmem>>, vector<2x256xf32>
    %c2_i32_177 = arith.constant 2 : i32
    %457 = arith.muli %450, %c2_i32_177 : i32
    %458 = arith.index_cast %457 : i32 to index
    %c0_178 = arith.constant 0 : index
    %459 = vector.load %arg6[%458, %c0_178] : memref<16x256xf32, #tpu.memory_space<vmem>>, vector<2x256xf32>
    %460 = vector.extract_strided_slice %456 {offsets = [0, 0], sizes = [2, 128], strides = [1, 1]} : vector<2x256xf32> to vector<2x128xf32>
    %461 = vector.extract_strided_slice %453 {offsets = [0, 0], sizes = [2, 128], strides = [1, 1]} : vector<2x256xf32> to vector<2x128xf32>
    %462 = arith.addf %460, %461 : vector<2x128xf32>
    %463 = vector.extract_strided_slice %459 {offsets = [0, 128], sizes = [2, 128], strides = [1, 1]} : vector<2x256xf32> to vector<2x128xf32>
    %464 = vector.extract_strided_slice %453 {offsets = [0, 128], sizes = [2, 128], strides = [1, 1]} : vector<2x256xf32> to vector<2x128xf32>
    %465 = arith.addf %463, %464 : vector<2x128xf32>
    %c0_179 = arith.constant 0 : index
    %c0_180 = arith.constant 0 : index
    %466 = vector.load %arg8[%c0_179, %c0_180] : memref<2x32xf32, #tpu.memory_space<vmem>>, vector<2x32xf32>
    %467 = vector.extract_strided_slice %462 {offsets = [0, 0], sizes = [2, 32], strides = [1, 1]} : vector<2x128xf32> to vector<2x32xf32>
    %468 = arith.negf %467 : vector<2x32xf32>
    %469 = math.exp %468 : vector<2x32xf32>
    %cst_181 = arith.constant 1.000000e+00 : f32
    %470 = vector.broadcast %cst_181 : f32 to vector<2x32xf32>
    %471 = arith.addf %470, %469 : vector<2x32xf32>
    %472 = arith.divf %470, %471 : vector<2x32xf32>
    %473 = vector.extract_strided_slice %462 {offsets = [0, 32], sizes = [2, 32], strides = [1, 1]} : vector<2x128xf32> to vector<2x32xf32>
    %474 = arith.negf %473 : vector<2x32xf32>
    %475 = math.exp %474 : vector<2x32xf32>
    %cst_182 = arith.constant 1.000000e+00 : f32
    %476 = vector.broadcast %cst_182 : f32 to vector<2x32xf32>
    %477 = arith.addf %476, %475 : vector<2x32xf32>
    %478 = arith.divf %476, %477 : vector<2x32xf32>
    %479 = vector.extract_strided_slice %462 {offsets = [0, 64], sizes = [2, 32], strides = [1, 1]} : vector<2x128xf32> to vector<2x32xf32>
    %480 = math.tanh %479 : vector<2x32xf32>
    %481 = vector.extract_strided_slice %462 {offsets = [0, 96], sizes = [2, 32], strides = [1, 1]} : vector<2x128xf32> to vector<2x32xf32>
    %482 = arith.negf %481 : vector<2x32xf32>
    %483 = math.exp %482 : vector<2x32xf32>
    %cst_183 = arith.constant 1.000000e+00 : f32
    %484 = vector.broadcast %cst_183 : f32 to vector<2x32xf32>
    %485 = arith.addf %484, %483 : vector<2x32xf32>
    %486 = arith.divf %484, %485 : vector<2x32xf32>
    %487 = arith.mulf %478, %466 : vector<2x32xf32>
    %488 = arith.mulf %472, %480 : vector<2x32xf32>
    %489 = arith.addf %487, %488 : vector<2x32xf32>
    %490 = math.tanh %489 : vector<2x32xf32>
    %491 = arith.mulf %486, %490 : vector<2x32xf32>
    %c0_184 = arith.constant 0 : index
    %c0_185 = arith.constant 0 : index
    %492 = vector.load %arg9[%c0_184, %c0_185] : memref<2x32xf32, #tpu.memory_space<vmem>>, vector<2x32xf32>
    %493 = vector.extract_strided_slice %465 {offsets = [0, 0], sizes = [2, 32], strides = [1, 1]} : vector<2x128xf32> to vector<2x32xf32>
    %494 = arith.negf %493 : vector<2x32xf32>
    %495 = math.exp %494 : vector<2x32xf32>
    %cst_186 = arith.constant 1.000000e+00 : f32
    %496 = vector.broadcast %cst_186 : f32 to vector<2x32xf32>
    %497 = arith.addf %496, %495 : vector<2x32xf32>
    %498 = arith.divf %496, %497 : vector<2x32xf32>
    %499 = vector.extract_strided_slice %465 {offsets = [0, 32], sizes = [2, 32], strides = [1, 1]} : vector<2x128xf32> to vector<2x32xf32>
    %500 = arith.negf %499 : vector<2x32xf32>
    %501 = math.exp %500 : vector<2x32xf32>
    %cst_187 = arith.constant 1.000000e+00 : f32
    %502 = vector.broadcast %cst_187 : f32 to vector<2x32xf32>
    %503 = arith.addf %502, %501 : vector<2x32xf32>
    %504 = arith.divf %502, %503 : vector<2x32xf32>
    %505 = vector.extract_strided_slice %465 {offsets = [0, 64], sizes = [2, 32], strides = [1, 1]} : vector<2x128xf32> to vector<2x32xf32>
    %506 = math.tanh %505 : vector<2x32xf32>
    %507 = vector.extract_strided_slice %465 {offsets = [0, 96], sizes = [2, 32], strides = [1, 1]} : vector<2x128xf32> to vector<2x32xf32>
    %508 = arith.negf %507 : vector<2x32xf32>
    %509 = math.exp %508 : vector<2x32xf32>
    %cst_188 = arith.constant 1.000000e+00 : f32
    %510 = vector.broadcast %cst_188 : f32 to vector<2x32xf32>
    %511 = arith.addf %510, %509 : vector<2x32xf32>
    %512 = arith.divf %510, %511 : vector<2x32xf32>
    %513 = arith.mulf %504, %492 : vector<2x32xf32>
    %514 = arith.mulf %498, %506 : vector<2x32xf32>
    %515 = arith.addf %513, %514 : vector<2x32xf32>
    %516 = math.tanh %515 : vector<2x32xf32>
    %517 = arith.mulf %512, %516 : vector<2x32xf32>
    %518 = vector.broadcast %c4_i32 : i32 to vector<2x1xi32>
    %519 = arith.cmpi sgt, %13, %518 : vector<2x1xi32>
    %520 = vector.broadcast %450 : i32 to vector<2x1xi32>
    %521 = arith.cmpi sgt, %13, %520 : vector<2x1xi32>
    %c0_189 = arith.constant 0 : index
    %c0_190 = arith.constant 0 : index
    %522 = vector.load %arg8[%c0_189, %c0_190] : memref<2x32xf32, #tpu.memory_space<vmem>>, vector<2x32xf32>
    %523 = vector.shape_cast %519 : vector<2x1xi1> to vector<2x1xi1>
    %524 = vector.broadcast %523 : vector<2x1xi1> to vector<2x32xi1>
    %525 = arith.select %524, %489, %522 : vector<2x32xi1>, vector<2x32xf32>
    %c0_191 = arith.constant 0 : index
    %c0_192 = arith.constant 0 : index
    %526 = vector.load %arg8[%c0_191, %c0_192] : memref<2x32xf32, #tpu.memory_space<vmem>>, vector<2x32xf32>
    tpu.vector_store %arg8[%c0_191, %c0_192], %525 {strides = array<i32>} : memref<2x32xf32, #tpu.memory_space<vmem>>, vector<2x32xf32>,
    %c0_193 = arith.constant 0 : index
    %c0_194 = arith.constant 0 : index
    %527 = vector.load %arg9[%c0_193, %c0_194] : memref<2x32xf32, #tpu.memory_space<vmem>>, vector<2x32xf32>
    %528 = vector.shape_cast %521 : vector<2x1xi1> to vector<2x1xi1>
    %529 = vector.broadcast %528 : vector<2x1xi1> to vector<2x32xi1>
    %530 = arith.select %529, %515, %527 : vector<2x32xi1>, vector<2x32xf32>
    %c0_195 = arith.constant 0 : index
    %c0_196 = arith.constant 0 : index
    %531 = vector.load %arg9[%c0_195, %c0_196] : memref<2x32xf32, #tpu.memory_space<vmem>>, vector<2x32xf32>
    tpu.vector_store %arg9[%c0_195, %c0_196], %530 {strides = array<i32>} : memref<2x32xf32, #tpu.memory_space<vmem>>, vector<2x32xf32>,
    %c0_197 = arith.constant 0 : index
    %c0_198 = arith.constant 0 : index
    %532 = vector.load %arg7[%c0_197, %c0_198] : memref<2x64xf32, #tpu.memory_space<vmem>>, vector<2x64xf32>
    %533 = vector.extract_strided_slice %532 {offsets = [0, 0], sizes = [2, 32], strides = [1, 1]} : vector<2x64xf32> to vector<2x32xf32>
    %534 = vector.shape_cast %519 : vector<2x1xi1> to vector<2x1xi1>
    %535 = vector.broadcast %534 : vector<2x1xi1> to vector<2x32xi1>
    %536 = arith.select %535, %491, %533 : vector<2x32xi1>, vector<2x32xf32>
    %537 = vector.extract_strided_slice %532 {offsets = [0, 32], sizes = [2, 32], strides = [1, 1]} : vector<2x64xf32> to vector<2x32xf32>
    %538 = vector.shape_cast %521 : vector<2x1xi1> to vector<2x1xi1>
    %539 = vector.broadcast %538 : vector<2x1xi1> to vector<2x32xi1>
    %540 = arith.select %539, %517, %537 : vector<2x32xi1>, vector<2x32xf32>
    %541 = tpu.concatenate %536, %540 in 1 : vector<2x32xf32>, vector<2x32xf32> -> vector<2x64xf32>
    %c0_199 = arith.constant 0 : index
    %c0_200 = arith.constant 0 : index
    %542 = vector.load %arg7[%c0_199, %c0_200] : memref<2x64xf32, #tpu.memory_space<vmem>>, vector<2x64xf32>
    tpu.vector_store %arg7[%c0_199, %c0_200], %541 {strides = array<i32>} : memref<2x64xf32, #tpu.memory_space<vmem>>, vector<2x64xf32>,
    %cst_201 = arith.constant 0.000000e+00 : f32
    %543 = vector.shape_cast %519 : vector<2x1xi1> to vector<2x1xi1>
    %544 = vector.broadcast %543 : vector<2x1xi1> to vector<2x32xi1>
    %545 = vector.broadcast %cst_201 : f32 to vector<2x32xf32>
    %546 = arith.select %544, %491, %545 : vector<2x32xi1>, vector<2x32xf32>
    %547 = arith.index_cast %c4_i32 : i32 to index
    %c0_202 = arith.constant 0 : index
    %c0_203 = arith.constant 0 : index
    %548 = vector.load %arg10[%547, %c0_202, %c0_203] : memref<8x2x32xf32, #tpu.memory_space<vmem>>, vector<1x2x32xf32>
    %549 = vector.shape_cast %548 : vector<1x2x32xf32> to vector<2x32xf32>
    %550 = vector.shape_cast %546 : vector<2x32xf32> to vector<1x2x32xf32>
    tpu.vector_store %arg10[%547, %c0_202, %c0_203], %550 {strides = array<i32>} : memref<8x2x32xf32, #tpu.memory_space<vmem>>, vector<1x2x32xf32>,
    %cst_204 = arith.constant 0.000000e+00 : f32
    %551 = vector.shape_cast %521 : vector<2x1xi1> to vector<2x1xi1>
    %552 = vector.broadcast %551 : vector<2x1xi1> to vector<2x32xi1>
    %553 = vector.broadcast %cst_204 : f32 to vector<2x32xf32>
    %554 = arith.select %552, %517, %553 : vector<2x32xi1>, vector<2x32xf32>
    %555 = arith.index_cast %450 : i32 to index
    %c0_205 = arith.constant 0 : index
    %c0_206 = arith.constant 0 : index
    %556 = vector.load %arg11[%555, %c0_205, %c0_206] : memref<8x2x32xf32, #tpu.memory_space<vmem>>, vector<1x2x32xf32>
    %557 = vector.shape_cast %556 : vector<1x2x32xf32> to vector<2x32xf32>
    %558 = vector.shape_cast %554 : vector<2x32xf32> to vector<1x2x32xf32>
    tpu.vector_store %arg11[%555, %c0_205, %c0_206], %558 {strides = array<i32>} : memref<8x2x32xf32, #tpu.memory_space<vmem>>, vector<1x2x32xf32>,
    %c5_i32 = arith.constant 5 : i32
    %c7_i32_207 = arith.constant 7 : i32
    %559 = arith.subi %c7_i32_207, %c5_i32 : i32
    %c0_208 = arith.constant 0 : index
    %c0_209 = arith.constant 0 : index
    %560 = vector.load %arg7[%c0_208, %c0_209] : memref<2x64xf32, #tpu.memory_space<vmem>>, vector<2x64xf32>
    %c0_210 = arith.constant 0 : index
    %c0_211 = arith.constant 0 : index
    %561 = vector.load %arg3[%c0_210, %c0_211] : memref<64x256xf32, #tpu.memory_space<vmem>>, vector<64x256xf32>
    %cst_212 = arith.constant dense<0.000000e+00> : vector<2x256xf32>
    %562 = tpu.matmul %560, %561, %cst_212 {dimension_numbers = #tpu.dot_dimension_numbers<[1], [0], [0], [1], [0, 0, 1, 1], [], []>} : vector<2x64xf32>, vector<64x256xf32>, vector<2x256xf32> -> vector<2x256xf32>
    %c2_i32_213 = arith.constant 2 : i32
    %563 = arith.muli %c5_i32, %c2_i32_213 : i32
    %564 = arith.index_cast %563 : i32 to index
    %c0_214 = arith.constant 0 : index
    %565 = vector.load %arg6[%564, %c0_214] : memref<16x256xf32, #tpu.memory_space<vmem>>, vector<2x256xf32>
    %c2_i32_215 = arith.constant 2 : i32
    %566 = arith.muli %559, %c2_i32_215 : i32
    %567 = arith.index_cast %566 : i32 to index
    %c0_216 = arith.constant 0 : index
    %568 = vector.load %arg6[%567, %c0_216] : memref<16x256xf32, #tpu.memory_space<vmem>>, vector<2x256xf32>
    %569 = vector.extract_strided_slice %565 {offsets = [0, 0], sizes = [2, 128], strides = [1, 1]} : vector<2x256xf32> to vector<2x128xf32>
    %570 = vector.extract_strided_slice %562 {offsets = [0, 0], sizes = [2, 128], strides = [1, 1]} : vector<2x256xf32> to vector<2x128xf32>
    %571 = arith.addf %569, %570 : vector<2x128xf32>
    %572 = vector.extract_strided_slice %568 {offsets = [0, 128], sizes = [2, 128], strides = [1, 1]} : vector<2x256xf32> to vector<2x128xf32>
    %573 = vector.extract_strided_slice %562 {offsets = [0, 128], sizes = [2, 128], strides = [1, 1]} : vector<2x256xf32> to vector<2x128xf32>
    %574 = arith.addf %572, %573 : vector<2x128xf32>
    %c0_217 = arith.constant 0 : index
    %c0_218 = arith.constant 0 : index
    %575 = vector.load %arg8[%c0_217, %c0_218] : memref<2x32xf32, #tpu.memory_space<vmem>>, vector<2x32xf32>
    %576 = vector.extract_strided_slice %571 {offsets = [0, 0], sizes = [2, 32], strides = [1, 1]} : vector<2x128xf32> to vector<2x32xf32>
    %577 = arith.negf %576 : vector<2x32xf32>
    %578 = math.exp %577 : vector<2x32xf32>
    %cst_219 = arith.constant 1.000000e+00 : f32
    %579 = vector.broadcast %cst_219 : f32 to vector<2x32xf32>
    %580 = arith.addf %579, %578 : vector<2x32xf32>
    %581 = arith.divf %579, %580 : vector<2x32xf32>
    %582 = vector.extract_strided_slice %571 {offsets = [0, 32], sizes = [2, 32], strides = [1, 1]} : vector<2x128xf32> to vector<2x32xf32>
    %583 = arith.negf %582 : vector<2x32xf32>
    %584 = math.exp %583 : vector<2x32xf32>
    %cst_220 = arith.constant 1.000000e+00 : f32
    %585 = vector.broadcast %cst_220 : f32 to vector<2x32xf32>
    %586 = arith.addf %585, %584 : vector<2x32xf32>
    %587 = arith.divf %585, %586 : vector<2x32xf32>
    %588 = vector.extract_strided_slice %571 {offsets = [0, 64], sizes = [2, 32], strides = [1, 1]} : vector<2x128xf32> to vector<2x32xf32>
    %589 = math.tanh %588 : vector<2x32xf32>
    %590 = vector.extract_strided_slice %571 {offsets = [0, 96], sizes = [2, 32], strides = [1, 1]} : vector<2x128xf32> to vector<2x32xf32>
    %591 = arith.negf %590 : vector<2x32xf32>
    %592 = math.exp %591 : vector<2x32xf32>
    %cst_221 = arith.constant 1.000000e+00 : f32
    %593 = vector.broadcast %cst_221 : f32 to vector<2x32xf32>
    %594 = arith.addf %593, %592 : vector<2x32xf32>
    %595 = arith.divf %593, %594 : vector<2x32xf32>
    %596 = arith.mulf %587, %575 : vector<2x32xf32>
    %597 = arith.mulf %581, %589 : vector<2x32xf32>
    %598 = arith.addf %596, %597 : vector<2x32xf32>
    %599 = math.tanh %598 : vector<2x32xf32>
    %600 = arith.mulf %595, %599 : vector<2x32xf32>
    %c0_222 = arith.constant 0 : index
    %c0_223 = arith.constant 0 : index
    %601 = vector.load %arg9[%c0_222, %c0_223] : memref<2x32xf32, #tpu.memory_space<vmem>>, vector<2x32xf32>
    %602 = vector.extract_strided_slice %574 {offsets = [0, 0], sizes = [2, 32], strides = [1, 1]} : vector<2x128xf32> to vector<2x32xf32>
    %603 = arith.negf %602 : vector<2x32xf32>
    %604 = math.exp %603 : vector<2x32xf32>
    %cst_224 = arith.constant 1.000000e+00 : f32
    %605 = vector.broadcast %cst_224 : f32 to vector<2x32xf32>
    %606 = arith.addf %605, %604 : vector<2x32xf32>
    %607 = arith.divf %605, %606 : vector<2x32xf32>
    %608 = vector.extract_strided_slice %574 {offsets = [0, 32], sizes = [2, 32], strides = [1, 1]} : vector<2x128xf32> to vector<2x32xf32>
    %609 = arith.negf %608 : vector<2x32xf32>
    %610 = math.exp %609 : vector<2x32xf32>
    %cst_225 = arith.constant 1.000000e+00 : f32
    %611 = vector.broadcast %cst_225 : f32 to vector<2x32xf32>
    %612 = arith.addf %611, %610 : vector<2x32xf32>
    %613 = arith.divf %611, %612 : vector<2x32xf32>
    %614 = vector.extract_strided_slice %574 {offsets = [0, 64], sizes = [2, 32], strides = [1, 1]} : vector<2x128xf32> to vector<2x32xf32>
    %615 = math.tanh %614 : vector<2x32xf32>
    %616 = vector.extract_strided_slice %574 {offsets = [0, 96], sizes = [2, 32], strides = [1, 1]} : vector<2x128xf32> to vector<2x32xf32>
    %617 = arith.negf %616 : vector<2x32xf32>
    %618 = math.exp %617 : vector<2x32xf32>
    %cst_226 = arith.constant 1.000000e+00 : f32
    %619 = vector.broadcast %cst_226 : f32 to vector<2x32xf32>
    %620 = arith.addf %619, %618 : vector<2x32xf32>
    %621 = arith.divf %619, %620 : vector<2x32xf32>
    %622 = arith.mulf %613, %601 : vector<2x32xf32>
    %623 = arith.mulf %607, %615 : vector<2x32xf32>
    %624 = arith.addf %622, %623 : vector<2x32xf32>
    %625 = math.tanh %624 : vector<2x32xf32>
    %626 = arith.mulf %621, %625 : vector<2x32xf32>
    %627 = vector.broadcast %c5_i32 : i32 to vector<2x1xi32>
    %628 = arith.cmpi sgt, %13, %627 : vector<2x1xi32>
    %629 = vector.broadcast %559 : i32 to vector<2x1xi32>
    %630 = arith.cmpi sgt, %13, %629 : vector<2x1xi32>
    %c0_227 = arith.constant 0 : index
    %c0_228 = arith.constant 0 : index
    %631 = vector.load %arg8[%c0_227, %c0_228] : memref<2x32xf32, #tpu.memory_space<vmem>>, vector<2x32xf32>
    %632 = vector.shape_cast %628 : vector<2x1xi1> to vector<2x1xi1>
    %633 = vector.broadcast %632 : vector<2x1xi1> to vector<2x32xi1>
    %634 = arith.select %633, %598, %631 : vector<2x32xi1>, vector<2x32xf32>
    %c0_229 = arith.constant 0 : index
    %c0_230 = arith.constant 0 : index
    %635 = vector.load %arg8[%c0_229, %c0_230] : memref<2x32xf32, #tpu.memory_space<vmem>>, vector<2x32xf32>
    tpu.vector_store %arg8[%c0_229, %c0_230], %634 {strides = array<i32>} : memref<2x32xf32, #tpu.memory_space<vmem>>, vector<2x32xf32>,
    %c0_231 = arith.constant 0 : index
    %c0_232 = arith.constant 0 : index
    %636 = vector.load %arg9[%c0_231, %c0_232] : memref<2x32xf32, #tpu.memory_space<vmem>>, vector<2x32xf32>
    %637 = vector.shape_cast %630 : vector<2x1xi1> to vector<2x1xi1>
    %638 = vector.broadcast %637 : vector<2x1xi1> to vector<2x32xi1>
    %639 = arith.select %638, %624, %636 : vector<2x32xi1>, vector<2x32xf32>
    %c0_233 = arith.constant 0 : index
    %c0_234 = arith.constant 0 : index
    %640 = vector.load %arg9[%c0_233, %c0_234] : memref<2x32xf32, #tpu.memory_space<vmem>>, vector<2x32xf32>
    tpu.vector_store %arg9[%c0_233, %c0_234], %639 {strides = array<i32>} : memref<2x32xf32, #tpu.memory_space<vmem>>, vector<2x32xf32>,
    %c0_235 = arith.constant 0 : index
    %c0_236 = arith.constant 0 : index
    %641 = vector.load %arg7[%c0_235, %c0_236] : memref<2x64xf32, #tpu.memory_space<vmem>>, vector<2x64xf32>
    %642 = vector.extract_strided_slice %641 {offsets = [0, 0], sizes = [2, 32], strides = [1, 1]} : vector<2x64xf32> to vector<2x32xf32>
    %643 = vector.shape_cast %628 : vector<2x1xi1> to vector<2x1xi1>
    %644 = vector.broadcast %643 : vector<2x1xi1> to vector<2x32xi1>
    %645 = arith.select %644, %600, %642 : vector<2x32xi1>, vector<2x32xf32>
    %646 = vector.extract_strided_slice %641 {offsets = [0, 32], sizes = [2, 32], strides = [1, 1]} : vector<2x64xf32> to vector<2x32xf32>
    %647 = vector.shape_cast %630 : vector<2x1xi1> to vector<2x1xi1>
    %648 = vector.broadcast %647 : vector<2x1xi1> to vector<2x32xi1>
    %649 = arith.select %648, %626, %646 : vector<2x32xi1>, vector<2x32xf32>
    %650 = tpu.concatenate %645, %649 in 1 : vector<2x32xf32>, vector<2x32xf32> -> vector<2x64xf32>
    %c0_237 = arith.constant 0 : index
    %c0_238 = arith.constant 0 : index
    %651 = vector.load %arg7[%c0_237, %c0_238] : memref<2x64xf32, #tpu.memory_space<vmem>>, vector<2x64xf32>
    tpu.vector_store %arg7[%c0_237, %c0_238], %650 {strides = array<i32>} : memref<2x64xf32, #tpu.memory_space<vmem>>, vector<2x64xf32>,
    %cst_239 = arith.constant 0.000000e+00 : f32
    %652 = vector.shape_cast %628 : vector<2x1xi1> to vector<2x1xi1>
    %653 = vector.broadcast %652 : vector<2x1xi1> to vector<2x32xi1>
    %654 = vector.broadcast %cst_239 : f32 to vector<2x32xf32>
    %655 = arith.select %653, %600, %654 : vector<2x32xi1>, vector<2x32xf32>
    %656 = arith.index_cast %c5_i32 : i32 to index
    %c0_240 = arith.constant 0 : index
    %c0_241 = arith.constant 0 : index
    %657 = vector.load %arg10[%656, %c0_240, %c0_241] : memref<8x2x32xf32, #tpu.memory_space<vmem>>, vector<1x2x32xf32>
    %658 = vector.shape_cast %657 : vector<1x2x32xf32> to vector<2x32xf32>
    %659 = vector.shape_cast %655 : vector<2x32xf32> to vector<1x2x32xf32>
    tpu.vector_store %arg10[%656, %c0_240, %c0_241], %659 {strides = array<i32>} : memref<8x2x32xf32, #tpu.memory_space<vmem>>, vector<1x2x32xf32>,
    %cst_242 = arith.constant 0.000000e+00 : f32
    %660 = vector.shape_cast %630 : vector<2x1xi1> to vector<2x1xi1>
    %661 = vector.broadcast %660 : vector<2x1xi1> to vector<2x32xi1>
    %662 = vector.broadcast %cst_242 : f32 to vector<2x32xf32>
    %663 = arith.select %661, %626, %662 : vector<2x32xi1>, vector<2x32xf32>
    %664 = arith.index_cast %559 : i32 to index
    %c0_243 = arith.constant 0 : index
    %c0_244 = arith.constant 0 : index
    %665 = vector.load %arg11[%664, %c0_243, %c0_244] : memref<8x2x32xf32, #tpu.memory_space<vmem>>, vector<1x2x32xf32>
    %666 = vector.shape_cast %665 : vector<1x2x32xf32> to vector<2x32xf32>
    %667 = vector.shape_cast %663 : vector<2x32xf32> to vector<1x2x32xf32>
    tpu.vector_store %arg11[%664, %c0_243, %c0_244], %667 {strides = array<i32>} : memref<8x2x32xf32, #tpu.memory_space<vmem>>, vector<1x2x32xf32>,
    %c6_i32 = arith.constant 6 : i32
    %c7_i32_245 = arith.constant 7 : i32
    %668 = arith.subi %c7_i32_245, %c6_i32 : i32
    %c0_246 = arith.constant 0 : index
    %c0_247 = arith.constant 0 : index
    %669 = vector.load %arg7[%c0_246, %c0_247] : memref<2x64xf32, #tpu.memory_space<vmem>>, vector<2x64xf32>
    %c0_248 = arith.constant 0 : index
    %c0_249 = arith.constant 0 : index
    %670 = vector.load %arg3[%c0_248, %c0_249] : memref<64x256xf32, #tpu.memory_space<vmem>>, vector<64x256xf32>
    %cst_250 = arith.constant dense<0.000000e+00> : vector<2x256xf32>
    %671 = tpu.matmul %669, %670, %cst_250 {dimension_numbers = #tpu.dot_dimension_numbers<[1], [0], [0], [1], [0, 0, 1, 1], [], []>} : vector<2x64xf32>, vector<64x256xf32>, vector<2x256xf32> -> vector<2x256xf32>
    %c2_i32_251 = arith.constant 2 : i32
    %672 = arith.muli %c6_i32, %c2_i32_251 : i32
    %673 = arith.index_cast %672 : i32 to index
    %c0_252 = arith.constant 0 : index
    %674 = vector.load %arg6[%673, %c0_252] : memref<16x256xf32, #tpu.memory_space<vmem>>, vector<2x256xf32>
    %c2_i32_253 = arith.constant 2 : i32
    %675 = arith.muli %668, %c2_i32_253 : i32
    %676 = arith.index_cast %675 : i32 to index
    %c0_254 = arith.constant 0 : index
    %677 = vector.load %arg6[%676, %c0_254] : memref<16x256xf32, #tpu.memory_space<vmem>>, vector<2x256xf32>
    %678 = vector.extract_strided_slice %674 {offsets = [0, 0], sizes = [2, 128], strides = [1, 1]} : vector<2x256xf32> to vector<2x128xf32>
    %679 = vector.extract_strided_slice %671 {offsets = [0, 0], sizes = [2, 128], strides = [1, 1]} : vector<2x256xf32> to vector<2x128xf32>
    %680 = arith.addf %678, %679 : vector<2x128xf32>
    %681 = vector.extract_strided_slice %677 {offsets = [0, 128], sizes = [2, 128], strides = [1, 1]} : vector<2x256xf32> to vector<2x128xf32>
    %682 = vector.extract_strided_slice %671 {offsets = [0, 128], sizes = [2, 128], strides = [1, 1]} : vector<2x256xf32> to vector<2x128xf32>
    %683 = arith.addf %681, %682 : vector<2x128xf32>
    %c0_255 = arith.constant 0 : index
    %c0_256 = arith.constant 0 : index
    %684 = vector.load %arg8[%c0_255, %c0_256] : memref<2x32xf32, #tpu.memory_space<vmem>>, vector<2x32xf32>
    %685 = vector.extract_strided_slice %680 {offsets = [0, 0], sizes = [2, 32], strides = [1, 1]} : vector<2x128xf32> to vector<2x32xf32>
    %686 = arith.negf %685 : vector<2x32xf32>
    %687 = math.exp %686 : vector<2x32xf32>
    %cst_257 = arith.constant 1.000000e+00 : f32
    %688 = vector.broadcast %cst_257 : f32 to vector<2x32xf32>
    %689 = arith.addf %688, %687 : vector<2x32xf32>
    %690 = arith.divf %688, %689 : vector<2x32xf32>
    %691 = vector.extract_strided_slice %680 {offsets = [0, 32], sizes = [2, 32], strides = [1, 1]} : vector<2x128xf32> to vector<2x32xf32>
    %692 = arith.negf %691 : vector<2x32xf32>
    %693 = math.exp %692 : vector<2x32xf32>
    %cst_258 = arith.constant 1.000000e+00 : f32
    %694 = vector.broadcast %cst_258 : f32 to vector<2x32xf32>
    %695 = arith.addf %694, %693 : vector<2x32xf32>
    %696 = arith.divf %694, %695 : vector<2x32xf32>
    %697 = vector.extract_strided_slice %680 {offsets = [0, 64], sizes = [2, 32], strides = [1, 1]} : vector<2x128xf32> to vector<2x32xf32>
    %698 = math.tanh %697 : vector<2x32xf32>
    %699 = vector.extract_strided_slice %680 {offsets = [0, 96], sizes = [2, 32], strides = [1, 1]} : vector<2x128xf32> to vector<2x32xf32>
    %700 = arith.negf %699 : vector<2x32xf32>
    %701 = math.exp %700 : vector<2x32xf32>
    %cst_259 = arith.constant 1.000000e+00 : f32
    %702 = vector.broadcast %cst_259 : f32 to vector<2x32xf32>
    %703 = arith.addf %702, %701 : vector<2x32xf32>
    %704 = arith.divf %702, %703 : vector<2x32xf32>
    %705 = arith.mulf %696, %684 : vector<2x32xf32>
    %706 = arith.mulf %690, %698 : vector<2x32xf32>
    %707 = arith.addf %705, %706 : vector<2x32xf32>
    %708 = math.tanh %707 : vector<2x32xf32>
    %709 = arith.mulf %704, %708 : vector<2x32xf32>
    %c0_260 = arith.constant 0 : index
    %c0_261 = arith.constant 0 : index
    %710 = vector.load %arg9[%c0_260, %c0_261] : memref<2x32xf32, #tpu.memory_space<vmem>>, vector<2x32xf32>
    %711 = vector.extract_strided_slice %683 {offsets = [0, 0], sizes = [2, 32], strides = [1, 1]} : vector<2x128xf32> to vector<2x32xf32>
    %712 = arith.negf %711 : vector<2x32xf32>
    %713 = math.exp %712 : vector<2x32xf32>
    %cst_262 = arith.constant 1.000000e+00 : f32
    %714 = vector.broadcast %cst_262 : f32 to vector<2x32xf32>
    %715 = arith.addf %714, %713 : vector<2x32xf32>
    %716 = arith.divf %714, %715 : vector<2x32xf32>
    %717 = vector.extract_strided_slice %683 {offsets = [0, 32], sizes = [2, 32], strides = [1, 1]} : vector<2x128xf32> to vector<2x32xf32>
    %718 = arith.negf %717 : vector<2x32xf32>
    %719 = math.exp %718 : vector<2x32xf32>
    %cst_263 = arith.constant 1.000000e+00 : f32
    %720 = vector.broadcast %cst_263 : f32 to vector<2x32xf32>
    %721 = arith.addf %720, %719 : vector<2x32xf32>
    %722 = arith.divf %720, %721 : vector<2x32xf32>
    %723 = vector.extract_strided_slice %683 {offsets = [0, 64], sizes = [2, 32], strides = [1, 1]} : vector<2x128xf32> to vector<2x32xf32>
    %724 = math.tanh %723 : vector<2x32xf32>
    %725 = vector.extract_strided_slice %683 {offsets = [0, 96], sizes = [2, 32], strides = [1, 1]} : vector<2x128xf32> to vector<2x32xf32>
    %726 = arith.negf %725 : vector<2x32xf32>
    %727 = math.exp %726 : vector<2x32xf32>
    %cst_264 = arith.constant 1.000000e+00 : f32
    %728 = vector.broadcast %cst_264 : f32 to vector<2x32xf32>
    %729 = arith.addf %728, %727 : vector<2x32xf32>
    %730 = arith.divf %728, %729 : vector<2x32xf32>
    %731 = arith.mulf %722, %710 : vector<2x32xf32>
    %732 = arith.mulf %716, %724 : vector<2x32xf32>
    %733 = arith.addf %731, %732 : vector<2x32xf32>
    %734 = math.tanh %733 : vector<2x32xf32>
    %735 = arith.mulf %730, %734 : vector<2x32xf32>
    %736 = vector.broadcast %c6_i32 : i32 to vector<2x1xi32>
    %737 = arith.cmpi sgt, %13, %736 : vector<2x1xi32>
    %738 = vector.broadcast %668 : i32 to vector<2x1xi32>
    %739 = arith.cmpi sgt, %13, %738 : vector<2x1xi32>
    %c0_265 = arith.constant 0 : index
    %c0_266 = arith.constant 0 : index
    %740 = vector.load %arg8[%c0_265, %c0_266] : memref<2x32xf32, #tpu.memory_space<vmem>>, vector<2x32xf32>
    %741 = vector.shape_cast %737 : vector<2x1xi1> to vector<2x1xi1>
    %742 = vector.broadcast %741 : vector<2x1xi1> to vector<2x32xi1>
    %743 = arith.select %742, %707, %740 : vector<2x32xi1>, vector<2x32xf32>
    %c0_267 = arith.constant 0 : index
    %c0_268 = arith.constant 0 : index
    %744 = vector.load %arg8[%c0_267, %c0_268] : memref<2x32xf32, #tpu.memory_space<vmem>>, vector<2x32xf32>
    tpu.vector_store %arg8[%c0_267, %c0_268], %743 {strides = array<i32>} : memref<2x32xf32, #tpu.memory_space<vmem>>, vector<2x32xf32>,
    %c0_269 = arith.constant 0 : index
    %c0_270 = arith.constant 0 : index
    %745 = vector.load %arg9[%c0_269, %c0_270] : memref<2x32xf32, #tpu.memory_space<vmem>>, vector<2x32xf32>
    %746 = vector.shape_cast %739 : vector<2x1xi1> to vector<2x1xi1>
    %747 = vector.broadcast %746 : vector<2x1xi1> to vector<2x32xi1>
    %748 = arith.select %747, %733, %745 : vector<2x32xi1>, vector<2x32xf32>
    %c0_271 = arith.constant 0 : index
    %c0_272 = arith.constant 0 : index
    %749 = vector.load %arg9[%c0_271, %c0_272] : memref<2x32xf32, #tpu.memory_space<vmem>>, vector<2x32xf32>
    tpu.vector_store %arg9[%c0_271, %c0_272], %748 {strides = array<i32>} : memref<2x32xf32, #tpu.memory_space<vmem>>, vector<2x32xf32>,
    %c0_273 = arith.constant 0 : index
    %c0_274 = arith.constant 0 : index
    %750 = vector.load %arg7[%c0_273, %c0_274] : memref<2x64xf32, #tpu.memory_space<vmem>>, vector<2x64xf32>
    %751 = vector.extract_strided_slice %750 {offsets = [0, 0], sizes = [2, 32], strides = [1, 1]} : vector<2x64xf32> to vector<2x32xf32>
    %752 = vector.shape_cast %737 : vector<2x1xi1> to vector<2x1xi1>
    %753 = vector.broadcast %752 : vector<2x1xi1> to vector<2x32xi1>
    %754 = arith.select %753, %709, %751 : vector<2x32xi1>, vector<2x32xf32>
    %755 = vector.extract_strided_slice %750 {offsets = [0, 32], sizes = [2, 32], strides = [1, 1]} : vector<2x64xf32> to vector<2x32xf32>
    %756 = vector.shape_cast %739 : vector<2x1xi1> to vector<2x1xi1>
    %757 = vector.broadcast %756 : vector<2x1xi1> to vector<2x32xi1>
    %758 = arith.select %757, %735, %755 : vector<2x32xi1>, vector<2x32xf32>
    %759 = tpu.concatenate %754, %758 in 1 : vector<2x32xf32>, vector<2x32xf32> -> vector<2x64xf32>
    %c0_275 = arith.constant 0 : index
    %c0_276 = arith.constant 0 : index
    %760 = vector.load %arg7[%c0_275, %c0_276] : memref<2x64xf32, #tpu.memory_space<vmem>>, vector<2x64xf32>
    tpu.vector_store %arg7[%c0_275, %c0_276], %759 {strides = array<i32>} : memref<2x64xf32, #tpu.memory_space<vmem>>, vector<2x64xf32>,
    %cst_277 = arith.constant 0.000000e+00 : f32
    %761 = vector.shape_cast %737 : vector<2x1xi1> to vector<2x1xi1>
    %762 = vector.broadcast %761 : vector<2x1xi1> to vector<2x32xi1>
    %763 = vector.broadcast %cst_277 : f32 to vector<2x32xf32>
    %764 = arith.select %762, %709, %763 : vector<2x32xi1>, vector<2x32xf32>
    %765 = arith.index_cast %c6_i32 : i32 to index
    %c0_278 = arith.constant 0 : index
    %c0_279 = arith.constant 0 : index
    %766 = vector.load %arg10[%765, %c0_278, %c0_279] : memref<8x2x32xf32, #tpu.memory_space<vmem>>, vector<1x2x32xf32>
    %767 = vector.shape_cast %766 : vector<1x2x32xf32> to vector<2x32xf32>
    %768 = vector.shape_cast %764 : vector<2x32xf32> to vector<1x2x32xf32>
    tpu.vector_store %arg10[%765, %c0_278, %c0_279], %768 {strides = array<i32>} : memref<8x2x32xf32, #tpu.memory_space<vmem>>, vector<1x2x32xf32>,
    %cst_280 = arith.constant 0.000000e+00 : f32
    %769 = vector.shape_cast %739 : vector<2x1xi1> to vector<2x1xi1>
    %770 = vector.broadcast %769 : vector<2x1xi1> to vector<2x32xi1>
    %771 = vector.broadcast %cst_280 : f32 to vector<2x32xf32>
    %772 = arith.select %770, %735, %771 : vector<2x32xi1>, vector<2x32xf32>
    %773 = arith.index_cast %668 : i32 to index
    %c0_281 = arith.constant 0 : index
    %c0_282 = arith.constant 0 : index
    %774 = vector.load %arg11[%773, %c0_281, %c0_282] : memref<8x2x32xf32, #tpu.memory_space<vmem>>, vector<1x2x32xf32>
    %775 = vector.shape_cast %774 : vector<1x2x32xf32> to vector<2x32xf32>
    %776 = vector.shape_cast %772 : vector<2x32xf32> to vector<1x2x32xf32>
    tpu.vector_store %arg11[%773, %c0_281, %c0_282], %776 {strides = array<i32>} : memref<8x2x32xf32, #tpu.memory_space<vmem>>, vector<1x2x32xf32>,
    %c7_i32_283 = arith.constant 7 : i32
    %c7_i32_284 = arith.constant 7 : i32
    %777 = arith.subi %c7_i32_284, %c7_i32_283 : i32
    %c0_285 = arith.constant 0 : index
    %c0_286 = arith.constant 0 : index
    %778 = vector.load %arg7[%c0_285, %c0_286] : memref<2x64xf32, #tpu.memory_space<vmem>>, vector<2x64xf32>
    %c0_287 = arith.constant 0 : index
    %c0_288 = arith.constant 0 : index
    %779 = vector.load %arg3[%c0_287, %c0_288] : memref<64x256xf32, #tpu.memory_space<vmem>>, vector<64x256xf32>
    %cst_289 = arith.constant dense<0.000000e+00> : vector<2x256xf32>
    %780 = tpu.matmul %778, %779, %cst_289 {dimension_numbers = #tpu.dot_dimension_numbers<[1], [0], [0], [1], [0, 0, 1, 1], [], []>} : vector<2x64xf32>, vector<64x256xf32>, vector<2x256xf32> -> vector<2x256xf32>
    %c2_i32_290 = arith.constant 2 : i32
    %781 = arith.muli %c7_i32_283, %c2_i32_290 : i32
    %782 = arith.index_cast %781 : i32 to index
    %c0_291 = arith.constant 0 : index
    %783 = vector.load %arg6[%782, %c0_291] : memref<16x256xf32, #tpu.memory_space<vmem>>, vector<2x256xf32>
    %c2_i32_292 = arith.constant 2 : i32
    %784 = arith.muli %777, %c2_i32_292 : i32
    %785 = arith.index_cast %784 : i32 to index
    %c0_293 = arith.constant 0 : index
    %786 = vector.load %arg6[%785, %c0_293] : memref<16x256xf32, #tpu.memory_space<vmem>>, vector<2x256xf32>
    %787 = vector.extract_strided_slice %783 {offsets = [0, 0], sizes = [2, 128], strides = [1, 1]} : vector<2x256xf32> to vector<2x128xf32>
    %788 = vector.extract_strided_slice %780 {offsets = [0, 0], sizes = [2, 128], strides = [1, 1]} : vector<2x256xf32> to vector<2x128xf32>
    %789 = arith.addf %787, %788 : vector<2x128xf32>
    %790 = vector.extract_strided_slice %786 {offsets = [0, 128], sizes = [2, 128], strides = [1, 1]} : vector<2x256xf32> to vector<2x128xf32>
    %791 = vector.extract_strided_slice %780 {offsets = [0, 128], sizes = [2, 128], strides = [1, 1]} : vector<2x256xf32> to vector<2x128xf32>
    %792 = arith.addf %790, %791 : vector<2x128xf32>
    %c0_294 = arith.constant 0 : index
    %c0_295 = arith.constant 0 : index
    %793 = vector.load %arg8[%c0_294, %c0_295] : memref<2x32xf32, #tpu.memory_space<vmem>>, vector<2x32xf32>
    %794 = vector.extract_strided_slice %789 {offsets = [0, 0], sizes = [2, 32], strides = [1, 1]} : vector<2x128xf32> to vector<2x32xf32>
    %795 = arith.negf %794 : vector<2x32xf32>
    %796 = math.exp %795 : vector<2x32xf32>
    %cst_296 = arith.constant 1.000000e+00 : f32
    %797 = vector.broadcast %cst_296 : f32 to vector<2x32xf32>
    %798 = arith.addf %797, %796 : vector<2x32xf32>
    %799 = arith.divf %797, %798 : vector<2x32xf32>
    %800 = vector.extract_strided_slice %789 {offsets = [0, 32], sizes = [2, 32], strides = [1, 1]} : vector<2x128xf32> to vector<2x32xf32>
    %801 = arith.negf %800 : vector<2x32xf32>
    %802 = math.exp %801 : vector<2x32xf32>
    %cst_297 = arith.constant 1.000000e+00 : f32
    %803 = vector.broadcast %cst_297 : f32 to vector<2x32xf32>
    %804 = arith.addf %803, %802 : vector<2x32xf32>
    %805 = arith.divf %803, %804 : vector<2x32xf32>
    %806 = vector.extract_strided_slice %789 {offsets = [0, 64], sizes = [2, 32], strides = [1, 1]} : vector<2x128xf32> to vector<2x32xf32>
    %807 = math.tanh %806 : vector<2x32xf32>
    %808 = vector.extract_strided_slice %789 {offsets = [0, 96], sizes = [2, 32], strides = [1, 1]} : vector<2x128xf32> to vector<2x32xf32>
    %809 = arith.negf %808 : vector<2x32xf32>
    %810 = math.exp %809 : vector<2x32xf32>
    %cst_298 = arith.constant 1.000000e+00 : f32
    %811 = vector.broadcast %cst_298 : f32 to vector<2x32xf32>
    %812 = arith.addf %811, %810 : vector<2x32xf32>
    %813 = arith.divf %811, %812 : vector<2x32xf32>
    %814 = arith.mulf %805, %793 : vector<2x32xf32>
    %815 = arith.mulf %799, %807 : vector<2x32xf32>
    %816 = arith.addf %814, %815 : vector<2x32xf32>
    %817 = math.tanh %816 : vector<2x32xf32>
    %818 = arith.mulf %813, %817 : vector<2x32xf32>
    %c0_299 = arith.constant 0 : index
    %c0_300 = arith.constant 0 : index
    %819 = vector.load %arg9[%c0_299, %c0_300] : memref<2x32xf32, #tpu.memory_space<vmem>>, vector<2x32xf32>
    %820 = vector.extract_strided_slice %792 {offsets = [0, 0], sizes = [2, 32], strides = [1, 1]} : vector<2x128xf32> to vector<2x32xf32>
    %821 = arith.negf %820 : vector<2x32xf32>
    %822 = math.exp %821 : vector<2x32xf32>
    %cst_301 = arith.constant 1.000000e+00 : f32
    %823 = vector.broadcast %cst_301 : f32 to vector<2x32xf32>
    %824 = arith.addf %823, %822 : vector<2x32xf32>
    %825 = arith.divf %823, %824 : vector<2x32xf32>
    %826 = vector.extract_strided_slice %792 {offsets = [0, 32], sizes = [2, 32], strides = [1, 1]} : vector<2x128xf32> to vector<2x32xf32>
    %827 = arith.negf %826 : vector<2x32xf32>
    %828 = math.exp %827 : vector<2x32xf32>
    %cst_302 = arith.constant 1.000000e+00 : f32
    %829 = vector.broadcast %cst_302 : f32 to vector<2x32xf32>
    %830 = arith.addf %829, %828 : vector<2x32xf32>
    %831 = arith.divf %829, %830 : vector<2x32xf32>
    %832 = vector.extract_strided_slice %792 {offsets = [0, 64], sizes = [2, 32], strides = [1, 1]} : vector<2x128xf32> to vector<2x32xf32>
    %833 = math.tanh %832 : vector<2x32xf32>
    %834 = vector.extract_strided_slice %792 {offsets = [0, 96], sizes = [2, 32], strides = [1, 1]} : vector<2x128xf32> to vector<2x32xf32>
    %835 = arith.negf %834 : vector<2x32xf32>
    %836 = math.exp %835 : vector<2x32xf32>
    %cst_303 = arith.constant 1.000000e+00 : f32
    %837 = vector.broadcast %cst_303 : f32 to vector<2x32xf32>
    %838 = arith.addf %837, %836 : vector<2x32xf32>
    %839 = arith.divf %837, %838 : vector<2x32xf32>
    %840 = arith.mulf %831, %819 : vector<2x32xf32>
    %841 = arith.mulf %825, %833 : vector<2x32xf32>
    %842 = arith.addf %840, %841 : vector<2x32xf32>
    %843 = math.tanh %842 : vector<2x32xf32>
    %844 = arith.mulf %839, %843 : vector<2x32xf32>
    %845 = vector.broadcast %c7_i32_283 : i32 to vector<2x1xi32>
    %846 = arith.cmpi sgt, %13, %845 : vector<2x1xi32>
    %847 = vector.broadcast %777 : i32 to vector<2x1xi32>
    %848 = arith.cmpi sgt, %13, %847 : vector<2x1xi32>
    %c0_304 = arith.constant 0 : index
    %c0_305 = arith.constant 0 : index
    %849 = vector.load %arg8[%c0_304, %c0_305] : memref<2x32xf32, #tpu.memory_space<vmem>>, vector<2x32xf32>
    %850 = vector.shape_cast %846 : vector<2x1xi1> to vector<2x1xi1>
    %851 = vector.broadcast %850 : vector<2x1xi1> to vector<2x32xi1>
    %852 = arith.select %851, %816, %849 : vector<2x32xi1>, vector<2x32xf32>
    %c0_306 = arith.constant 0 : index
    %c0_307 = arith.constant 0 : index
    %853 = vector.load %arg8[%c0_306, %c0_307] : memref<2x32xf32, #tpu.memory_space<vmem>>, vector<2x32xf32>
    tpu.vector_store %arg8[%c0_306, %c0_307], %852 {strides = array<i32>} : memref<2x32xf32, #tpu.memory_space<vmem>>, vector<2x32xf32>,
    %c0_308 = arith.constant 0 : index
    %c0_309 = arith.constant 0 : index
    %854 = vector.load %arg9[%c0_308, %c0_309] : memref<2x32xf32, #tpu.memory_space<vmem>>, vector<2x32xf32>
    %855 = vector.shape_cast %848 : vector<2x1xi1> to vector<2x1xi1>
    %856 = vector.broadcast %855 : vector<2x1xi1> to vector<2x32xi1>
    %857 = arith.select %856, %842, %854 : vector<2x32xi1>, vector<2x32xf32>
    %c0_310 = arith.constant 0 : index
    %c0_311 = arith.constant 0 : index
    %858 = vector.load %arg9[%c0_310, %c0_311] : memref<2x32xf32, #tpu.memory_space<vmem>>, vector<2x32xf32>
    tpu.vector_store %arg9[%c0_310, %c0_311], %857 {strides = array<i32>} : memref<2x32xf32, #tpu.memory_space<vmem>>, vector<2x32xf32>,
    %c0_312 = arith.constant 0 : index
    %c0_313 = arith.constant 0 : index
    %859 = vector.load %arg7[%c0_312, %c0_313] : memref<2x64xf32, #tpu.memory_space<vmem>>, vector<2x64xf32>
    %860 = vector.extract_strided_slice %859 {offsets = [0, 0], sizes = [2, 32], strides = [1, 1]} : vector<2x64xf32> to vector<2x32xf32>
    %861 = vector.shape_cast %846 : vector<2x1xi1> to vector<2x1xi1>
    %862 = vector.broadcast %861 : vector<2x1xi1> to vector<2x32xi1>
    %863 = arith.select %862, %818, %860 : vector<2x32xi1>, vector<2x32xf32>
    %864 = vector.extract_strided_slice %859 {offsets = [0, 32], sizes = [2, 32], strides = [1, 1]} : vector<2x64xf32> to vector<2x32xf32>
    %865 = vector.shape_cast %848 : vector<2x1xi1> to vector<2x1xi1>
    %866 = vector.broadcast %865 : vector<2x1xi1> to vector<2x32xi1>
    %867 = arith.select %866, %844, %864 : vector<2x32xi1>, vector<2x32xf32>
    %868 = tpu.concatenate %863, %867 in 1 : vector<2x32xf32>, vector<2x32xf32> -> vector<2x64xf32>
    %c0_314 = arith.constant 0 : index
    %c0_315 = arith.constant 0 : index
    %869 = vector.load %arg7[%c0_314, %c0_315] : memref<2x64xf32, #tpu.memory_space<vmem>>, vector<2x64xf32>
    tpu.vector_store %arg7[%c0_314, %c0_315], %868 {strides = array<i32>} : memref<2x64xf32, #tpu.memory_space<vmem>>, vector<2x64xf32>,
    %cst_316 = arith.constant 0.000000e+00 : f32
    %870 = vector.shape_cast %846 : vector<2x1xi1> to vector<2x1xi1>
    %871 = vector.broadcast %870 : vector<2x1xi1> to vector<2x32xi1>
    %872 = vector.broadcast %cst_316 : f32 to vector<2x32xf32>
    %873 = arith.select %871, %818, %872 : vector<2x32xi1>, vector<2x32xf32>
    %874 = arith.index_cast %c7_i32_283 : i32 to index
    %c0_317 = arith.constant 0 : index
    %c0_318 = arith.constant 0 : index
    %875 = vector.load %arg10[%874, %c0_317, %c0_318] : memref<8x2x32xf32, #tpu.memory_space<vmem>>, vector<1x2x32xf32>
    %876 = vector.shape_cast %875 : vector<1x2x32xf32> to vector<2x32xf32>
    %877 = vector.shape_cast %873 : vector<2x32xf32> to vector<1x2x32xf32>
    tpu.vector_store %arg10[%874, %c0_317, %c0_318], %877 {strides = array<i32>} : memref<8x2x32xf32, #tpu.memory_space<vmem>>, vector<1x2x32xf32>,
    %cst_319 = arith.constant 0.000000e+00 : f32
    %878 = vector.shape_cast %848 : vector<2x1xi1> to vector<2x1xi1>
    %879 = vector.broadcast %878 : vector<2x1xi1> to vector<2x32xi1>
    %880 = vector.broadcast %cst_319 : f32 to vector<2x32xf32>
    %881 = arith.select %879, %844, %880 : vector<2x32xi1>, vector<2x32xf32>
    %882 = arith.index_cast %777 : i32 to index
    %c0_320 = arith.constant 0 : index
    %c0_321 = arith.constant 0 : index
    %883 = vector.load %arg11[%882, %c0_320, %c0_321] : memref<8x2x32xf32, #tpu.memory_space<vmem>>, vector<1x2x32xf32>
    %884 = vector.shape_cast %883 : vector<1x2x32xf32> to vector<2x32xf32>
    %885 = vector.shape_cast %881 : vector<2x32xf32> to vector<1x2x32xf32>
    tpu.vector_store %arg11[%882, %c0_320, %c0_321], %885 {strides = array<i32>} : memref<8x2x32xf32, #tpu.memory_space<vmem>>, vector<1x2x32xf32>,
    %c8_i32 = arith.constant 8 : i32
    %c0_322 = arith.constant 0 : index
    %c0_323 = arith.constant 0 : index
    %c0_324 = arith.constant 0 : index
    %886 = vector.load %arg10[%c0_322, %c0_323, %c0_324] : memref<8x2x32xf32, #tpu.memory_space<vmem>>, vector<8x2x32xf32>
    %c0_325 = arith.constant 0 : index
    %c0_326 = arith.constant 0 : index
    %c0_327 = arith.constant 0 : index
    %887 = vector.load %arg11[%c0_325, %c0_326, %c0_327] : memref<8x2x32xf32, #tpu.memory_space<vmem>>, vector<8x2x32xf32>
    %888 = tpu.concatenate %886, %887 in 2 : vector<8x2x32xf32>, vector<8x2x32xf32> -> vector<8x2x64xf32>
    %c0_328 = arith.constant 0 : index
    %c0_329 = arith.constant 0 : index
    %c0_330 = arith.constant 0 : index
    %889 = vector.load %arg5[%c0_328, %c0_329, %c0_330] : memref<8x2x64xf32, #tpu.memory_space<vmem>>, vector<8x2x64xf32>
    tpu.vector_store %arg5[%c0_328, %c0_329, %c0_330], %888 {strides = array<i32>} : memref<8x2x64xf32, #tpu.memory_space<vmem>>, vector<8x2x64xf32>,
    return
  }
}

module attributes {stable_mosaic.version = 11 : i64} {
  func.func @_bilstm_kernel(%arg0: memref<16x32xf32, #tpu.memory_space<vmem>>, %arg1: memref<2x1xi32, #tpu.memory_space<vmem>>, %arg2: memref<32x256xf32, #tpu.memory_space<vmem>>, %arg3: memref<64x256xf32, #tpu.memory_space<vmem>>, %arg4: memref<1x256xf32, #tpu.memory_space<vmem>>, %arg5: memref<8x2x64xf32, #tpu.memory_space<vmem>>, %arg6: memref<16x256xf32, #tpu.memory_space<vmem>>, %arg7: memref<2x64xf32, #tpu.memory_space<vmem>>, %arg8: memref<2x32xf32, #tpu.memory_space<vmem>>, %arg9: memref<2x32xf32, #tpu.memory_space<vmem>>, %arg10: memref<8x2x32xf32, #tpu.memory_space<vmem>>, %arg11: memref<8x2x32xf32, #tpu.memory_space<vmem>>) attributes {dimension_semantics = [], scalar_prefetch = 0 : i64, scratch_operands = 6 : i64, tpu.core_type = #tpu.core_type<tc>} {
    %c0 = arith.constant 0 : index
    %c0_0 = arith.constant 0 : index
    %0 = vector.load %arg0[%c0, %c0_0] : memref<16x32xf32, #tpu.memory_space<vmem>>, vector<16x32xf32>
    %c0_1 = arith.constant 0 : index
    %c0_2 = arith.constant 0 : index
    %1 = vector.load %arg2[%c0_1, %c0_2] : memref<32x256xf32, #tpu.memory_space<vmem>>, vector<32x256xf32>
    %cst = arith.constant dense<0.000000e+00> : vector<16x256xf32>
    %2 = tpu.matmul %0, %1, %cst {dimension_numbers = #tpu.dot_dimension_numbers<[1], [0], [0], [1], [0, 0, 1, 1], [], []>} : vector<16x32xf32>, vector<32x256xf32>, vector<16x256xf32> -> vector<16x256xf32>
    %c0_3 = arith.constant 0 : index
    %c0_4 = arith.constant 0 : index
    %3 = vector.load %arg4[%c0_3, %c0_4] : memref<1x256xf32, #tpu.memory_space<vmem>>, vector<1x256xf32>
    %4 = vector.broadcast %3 : vector<1x256xf32> to vector<16x256xf32>
    %5 = arith.addf %2, %4 : vector<16x256xf32>
    %c0_5 = arith.constant 0 : index
    %c0_6 = arith.constant 0 : index
    %6 = vector.load %arg6[%c0_5, %c0_6] : memref<16x256xf32, #tpu.memory_space<vmem>>, vector<16x256xf32>
    tpu.vector_store %arg6[%c0_5, %c0_6], %5 {strides = array<i32>} : memref<16x256xf32, #tpu.memory_space<vmem>>, vector<16x256xf32>,
    %cst_7 = arith.constant 0.000000e+00 : f32
    %7 = vector.broadcast %cst_7 : f32 to vector<2x64xf32>
    %c0_8 = arith.constant 0 : index
    %c0_9 = arith.constant 0 : index
    %8 = vector.load %arg7[%c0_8, %c0_9] : memref<2x64xf32, #tpu.memory_space<vmem>>, vector<2x64xf32>
    tpu.vector_store %arg7[%c0_8, %c0_9], %7 {strides = array<i32>} : memref<2x64xf32, #tpu.memory_space<vmem>>, vector<2x64xf32>,
    %cst_10 = arith.constant 0.000000e+00 : f32
    %9 = vector.broadcast %cst_10 : f32 to vector<2x32xf32>
    %c0_11 = arith.constant 0 : index
    %c0_12 = arith.constant 0 : index
    %10 = vector.load %arg8[%c0_11, %c0_12] : memref<2x32xf32, #tpu.memory_space<vmem>>, vector<2x32xf32>
    tpu.vector_store %arg8[%c0_11, %c0_12], %9 {strides = array<i32>} : memref<2x32xf32, #tpu.memory_space<vmem>>, vector<2x32xf32>,
    %cst_13 = arith.constant 0.000000e+00 : f32
    %11 = vector.broadcast %cst_13 : f32 to vector<2x32xf32>
    %c0_14 = arith.constant 0 : index
    %c0_15 = arith.constant 0 : index
    %12 = vector.load %arg9[%c0_14, %c0_15] : memref<2x32xf32, #tpu.memory_space<vmem>>, vector<2x32xf32>
    tpu.vector_store %arg9[%c0_14, %c0_15], %11 {strides = array<i32>} : memref<2x32xf32, #tpu.memory_space<vmem>>, vector<2x32xf32>,
    %c0_16 = arith.constant 0 : index
    %c0_17 = arith.constant 0 : index
    %13 = vector.load %arg1[%c0_16, %c0_17] : memref<2x1xi32, #tpu.memory_space<vmem>>, vector<2x1xi32>
    %c0_i32 = arith.constant 0 : i32
    %c7_i32 = arith.constant 7 : i32
    %14 = arith.subi %c7_i32, %c0_i32 : i32
    %c0_18 = arith.constant 0 : index
    %c0_19 = arith.constant 0 : index
    %15 = vector.load %arg7[%c0_18, %c0_19] : memref<2x64xf32, #tpu.memory_space<vmem>>, vector<2x64xf32>
    %c0_20 = arith.constant 0 : index
    %c0_21 = arith.constant 0 : index
    %16 = vector.load %arg3[%c0_20, %c0_21] : memref<64x256xf32, #tpu.memory_space<vmem>>, vector<64x256xf32>
    %cst_22 = arith.constant dense<0.000000e+00> : vector<2x256xf32>
    %17 = tpu.matmul %15, %16, %cst_22 {dimension_numbers = #tpu.dot_dimension_numbers<[1], [0], [0], [1], [0, 0, 1, 1], [], []>} : vector<2x64xf32>, vector<64x256xf32>, vector<2x256xf32> -> vector<2x256xf32>
    %c2_i32 = arith.constant 2 : i32
    %18 = arith.muli %c0_i32, %c2_i32 : i32
    %19 = arith.index_cast %18 : i32 to index
    %c0_23 = arith.constant 0 : index
    %20 = vector.load %arg6[%19, %c0_23] : memref<16x256xf32, #tpu.memory_space<vmem>>, vector<2x256xf32>
    %c2_i32_24 = arith.constant 2 : i32
    %21 = arith.muli %14, %c2_i32_24 : i32
    %22 = arith.index_cast %21 : i32 to index
    %c0_25 = arith.constant 0 : index
    %23 = vector.load %arg6[%22, %c0_25] : memref<16x256xf32, #tpu.memory_space<vmem>>, vector<2x256xf32>
    %24 = vector.extract_strided_slice %20 {offsets = [0, 0], sizes = [2, 128], strides = [1, 1]} : vector<2x256xf32> to vector<2x128xf32>
    %25 = vector.extract_strided_slice %17 {offsets = [0, 0], sizes = [2, 128], strides = [1, 1]} : vector<2x256xf32> to vector<2x128xf32>
    %26 = arith.addf %24, %25 : vector<2x128xf32>
    %27 = vector.extract_strided_slice %23 {offsets = [0, 128], sizes = [2, 128], strides = [1, 1]} : vector<2x256xf32> to vector<2x128xf32>
    %28 = vector.extract_strided_slice %17 {offsets = [0, 128], sizes = [2, 128], strides = [1, 1]} : vector<2x256xf32> to vector<2x128xf32>
    %29 = arith.addf %27, %28 : vector<2x128xf32>
    %c0_26 = arith.constant 0 : index
    %c0_27 = arith.constant 0 : index
    %30 = vector.load %arg8[%c0_26, %c0_27] : memref<2x32xf32, #tpu.memory_space<vmem>>, vector<2x32xf32>
    %31 = vector.extract_strided_slice %26 {offsets = [0, 0], sizes = [2, 32], strides = [1, 1]} : vector<2x128xf32> to vector<2x32xf32>
    %32 = arith.negf %31 : vector<2x32xf32>
    %33 = math.exp %32 : vector<2x32xf32>
    %cst_28 = arith.constant 1.000000e+00 : f32
    %34 = vector.broadcast %cst_28 : f32 to vector<2x32xf32>
    %35 = arith.addf %34, %33 : vector<2x32xf32>
    %36 = arith.divf %34, %35 : vector<2x32xf32>
    %37 = vector.extract_strided_slice %26 {offsets = [0, 32], sizes = [2, 32], strides = [1, 1]} : vector<2x128xf32> to vector<2x32xf32>
    %38 = arith.negf %37 : vector<2x32xf32>
    %39 = math.exp %38 : vector<2x32xf32>
    %cst_29 = arith.constant 1.000000e+00 : f32
    %40 = vector.broadcast %cst_29 : f32 to vector<2x32xf32>
    %41 = arith.addf %40, %39 : vector<2x32xf32>
    %42 = arith.divf %40, %41 : vector<2x32xf32>
    %43 = vector.extract_strided_slice %26 {offsets = [0, 64], sizes = [2, 32], strides = [1, 1]} : vector<2x128xf32> to vector<2x32xf32>
    %44 = math.tanh %43 : vector<2x32xf32>
    %45 = vector.extract_strided_slice %26 {offsets = [0, 96], sizes = [2, 32], strides = [1, 1]} : vector<2x128xf32> to vector<2x32xf32>
    %46 = arith.negf %45 : vector<2x32xf32>
    %47 = math.exp %46 : vector<2x32xf32>
    %cst_30 = arith.constant 1.000000e+00 : f32
    %48 = vector.broadcast %cst_30 : f32 to vector<2x32xf32>
    %49 = arith.addf %48, %47 : vector<2x32xf32>
    %50 = arith.divf %48, %49 : vector<2x32xf32>
    %51 = arith.mulf %42, %30 : vector<2x32xf32>
    %52 = arith.mulf %36, %44 : vector<2x32xf32>
    %53 = arith.addf %51, %52 : vector<2x32xf32>
    %54 = math.tanh %53 : vector<2x32xf32>
    %55 = arith.mulf %50, %54 : vector<2x32xf32>
    %c0_31 = arith.constant 0 : index
    %c0_32 = arith.constant 0 : index
    %56 = vector.load %arg9[%c0_31, %c0_32] : memref<2x32xf32, #tpu.memory_space<vmem>>, vector<2x32xf32>
    %57 = vector.extract_strided_slice %29 {offsets = [0, 0], sizes = [2, 32], strides = [1, 1]} : vector<2x128xf32> to vector<2x32xf32>
    %58 = arith.negf %57 : vector<2x32xf32>
    %59 = math.exp %58 : vector<2x32xf32>
    %cst_33 = arith.constant 1.000000e+00 : f32
    %60 = vector.broadcast %cst_33 : f32 to vector<2x32xf32>
    %61 = arith.addf %60, %59 : vector<2x32xf32>
    %62 = arith.divf %60, %61 : vector<2x32xf32>
    %63 = vector.extract_strided_slice %29 {offsets = [0, 32], sizes = [2, 32], strides = [1, 1]} : vector<2x128xf32> to vector<2x32xf32>
    %64 = arith.negf %63 : vector<2x32xf32>
    %65 = math.exp %64 : vector<2x32xf32>
    %cst_34 = arith.constant 1.000000e+00 : f32
    %66 = vector.broadcast %cst_34 : f32 to vector<2x32xf32>
    %67 = arith.addf %66, %65 : vector<2x32xf32>
    %68 = arith.divf %66, %67 : vector<2x32xf32>
    %69 = vector.extract_strided_slice %29 {offsets = [0, 64], sizes = [2, 32], strides = [1, 1]} : vector<2x128xf32> to vector<2x32xf32>
    %70 = math.tanh %69 : vector<2x32xf32>
    %71 = vector.extract_strided_slice %29 {offsets = [0, 96], sizes = [2, 32], strides = [1, 1]} : vector<2x128xf32> to vector<2x32xf32>
    %72 = arith.negf %71 : vector<2x32xf32>
    %73 = math.exp %72 : vector<2x32xf32>
    %cst_35 = arith.constant 1.000000e+00 : f32
    %74 = vector.broadcast %cst_35 : f32 to vector<2x32xf32>
    %75 = arith.addf %74, %73 : vector<2x32xf32>
    %76 = arith.divf %74, %75 : vector<2x32xf32>
    %77 = arith.mulf %68, %56 : vector<2x32xf32>
    %78 = arith.mulf %62, %70 : vector<2x32xf32>
    %79 = arith.addf %77, %78 : vector<2x32xf32>
    %80 = math.tanh %79 : vector<2x32xf32>
    %81 = arith.mulf %76, %80 : vector<2x32xf32>
    %82 = vector.broadcast %c0_i32 : i32 to vector<2x1xi32>
    %83 = arith.cmpi sgt, %13, %82 : vector<2x1xi32>
    %84 = vector.broadcast %14 : i32 to vector<2x1xi32>
    %85 = arith.cmpi sgt, %13, %84 : vector<2x1xi32>
    %c0_36 = arith.constant 0 : index
    %c0_37 = arith.constant 0 : index
    %86 = vector.load %arg8[%c0_36, %c0_37] : memref<2x32xf32, #tpu.memory_space<vmem>>, vector<2x32xf32>
    %87 = vector.shape_cast %83 : vector<2x1xi1> to vector<2x1xi1>
    %88 = vector.broadcast %87 : vector<2x1xi1> to vector<2x32xi1>
    %89 = arith.select %88, %53, %86 : vector<2x32xi1>, vector<2x32xf32>
    %c0_38 = arith.constant 0 : index
    %c0_39 = arith.constant 0 : index
    %90 = vector.load %arg8[%c0_38, %c0_39] : memref<2x32xf32, #tpu.memory_space<vmem>>, vector<2x32xf32>
    tpu.vector_store %arg8[%c0_38, %c0_39], %89 {strides = array<i32>} : memref<2x32xf32, #tpu.memory_space<vmem>>, vector<2x32xf32>,
    %c0_40 = arith.constant 0 : index
    %c0_41 = arith.constant 0 : index
    %91 = vector.load %arg9[%c0_40, %c0_41] : memref<2x32xf32, #tpu.memory_space<vmem>>, vector<2x32xf32>
    %92 = vector.shape_cast %85 : vector<2x1xi1> to vector<2x1xi1>
    %93 = vector.broadcast %92 : vector<2x1xi1> to vector<2x32xi1>
    %94 = arith.select %93, %79, %91 : vector<2x32xi1>, vector<2x32xf32>
    %c0_42 = arith.constant 0 : index
    %c0_43 = arith.constant 0 : index
    %95 = vector.load %arg9[%c0_42, %c0_43] : memref<2x32xf32, #tpu.memory_space<vmem>>, vector<2x32xf32>
    tpu.vector_store %arg9[%c0_42, %c0_43], %94 {strides = array<i32>} : memref<2x32xf32, #tpu.memory_space<vmem>>, vector<2x32xf32>,
    %c0_44 = arith.constant 0 : index
    %c0_45 = arith.constant 0 : index
    %96 = vector.load %arg7[%c0_44, %c0_45] : memref<2x64xf32, #tpu.memory_space<vmem>>, vector<2x64xf32>
    %97 = vector.extract_strided_slice %96 {offsets = [0, 0], sizes = [2, 32], strides = [1, 1]} : vector<2x64xf32> to vector<2x32xf32>
    %98 = vector.shape_cast %83 : vector<2x1xi1> to vector<2x1xi1>
    %99 = vector.broadcast %98 : vector<2x1xi1> to vector<2x32xi1>
    %100 = arith.select %99, %55, %97 : vector<2x32xi1>, vector<2x32xf32>
    %101 = vector.extract_strided_slice %96 {offsets = [0, 32], sizes = [2, 32], strides = [1, 1]} : vector<2x64xf32> to vector<2x32xf32>
    %102 = vector.shape_cast %85 : vector<2x1xi1> to vector<2x1xi1>
    %103 = vector.broadcast %102 : vector<2x1xi1> to vector<2x32xi1>
    %104 = arith.select %103, %81, %101 : vector<2x32xi1>, vector<2x32xf32>
    %105 = tpu.concatenate %100, %104 in 1 : vector<2x32xf32>, vector<2x32xf32> -> vector<2x64xf32>
    %c0_46 = arith.constant 0 : index
    %c0_47 = arith.constant 0 : index
    %106 = vector.load %arg7[%c0_46, %c0_47] : memref<2x64xf32, #tpu.memory_space<vmem>>, vector<2x64xf32>
    tpu.vector_store %arg7[%c0_46, %c0_47], %105 {strides = array<i32>} : memref<2x64xf32, #tpu.memory_space<vmem>>, vector<2x64xf32>,
    %cst_48 = arith.constant 0.000000e+00 : f32
    %107 = vector.shape_cast %83 : vector<2x1xi1> to vector<2x1xi1>
    %108 = vector.broadcast %107 : vector<2x1xi1> to vector<2x32xi1>
    %109 = vector.broadcast %cst_48 : f32 to vector<2x32xf32>
    %110 = arith.select %108, %55, %109 : vector<2x32xi1>, vector<2x32xf32>
    %111 = arith.index_cast %c0_i32 : i32 to index
    %c0_49 = arith.constant 0 : index
    %c0_50 = arith.constant 0 : index
    %112 = vector.load %arg10[%111, %c0_49, %c0_50] : memref<8x2x32xf32, #tpu.memory_space<vmem>>, vector<1x2x32xf32>
    %113 = vector.shape_cast %112 : vector<1x2x32xf32> to vector<2x32xf32>
    %114 = vector.shape_cast %110 : vector<2x32xf32> to vector<1x2x32xf32>
    tpu.vector_store %arg10[%111, %c0_49, %c0_50], %114 {strides = array<i32>} : memref<8x2x32xf32, #tpu.memory_space<vmem>>, vector<1x2x32xf32>,
    %cst_51 = arith.constant 0.000000e+00 : f32
    %115 = vector.shape_cast %85 : vector<2x1xi1> to vector<2x1xi1>
    %116 = vector.broadcast %115 : vector<2x1xi1> to vector<2x32xi1>
    %117 = vector.broadcast %cst_51 : f32 to vector<2x32xf32>
    %118 = arith.select %116, %81, %117 : vector<2x32xi1>, vector<2x32xf32>
    %119 = arith.index_cast %14 : i32 to index
    %c0_52 = arith.constant 0 : index
    %c0_53 = arith.constant 0 : index
    %120 = vector.load %arg11[%119, %c0_52, %c0_53] : memref<8x2x32xf32, #tpu.memory_space<vmem>>, vector<1x2x32xf32>
    %121 = vector.shape_cast %120 : vector<1x2x32xf32> to vector<2x32xf32>
    %122 = vector.shape_cast %118 : vector<2x32xf32> to vector<1x2x32xf32>
    tpu.vector_store %arg11[%119, %c0_52, %c0_53], %122 {strides = array<i32>} : memref<8x2x32xf32, #tpu.memory_space<vmem>>, vector<1x2x32xf32>,
    %c1_i32 = arith.constant 1 : i32
    %c7_i32_54 = arith.constant 7 : i32
    %123 = arith.subi %c7_i32_54, %c1_i32 : i32
    %c0_55 = arith.constant 0 : index
    %c0_56 = arith.constant 0 : index
    %124 = vector.load %arg7[%c0_55, %c0_56] : memref<2x64xf32, #tpu.memory_space<vmem>>, vector<2x64xf32>
    %c0_57 = arith.constant 0 : index
    %c0_58 = arith.constant 0 : index
    %125 = vector.load %arg3[%c0_57, %c0_58] : memref<64x256xf32, #tpu.memory_space<vmem>>, vector<64x256xf32>
    %cst_59 = arith.constant dense<0.000000e+00> : vector<2x256xf32>
    %126 = tpu.matmul %124, %125, %cst_59 {dimension_numbers = #tpu.dot_dimension_numbers<[1], [0], [0], [1], [0, 0, 1, 1], [], []>} : vector<2x64xf32>, vector<64x256xf32>, vector<2x256xf32> -> vector<2x256xf32>
    %c2_i32_60 = arith.constant 2 : i32
    %127 = arith.muli %c1_i32, %c2_i32_60 : i32
    %128 = arith.index_cast %127 : i32 to index
    %c0_61 = arith.constant 0 : index
    %129 = vector.load %arg6[%128, %c0_61] : memref<16x256xf32, #tpu.memory_space<vmem>>, vector<2x256xf32>
    %c2_i32_62 = arith.constant 2 : i32
    %130 = arith.muli %123, %c2_i32_62 : i32
    %131 = arith.index_cast %130 : i32 to index
    %c0_63 = arith.constant 0 : index
    %132 = vector.load %arg6[%131, %c0_63] : memref<16x256xf32, #tpu.memory_space<vmem>>, vector<2x256xf32>
    %133 = vector.extract_strided_slice %129 {offsets = [0, 0], sizes = [2, 128], strides = [1, 1]} : vector<2x256xf32> to vector<2x128xf32>
    %134 = vector.extract_strided_slice %126 {offsets = [0, 0], sizes = [2, 128], strides = [1, 1]} : vector<2x256xf32> to vector<2x128xf32>
    %135 = arith.addf %133, %134 : vector<2x128xf32>
    %136 = vector.extract_strided_slice %132 {offsets = [0, 128], sizes = [2, 128], strides = [1, 1]} : vector<2x256xf32> to vector<2x128xf32>
    %137 = vector.extract_strided_slice %126 {offsets = [0, 128], sizes = [2, 128], strides = [1, 1]} : vector<2x256xf32> to vector<2x128xf32>
    %138 = arith.addf %136, %137 : vector<2x128xf32>
    %c0_64 = arith.constant 0 : index
    %c0_65 = arith.constant 0 : index
    %139 = vector.load %arg8[%c0_64, %c0_65] : memref<2x32xf32, #tpu.memory_space<vmem>>, vector<2x32xf32>
    %140 = vector.extract_strided_slice %135 {offsets = [0, 0], sizes = [2, 32], strides = [1, 1]} : vector<2x128xf32> to vector<2x32xf32>
    %141 = arith.negf %140 : vector<2x32xf32>
    %142 = math.exp %141 : vector<2x32xf32>
    %cst_66 = arith.constant 1.000000e+00 : f32
    %143 = vector.broadcast %cst_66 : f32 to vector<2x32xf32>
    %144 = arith.addf %143, %142 : vector<2x32xf32>
    %145 = arith.divf %143, %144 : vector<2x32xf32>
    %146 = vector.extract_strided_slice %135 {offsets = [0, 32], sizes = [2, 32], strides = [1, 1]} : vector<2x128xf32> to vector<2x32xf32>
    %147 = arith.negf %146 : vector<2x32xf32>
    %148 = math.exp %147 : vector<2x32xf32>
    %cst_67 = arith.constant 1.000000e+00 : f32
    %149 = vector.broadcast %cst_67 : f32 to vector<2x32xf32>
    %150 = arith.addf %149, %148 : vector<2x32xf32>
    %151 = arith.divf %149, %150 : vector<2x32xf32>
    %152 = vector.extract_strided_slice %135 {offsets = [0, 64], sizes = [2, 32], strides = [1, 1]} : vector<2x128xf32> to vector<2x32xf32>
    %153 = math.tanh %152 : vector<2x32xf32>
    %154 = vector.extract_strided_slice %135 {offsets = [0, 96], sizes = [2, 32], strides = [1, 1]} : vector<2x128xf32> to vector<2x32xf32>
    %155 = arith.negf %154 : vector<2x32xf32>
    %156 = math.exp %155 : vector<2x32xf32>
    %cst_68 = arith.constant 1.000000e+00 : f32
    %157 = vector.broadcast %cst_68 : f32 to vector<2x32xf32>
    %158 = arith.addf %157, %156 : vector<2x32xf32>
    %159 = arith.divf %157, %158 : vector<2x32xf32>
    %160 = arith.mulf %151, %139 : vector<2x32xf32>
    %161 = arith.mulf %145, %153 : vector<2x32xf32>
    %162 = arith.addf %160, %161 : vector<2x32xf32>
    %163 = math.tanh %162 : vector<2x32xf32>
    %164 = arith.mulf %159, %163 : vector<2x32xf32>
    %c0_69 = arith.constant 0 : index
    %c0_70 = arith.constant 0 : index
    %165 = vector.load %arg9[%c0_69, %c0_70] : memref<2x32xf32, #tpu.memory_space<vmem>>, vector<2x32xf32>
    %166 = vector.extract_strided_slice %138 {offsets = [0, 0], sizes = [2, 32], strides = [1, 1]} : vector<2x128xf32> to vector<2x32xf32>
    %167 = arith.negf %166 : vector<2x32xf32>
    %168 = math.exp %167 : vector<2x32xf32>
    %cst_71 = arith.constant 1.000000e+00 : f32
    %169 = vector.broadcast %cst_71 : f32 to vector<2x32xf32>
    %170 = arith.addf %169, %168 : vector<2x32xf32>
    %171 = arith.divf %169, %170 : vector<2x32xf32>
    %172 = vector.extract_strided_slice %138 {offsets = [0, 32], sizes = [2, 32], strides = [1, 1]} : vector<2x128xf32> to vector<2x32xf32>
    %173 = arith.negf %172 : vector<2x32xf32>
    %174 = math.exp %173 : vector<2x32xf32>
    %cst_72 = arith.constant 1.000000e+00 : f32
    %175 = vector.broadcast %cst_72 : f32 to vector<2x32xf32>
    %176 = arith.addf %175, %174 : vector<2x32xf32>
    %177 = arith.divf %175, %176 : vector<2x32xf32>
    %178 = vector.extract_strided_slice %138 {offsets = [0, 64], sizes = [2, 32], strides = [1, 1]} : vector<2x128xf32> to vector<2x32xf32>
    %179 = math.tanh %178 : vector<2x32xf32>
    %180 = vector.extract_strided_slice %138 {offsets = [0, 96], sizes = [2, 32], strides = [1, 1]} : vector<2x128xf32> to vector<2x32xf32>
    %181 = arith.negf %180 : vector<2x32xf32>
    %182 = math.exp %181 : vector<2x32xf32>
    %cst_73 = arith.constant 1.000000e+00 : f32
    %183 = vector.broadcast %cst_73 : f32 to vector<2x32xf32>
    %184 = arith.addf %183, %182 : vector<2x32xf32>
    %185 = arith.divf %183, %184 : vector<2x32xf32>
    %186 = arith.mulf %177, %165 : vector<2x32xf32>
    %187 = arith.mulf %171, %179 : vector<2x32xf32>
    %188 = arith.addf %186, %187 : vector<2x32xf32>
    %189 = math.tanh %188 : vector<2x32xf32>
    %190 = arith.mulf %185, %189 : vector<2x32xf32>
    %191 = vector.broadcast %c1_i32 : i32 to vector<2x1xi32>
    %192 = arith.cmpi sgt, %13, %191 : vector<2x1xi32>
    %193 = vector.broadcast %123 : i32 to vector<2x1xi32>
    %194 = arith.cmpi sgt, %13, %193 : vector<2x1xi32>
    %c0_74 = arith.constant 0 : index
    %c0_75 = arith.constant 0 : index
    %195 = vector.load %arg8[%c0_74, %c0_75] : memref<2x32xf32, #tpu.memory_space<vmem>>, vector<2x32xf32>
    %196 = vector.shape_cast %192 : vector<2x1xi1> to vector<2x1xi1>
    %197 = vector.broadcast %196 : vector<2x1xi1> to vector<2x32xi1>
    %198 = arith.select %197, %162, %195 : vector<2x32xi1>, vector<2x32xf32>
    %c0_76 = arith.constant 0 : index
    %c0_77 = arith.constant 0 : index
    %199 = vector.load %arg8[%c0_76, %c0_77] : memref<2x32xf32, #tpu.memory_space<vmem>>, vector<2x32xf32>
    tpu.vector_store %arg8[%c0_76, %c0_77], %198 {strides = array<i32>} : memref<2x32xf32, #tpu.memory_space<vmem>>, vector<2x32xf32>,
    %c0_78 = arith.constant 0 : index
    %c0_79 = arith.constant 0 : index
    %200 = vector.load %arg9[%c0_78, %c0_79] : memref<2x32xf32, #tpu.memory_space<vmem>>, vector<2x32xf32>
    %201 = vector.shape_cast %194 : vector<2x1xi1> to vector<2x1xi1>
    %202 = vector.broadcast %201 : vector<2x1xi1> to vector<2x32xi1>
    %203 = arith.select %202, %188, %200 : vector<2x32xi1>, vector<2x32xf32>
    %c0_80 = arith.constant 0 : index
    %c0_81 = arith.constant 0 : index
    %204 = vector.load %arg9[%c0_80, %c0_81] : memref<2x32xf32, #tpu.memory_space<vmem>>, vector<2x32xf32>
    tpu.vector_store %arg9[%c0_80, %c0_81], %203 {strides = array<i32>} : memref<2x32xf32, #tpu.memory_space<vmem>>, vector<2x32xf32>,
    %c0_82 = arith.constant 0 : index
    %c0_83 = arith.constant 0 : index
    %205 = vector.load %arg7[%c0_82, %c0_83] : memref<2x64xf32, #tpu.memory_space<vmem>>, vector<2x64xf32>
    %206 = vector.extract_strided_slice %205 {offsets = [0, 0], sizes = [2, 32], strides = [1, 1]} : vector<2x64xf32> to vector<2x32xf32>
    %207 = vector.shape_cast %192 : vector<2x1xi1> to vector<2x1xi1>
    %208 = vector.broadcast %207 : vector<2x1xi1> to vector<2x32xi1>
    %209 = arith.select %208, %164, %206 : vector<2x32xi1>, vector<2x32xf32>
    %210 = vector.extract_strided_slice %205 {offsets = [0, 32], sizes = [2, 32], strides = [1, 1]} : vector<2x64xf32> to vector<2x32xf32>
    %211 = vector.shape_cast %194 : vector<2x1xi1> to vector<2x1xi1>
    %212 = vector.broadcast %211 : vector<2x1xi1> to vector<2x32xi1>
    %213 = arith.select %212, %190, %210 : vector<2x32xi1>, vector<2x32xf32>
    %214 = tpu.concatenate %209, %213 in 1 : vector<2x32xf32>, vector<2x32xf32> -> vector<2x64xf32>
    %c0_84 = arith.constant 0 : index
    %c0_85 = arith.constant 0 : index
    %215 = vector.load %arg7[%c0_84, %c0_85] : memref<2x64xf32, #tpu.memory_space<vmem>>, vector<2x64xf32>
    tpu.vector_store %arg7[%c0_84, %c0_85], %214 {strides = array<i32>} : memref<2x64xf32, #tpu.memory_space<vmem>>, vector<2x64xf32>,
    %cst_86 = arith.constant 0.000000e+00 : f32
    %216 = vector.shape_cast %192 : vector<2x1xi1> to vector<2x1xi1>
    %217 = vector.broadcast %216 : vector<2x1xi1> to vector<2x32xi1>
    %218 = vector.broadcast %cst_86 : f32 to vector<2x32xf32>
    %219 = arith.select %217, %164, %218 : vector<2x32xi1>, vector<2x32xf32>
    %220 = arith.index_cast %c1_i32 : i32 to index
    %c0_87 = arith.constant 0 : index
    %c0_88 = arith.constant 0 : index
    %221 = vector.load %arg10[%220, %c0_87, %c0_88] : memref<8x2x32xf32, #tpu.memory_space<vmem>>, vector<1x2x32xf32>
    %222 = vector.shape_cast %221 : vector<1x2x32xf32> to vector<2x32xf32>
    %223 = vector.shape_cast %219 : vector<2x32xf32> to vector<1x2x32xf32>
    tpu.vector_store %arg10[%220, %c0_87, %c0_88], %223 {strides = array<i32>} : memref<8x2x32xf32, #tpu.memory_space<vmem>>, vector<1x2x32xf32>,
    %cst_89 = arith.constant 0.000000e+00 : f32
    %224 = vector.shape_cast %194 : vector<2x1xi1> to vector<2x1xi1>
    %225 = vector.broadcast %224 : vector<2x1xi1> to vector<2x32xi1>
    %226 = vector.broadcast %cst_89 : f32 to vector<2x32xf32>
    %227 = arith.select %225, %190, %226 : vector<2x32xi1>, vector<2x32xf32>
    %228 = arith.index_cast %123 : i32 to index
    %c0_90 = arith.constant 0 : index
    %c0_91 = arith.constant 0 : index
    %229 = vector.load %arg11[%228, %c0_90, %c0_91] : memref<8x2x32xf32, #tpu.memory_space<vmem>>, vector<1x2x32xf32>
    %230 = vector.shape_cast %229 : vector<1x2x32xf32> to vector<2x32xf32>
    %231 = vector.shape_cast %227 : vector<2x32xf32> to vector<1x2x32xf32>
    tpu.vector_store %arg11[%228, %c0_90, %c0_91], %231 {strides = array<i32>} : memref<8x2x32xf32, #tpu.memory_space<vmem>>, vector<1x2x32xf32>,
    %c2_i32_92 = arith.constant 2 : i32
    %c7_i32_93 = arith.constant 7 : i32
    %232 = arith.subi %c7_i32_93, %c2_i32_92 : i32
    %c0_94 = arith.constant 0 : index
    %c0_95 = arith.constant 0 : index
    %233 = vector.load %arg7[%c0_94, %c0_95] : memref<2x64xf32, #tpu.memory_space<vmem>>, vector<2x64xf32>
    %c0_96 = arith.constant 0 : index
    %c0_97 = arith.constant 0 : index
    %234 = vector.load %arg3[%c0_96, %c0_97] : memref<64x256xf32, #tpu.memory_space<vmem>>, vector<64x256xf32>
    %cst_98 = arith.constant dense<0.000000e+00> : vector<2x256xf32>
    %235 = tpu.matmul %233, %234, %cst_98 {dimension_numbers = #tpu.dot_dimension_numbers<[1], [0], [0], [1], [0, 0, 1, 1], [], []>} : vector<2x64xf32>, vector<64x256xf32>, vector<2x256xf32> -> vector<2x256xf32>
    %c2_i32_99 = arith.constant 2 : i32
    %236 = arith.muli %c2_i32_92, %c2_i32_99 : i32
    %237 = arith.index_cast %236 : i32 to index
    %c0_100 = arith.constant 0 : index
    %238 = vector.load %arg6[%237, %c0_100] : memref<16x256xf32, #tpu.memory_space<vmem>>, vector<2x256xf32>
    %c2_i32_101 = arith.constant 2 : i32
    %239 = arith.muli %232, %c2_i32_101 : i32
    %240 = arith.index_cast %239 : i32 to index
    %c0_102 = arith.constant 0 : index
    %241 = vector.load %arg6[%240, %c0_102] : memref<16x256xf32, #tpu.memory_space<vmem>>, vector<2x256xf32>
    %242 = vector.extract_strided_slice %238 {offsets = [0, 0], sizes = [2, 128], strides = [1, 1]} : vector<2x256xf32> to vector<2x128xf32>
    %243 = vector.extract_strided_slice %235 {offsets = [0, 0], sizes = [2, 128], strides = [1, 1]} : vector<2x256xf32> to vector<2x128xf32>
    %244 = arith.addf %242, %243 : vector<2x128xf32>
    %245 = vector.extract_strided_slice %241 {offsets = [0, 128], sizes = [2, 128], strides = [1, 1]} : vector<2x256xf32> to vector<2x128xf32>
    %246 = vector.extract_strided_slice %235 {offsets = [0, 128], sizes = [2, 128], strides = [1, 1]} : vector<2x256xf32> to vector<2x128xf32>
    %247 = arith.addf %245, %246 : vector<2x128xf32>
    %c0_103 = arith.constant 0 : index
    %c0_104 = arith.constant 0 : index
    %248 = vector.load %arg8[%c0_103, %c0_104] : memref<2x32xf32, #tpu.memory_space<vmem>>, vector<2x32xf32>
    %249 = vector.extract_strided_slice %244 {offsets = [0, 0], sizes = [2, 32], strides = [1, 1]} : vector<2x128xf32> to vector<2x32xf32>
    %250 = arith.negf %249 : vector<2x32xf32>
    %251 = math.exp %250 : vector<2x32xf32>
    %cst_105 = arith.constant 1.000000e+00 : f32
    %252 = vector.broadcast %cst_105 : f32 to vector<2x32xf32>
    %253 = arith.addf %252, %251 : vector<2x32xf32>
    %254 = arith.divf %252, %253 : vector<2x32xf32>
    %255 = vector.extract_strided_slice %244 {offsets = [0, 32], sizes = [2, 32], strides = [1, 1]} : vector<2x128xf32> to vector<2x32xf32>
    %256 = arith.negf %255 : vector<2x32xf32>
    %257 = math.exp %256 : vector<2x32xf32>
    %cst_106 = arith.constant 1.000000e+00 : f32
    %258 = vector.broadcast %cst_106 : f32 to vector<2x32xf32>
    %259 = arith.addf %258, %257 : vector<2x32xf32>
    %260 = arith.divf %258, %259 : vector<2x32xf32>
    %261 = vector.extract_strided_slice %244 {offsets = [0, 64], sizes = [2, 32], strides = [1, 1]} : vector<2x128xf32> to vector<2x32xf32>
    %262 = math.tanh %261 : vector<2x32xf32>
    %263 = vector.extract_strided_slice %244 {offsets = [0, 96], sizes = [2, 32], strides = [1, 1]} : vector<2x128xf32> to vector<2x32xf32>
    %264 = arith.negf %263 : vector<2x32xf32>
    %265 = math.exp %264 : vector<2x32xf32>
    %cst_107 = arith.constant 1.000000e+00 : f32
    %266 = vector.broadcast %cst_107 : f32 to vector<2x32xf32>
    %267 = arith.addf %266, %265 : vector<2x32xf32>
    %268 = arith.divf %266, %267 : vector<2x32xf32>
    %269 = arith.mulf %260, %248 : vector<2x32xf32>
    %270 = arith.mulf %254, %262 : vector<2x32xf32>
    %271 = arith.addf %269, %270 : vector<2x32xf32>
    %272 = math.tanh %271 : vector<2x32xf32>
    %273 = arith.mulf %268, %272 : vector<2x32xf32>
    %c0_108 = arith.constant 0 : index
    %c0_109 = arith.constant 0 : index
    %274 = vector.load %arg9[%c0_108, %c0_109] : memref<2x32xf32, #tpu.memory_space<vmem>>, vector<2x32xf32>
    %275 = vector.extract_strided_slice %247 {offsets = [0, 0], sizes = [2, 32], strides = [1, 1]} : vector<2x128xf32> to vector<2x32xf32>
    %276 = arith.negf %275 : vector<2x32xf32>
    %277 = math.exp %276 : vector<2x32xf32>
    %cst_110 = arith.constant 1.000000e+00 : f32
    %278 = vector.broadcast %cst_110 : f32 to vector<2x32xf32>
    %279 = arith.addf %278, %277 : vector<2x32xf32>
    %280 = arith.divf %278, %279 : vector<2x32xf32>
    %281 = vector.extract_strided_slice %247 {offsets = [0, 32], sizes = [2, 32], strides = [1, 1]} : vector<2x128xf32> to vector<2x32xf32>
    %282 = arith.negf %281 : vector<2x32xf32>
    %283 = math.exp %282 : vector<2x32xf32>
    %cst_111 = arith.constant 1.000000e+00 : f32
    %284 = vector.broadcast %cst_111 : f32 to vector<2x32xf32>
    %285 = arith.addf %284, %283 : vector<2x32xf32>
    %286 = arith.divf %284, %285 : vector<2x32xf32>
    %287 = vector.extract_strided_slice %247 {offsets = [0, 64], sizes = [2, 32], strides = [1, 1]} : vector<2x128xf32> to vector<2x32xf32>
    %288 = math.tanh %287 : vector<2x32xf32>
    %289 = vector.extract_strided_slice %247 {offsets = [0, 96], sizes = [2, 32], strides = [1, 1]} : vector<2x128xf32> to vector<2x32xf32>
    %290 = arith.negf %289 : vector<2x32xf32>
    %291 = math.exp %290 : vector<2x32xf32>
    %cst_112 = arith.constant 1.000000e+00 : f32
    %292 = vector.broadcast %cst_112 : f32 to vector<2x32xf32>
    %293 = arith.addf %292, %291 : vector<2x32xf32>
    %294 = arith.divf %292, %293 : vector<2x32xf32>
    %295 = arith.mulf %286, %274 : vector<2x32xf32>
    %296 = arith.mulf %280, %288 : vector<2x32xf32>
    %297 = arith.addf %295, %296 : vector<2x32xf32>
    %298 = math.tanh %297 : vector<2x32xf32>
    %299 = arith.mulf %294, %298 : vector<2x32xf32>
    %300 = vector.broadcast %c2_i32_92 : i32 to vector<2x1xi32>
    %301 = arith.cmpi sgt, %13, %300 : vector<2x1xi32>
    %302 = vector.broadcast %232 : i32 to vector<2x1xi32>
    %303 = arith.cmpi sgt, %13, %302 : vector<2x1xi32>
    %c0_113 = arith.constant 0 : index
    %c0_114 = arith.constant 0 : index
    %304 = vector.load %arg8[%c0_113, %c0_114] : memref<2x32xf32, #tpu.memory_space<vmem>>, vector<2x32xf32>
    %305 = vector.shape_cast %301 : vector<2x1xi1> to vector<2x1xi1>
    %306 = vector.broadcast %305 : vector<2x1xi1> to vector<2x32xi1>
    %307 = arith.select %306, %271, %304 : vector<2x32xi1>, vector<2x32xf32>
    %c0_115 = arith.constant 0 : index
    %c0_116 = arith.constant 0 : index
    %308 = vector.load %arg8[%c0_115, %c0_116] : memref<2x32xf32, #tpu.memory_space<vmem>>, vector<2x32xf32>
    tpu.vector_store %arg8[%c0_115, %c0_116], %307 {strides = array<i32>} : memref<2x32xf32, #tpu.memory_space<vmem>>, vector<2x32xf32>,
    %c0_117 = arith.constant 0 : index
    %c0_118 = arith.constant 0 : index
    %309 = vector.load %arg9[%c0_117, %c0_118] : memref<2x32xf32, #tpu.memory_space<vmem>>, vector<2x32xf32>
    %310 = vector.shape_cast %303 : vector<2x1xi1> to vector<2x1xi1>
    %311 = vector.broadcast %310 : vector<2x1xi1> to vector<2x32xi1>
    %312 = arith.select %311, %297, %309 : vector<2x32xi1>, vector<2x32xf32>
    %c0_119 = arith.constant 0 : index
    %c0_120 = arith.constant 0 : index
    %313 = vector.load %arg9[%c0_119, %c0_120] : memref<2x32xf32, #tpu.memory_space<vmem>>, vector<2x32xf32>
    tpu.vector_store %arg9[%c0_119, %c0_120], %312 {strides = array<i32>} : memref<2x32xf32, #tpu.memory_space<vmem>>, vector<2x32xf32>,
    %c0_121 = arith.constant 0 : index
    %c0_122 = arith.constant 0 : index
    %314 = vector.load %arg7[%c0_121, %c0_122] : memref<2x64xf32, #tpu.memory_space<vmem>>, vector<2x64xf32>
    %315 = vector.extract_strided_slice %314 {offsets = [0, 0], sizes = [2, 32], strides = [1, 1]} : vector<2x64xf32> to vector<2x32xf32>
    %316 = vector.shape_cast %301 : vector<2x1xi1> to vector<2x1xi1>
    %317 = vector.broadcast %316 : vector<2x1xi1> to vector<2x32xi1>
    %318 = arith.select %317, %273, %315 : vector<2x32xi1>, vector<2x32xf32>
    %319 = vector.extract_strided_slice %314 {offsets = [0, 32], sizes = [2, 32], strides = [1, 1]} : vector<2x64xf32> to vector<2x32xf32>
    %320 = vector.shape_cast %303 : vector<2x1xi1> to vector<2x1xi1>
    %321 = vector.broadcast %320 : vector<2x1xi1> to vector<2x32xi1>
    %322 = arith.select %321, %299, %319 : vector<2x32xi1>, vector<2x32xf32>
    %323 = tpu.concatenate %318, %322 in 1 : vector<2x32xf32>, vector<2x32xf32> -> vector<2x64xf32>
    %c0_123 = arith.constant 0 : index
    %c0_124 = arith.constant 0 : index
    %324 = vector.load %arg7[%c0_123, %c0_124] : memref<2x64xf32, #tpu.memory_space<vmem>>, vector<2x64xf32>
    tpu.vector_store %arg7[%c0_123, %c0_124], %323 {strides = array<i32>} : memref<2x64xf32, #tpu.memory_space<vmem>>, vector<2x64xf32>,
    %cst_125 = arith.constant 0.000000e+00 : f32
    %325 = vector.shape_cast %301 : vector<2x1xi1> to vector<2x1xi1>
    %326 = vector.broadcast %325 : vector<2x1xi1> to vector<2x32xi1>
    %327 = vector.broadcast %cst_125 : f32 to vector<2x32xf32>
    %328 = arith.select %326, %273, %327 : vector<2x32xi1>, vector<2x32xf32>
    %329 = arith.index_cast %c2_i32_92 : i32 to index
    %c0_126 = arith.constant 0 : index
    %c0_127 = arith.constant 0 : index
    %330 = vector.load %arg10[%329, %c0_126, %c0_127] : memref<8x2x32xf32, #tpu.memory_space<vmem>>, vector<1x2x32xf32>
    %331 = vector.shape_cast %330 : vector<1x2x32xf32> to vector<2x32xf32>
    %332 = vector.shape_cast %328 : vector<2x32xf32> to vector<1x2x32xf32>
    tpu.vector_store %arg10[%329, %c0_126, %c0_127], %332 {strides = array<i32>} : memref<8x2x32xf32, #tpu.memory_space<vmem>>, vector<1x2x32xf32>,
    %cst_128 = arith.constant 0.000000e+00 : f32
    %333 = vector.shape_cast %303 : vector<2x1xi1> to vector<2x1xi1>
    %334 = vector.broadcast %333 : vector<2x1xi1> to vector<2x32xi1>
    %335 = vector.broadcast %cst_128 : f32 to vector<2x32xf32>
    %336 = arith.select %334, %299, %335 : vector<2x32xi1>, vector<2x32xf32>
    %337 = arith.index_cast %232 : i32 to index
    %c0_129 = arith.constant 0 : index
    %c0_130 = arith.constant 0 : index
    %338 = vector.load %arg11[%337, %c0_129, %c0_130] : memref<8x2x32xf32, #tpu.memory_space<vmem>>, vector<1x2x32xf32>
    %339 = vector.shape_cast %338 : vector<1x2x32xf32> to vector<2x32xf32>
    %340 = vector.shape_cast %336 : vector<2x32xf32> to vector<1x2x32xf32>
    tpu.vector_store %arg11[%337, %c0_129, %c0_130], %340 {strides = array<i32>} : memref<8x2x32xf32, #tpu.memory_space<vmem>>, vector<1x2x32xf32>,
    %c3_i32 = arith.constant 3 : i32
    %c7_i32_131 = arith.constant 7 : i32
    %341 = arith.subi %c7_i32_131, %c3_i32 : i32
    %c0_132 = arith.constant 0 : index
    %c0_133 = arith.constant 0 : index
    %342 = vector.load %arg7[%c0_132, %c0_133] : memref<2x64xf32, #tpu.memory_space<vmem>>, vector<2x64xf32>
    %c0_134 = arith.constant 0 : index
    %c0_135 = arith.constant 0 : index
    %343 = vector.load %arg3[%c0_134, %c0_135] : memref<64x256xf32, #tpu.memory_space<vmem>>, vector<64x256xf32>
    %cst_136 = arith.constant dense<0.000000e+00> : vector<2x256xf32>
    %344 = tpu.matmul %342, %343, %cst_136 {dimension_numbers = #tpu.dot_dimension_numbers<[1], [0], [0], [1], [0, 0, 1, 1], [], []>} : vector<2x64xf32>, vector<64x256xf32>, vector<2x256xf32> -> vector<2x256xf32>
    %c2_i32_137 = arith.constant 2 : i32
    %345 = arith.muli %c3_i32, %c2_i32_137 : i32
    %346 = arith.index_cast %345 : i32 to index
    %c0_138 = arith.constant 0 : index
    %347 = vector.load %arg6[%346, %c0_138] : memref<16x256xf32, #tpu.memory_space<vmem>>, vector<2x256xf32>
    %c2_i32_139 = arith.constant 2 : i32
    %348 = arith.muli %341, %c2_i32_139 : i32
    %349 = arith.index_cast %348 : i32 to index
    %c0_140 = arith.constant 0 : index
    %350 = vector.load %arg6[%349, %c0_140] : memref<16x256xf32, #tpu.memory_space<vmem>>, vector<2x256xf32>
    %351 = vector.extract_strided_slice %347 {offsets = [0, 0], sizes = [2, 128], strides = [1, 1]} : vector<2x256xf32> to vector<2x128xf32>
    %352 = vector.extract_strided_slice %344 {offsets = [0, 0], sizes = [2, 128], strides = [1, 1]} : vector<2x256xf32> to vector<2x128xf32>
    %353 = arith.addf %351, %352 : vector<2x128xf32>
    %354 = vector.extract_strided_slice %350 {offsets = [0, 128], sizes = [2, 128], strides = [1, 1]} : vector<2x256xf32> to vector<2x128xf32>
    %355 = vector.extract_strided_slice %344 {offsets = [0, 128], sizes = [2, 128], strides = [1, 1]} : vector<2x256xf32> to vector<2x128xf32>
    %356 = arith.addf %354, %355 : vector<2x128xf32>
    %c0_141 = arith.constant 0 : index
    %c0_142 = arith.constant 0 : index
    %357 = vector.load %arg8[%c0_141, %c0_142] : memref<2x32xf32, #tpu.memory_space<vmem>>, vector<2x32xf32>
    %358 = vector.extract_strided_slice %353 {offsets = [0, 0], sizes = [2, 32], strides = [1, 1]} : vector<2x128xf32> to vector<2x32xf32>
    %359 = arith.negf %358 : vector<2x32xf32>
    %360 = math.exp %359 : vector<2x32xf32>
    %cst_143 = arith.constant 1.000000e+00 : f32
    %361 = vector.broadcast %cst_143 : f32 to vector<2x32xf32>
    %362 = arith.addf %361, %360 : vector<2x32xf32>
    %363 = arith.divf %361, %362 : vector<2x32xf32>
    %364 = vector.extract_strided_slice %353 {offsets = [0, 32], sizes = [2, 32], strides = [1, 1]} : vector<2x128xf32> to vector<2x32xf32>
    %365 = arith.negf %364 : vector<2x32xf32>
    %366 = math.exp %365 : vector<2x32xf32>
    %cst_144 = arith.constant 1.000000e+00 : f32
    %367 = vector.broadcast %cst_144 : f32 to vector<2x32xf32>
    %368 = arith.addf %367, %366 : vector<2x32xf32>
    %369 = arith.divf %367, %368 : vector<2x32xf32>
    %370 = vector.extract_strided_slice %353 {offsets = [0, 64], sizes = [2, 32], strides = [1, 1]} : vector<2x128xf32> to vector<2x32xf32>
    %371 = math.tanh %370 : vector<2x32xf32>
    %372 = vector.extract_strided_slice %353 {offsets = [0, 96], sizes = [2, 32], strides = [1, 1]} : vector<2x128xf32> to vector<2x32xf32>
    %373 = arith.negf %372 : vector<2x32xf32>
    %374 = math.exp %373 : vector<2x32xf32>
    %cst_145 = arith.constant 1.000000e+00 : f32
    %375 = vector.broadcast %cst_145 : f32 to vector<2x32xf32>
    %376 = arith.addf %375, %374 : vector<2x32xf32>
    %377 = arith.divf %375, %376 : vector<2x32xf32>
    %378 = arith.mulf %369, %357 : vector<2x32xf32>
    %379 = arith.mulf %363, %371 : vector<2x32xf32>
    %380 = arith.addf %378, %379 : vector<2x32xf32>
    %381 = math.tanh %380 : vector<2x32xf32>
    %382 = arith.mulf %377, %381 : vector<2x32xf32>
    %c0_146 = arith.constant 0 : index
    %c0_147 = arith.constant 0 : index
    %383 = vector.load %arg9[%c0_146, %c0_147] : memref<2x32xf32, #tpu.memory_space<vmem>>, vector<2x32xf32>
    %384 = vector.extract_strided_slice %356 {offsets = [0, 0], sizes = [2, 32], strides = [1, 1]} : vector<2x128xf32> to vector<2x32xf32>
    %385 = arith.negf %384 : vector<2x32xf32>
    %386 = math.exp %385 : vector<2x32xf32>
    %cst_148 = arith.constant 1.000000e+00 : f32
    %387 = vector.broadcast %cst_148 : f32 to vector<2x32xf32>
    %388 = arith.addf %387, %386 : vector<2x32xf32>
    %389 = arith.divf %387, %388 : vector<2x32xf32>
    %390 = vector.extract_strided_slice %356 {offsets = [0, 32], sizes = [2, 32], strides = [1, 1]} : vector<2x128xf32> to vector<2x32xf32>
    %391 = arith.negf %390 : vector<2x32xf32>
    %392 = math.exp %391 : vector<2x32xf32>
    %cst_149 = arith.constant 1.000000e+00 : f32
    %393 = vector.broadcast %cst_149 : f32 to vector<2x32xf32>
    %394 = arith.addf %393, %392 : vector<2x32xf32>
    %395 = arith.divf %393, %394 : vector<2x32xf32>
    %396 = vector.extract_strided_slice %356 {offsets = [0, 64], sizes = [2, 32], strides = [1, 1]} : vector<2x128xf32> to vector<2x32xf32>
    %397 = math.tanh %396 : vector<2x32xf32>
    %398 = vector.extract_strided_slice %356 {offsets = [0, 96], sizes = [2, 32], strides = [1, 1]} : vector<2x128xf32> to vector<2x32xf32>
    %399 = arith.negf %398 : vector<2x32xf32>
    %400 = math.exp %399 : vector<2x32xf32>
    %cst_150 = arith.constant 1.000000e+00 : f32
    %401 = vector.broadcast %cst_150 : f32 to vector<2x32xf32>
    %402 = arith.addf %401, %400 : vector<2x32xf32>
    %403 = arith.divf %401, %402 : vector<2x32xf32>
    %404 = arith.mulf %395, %383 : vector<2x32xf32>
    %405 = arith.mulf %389, %397 : vector<2x32xf32>
    %406 = arith.addf %404, %405 : vector<2x32xf32>
    %407 = math.tanh %406 : vector<2x32xf32>
    %408 = arith.mulf %403, %407 : vector<2x32xf32>
    %409 = vector.broadcast %c3_i32 : i32 to vector<2x1xi32>
    %410 = arith.cmpi sgt, %13, %409 : vector<2x1xi32>
    %411 = vector.broadcast %341 : i32 to vector<2x1xi32>
    %412 = arith.cmpi sgt, %13, %411 : vector<2x1xi32>
    %c0_151 = arith.constant 0 : index
    %c0_152 = arith.constant 0 : index
    %413 = vector.load %arg8[%c0_151, %c0_152] : memref<2x32xf32, #tpu.memory_space<vmem>>, vector<2x32xf32>
    %414 = vector.shape_cast %410 : vector<2x1xi1> to vector<2x1xi1>
    %415 = vector.broadcast %414 : vector<2x1xi1> to vector<2x32xi1>
    %416 = arith.select %415, %380, %413 : vector<2x32xi1>, vector<2x32xf32>
    %c0_153 = arith.constant 0 : index
    %c0_154 = arith.constant 0 : index
    %417 = vector.load %arg8[%c0_153, %c0_154] : memref<2x32xf32, #tpu.memory_space<vmem>>, vector<2x32xf32>
    tpu.vector_store %arg8[%c0_153, %c0_154], %416 {strides = array<i32>} : memref<2x32xf32, #tpu.memory_space<vmem>>, vector<2x32xf32>,
    %c0_155 = arith.constant 0 : index
    %c0_156 = arith.constant 0 : index
    %418 = vector.load %arg9[%c0_155, %c0_156] : memref<2x32xf32, #tpu.memory_space<vmem>>, vector<2x32xf32>
    %419 = vector.shape_cast %412 : vector<2x1xi1> to vector<2x1xi1>
    %420 = vector.broadcast %419 : vector<2x1xi1> to vector<2x32xi1>
    %421 = arith.select %420, %406, %418 : vector<2x32xi1>, vector<2x32xf32>
    %c0_157 = arith.constant 0 : index
    %c0_158 = arith.constant 0 : index
    %422 = vector.load %arg9[%c0_157, %c0_158] : memref<2x32xf32, #tpu.memory_space<vmem>>, vector<2x32xf32>
    tpu.vector_store %arg9[%c0_157, %c0_158], %421 {strides = array<i32>} : memref<2x32xf32, #tpu.memory_space<vmem>>, vector<2x32xf32>,
    %c0_159 = arith.constant 0 : index
    %c0_160 = arith.constant 0 : index
    %423 = vector.load %arg7[%c0_159, %c0_160] : memref<2x64xf32, #tpu.memory_space<vmem>>, vector<2x64xf32>
    %424 = vector.extract_strided_slice %423 {offsets = [0, 0], sizes = [2, 32], strides = [1, 1]} : vector<2x64xf32> to vector<2x32xf32>
    %425 = vector.shape_cast %410 : vector<2x1xi1> to vector<2x1xi1>
    %426 = vector.broadcast %425 : vector<2x1xi1> to vector<2x32xi1>
    %427 = arith.select %426, %382, %424 : vector<2x32xi1>, vector<2x32xf32>
    %428 = vector.extract_strided_slice %423 {offsets = [0, 32], sizes = [2, 32], strides = [1, 1]} : vector<2x64xf32> to vector<2x32xf32>
    %429 = vector.shape_cast %412 : vector<2x1xi1> to vector<2x1xi1>
    %430 = vector.broadcast %429 : vector<2x1xi1> to vector<2x32xi1>
    %431 = arith.select %430, %408, %428 : vector<2x32xi1>, vector<2x32xf32>
    %432 = tpu.concatenate %427, %431 in 1 : vector<2x32xf32>, vector<2x32xf32> -> vector<2x64xf32>
    %c0_161 = arith.constant 0 : index
    %c0_162 = arith.constant 0 : index
    %433 = vector.load %arg7[%c0_161, %c0_162] : memref<2x64xf32, #tpu.memory_space<vmem>>, vector<2x64xf32>
    tpu.vector_store %arg7[%c0_161, %c0_162], %432 {strides = array<i32>} : memref<2x64xf32, #tpu.memory_space<vmem>>, vector<2x64xf32>,
    %cst_163 = arith.constant 0.000000e+00 : f32
    %434 = vector.shape_cast %410 : vector<2x1xi1> to vector<2x1xi1>
    %435 = vector.broadcast %434 : vector<2x1xi1> to vector<2x32xi1>
    %436 = vector.broadcast %cst_163 : f32 to vector<2x32xf32>
    %437 = arith.select %435, %382, %436 : vector<2x32xi1>, vector<2x32xf32>
    %438 = arith.index_cast %c3_i32 : i32 to index
    %c0_164 = arith.constant 0 : index
    %c0_165 = arith.constant 0 : index
    %439 = vector.load %arg10[%438, %c0_164, %c0_165] : memref<8x2x32xf32, #tpu.memory_space<vmem>>, vector<1x2x32xf32>
    %440 = vector.shape_cast %439 : vector<1x2x32xf32> to vector<2x32xf32>
    %441 = vector.shape_cast %437 : vector<2x32xf32> to vector<1x2x32xf32>
    tpu.vector_store %arg10[%438, %c0_164, %c0_165], %441 {strides = array<i32>} : memref<8x2x32xf32, #tpu.memory_space<vmem>>, vector<1x2x32xf32>,
    %cst_166 = arith.constant 0.000000e+00 : f32
    %442 = vector.shape_cast %412 : vector<2x1xi1> to vector<2x1xi1>
    %443 = vector.broadcast %442 : vector<2x1xi1> to vector<2x32xi1>
    %444 = vector.broadcast %cst_166 : f32 to vector<2x32xf32>
    %445 = arith.select %443, %408, %444 : vector<2x32xi1>, vector<2x32xf32>
    %446 = arith.index_cast %341 : i32 to index
    %c0_167 = arith.constant 0 : index
    %c0_168 = arith.constant 0 : index
    %447 = vector.load %arg11[%446, %c0_167, %c0_168] : memref<8x2x32xf32, #tpu.memory_space<vmem>>, vector<1x2x32xf32>
    %448 = vector.shape_cast %447 : vector<1x2x32xf32> to vector<2x32xf32>
    %449 = vector.shape_cast %445 : vector<2x32xf32> to vector<1x2x32xf32>
    tpu.vector_store %arg11[%446, %c0_167, %c0_168], %449 {strides = array<i32>} : memref<8x2x32xf32, #tpu.memory_space<vmem>>, vector<1x2x32xf32>,
    %c4_i32 = arith.constant 4 : i32
    %c7_i32_169 = arith.constant 7 : i32
    %450 = arith.subi %c7_i32_169, %c4_i32 : i32
    %c0_170 = arith.constant 0 : index
    %c0_171 = arith.constant 0 : index
    %451 = vector.load %arg7[%c0_170, %c0_171] : memref<2x64xf32, #tpu.memory_space<vmem>>, vector<2x64xf32>
    %c0_172 = arith.constant 0 : index
    %c0_173 = arith.constant 0 : index
    %452 = vector.load %arg3[%c0_172, %c0_173] : memref<64x256xf32, #tpu.memory_space<vmem>>, vector<64x256xf32>
    %cst_174 = arith.constant dense<0.000000e+00> : vector<2x256xf32>
    %453 = tpu.matmul %451, %452, %cst_174 {dimension_numbers = #tpu.dot_dimension_numbers<[1], [0], [0], [1], [0, 0, 1, 1], [], []>} : vector<2x64xf32>, vector<64x256xf32>, vector<2x256xf32> -> vector<2x256xf32>
    %c2_i32_175 = arith.constant 2 : i32
    %454 = arith.muli %c4_i32, %c2_i32_175 : i32
    %455 = arith.index_cast %454 : i32 to index
    %c0_176 = arith.constant 0 : index
    %456 = vector.load %arg6[%455, %c0_176] : memref<16x256xf32, #tpu.memory_space<vmem>>, vector<2x256xf32>
    %c2_i32_177 = arith.constant 2 : i32
    %457 = arith.muli %450, %c2_i32_177 : i32
    %458 = arith.index_cast %457 : i32 to index
    %c0_178 = arith.constant 0 : index
    %459 = vector.load %arg6[%458, %c0_178] : memref<16x256xf32, #tpu.memory_space<vmem>>, vector<2x256xf32>
    %460 = vector.extract_strided_slice %456 {offsets = [0, 0], sizes = [2, 128], strides = [1, 1]} : vector<2x256xf32> to vector<2x128xf32>
    %461 = vector.extract_strided_slice %453 {offsets = [0, 0], sizes = [2, 128], strides = [1, 1]} : vector<2x256xf32> to vector<2x128xf32>
    %462 = arith.addf %460, %461 : vector<2x128xf32>
    %463 = vector.extract_strided_slice %459 {offsets = [0, 128], sizes = [2, 128], strides = [1, 1]} : vector<2x256xf32> to vector<2x128xf32>
    %464 = vector.extract_strided_slice %453 {offsets = [0, 128], sizes = [2, 128], strides = [1, 1]} : vector<2x256xf32> to vector<2x128xf32>
    %465 = arith.addf %463, %464 : vector<2x128xf32>
    %c0_179 = arith.constant 0 : index
    %c0_180 = arith.constant 0 : index
    %466 = vector.load %arg8[%c0_179, %c0_180] : memref<2x32xf32, #tpu.memory_space<vmem>>, vector<2x32xf32>
    %467 = vector.extract_strided_slice %462 {offsets = [0, 0], sizes = [2, 32], strides = [1, 1]} : vector<2x128xf32> to vector<2x32xf32>
    %468 = arith.negf %467 : vector<2x32xf32>
    %469 = math.exp %468 : vector<2x32xf32>
    %cst_181 = arith.constant 1.000000e+00 : f32
    %470 = vector.broadcast %cst_181 : f32 to vector<2x32xf32>
    %471 = arith.addf %470, %469 : vector<2x32xf32>
    %472 = arith.divf %470, %471 : vector<2x32xf32>
    %473 = vector.extract_strided_slice %462 {offsets = [0, 32], sizes = [2, 32], strides = [1, 1]} : vector<2x128xf32> to vector<2x32xf32>
    %474 = arith.negf %473 : vector<2x32xf32>
    %475 = math.exp %474 : vector<2x32xf32>
    %cst_182 = arith.constant 1.000000e+00 : f32
    %476 = vector.broadcast %cst_182 : f32 to vector<2x32xf32>
    %477 = arith.addf %476, %475 : vector<2x32xf32>
    %478 = arith.divf %476, %477 : vector<2x32xf32>
    %479 = vector.extract_strided_slice %462 {offsets = [0, 64], sizes = [2, 32], strides = [1, 1]} : vector<2x128xf32> to vector<2x32xf32>
    %480 = math.tanh %479 : vector<2x32xf32>
    %481 = vector.extract_strided_slice %462 {offsets = [0, 96], sizes = [2, 32], strides = [1, 1]} : vector<2x128xf32> to vector<2x32xf32>
    %482 = arith.negf %481 : vector<2x32xf32>
    %483 = math.exp %482 : vector<2x32xf32>
    %cst_183 = arith.constant 1.000000e+00 : f32
    %484 = vector.broadcast %cst_183 : f32 to vector<2x32xf32>
    %485 = arith.addf %484, %483 : vector<2x32xf32>
    %486 = arith.divf %484, %485 : vector<2x32xf32>
    %487 = arith.mulf %478, %466 : vector<2x32xf32>
    %488 = arith.mulf %472, %480 : vector<2x32xf32>
    %489 = arith.addf %487, %488 : vector<2x32xf32>
    %490 = math.tanh %489 : vector<2x32xf32>
    %491 = arith.mulf %486, %490 : vector<2x32xf32>
    %c0_184 = arith.constant 0 : index
    %c0_185 = arith.constant 0 : index
    %492 = vector.load %arg9[%c0_184, %c0_185] : memref<2x32xf32, #tpu.memory_space<vmem>>, vector<2x32xf32>
    %493 = vector.extract_strided_slice %465 {offsets = [0, 0], sizes = [2, 32], strides = [1, 1]} : vector<2x128xf32> to vector<2x32xf32>
    %494 = arith.negf %493 : vector<2x32xf32>
    %495 = math.exp %494 : vector<2x32xf32>
    %cst_186 = arith.constant 1.000000e+00 : f32
    %496 = vector.broadcast %cst_186 : f32 to vector<2x32xf32>
    %497 = arith.addf %496, %495 : vector<2x32xf32>
    %498 = arith.divf %496, %497 : vector<2x32xf32>
    %499 = vector.extract_strided_slice %465 {offsets = [0, 32], sizes = [2, 32], strides = [1, 1]} : vector<2x128xf32> to vector<2x32xf32>
    %500 = arith.negf %499 : vector<2x32xf32>
    %501 = math.exp %500 : vector<2x32xf32>
    %cst_187 = arith.constant 1.000000e+00 : f32
    %502 = vector.broadcast %cst_187 : f32 to vector<2x32xf32>
    %503 = arith.addf %502, %501 : vector<2x32xf32>
    %504 = arith.divf %502, %503 : vector<2x32xf32>
    %505 = vector.extract_strided_slice %465 {offsets = [0, 64], sizes = [2, 32], strides = [1, 1]} : vector<2x128xf32> to vector<2x32xf32>
    %506 = math.tanh %505 : vector<2x32xf32>
    %507 = vector.extract_strided_slice %465 {offsets = [0, 96], sizes = [2, 32], strides = [1, 1]} : vector<2x128xf32> to vector<2x32xf32>
    %508 = arith.negf %507 : vector<2x32xf32>
    %509 = math.exp %508 : vector<2x32xf32>
    %cst_188 = arith.constant 1.000000e+00 : f32
    %510 = vector.broadcast %cst_188 : f32 to vector<2x32xf32>
    %511 = arith.addf %510, %509 : vector<2x32xf32>
    %512 = arith.divf %510, %511 : vector<2x32xf32>
    %513 = arith.mulf %504, %492 : vector<2x32xf32>
    %514 = arith.mulf %498, %506 : vector<2x32xf32>
    %515 = arith.addf %513, %514 : vector<2x32xf32>
    %516 = math.tanh %515 : vector<2x32xf32>
    %517 = arith.mulf %512, %516 : vector<2x32xf32>
    %518 = vector.broadcast %c4_i32 : i32 to vector<2x1xi32>
    %519 = arith.cmpi sgt, %13, %518 : vector<2x1xi32>
    %520 = vector.broadcast %450 : i32 to vector<2x1xi32>
    %521 = arith.cmpi sgt, %13, %520 : vector<2x1xi32>
    %c0_189 = arith.constant 0 : index
    %c0_190 = arith.constant 0 : index
    %522 = vector.load %arg8[%c0_189, %c0_190] : memref<2x32xf32, #tpu.memory_space<vmem>>, vector<2x32xf32>
    %523 = vector.shape_cast %519 : vector<2x1xi1> to vector<2x1xi1>
    %524 = vector.broadcast %523 : vector<2x1xi1> to vector<2x32xi1>
    %525 = arith.select %524, %489, %522 : vector<2x32xi1>, vector<2x32xf32>
    %c0_191 = arith.constant 0 : index
    %c0_192 = arith.constant 0 : index
    %526 = vector.load %arg8[%c0_191, %c0_192] : memref<2x32xf32, #tpu.memory_space<vmem>>, vector<2x32xf32>
    tpu.vector_store %arg8[%c0_191, %c0_192], %525 {strides = array<i32>} : memref<2x32xf32, #tpu.memory_space<vmem>>, vector<2x32xf32>,
    %c0_193 = arith.constant 0 : index
    %c0_194 = arith.constant 0 : index
    %527 = vector.load %arg9[%c0_193, %c0_194] : memref<2x32xf32, #tpu.memory_space<vmem>>, vector<2x32xf32>
    %528 = vector.shape_cast %521 : vector<2x1xi1> to vector<2x1xi1>
    %529 = vector.broadcast %528 : vector<2x1xi1> to vector<2x32xi1>
    %530 = arith.select %529, %515, %527 : vector<2x32xi1>, vector<2x32xf32>
    %c0_195 = arith.constant 0 : index
    %c0_196 = arith.constant 0 : index
    %531 = vector.load %arg9[%c0_195, %c0_196] : memref<2x32xf32, #tpu.memory_space<vmem>>, vector<2x32xf32>
    tpu.vector_store %arg9[%c0_195, %c0_196], %530 {strides = array<i32>} : memref<2x32xf32, #tpu.memory_space<vmem>>, vector<2x32xf32>,
    %c0_197 = arith.constant 0 : index
    %c0_198 = arith.constant 0 : index
    %532 = vector.load %arg7[%c0_197, %c0_198] : memref<2x64xf32, #tpu.memory_space<vmem>>, vector<2x64xf32>
    %533 = vector.extract_strided_slice %532 {offsets = [0, 0], sizes = [2, 32], strides = [1, 1]} : vector<2x64xf32> to vector<2x32xf32>
    %534 = vector.shape_cast %519 : vector<2x1xi1> to vector<2x1xi1>
    %535 = vector.broadcast %534 : vector<2x1xi1> to vector<2x32xi1>
    %536 = arith.select %535, %491, %533 : vector<2x32xi1>, vector<2x32xf32>
    %537 = vector.extract_strided_slice %532 {offsets = [0, 32], sizes = [2, 32], strides = [1, 1]} : vector<2x64xf32> to vector<2x32xf32>
    %538 = vector.shape_cast %521 : vector<2x1xi1> to vector<2x1xi1>
    %539 = vector.broadcast %538 : vector<2x1xi1> to vector<2x32xi1>
    %540 = arith.select %539, %517, %537 : vector<2x32xi1>, vector<2x32xf32>
    %541 = tpu.concatenate %536, %540 in 1 : vector<2x32xf32>, vector<2x32xf32> -> vector<2x64xf32>
    %c0_199 = arith.constant 0 : index
    %c0_200 = arith.constant 0 : index
    %542 = vector.load %arg7[%c0_199, %c0_200] : memref<2x64xf32, #tpu.memory_space<vmem>>, vector<2x64xf32>
    tpu.vector_store %arg7[%c0_199, %c0_200], %541 {strides = array<i32>} : memref<2x64xf32, #tpu.memory_space<vmem>>, vector<2x64xf32>,
    %cst_201 = arith.constant 0.000000e+00 : f32
    %543 = vector.shape_cast %519 : vector<2x1xi1> to vector<2x1xi1>
    %544 = vector.broadcast %543 : vector<2x1xi1> to vector<2x32xi1>
    %545 = vector.broadcast %cst_201 : f32 to vector<2x32xf32>
    %546 = arith.select %544, %491, %545 : vector<2x32xi1>, vector<2x32xf32>
    %547 = arith.index_cast %c4_i32 : i32 to index
    %c0_202 = arith.constant 0 : index
    %c0_203 = arith.constant 0 : index
    %548 = vector.load %arg10[%547, %c0_202, %c0_203] : memref<8x2x32xf32, #tpu.memory_space<vmem>>, vector<1x2x32xf32>
    %549 = vector.shape_cast %548 : vector<1x2x32xf32> to vector<2x32xf32>
    %550 = vector.shape_cast %546 : vector<2x32xf32> to vector<1x2x32xf32>
    tpu.vector_store %arg10[%547, %c0_202, %c0_203], %550 {strides = array<i32>} : memref<8x2x32xf32, #tpu.memory_space<vmem>>, vector<1x2x32xf32>,
    %cst_204 = arith.constant 0.000000e+00 : f32
    %551 = vector.shape_cast %521 : vector<2x1xi1> to vector<2x1xi1>
    %552 = vector.broadcast %551 : vector<2x1xi1> to vector<2x32xi1>
    %553 = vector.broadcast %cst_204 : f32 to vector<2x32xf32>
    %554 = arith.select %552, %517, %553 : vector<2x32xi1>, vector<2x32xf32>
    %555 = arith.index_cast %450 : i32 to index
    %c0_205 = arith.constant 0 : index
    %c0_206 = arith.constant 0 : index
    %556 = vector.load %arg11[%555, %c0_205, %c0_206] : memref<8x2x32xf32, #tpu.memory_space<vmem>>, vector<1x2x32xf32>
    %557 = vector.shape_cast %556 : vector<1x2x32xf32> to vector<2x32xf32>
    %558 = vector.shape_cast %554 : vector<2x32xf32> to vector<1x2x32xf32>
    tpu.vector_store %arg11[%555, %c0_205, %c0_206], %558 {strides = array<i32>} : memref<8x2x32xf32, #tpu.memory_space<vmem>>, vector<1x2x32xf32>,
    %c5_i32 = arith.constant 5 : i32
    %c7_i32_207 = arith.constant 7 : i32
    %559 = arith.subi %c7_i32_207, %c5_i32 : i32
    %c0_208 = arith.constant 0 : index
    %c0_209 = arith.constant 0 : index
    %560 = vector.load %arg7[%c0_208, %c0_209] : memref<2x64xf32, #tpu.memory_space<vmem>>, vector<2x64xf32>
    %c0_210 = arith.constant 0 : index
    %c0_211 = arith.constant 0 : index
    %561 = vector.load %arg3[%c0_210, %c0_211] : memref<64x256xf32, #tpu.memory_space<vmem>>, vector<64x256xf32>
    %cst_212 = arith.constant dense<0.000000e+00> : vector<2x256xf32>
    %562 = tpu.matmul %560, %561, %cst_212 {dimension_numbers = #tpu.dot_dimension_numbers<[1], [0], [0], [1], [0, 0, 1, 1], [], []>} : vector<2x64xf32>, vector<64x256xf32>, vector<2x256xf32> -> vector<2x256xf32>
    %c2_i32_213 = arith.constant 2 : i32
    %563 = arith.muli %c5_i32, %c2_i32_213 : i32
    %564 = arith.index_cast %563 : i32 to index
    %c0_214 = arith.constant 0 : index
    %565 = vector.load %arg6[%564, %c0_214] : memref<16x256xf32, #tpu.memory_space<vmem>>, vector<2x256xf32>
    %c2_i32_215 = arith.constant 2 : i32
    %566 = arith.muli %559, %c2_i32_215 : i32
    %567 = arith.index_cast %566 : i32 to index
    %c0_216 = arith.constant 0 : index
    %568 = vector.load %arg6[%567, %c0_216] : memref<16x256xf32, #tpu.memory_space<vmem>>, vector<2x256xf32>
    %569 = vector.extract_strided_slice %565 {offsets = [0, 0], sizes = [2, 128], strides = [1, 1]} : vector<2x256xf32> to vector<2x128xf32>
    %570 = vector.extract_strided_slice %562 {offsets = [0, 0], sizes = [2, 128], strides = [1, 1]} : vector<2x256xf32> to vector<2x128xf32>
    %571 = arith.addf %569, %570 : vector<2x128xf32>
    %572 = vector.extract_strided_slice %568 {offsets = [0, 128], sizes = [2, 128], strides = [1, 1]} : vector<2x256xf32> to vector<2x128xf32>
    %573 = vector.extract_strided_slice %562 {offsets = [0, 128], sizes = [2, 128], strides = [1, 1]} : vector<2x256xf32> to vector<2x128xf32>
    %574 = arith.addf %572, %573 : vector<2x128xf32>
    %c0_217 = arith.constant 0 : index
    %c0_218 = arith.constant 0 : index
    %575 = vector.load %arg8[%c0_217, %c0_218] : memref<2x32xf32, #tpu.memory_space<vmem>>, vector<2x32xf32>
    %576 = vector.extract_strided_slice %571 {offsets = [0, 0], sizes = [2, 32], strides = [1, 1]} : vector<2x128xf32> to vector<2x32xf32>
    %577 = arith.negf %576 : vector<2x32xf32>
    %578 = math.exp %577 : vector<2x32xf32>
    %cst_219 = arith.constant 1.000000e+00 : f32
    %579 = vector.broadcast %cst_219 : f32 to vector<2x32xf32>
    %580 = arith.addf %579, %578 : vector<2x32xf32>
    %581 = arith.divf %579, %580 : vector<2x32xf32>
    %582 = vector.extract_strided_slice %571 {offsets = [0, 32], sizes = [2, 32], strides = [1, 1]} : vector<2x128xf32> to vector<2x32xf32>
    %583 = arith.negf %582 : vector<2x32xf32>
    %584 = math.exp %583 : vector<2x32xf32>
    %cst_220 = arith.constant 1.000000e+00 : f32
    %585 = vector.broadcast %cst_220 : f32 to vector<2x32xf32>
    %586 = arith.addf %585, %584 : vector<2x32xf32>
    %587 = arith.divf %585, %586 : vector<2x32xf32>
    %588 = vector.extract_strided_slice %571 {offsets = [0, 64], sizes = [2, 32], strides = [1, 1]} : vector<2x128xf32> to vector<2x32xf32>
    %589 = math.tanh %588 : vector<2x32xf32>
    %590 = vector.extract_strided_slice %571 {offsets = [0, 96], sizes = [2, 32], strides = [1, 1]} : vector<2x128xf32> to vector<2x32xf32>
    %591 = arith.negf %590 : vector<2x32xf32>
    %592 = math.exp %591 : vector<2x32xf32>
    %cst_221 = arith.constant 1.000000e+00 : f32
    %593 = vector.broadcast %cst_221 : f32 to vector<2x32xf32>
    %594 = arith.addf %593, %592 : vector<2x32xf32>
    %595 = arith.divf %593, %594 : vector<2x32xf32>
    %596 = arith.mulf %587, %575 : vector<2x32xf32>
    %597 = arith.mulf %581, %589 : vector<2x32xf32>
    %598 = arith.addf %596, %597 : vector<2x32xf32>
    %599 = math.tanh %598 : vector<2x32xf32>
    %600 = arith.mulf %595, %599 : vector<2x32xf32>
    %c0_222 = arith.constant 0 : index
    %c0_223 = arith.constant 0 : index
    %601 = vector.load %arg9[%c0_222, %c0_223] : memref<2x32xf32, #tpu.memory_space<vmem>>, vector<2x32xf32>
    %602 = vector.extract_strided_slice %574 {offsets = [0, 0], sizes = [2, 32], strides = [1, 1]} : vector<2x128xf32> to vector<2x32xf32>
    %603 = arith.negf %602 : vector<2x32xf32>
    %604 = math.exp %603 : vector<2x32xf32>
    %cst_224 = arith.constant 1.000000e+00 : f32
    %605 = vector.broadcast %cst_224 : f32 to vector<2x32xf32>
    %606 = arith.addf %605, %604 : vector<2x32xf32>
    %607 = arith.divf %605, %606 : vector<2x32xf32>
    %608 = vector.extract_strided_slice %574 {offsets = [0, 32], sizes = [2, 32], strides = [1, 1]} : vector<2x128xf32> to vector<2x32xf32>
    %609 = arith.negf %608 : vector<2x32xf32>
    %610 = math.exp %609 : vector<2x32xf32>
    %cst_225 = arith.constant 1.000000e+00 : f32
    %611 = vector.broadcast %cst_225 : f32 to vector<2x32xf32>
    %612 = arith.addf %611, %610 : vector<2x32xf32>
    %613 = arith.divf %611, %612 : vector<2x32xf32>
    %614 = vector.extract_strided_slice %574 {offsets = [0, 64], sizes = [2, 32], strides = [1, 1]} : vector<2x128xf32> to vector<2x32xf32>
    %615 = math.tanh %614 : vector<2x32xf32>
    %616 = vector.extract_strided_slice %574 {offsets = [0, 96], sizes = [2, 32], strides = [1, 1]} : vector<2x128xf32> to vector<2x32xf32>
    %617 = arith.negf %616 : vector<2x32xf32>
    %618 = math.exp %617 : vector<2x32xf32>
    %cst_226 = arith.constant 1.000000e+00 : f32
    %619 = vector.broadcast %cst_226 : f32 to vector<2x32xf32>
    %620 = arith.addf %619, %618 : vector<2x32xf32>
    %621 = arith.divf %619, %620 : vector<2x32xf32>
    %622 = arith.mulf %613, %601 : vector<2x32xf32>
    %623 = arith.mulf %607, %615 : vector<2x32xf32>
    %624 = arith.addf %622, %623 : vector<2x32xf32>
    %625 = math.tanh %624 : vector<2x32xf32>
    %626 = arith.mulf %621, %625 : vector<2x32xf32>
    %627 = vector.broadcast %c5_i32 : i32 to vector<2x1xi32>
    %628 = arith.cmpi sgt, %13, %627 : vector<2x1xi32>
    %629 = vector.broadcast %559 : i32 to vector<2x1xi32>
    %630 = arith.cmpi sgt, %13, %629 : vector<2x1xi32>
    %c0_227 = arith.constant 0 : index
    %c0_228 = arith.constant 0 : index
    %631 = vector.load %arg8[%c0_227, %c0_228] : memref<2x32xf32, #tpu.memory_space<vmem>>, vector<2x32xf32>
    %632 = vector.shape_cast %628 : vector<2x1xi1> to vector<2x1xi1>
    %633 = vector.broadcast %632 : vector<2x1xi1> to vector<2x32xi1>
    %634 = arith.select %633, %598, %631 : vector<2x32xi1>, vector<2x32xf32>
    %c0_229 = arith.constant 0 : index
    %c0_230 = arith.constant 0 : index
    %635 = vector.load %arg8[%c0_229, %c0_230] : memref<2x32xf32, #tpu.memory_space<vmem>>, vector<2x32xf32>
    tpu.vector_store %arg8[%c0_229, %c0_230], %634 {strides = array<i32>} : memref<2x32xf32, #tpu.memory_space<vmem>>, vector<2x32xf32>,
    %c0_231 = arith.constant 0 : index
    %c0_232 = arith.constant 0 : index
    %636 = vector.load %arg9[%c0_231, %c0_232] : memref<2x32xf32, #tpu.memory_space<vmem>>, vector<2x32xf32>
    %637 = vector.shape_cast %630 : vector<2x1xi1> to vector<2x1xi1>
    %638 = vector.broadcast %637 : vector<2x1xi1> to vector<2x32xi1>
    %639 = arith.select %638, %624, %636 : vector<2x32xi1>, vector<2x32xf32>
    %c0_233 = arith.constant 0 : index
    %c0_234 = arith.constant 0 : index
    %640 = vector.load %arg9[%c0_233, %c0_234] : memref<2x32xf32, #tpu.memory_space<vmem>>, vector<2x32xf32>
    tpu.vector_store %arg9[%c0_233, %c0_234], %639 {strides = array<i32>} : memref<2x32xf32, #tpu.memory_space<vmem>>, vector<2x32xf32>,
    %c0_235 = arith.constant 0 : index
    %c0_236 = arith.constant 0 : index
    %641 = vector.load %arg7[%c0_235, %c0_236] : memref<2x64xf32, #tpu.memory_space<vmem>>, vector<2x64xf32>
    %642 = vector.extract_strided_slice %641 {offsets = [0, 0], sizes = [2, 32], strides = [1, 1]} : vector<2x64xf32> to vector<2x32xf32>
    %643 = vector.shape_cast %628 : vector<2x1xi1> to vector<2x1xi1>
    %644 = vector.broadcast %643 : vector<2x1xi1> to vector<2x32xi1>
    %645 = arith.select %644, %600, %642 : vector<2x32xi1>, vector<2x32xf32>
    %646 = vector.extract_strided_slice %641 {offsets = [0, 32], sizes = [2, 32], strides = [1, 1]} : vector<2x64xf32> to vector<2x32xf32>
    %647 = vector.shape_cast %630 : vector<2x1xi1> to vector<2x1xi1>
    %648 = vector.broadcast %647 : vector<2x1xi1> to vector<2x32xi1>
    %649 = arith.select %648, %626, %646 : vector<2x32xi1>, vector<2x32xf32>
    %650 = tpu.concatenate %645, %649 in 1 : vector<2x32xf32>, vector<2x32xf32> -> vector<2x64xf32>
    %c0_237 = arith.constant 0 : index
    %c0_238 = arith.constant 0 : index
    %651 = vector.load %arg7[%c0_237, %c0_238] : memref<2x64xf32, #tpu.memory_space<vmem>>, vector<2x64xf32>
    tpu.vector_store %arg7[%c0_237, %c0_238], %650 {strides = array<i32>} : memref<2x64xf32, #tpu.memory_space<vmem>>, vector<2x64xf32>,
    %cst_239 = arith.constant 0.000000e+00 : f32
    %652 = vector.shape_cast %628 : vector<2x1xi1> to vector<2x1xi1>
    %653 = vector.broadcast %652 : vector<2x1xi1> to vector<2x32xi1>
    %654 = vector.broadcast %cst_239 : f32 to vector<2x32xf32>
    %655 = arith.select %653, %600, %654 : vector<2x32xi1>, vector<2x32xf32>
    %656 = arith.index_cast %c5_i32 : i32 to index
    %c0_240 = arith.constant 0 : index
    %c0_241 = arith.constant 0 : index
    %657 = vector.load %arg10[%656, %c0_240, %c0_241] : memref<8x2x32xf32, #tpu.memory_space<vmem>>, vector<1x2x32xf32>
    %658 = vector.shape_cast %657 : vector<1x2x32xf32> to vector<2x32xf32>
    %659 = vector.shape_cast %655 : vector<2x32xf32> to vector<1x2x32xf32>
    tpu.vector_store %arg10[%656, %c0_240, %c0_241], %659 {strides = array<i32>} : memref<8x2x32xf32, #tpu.memory_space<vmem>>, vector<1x2x32xf32>,
    %cst_242 = arith.constant 0.000000e+00 : f32
    %660 = vector.shape_cast %630 : vector<2x1xi1> to vector<2x1xi1>
    %661 = vector.broadcast %660 : vector<2x1xi1> to vector<2x32xi1>
    %662 = vector.broadcast %cst_242 : f32 to vector<2x32xf32>
    %663 = arith.select %661, %626, %662 : vector<2x32xi1>, vector<2x32xf32>
    %664 = arith.index_cast %559 : i32 to index
    %c0_243 = arith.constant 0 : index
    %c0_244 = arith.constant 0 : index
    %665 = vector.load %arg11[%664, %c0_243, %c0_244] : memref<8x2x32xf32, #tpu.memory_space<vmem>>, vector<1x2x32xf32>
    %666 = vector.shape_cast %665 : vector<1x2x32xf32> to vector<2x32xf32>
    %667 = vector.shape_cast %663 : vector<2x32xf32> to vector<1x2x32xf32>
    tpu.vector_store %arg11[%664, %c0_243, %c0_244], %667 {strides = array<i32>} : memref<8x2x32xf32, #tpu.memory_space<vmem>>, vector<1x2x32xf32>,
    %c6_i32 = arith.constant 6 : i32
    %c7_i32_245 = arith.constant 7 : i32
    %668 = arith.subi %c7_i32_245, %c6_i32 : i32
    %c0_246 = arith.constant 0 : index
    %c0_247 = arith.constant 0 : index
    %669 = vector.load %arg7[%c0_246, %c0_247] : memref<2x64xf32, #tpu.memory_space<vmem>>, vector<2x64xf32>
    %c0_248 = arith.constant 0 : index
    %c0_249 = arith.constant 0 : index
    %670 = vector.load %arg3[%c0_248, %c0_249] : memref<64x256xf32, #tpu.memory_space<vmem>>, vector<64x256xf32>
    %cst_250 = arith.constant dense<0.000000e+00> : vector<2x256xf32>
    %671 = tpu.matmul %669, %670, %cst_250 {dimension_numbers = #tpu.dot_dimension_numbers<[1], [0], [0], [1], [0, 0, 1, 1], [], []>} : vector<2x64xf32>, vector<64x256xf32>, vector<2x256xf32> -> vector<2x256xf32>
    %c2_i32_251 = arith.constant 2 : i32
    %672 = arith.muli %c6_i32, %c2_i32_251 : i32
    %673 = arith.index_cast %672 : i32 to index
    %c0_252 = arith.constant 0 : index
    %674 = vector.load %arg6[%673, %c0_252] : memref<16x256xf32, #tpu.memory_space<vmem>>, vector<2x256xf32>
    %c2_i32_253 = arith.constant 2 : i32
    %675 = arith.muli %668, %c2_i32_253 : i32
    %676 = arith.index_cast %675 : i32 to index
    %c0_254 = arith.constant 0 : index
    %677 = vector.load %arg6[%676, %c0_254] : memref<16x256xf32, #tpu.memory_space<vmem>>, vector<2x256xf32>
    %678 = vector.extract_strided_slice %674 {offsets = [0, 0], sizes = [2, 128], strides = [1, 1]} : vector<2x256xf32> to vector<2x128xf32>
    %679 = vector.extract_strided_slice %671 {offsets = [0, 0], sizes = [2, 128], strides = [1, 1]} : vector<2x256xf32> to vector<2x128xf32>
    %680 = arith.addf %678, %679 : vector<2x128xf32>
    %681 = vector.extract_strided_slice %677 {offsets = [0, 128], sizes = [2, 128], strides = [1, 1]} : vector<2x256xf32> to vector<2x128xf32>
    %682 = vector.extract_strided_slice %671 {offsets = [0, 128], sizes = [2, 128], strides = [1, 1]} : vector<2x256xf32> to vector<2x128xf32>
    %683 = arith.addf %681, %682 : vector<2x128xf32>
    %c0_255 = arith.constant 0 : index
    %c0_256 = arith.constant 0 : index
    %684 = vector.load %arg8[%c0_255, %c0_256] : memref<2x32xf32, #tpu.memory_space<vmem>>, vector<2x32xf32>
    %685 = vector.extract_strided_slice %680 {offsets = [0, 0], sizes = [2, 32], strides = [1, 1]} : vector<2x128xf32> to vector<2x32xf32>
    %686 = arith.negf %685 : vector<2x32xf32>
    %687 = math.exp %686 : vector<2x32xf32>
    %cst_257 = arith.constant 1.000000e+00 : f32
    %688 = vector.broadcast %cst_257 : f32 to vector<2x32xf32>
    %689 = arith.addf %688, %687 : vector<2x32xf32>
    %690 = arith.divf %688, %689 : vector<2x32xf32>
    %691 = vector.extract_strided_slice %680 {offsets = [0, 32], sizes = [2, 32], strides = [1, 1]} : vector<2x128xf32> to vector<2x32xf32>
    %692 = arith.negf %691 : vector<2x32xf32>
    %693 = math.exp %692 : vector<2x32xf32>
    %cst_258 = arith.constant 1.000000e+00 : f32
    %694 = vector.broadcast %cst_258 : f32 to vector<2x32xf32>
    %695 = arith.addf %694, %693 : vector<2x32xf32>
    %696 = arith.divf %694, %695 : vector<2x32xf32>
    %697 = vector.extract_strided_slice %680 {offsets = [0, 64], sizes = [2, 32], strides = [1, 1]} : vector<2x128xf32> to vector<2x32xf32>
    %698 = math.tanh %697 : vector<2x32xf32>
    %699 = vector.extract_strided_slice %680 {offsets = [0, 96], sizes = [2, 32], strides = [1, 1]} : vector<2x128xf32> to vector<2x32xf32>
    %700 = arith.negf %699 : vector<2x32xf32>
    %701 = math.exp %700 : vector<2x32xf32>
    %cst_259 = arith.constant 1.000000e+00 : f32
    %702 = vector.broadcast %cst_259 : f32 to vector<2x32xf32>
    %703 = arith.addf %702, %701 : vector<2x32xf32>
    %704 = arith.divf %702, %703 : vector<2x32xf32>
    %705 = arith.mulf %696, %684 : vector<2x32xf32>
    %706 = arith.mulf %690, %698 : vector<2x32xf32>
    %707 = arith.addf %705, %706 : vector<2x32xf32>
    %708 = math.tanh %707 : vector<2x32xf32>
    %709 = arith.mulf %704, %708 : vector<2x32xf32>
    %c0_260 = arith.constant 0 : index
    %c0_261 = arith.constant 0 : index
    %710 = vector.load %arg9[%c0_260, %c0_261] : memref<2x32xf32, #tpu.memory_space<vmem>>, vector<2x32xf32>
    %711 = vector.extract_strided_slice %683 {offsets = [0, 0], sizes = [2, 32], strides = [1, 1]} : vector<2x128xf32> to vector<2x32xf32>
    %712 = arith.negf %711 : vector<2x32xf32>
    %713 = math.exp %712 : vector<2x32xf32>
    %cst_262 = arith.constant 1.000000e+00 : f32
    %714 = vector.broadcast %cst_262 : f32 to vector<2x32xf32>
    %715 = arith.addf %714, %713 : vector<2x32xf32>
    %716 = arith.divf %714, %715 : vector<2x32xf32>
    %717 = vector.extract_strided_slice %683 {offsets = [0, 32], sizes = [2, 32], strides = [1, 1]} : vector<2x128xf32> to vector<2x32xf32>
    %718 = arith.negf %717 : vector<2x32xf32>
    %719 = math.exp %718 : vector<2x32xf32>
    %cst_263 = arith.constant 1.000000e+00 : f32
    %720 = vector.broadcast %cst_263 : f32 to vector<2x32xf32>
    %721 = arith.addf %720, %719 : vector<2x32xf32>
    %722 = arith.divf %720, %721 : vector<2x32xf32>
    %723 = vector.extract_strided_slice %683 {offsets = [0, 64], sizes = [2, 32], strides = [1, 1]} : vector<2x128xf32> to vector<2x32xf32>
    %724 = math.tanh %723 : vector<2x32xf32>
    %725 = vector.extract_strided_slice %683 {offsets = [0, 96], sizes = [2, 32], strides = [1, 1]} : vector<2x128xf32> to vector<2x32xf32>
    %726 = arith.negf %725 : vector<2x32xf32>
    %727 = math.exp %726 : vector<2x32xf32>
    %cst_264 = arith.constant 1.000000e+00 : f32
    %728 = vector.broadcast %cst_264 : f32 to vector<2x32xf32>
    %729 = arith.addf %728, %727 : vector<2x32xf32>
    %730 = arith.divf %728, %729 : vector<2x32xf32>
    %731 = arith.mulf %722, %710 : vector<2x32xf32>
    %732 = arith.mulf %716, %724 : vector<2x32xf32>
    %733 = arith.addf %731, %732 : vector<2x32xf32>
    %734 = math.tanh %733 : vector<2x32xf32>
    %735 = arith.mulf %730, %734 : vector<2x32xf32>
    %736 = vector.broadcast %c6_i32 : i32 to vector<2x1xi32>
    %737 = arith.cmpi sgt, %13, %736 : vector<2x1xi32>
    %738 = vector.broadcast %668 : i32 to vector<2x1xi32>
    %739 = arith.cmpi sgt, %13, %738 : vector<2x1xi32>
    %c0_265 = arith.constant 0 : index
    %c0_266 = arith.constant 0 : index
    %740 = vector.load %arg8[%c0_265, %c0_266] : memref<2x32xf32, #tpu.memory_space<vmem>>, vector<2x32xf32>
    %741 = vector.shape_cast %737 : vector<2x1xi1> to vector<2x1xi1>
    %742 = vector.broadcast %741 : vector<2x1xi1> to vector<2x32xi1>
    %743 = arith.select %742, %707, %740 : vector<2x32xi1>, vector<2x32xf32>
    %c0_267 = arith.constant 0 : index
    %c0_268 = arith.constant 0 : index
    %744 = vector.load %arg8[%c0_267, %c0_268] : memref<2x32xf32, #tpu.memory_space<vmem>>, vector<2x32xf32>
    tpu.vector_store %arg8[%c0_267, %c0_268], %743 {strides = array<i32>} : memref<2x32xf32, #tpu.memory_space<vmem>>, vector<2x32xf32>,
    %c0_269 = arith.constant 0 : index
    %c0_270 = arith.constant 0 : index
    %745 = vector.load %arg9[%c0_269, %c0_270] : memref<2x32xf32, #tpu.memory_space<vmem>>, vector<2x32xf32>
    %746 = vector.shape_cast %739 : vector<2x1xi1> to vector<2x1xi1>
    %747 = vector.broadcast %746 : vector<2x1xi1> to vector<2x32xi1>
    %748 = arith.select %747, %733, %745 : vector<2x32xi1>, vector<2x32xf32>
    %c0_271 = arith.constant 0 : index
    %c0_272 = arith.constant 0 : index
    %749 = vector.load %arg9[%c0_271, %c0_272] : memref<2x32xf32, #tpu.memory_space<vmem>>, vector<2x32xf32>
    tpu.vector_store %arg9[%c0_271, %c0_272], %748 {strides = array<i32>} : memref<2x32xf32, #tpu.memory_space<vmem>>, vector<2x32xf32>,
    %c0_273 = arith.constant 0 : index
    %c0_274 = arith.constant 0 : index
    %750 = vector.load %arg7[%c0_273, %c0_274] : memref<2x64xf32, #tpu.memory_space<vmem>>, vector<2x64xf32>
    %751 = vector.extract_strided_slice %750 {offsets = [0, 0], sizes = [2, 32], strides = [1, 1]} : vector<2x64xf32> to vector<2x32xf32>
    %752 = vector.shape_cast %737 : vector<2x1xi1> to vector<2x1xi1>
    %753 = vector.broadcast %752 : vector<2x1xi1> to vector<2x32xi1>
    %754 = arith.select %753, %709, %751 : vector<2x32xi1>, vector<2x32xf32>
    %755 = vector.extract_strided_slice %750 {offsets = [0, 32], sizes = [2, 32], strides = [1, 1]} : vector<2x64xf32> to vector<2x32xf32>
    %756 = vector.shape_cast %739 : vector<2x1xi1> to vector<2x1xi1>
    %757 = vector.broadcast %756 : vector<2x1xi1> to vector<2x32xi1>
    %758 = arith.select %757, %735, %755 : vector<2x32xi1>, vector<2x32xf32>
    %759 = tpu.concatenate %754, %758 in 1 : vector<2x32xf32>, vector<2x32xf32> -> vector<2x64xf32>
    %c0_275 = arith.constant 0 : index
    %c0_276 = arith.constant 0 : index
    %760 = vector.load %arg7[%c0_275, %c0_276] : memref<2x64xf32, #tpu.memory_space<vmem>>, vector<2x64xf32>
    tpu.vector_store %arg7[%c0_275, %c0_276], %759 {strides = array<i32>} : memref<2x64xf32, #tpu.memory_space<vmem>>, vector<2x64xf32>,
    %cst_277 = arith.constant 0.000000e+00 : f32
    %761 = vector.shape_cast %737 : vector<2x1xi1> to vector<2x1xi1>
    %762 = vector.broadcast %761 : vector<2x1xi1> to vector<2x32xi1>
    %763 = vector.broadcast %cst_277 : f32 to vector<2x32xf32>
    %764 = arith.select %762, %709, %763 : vector<2x32xi1>, vector<2x32xf32>
    %765 = arith.index_cast %c6_i32 : i32 to index
    %c0_278 = arith.constant 0 : index
    %c0_279 = arith.constant 0 : index
    %766 = vector.load %arg10[%765, %c0_278, %c0_279] : memref<8x2x32xf32, #tpu.memory_space<vmem>>, vector<1x2x32xf32>
    %767 = vector.shape_cast %766 : vector<1x2x32xf32> to vector<2x32xf32>
    %768 = vector.shape_cast %764 : vector<2x32xf32> to vector<1x2x32xf32>
    tpu.vector_store %arg10[%765, %c0_278, %c0_279], %768 {strides = array<i32>} : memref<8x2x32xf32, #tpu.memory_space<vmem>>, vector<1x2x32xf32>,
    %cst_280 = arith.constant 0.000000e+00 : f32
    %769 = vector.shape_cast %739 : vector<2x1xi1> to vector<2x1xi1>
    %770 = vector.broadcast %769 : vector<2x1xi1> to vector<2x32xi1>
    %771 = vector.broadcast %cst_280 : f32 to vector<2x32xf32>
    %772 = arith.select %770, %735, %771 : vector<2x32xi1>, vector<2x32xf32>
    %773 = arith.index_cast %668 : i32 to index
    %c0_281 = arith.constant 0 : index
    %c0_282 = arith.constant 0 : index
    %774 = vector.load %arg11[%773, %c0_281, %c0_282] : memref<8x2x32xf32, #tpu.memory_space<vmem>>, vector<1x2x32xf32>
    %775 = vector.shape_cast %774 : vector<1x2x32xf32> to vector<2x32xf32>
    %776 = vector.shape_cast %772 : vector<2x32xf32> to vector<1x2x32xf32>
    tpu.vector_store %arg11[%773, %c0_281, %c0_282], %776 {strides = array<i32>} : memref<8x2x32xf32, #tpu.memory_space<vmem>>, vector<1x2x32xf32>,
    %c7_i32_283 = arith.constant 7 : i32
    %c7_i32_284 = arith.constant 7 : i32
    %777 = arith.subi %c7_i32_284, %c7_i32_283 : i32
    %c0_285 = arith.constant 0 : index
    %c0_286 = arith.constant 0 : index
    %778 = vector.load %arg7[%c0_285, %c0_286] : memref<2x64xf32, #tpu.memory_space<vmem>>, vector<2x64xf32>
    %c0_287 = arith.constant 0 : index
    %c0_288 = arith.constant 0 : index
    %779 = vector.load %arg3[%c0_287, %c0_288] : memref<64x256xf32, #tpu.memory_space<vmem>>, vector<64x256xf32>
    %cst_289 = arith.constant dense<0.000000e+00> : vector<2x256xf32>
    %780 = tpu.matmul %778, %779, %cst_289 {dimension_numbers = #tpu.dot_dimension_numbers<[1], [0], [0], [1], [0, 0, 1, 1], [], []>} : vector<2x64xf32>, vector<64x256xf32>, vector<2x256xf32> -> vector<2x256xf32>
    %c2_i32_290 = arith.constant 2 : i32
    %781 = arith.muli %c7_i32_283, %c2_i32_290 : i32
    %782 = arith.index_cast %781 : i32 to index
    %c0_291 = arith.constant 0 : index
    %783 = vector.load %arg6[%782, %c0_291] : memref<16x256xf32, #tpu.memory_space<vmem>>, vector<2x256xf32>
    %c2_i32_292 = arith.constant 2 : i32
    %784 = arith.muli %777, %c2_i32_292 : i32
    %785 = arith.index_cast %784 : i32 to index
    %c0_293 = arith.constant 0 : index
    %786 = vector.load %arg6[%785, %c0_293] : memref<16x256xf32, #tpu.memory_space<vmem>>, vector<2x256xf32>
    %787 = vector.extract_strided_slice %783 {offsets = [0, 0], sizes = [2, 128], strides = [1, 1]} : vector<2x256xf32> to vector<2x128xf32>
    %788 = vector.extract_strided_slice %780 {offsets = [0, 0], sizes = [2, 128], strides = [1, 1]} : vector<2x256xf32> to vector<2x128xf32>
    %789 = arith.addf %787, %788 : vector<2x128xf32>
    %790 = vector.extract_strided_slice %786 {offsets = [0, 128], sizes = [2, 128], strides = [1, 1]} : vector<2x256xf32> to vector<2x128xf32>
    %791 = vector.extract_strided_slice %780 {offsets = [0, 128], sizes = [2, 128], strides = [1, 1]} : vector<2x256xf32> to vector<2x128xf32>
    %792 = arith.addf %790, %791 : vector<2x128xf32>
    %c0_294 = arith.constant 0 : index
    %c0_295 = arith.constant 0 : index
    %793 = vector.load %arg8[%c0_294, %c0_295] : memref<2x32xf32, #tpu.memory_space<vmem>>, vector<2x32xf32>
    %794 = vector.extract_strided_slice %789 {offsets = [0, 0], sizes = [2, 32], strides = [1, 1]} : vector<2x128xf32> to vector<2x32xf32>
    %795 = arith.negf %794 : vector<2x32xf32>
    %796 = math.exp %795 : vector<2x32xf32>
    %cst_296 = arith.constant 1.000000e+00 : f32
    %797 = vector.broadcast %cst_296 : f32 to vector<2x32xf32>
    %798 = arith.addf %797, %796 : vector<2x32xf32>
    %799 = arith.divf %797, %798 : vector<2x32xf32>
    %800 = vector.extract_strided_slice %789 {offsets = [0, 32], sizes = [2, 32], strides = [1, 1]} : vector<2x128xf32> to vector<2x32xf32>
    %801 = arith.negf %800 : vector<2x32xf32>
    %802 = math.exp %801 : vector<2x32xf32>
    %cst_297 = arith.constant 1.000000e+00 : f32
    %803 = vector.broadcast %cst_297 : f32 to vector<2x32xf32>
    %804 = arith.addf %803, %802 : vector<2x32xf32>
    %805 = arith.divf %803, %804 : vector<2x32xf32>
    %806 = vector.extract_strided_slice %789 {offsets = [0, 64], sizes = [2, 32], strides = [1, 1]} : vector<2x128xf32> to vector<2x32xf32>
    %807 = math.tanh %806 : vector<2x32xf32>
    %808 = vector.extract_strided_slice %789 {offsets = [0, 96], sizes = [2, 32], strides = [1, 1]} : vector<2x128xf32> to vector<2x32xf32>
    %809 = arith.negf %808 : vector<2x32xf32>
    %810 = math.exp %809 : vector<2x32xf32>
    %cst_298 = arith.constant 1.000000e+00 : f32
    %811 = vector.broadcast %cst_298 : f32 to vector<2x32xf32>
    %812 = arith.addf %811, %810 : vector<2x32xf32>
    %813 = arith.divf %811, %812 : vector<2x32xf32>
    %814 = arith.mulf %805, %793 : vector<2x32xf32>
    %815 = arith.mulf %799, %807 : vector<2x32xf32>
    %816 = arith.addf %814, %815 : vector<2x32xf32>
    %817 = math.tanh %816 : vector<2x32xf32>
    %818 = arith.mulf %813, %817 : vector<2x32xf32>
    %c0_299 = arith.constant 0 : index
    %c0_300 = arith.constant 0 : index
    %819 = vector.load %arg9[%c0_299, %c0_300] : memref<2x32xf32, #tpu.memory_space<vmem>>, vector<2x32xf32>
    %820 = vector.extract_strided_slice %792 {offsets = [0, 0], sizes = [2, 32], strides = [1, 1]} : vector<2x128xf32> to vector<2x32xf32>
    %821 = arith.negf %820 : vector<2x32xf32>
    %822 = math.exp %821 : vector<2x32xf32>
    %cst_301 = arith.constant 1.000000e+00 : f32
    %823 = vector.broadcast %cst_301 : f32 to vector<2x32xf32>
    %824 = arith.addf %823, %822 : vector<2x32xf32>
    %825 = arith.divf %823, %824 : vector<2x32xf32>
    %826 = vector.extract_strided_slice %792 {offsets = [0, 32], sizes = [2, 32], strides = [1, 1]} : vector<2x128xf32> to vector<2x32xf32>
    %827 = arith.negf %826 : vector<2x32xf32>
    %828 = math.exp %827 : vector<2x32xf32>
    %cst_302 = arith.constant 1.000000e+00 : f32
    %829 = vector.broadcast %cst_302 : f32 to vector<2x32xf32>
    %830 = arith.addf %829, %828 : vector<2x32xf32>
    %831 = arith.divf %829, %830 : vector<2x32xf32>
    %832 = vector.extract_strided_slice %792 {offsets = [0, 64], sizes = [2, 32], strides = [1, 1]} : vector<2x128xf32> to vector<2x32xf32>
    %833 = math.tanh %832 : vector<2x32xf32>
    %834 = vector.extract_strided_slice %792 {offsets = [0, 96], sizes = [2, 32], strides = [1, 1]} : vector<2x128xf32> to vector<2x32xf32>
    %835 = arith.negf %834 : vector<2x32xf32>
    %836 = math.exp %835 : vector<2x32xf32>
    %cst_303 = arith.constant 1.000000e+00 : f32
    %837 = vector.broadcast %cst_303 : f32 to vector<2x32xf32>
    %838 = arith.addf %837, %836 : vector<2x32xf32>
    %839 = arith.divf %837, %838 : vector<2x32xf32>
    %840 = arith.mulf %831, %819 : vector<2x32xf32>
    %841 = arith.mulf %825, %833 : vector<2x32xf32>
    %842 = arith.addf %840, %841 : vector<2x32xf32>
    %843 = math.tanh %842 : vector<2x32xf32>
    %844 = arith.mulf %839, %843 : vector<2x32xf32>
    %845 = vector.broadcast %c7_i32_283 : i32 to vector<2x1xi32>
    %846 = arith.cmpi sgt, %13, %845 : vector<2x1xi32>
    %847 = vector.broadcast %777 : i32 to vector<2x1xi32>
    %848 = arith.cmpi sgt, %13, %847 : vector<2x1xi32>
    %c0_304 = arith.constant 0 : index
    %c0_305 = arith.constant 0 : index
    %849 = vector.load %arg8[%c0_304, %c0_305] : memref<2x32xf32, #tpu.memory_space<vmem>>, vector<2x32xf32>
    %850 = vector.shape_cast %846 : vector<2x1xi1> to vector<2x1xi1>
    %851 = vector.broadcast %850 : vector<2x1xi1> to vector<2x32xi1>
    %852 = arith.select %851, %816, %849 : vector<2x32xi1>, vector<2x32xf32>
    %c0_306 = arith.constant 0 : index
    %c0_307 = arith.constant 0 : index
    %853 = vector.load %arg8[%c0_306, %c0_307] : memref<2x32xf32, #tpu.memory_space<vmem>>, vector<2x32xf32>
    tpu.vector_store %arg8[%c0_306, %c0_307], %852 {strides = array<i32>} : memref<2x32xf32, #tpu.memory_space<vmem>>, vector<2x32xf32>,
    %c0_308 = arith.constant 0 : index
    %c0_309 = arith.constant 0 : index
    %854 = vector.load %arg9[%c0_308, %c0_309] : memref<2x32xf32, #tpu.memory_space<vmem>>, vector<2x32xf32>
    %855 = vector.shape_cast %848 : vector<2x1xi1> to vector<2x1xi1>
    %856 = vector.broadcast %855 : vector<2x1xi1> to vector<2x32xi1>
    %857 = arith.select %856, %842, %854 : vector<2x32xi1>, vector<2x32xf32>
    %c0_310 = arith.constant 0 : index
    %c0_311 = arith.constant 0 : index
    %858 = vector.load %arg9[%c0_310, %c0_311] : memref<2x32xf32, #tpu.memory_space<vmem>>, vector<2x32xf32>
    tpu.vector_store %arg9[%c0_310, %c0_311], %857 {strides = array<i32>} : memref<2x32xf32, #tpu.memory_space<vmem>>, vector<2x32xf32>,
    %c0_312 = arith.constant 0 : index
    %c0_313 = arith.constant 0 : index
    %859 = vector.load %arg7[%c0_312, %c0_313] : memref<2x64xf32, #tpu.memory_space<vmem>>, vector<2x64xf32>
    %860 = vector.extract_strided_slice %859 {offsets = [0, 0], sizes = [2, 32], strides = [1, 1]} : vector<2x64xf32> to vector<2x32xf32>
    %861 = vector.shape_cast %846 : vector<2x1xi1> to vector<2x1xi1>
    %862 = vector.broadcast %861 : vector<2x1xi1> to vector<2x32xi1>
    %863 = arith.select %862, %818, %860 : vector<2x32xi1>, vector<2x32xf32>
    %864 = vector.extract_strided_slice %859 {offsets = [0, 32], sizes = [2, 32], strides = [1, 1]} : vector<2x64xf32> to vector<2x32xf32>
    %865 = vector.shape_cast %848 : vector<2x1xi1> to vector<2x1xi1>
    %866 = vector.broadcast %865 : vector<2x1xi1> to vector<2x32xi1>
    %867 = arith.select %866, %844, %864 : vector<2x32xi1>, vector<2x32xf32>
    %868 = tpu.concatenate %863, %867 in 1 : vector<2x32xf32>, vector<2x32xf32> -> vector<2x64xf32>
    %c0_314 = arith.constant 0 : index
    %c0_315 = arith.constant 0 : index
    %869 = vector.load %arg7[%c0_314, %c0_315] : memref<2x64xf32, #tpu.memory_space<vmem>>, vector<2x64xf32>
    tpu.vector_store %arg7[%c0_314, %c0_315], %868 {strides = array<i32>} : memref<2x64xf32, #tpu.memory_space<vmem>>, vector<2x64xf32>,
    %cst_316 = arith.constant 0.000000e+00 : f32
    %870 = vector.shape_cast %846 : vector<2x1xi1> to vector<2x1xi1>
    %871 = vector.broadcast %870 : vector<2x1xi1> to vector<2x32xi1>
    %872 = vector.broadcast %cst_316 : f32 to vector<2x32xf32>
    %873 = arith.select %871, %818, %872 : vector<2x32xi1>, vector<2x32xf32>
    %874 = arith.index_cast %c7_i32_283 : i32 to index
    %c0_317 = arith.constant 0 : index
    %c0_318 = arith.constant 0 : index
    %875 = vector.load %arg10[%874, %c0_317, %c0_318] : memref<8x2x32xf32, #tpu.memory_space<vmem>>, vector<1x2x32xf32>
    %876 = vector.shape_cast %875 : vector<1x2x32xf32> to vector<2x32xf32>
    %877 = vector.shape_cast %873 : vector<2x32xf32> to vector<1x2x32xf32>
    tpu.vector_store %arg10[%874, %c0_317, %c0_318], %877 {strides = array<i32>} : memref<8x2x32xf32, #tpu.memory_space<vmem>>, vector<1x2x32xf32>,
    %cst_319 = arith.constant 0.000000e+00 : f32
    %878 = vector.shape_cast %848 : vector<2x1xi1> to vector<2x1xi1>
    %879 = vector.broadcast %878 : vector<2x1xi1> to vector<2x32xi1>
    %880 = vector.broadcast %cst_319 : f32 to vector<2x32xf32>
    %881 = arith.select %879, %844, %880 : vector<2x32xi1>, vector<2x32xf32>
    %882 = arith.index_cast %777 : i32 to index
    %c0_320 = arith.constant 0 : index
    %c0_321 = arith.constant 0 : index
    %883 = vector.load %arg11[%882, %c0_320, %c0_321] : memref<8x2x32xf32, #tpu.memory_space<vmem>>, vector<1x2x32xf32>
    %884 = vector.shape_cast %883 : vector<1x2x32xf32> to vector<2x32xf32>
    %885 = vector.shape_cast %881 : vector<2x32xf32> to vector<1x2x32xf32>
    tpu.vector_store %arg11[%882, %c0_320, %c0_321], %885 {strides = array<i32>} : memref<8x2x32xf32, #tpu.memory_space<vmem>>, vector<1x2x32xf32>,
    %c8_i32 = arith.constant 8 : i32
    %c0_322 = arith.constant 0 : index
    %c0_323 = arith.constant 0 : index
    %c0_324 = arith.constant 0 : index
    %886 = vector.load %arg10[%c0_322, %c0_323, %c0_324] : memref<8x2x32xf32, #tpu.memory_space<vmem>>, vector<8x2x32xf32>
    %c0_325 = arith.constant 0 : index
    %c0_326 = arith.constant 0 : index
    %c0_327 = arith.constant 0 : index
    %887 = vector.load %arg11[%c0_325, %c0_326, %c0_327] : memref<8x2x32xf32, #tpu.memory_space<vmem>>, vector<8x2x32xf32>
    %888 = tpu.concatenate %886, %887 in 2 : vector<8x2x32xf32>, vector<8x2x32xf32> -> vector<8x2x64xf32>
    %c0_328 = arith.constant 0 : index
    %c0_329 = arith.constant 0 : index
    %c0_330 = arith.constant 0 : index
    %889 = vector.load %arg5[%c0_328, %c0_329, %c0_330] : memref<8x2x64xf32, #tpu.memory_space<vmem>>, vector<8x2x64xf32>
    tpu.vector_store %arg5[%c0_328, %c0_329, %c0_330], %888 {strides = array<i32>} : memref<8x2x64xf32, #tpu.memory_space<vmem>>, vector<8x2x64xf32>,
    return
  }
}

</mosaic_0001>

<llo_original>
// kernel: bilstm_tagger_forward.5
$region0: #{bilstm_tagger_forward.5}
  #allocation0 [shape = 'u32[]', space=smem, size = 0x4, offset = 0x4, fixed_abs, tag = 'smem constant byte address 0x4 - core index']
  #allocation1 [shape = 'u32[72,128]{1,0:T(1,128)}', space=vmem, size = 0x9000, scoped, tag = 'internal scratch']
  %s0 = inlined_call_operand.vmem [shape: f32[16,64], index: 0, kind: input, shape index: {}]
  %s1 = inlined_call_operand.vmem [shape: f32[64,16], index: 1, kind: input, shape index: {}]
  %s2 = inlined_call_operand.vmem [shape: f32[1,16], index: 2, kind: input, shape index: {}]
  %s3 = inlined_call_operand.vmem [shape: f32[16,16], index: 3, kind: output, shape index: {}]
  %s4 = sld [smem:[#allocation0]]
  $region22: #{bilstm_tagger_forward.5} parent=0
    _
  %s6 = ssub.s32 1, %s4
  %s7 = scalar_select 0, %s6, %s4
  // Predicated region
  $region2: #{bilstm_tagger_forward.5} parent=0 // pred_check
    _
  $region3: #{bilstm_tagger_forward.5} parent=0 // pred_check_branch
    %9 = sbr.rel (0) target = $region5
  $region4: #{bilstm_tagger_forward.5} parent=0 // pred_region
    _
  $region5: #{bilstm_tagger_forward.5} parent=0 // pred_fallthru
    _
  // Predicated region
  $region6: #{bilstm_tagger_forward.5} parent=0 // pred_check
    _
  $region7: #{bilstm_tagger_forward.5} parent=0 // pred_check_branch
    %11 = sbr.rel (0) target = $region9
  $region8: #{bilstm_tagger_forward.5} parent=0 // pred_region
    _
  $region9: #{bilstm_tagger_forward.5} parent=0 // pred_fallthru
    _
  // Predicated region
  $region10: #{bilstm_tagger_forward.5} parent=0 // pred_check
    _
  $region11: #{bilstm_tagger_forward.5} parent=0 // pred_check_branch
    %13 = sbr.rel (0) target = $region13
  $region12: #{bilstm_tagger_forward.5} parent=0 // pred_region
    _
  $region13: #{bilstm_tagger_forward.5} parent=0 // pred_fallthru
    _
  %v14 = vld [vmem:[%s0] sm:$0xff]
  %v15 = vld [vmem:[%s0 + $0x8] sm:$0xff]
  %v16 = vld [vmem:[%s1] sm:$0xff]
  %v17 = vld [vmem:[%s1 + $0x8] sm:$0xff]
  %v18 = vld [vmem:[%s1 + $0x10] sm:$0xff]
  %v19 = vld [vmem:[%s1 + $0x18] sm:$0xff]
  %v20 = vld [vmem:[%s1 + $0x20] sm:$0xff]
  %v21 = vld [vmem:[%s1 + $0x28] sm:$0xff]
  %v22 = vld [vmem:[%s1 + $0x30] sm:$0xff]
  %v23 = vld [vmem:[%s1 + $0x38] sm:$0xff]
  %v24 = vld [vmem:[%s2] sm:$0x1]
  %v26 = vperm.slane %v24, 0
  %vm28 = vcmask 523264
  %v30 = vsel %vm28, %v14, 0
  %v33 = vsel %vm28, %v15, 0
  %35 = vmatpush.msra.mxu0 0.0
  %36 = vmatpush.msra.mxu0 0.0
  %37 = vmatpush.msra.mxu0 0.0
  %38 = vmatpush.msra.mxu0 0.0
  %39 = vmatpush.msra.mxu0 0.0
  %40 = vmatpush.msra.mxu0 0.0
  %41 = vmatpush.msra.mxu0 0.0
  %42 = vmatpush.msra.mxu0 0.0
  %43 = vmatpush.msra.mxu0 %v23
  %44 = vmatpush.msra.mxu0 %v22
  %45 = vmatpush.msra.mxu0 %v21
  %46 = vmatpush.msra.mxu0 %v20
  %47 = vmatpush.msra.mxu0 %v19
  %48 = vmatpush.msra.mxu0 %v18
  %49 = vmatpush.msra.mxu0 %v17
  %50 = vmatpush.msra.mxu0 %v16
  %51 = vmatmul.f32.gmra.mxu0 %v30
  %v52 = vpop.f32.mrf.mxu0
  %v53 = vadd.f32 %v26, %v52
  %54 = vmatmul.f32.gmra.mxu0 %v33
  %v55 = vpop.f32.mrf.mxu0
  %v56 = vadd.f32 %v26, %v55
  %57 = vdwg.mxu0
  %vm58 = vcmask 130048
  %59 = vst.msk [vmem:[%s3] sm:$0xff] %vm58, %v53
  %60 = vst.msk [vmem:[%s3 + $0x8] sm:$0xff] %vm58, %v56
  // Predicated region
  $region14: #{bilstm_tagger_forward.5} parent=0 // pred_check
    _
  $region15: #{bilstm_tagger_forward.5} parent=0 // pred_check_branch
    %62 = sbr.rel (0) target = $region17
  $region16: #{bilstm_tagger_forward.5} parent=0 // pred_region
    _
  $region17: #{bilstm_tagger_forward.5} parent=0 // pred_fallthru
    _
  // Predicated region
  $region18: #{bilstm_tagger_forward.5} parent=0 // pred_check
    _
  $region19: #{bilstm_tagger_forward.5} parent=0 // pred_check_branch
    %64 = sbr.rel (0) target = $region21
  $region20: #{bilstm_tagger_forward.5} parent=0 // pred_region
    _
  $region21: #{bilstm_tagger_forward.5} parent=0 // pred_fallthru
    _

// kernel: bilstm_tagger_forward.4
$region0: #{bilstm_tagger_forward.4}
  #allocation0 [shape = 'u32[]', space=smem, size = 0x4, offset = 0x4, fixed_abs, tag = 'smem constant byte address 0x4 - core index']
  #allocation1 [shape = 'u32[72,128]{1,0:T(1,128)}', space=vmem, size = 0x9000, scoped, tag = 'internal scratch']
  #allocation2 [shape = 'f32[16,256]{1,0:T(8,128)}', space=vmem, size = 0x4000, scoped, tag = 'scratch operand']
  #allocation3 [shape = 'f32[2,64]{1,0:T(2,128)}', space=vmem, size = 0x400, scoped, tag = 'scratch operand']
  #allocation4 [shape = 'f32[2,32]{1,0:T(2,128)}', space=vmem, size = 0x400, scoped, tag = 'scratch operand']
  #allocation5 [shape = 'f32[2,32]{1,0:T(2,128)}', space=vmem, size = 0x400, scoped, tag = 'scratch operand']
  #allocation6 [shape = 'f32[8,2,32]{2,1,0:T(2,128)}', space=vmem, size = 0x2000, scoped, tag = 'scratch operand']
  #allocation7 [shape = 'f32[8,2,32]{2,1,0:T(2,128)}', space=vmem, size = 0x2000, scoped, tag = 'scratch operand']
  %s0 = inlined_call_operand.vmem [shape: f32[16,64], index: 0, kind: input, shape index: {}]
  %s1 = inlined_call_operand.vmem [shape: s32[2,1], index: 1, kind: input, shape index: {}]
  %s2 = inlined_call_operand.vmem [shape: f32[64,256], index: 2, kind: input, shape index: {}]
  %s3 = inlined_call_operand.hbm [shape: f32[64,256], index: 3, kind: input, shape index: {}]
  %s4 = inlined_call_operand.vmem [shape: f32[1,256], index: 4, kind: input, shape index: {}]
  %s5 = inlined_call_operand.vmem [shape: f32[8,2,64], index: 5, kind: output, shape index: {}]
  %s6 = sld [smem:[#allocation0]]
  $region34: #{bilstm_tagger_forward.4} parent=0
    _
  %s8 = ssub.s32 1, %s6
  %s9 = scalar_select 0, %s8, %s6
  $region1: #{bilstm_tagger_forward.4} parent=0
    #allocation8 [shape = 'u8[65536]{0}', space=vmem, size = 0x10000, scoped, tag = 'input window, operand 3, single buffered']
    #allocation9 [shape = 's32[1]{0}', space=sflag, size = 0x4, scoped, tag = 'scoped memory for bilstm_tagger_forward.4']
    %10 = vsyncpa [#allocation9], 0
    // Predicated region
    $region2: #{bilstm_tagger_forward.4} parent=1 // pred_check
      _
    $region3: #{bilstm_tagger_forward.4} parent=1 // pred_check_branch
      %12 = sbr.rel (0) target = $region5
    $region4: #{bilstm_tagger_forward.4} parent=1 // pred_region
      _
    $region5: #{bilstm_tagger_forward.4} parent=1 // pred_fallthru
      _
    // Predicated region
    $region6: #{bilstm_tagger_forward.4} parent=1 // pred_check
      _
    $region7: #{bilstm_tagger_forward.4} parent=1 // pred_check_branch
      %14 = sbr.rel (0) target = $region9
    $region8: #{bilstm_tagger_forward.4} parent=1 // pred_region
      _
    $region9: #{bilstm_tagger_forward.4} parent=1 // pred_fallthru
      _
    // Predicated region
    $region10: #{bilstm_tagger_forward.4} parent=1 // pred_check
      _
    $region11: #{bilstm_tagger_forward.4} parent=1 // pred_check_branch
      %16 = sbr.rel (0) target = $region13
    $region12: #{bilstm_tagger_forward.4} parent=1 // pred_region
      _
    $region13: #{bilstm_tagger_forward.4} parent=1 // pred_fallthru
      _
    // Predicated region
    $region14: #{bilstm_tagger_forward.4} parent=1 // pred_check
      _
    $region15: #{bilstm_tagger_forward.4} parent=1 // pred_check_branch
      %18 = sbr.rel (0) target = $region17
    $region16: #{bilstm_tagger_forward.4} parent=1 // pred_region
      %20 = vsyncadd [#allocation9], 0
      %s21 = sshll.u32 %s3, 4
      %s22 = int_to_ptr.hbm [resolvable:$true] %s21
      %s23 = sshll.u32 [#allocation8], 4
      %s24 = int_to_ptr.vmem [resolvable:$true] %s23
      %29 = dma.hbm_to_vmem [thread:$0]  %s22, 2048, %s24, [#allocation9], 256, 256, 16
    $region17: #{bilstm_tagger_forward.4} parent=1 // pred_fallthru
      _
    // Predicated region
    $region18: #{bilstm_tagger_forward.4} parent=1 // pred_check
      _
    $region19: #{bilstm_tagger_forward.4} parent=1 // pred_check_branch
      %31 = sbr.rel (0) target = $region21
    $region20: #{bilstm_tagger_forward.4} parent=1 // pred_region
      _
    $region21: #{bilstm_tagger_forward.4} parent=1 // pred_fallthru
      _
    // Predicated region
    $region22: #{bilstm_tagger_forward.4} parent=1 // pred_check
      _
    $region23: #{bilstm_tagger_forward.4} parent=1 // pred_check_branch
      %33 = sbr.rel (0) target = $region25
    $region24: #{bilstm_tagger_forward.4} parent=1 // pred_region
      %35 = dma.done [#allocation9], 2048
    $region25: #{bilstm_tagger_forward.4} parent=1 // pred_fallthru
      _
    %v36 = vld [vmem:[%s0] sm:$0xff]
    %v37 = vld [vmem:[%s0 + $0x8] sm:$0xff]
    %v38 = vld [vmem:[%s2] sm:$0xff]
    %v39 = vld [vmem:[%s2 + $0x8] sm:$0xff]
    %v40 = vld [vmem:[%s2 + $0x10] sm:$0xff]
    %v41 = vld [vmem:[%s2 + $0x18] sm:$0xff]
    %v42 = vld [vmem:[%s2 + $0x20] sm:$0xff]
    %v43 = vld [vmem:[%s2 + $0x28] sm:$0xff]
    %v44 = vld [vmem:[%s2 + $0x30] sm:$0xff]
    %v45 = vld [vmem:[%s2 + $0x38] sm:$0xff]
    %v46 = vld [vmem:[%s2 + $0x40] sm:$0xff]
    %v47 = vld [vmem:[%s2 + $0x48] sm:$0xff]
    %v48 = vld [vmem:[%s2 + $0x50] sm:$0xff]
    %v49 = vld [vmem:[%s2 + $0x58] sm:$0xff]
    %v50 = vld [vmem:[%s2 + $0x60] sm:$0xff]
    %v51 = vld [vmem:[%s2 + $0x68] sm:$0xff]
    %v52 = vld [vmem:[%s2 + $0x70] sm:$0xff]
    %v53 = vld [vmem:[%s2 + $0x78] sm:$0xff]
    %v54 = vld [vmem:[%s4] sm:$0x3]
    %v56 = vperm.slane %v54, 0
    %v57 = vperm.slane %v54, 1
    %vm60 = vcmask 523264
    %v62 = vsel %vm60, %v36, 0
    %v65 = vsel %vm60, %v37, 0
    %67 = vmatpush.msra.mxu0 0.0
    %68 = vmatpush.msra.mxu0 0.0
    %69 = vmatpush.msra.mxu0 0.0
    %70 = vmatpush.msra.mxu0 0.0
    %71 = vmatpush.msra.mxu0 0.0
    %72 = vmatpush.msra.mxu0 0.0
    %73 = vmatpush.msra.mxu0 0.0
    %74 = vmatpush.msra.mxu0 0.0
    %75 = vmatpush.msra.mxu0 %v52
    %76 = vmatpush.msra.mxu0 %v50
    %77 = vmatpush.msra.mxu0 %v48
    %78 = vmatpush.msra.mxu0 %v46
    %79 = vmatpush.msra.mxu0 %v44
    %80 = vmatpush.msra.mxu0 %v42
    %81 = vmatpush.msra.mxu0 %v40
    %82 = vmatpush.msra.mxu0 %v38
    %83 = vmatmul.f32.gmra.mxu0 %v62
    %v84 = vpop.f32.mrf.mxu0
    %v85 = vadd.f32 %v56, %v84
    %86 = vmatmul.f32.gmra.mxu0 %v65
    %v87 = vpop.f32.mrf.mxu0
    %v88 = vadd.f32 %v56, %v87
    %89 = vdwg.mxu0
    %90 = vmatpush.msra.mxu0 0.0
    %91 = vmatpush.msra.mxu0 0.0
    %92 = vmatpush.msra.mxu0 0.0
    %93 = vmatpush.msra.mxu0 0.0
    %94 = vmatpush.msra.mxu0 0.0
    %95 = vmatpush.msra.mxu0 0.0
    %96 = vmatpush.msra.mxu0 0.0
    %97 = vmatpush.msra.mxu0 0.0
    %98 = vmatpush.msra.mxu0 %v53
    %99 = vmatpush.msra.mxu0 %v51
    %100 = vmatpush.msra.mxu0 %v49
    %101 = vmatpush.msra.mxu0 %v47
    %102 = vmatpush.msra.mxu0 %v45
    %103 = vmatpush.msra.mxu0 %v43
    %104 = vmatpush.msra.mxu0 %v41
    %105 = vmatpush.msra.mxu0 %v39
    %106 = vmatmul.f32.gmra.mxu0 %v62
    %v107 = vpop.f32.mrf.mxu0
    %v108 = vadd.f32 %v57, %v107
    %109 = vmatmul.f32.gmra.mxu0 %v65
    %v110 = vpop.f32.mrf.mxu0
    %v111 = vadd.f32 %v57, %v110
    %112 = vdwg.mxu0
    %113 = vst [vmem:[#allocation2] sm:$0xff] %v85
    %114 = vst [vmem:[#allocation2 + $0x8] sm:$0xff] %v108
    %115 = vst [vmem:[#allocation2 + $0x10] sm:$0xff] %v88
    %116 = vst [vmem:[#allocation2 + $0x18] sm:$0xff] %v111
    %vm117 = vcmask 517120
    %118 = vst.msk [vmem:[#allocation3] sm:$0x3] %vm117, 0.0
    %vm119 = vcmask 254976
    %120 = vst.msk [vmem:[#allocation4] sm:$0x3] %vm119, 0.0
    %121 = vst.msk [vmem:[#allocation5] sm:$0x3] %vm119, 0.0
    %v122 = vld [vmem:[%s1] sm:$0x3]
    %v123 = vld [vmem:[#allocation3] sm:$0x3]
    %v124 = vld [vmem:[#allocation8] sm:$0xff]
    %v125 = vld [vmem:[#allocation8 + $0x8] sm:$0xff]
    %v126 = vld [vmem:[#allocation8 + $0x10] sm:$0xff]
    %v127 = vld [vmem:[#allocation8 + $0x18] sm:$0xff]
    %v128 = vld [vmem:[#allocation8 + $0x20] sm:$0xff]
    %v129 = vld [vmem:[#allocation8 + $0x28] sm:$0xff]
    %v130 = vld [vmem:[#allocation8 + $0x30] sm:$0xff]
    %v131 = vld [vmem:[#allocation8 + $0x38] sm:$0xff]
    %v132 = vld [vmem:[#allocation8 + $0x40] sm:$0xff]
    %v133 = vld [vmem:[#allocation8 + $0x48] sm:$0xff]
    %v134 = vld [vmem:[#allocation8 + $0x50] sm:$0xff]
    %v135 = vld [vmem:[#allocation8 + $0x58] sm:$0xff]
    %v136 = vld [vmem:[#allocation8 + $0x60] sm:$0xff]
    %v137 = vld [vmem:[#allocation8 + $0x68] sm:$0xff]
    %v138 = vld [vmem:[#allocation8 + $0x70] sm:$0xff]
    %v139 = vld [vmem:[#allocation8 + $0x78] sm:$0xff]
    %v141 = vsel %vm60, %v123, 0
    %143 = vmatpush.msra.mxu0 0.0
    %144 = vmatpush.msra.mxu0 0.0
    %145 = vmatpush.msra.mxu0 0.0
    %146 = vmatpush.msra.mxu0 0.0
    %147 = vmatpush.msra.mxu0 0.0
    %148 = vmatpush.msra.mxu0 0.0
    %149 = vmatpush.msra.mxu0 0.0
    %150 = vmatpush.msra.mxu0 0.0
    %151 = vmatpush.msra.mxu0 %v138
    %152 = vmatpush.msra.mxu0 %v136
    %153 = vmatpush.msra.mxu0 %v134
    %154 = vmatpush.msra.mxu0 %v132
    %155 = vmatpush.msra.mxu0 %v130
    %156 = vmatpush.msra.mxu0 %v128
    %157 = vmatpush.msra.mxu0 %v126
    %158 = vmatpush.msra.mxu0 %v124
    %159 = vmatmul.f32.gmra.mxu0 %v141
    %v160 = vpop.f32.mrf.mxu0
    %v161 = vadd.f32 0.0, %v160
    %162 = vdwg.mxu0
    %163 = vmatpush.msra.mxu0 0.0
    %164 = vmatpush.msra.mxu0 0.0
    %165 = vmatpush.msra.mxu0 0.0
    %166 = vmatpush.msra.mxu0 0.0
    %167 = vmatpush.msra.mxu0 0.0
    %168 = vmatpush.msra.mxu0 0.0
    %169 = vmatpush.msra.mxu0 0.0
    %170 = vmatpush.msra.mxu0 0.0
    %171 = vmatpush.msra.mxu0 %v139
    %172 = vmatpush.msra.mxu0 %v137
    %173 = vmatpush.msra.mxu0 %v135
    %174 = vmatpush.msra.mxu0 %v133
    %175 = vmatpush.msra.mxu0 %v131
    %176 = vmatpush.msra.mxu0 %v129
    %177 = vmatpush.msra.mxu0 %v127
    %178 = vmatpush.msra.mxu0 %v125
    %179 = vmatmul.f32.gmra.mxu0 %v141
    %v180 = vpop.f32.mrf.mxu0
    %v181 = vadd.f32 0.0, %v180
    %182 = vdwg.mxu0
    %v183 = vld [vmem:[#allocation2] sm:$0x3]
    %v184 = vld [vmem:[#allocation2 + $0x18] sm:$0xc0]
    %v185 = vadd.f32 %v183, %v161
    %v187 = vrot.slane %v181, 2
    %v189 = vadd.f32 %v184, %v187
    %v190 = vld [vmem:[#allocation4] sm:$0x3]
    %v191 = vxor.u32 %v185, 2147483648
    %v192 = vmul.f32 %v191, 1.442695
    %v193 = vpow.pop %v192
    %v194 = vadd.f32 %v193, 1.0
    %v195 = vrcp.pop %v194
    %v196 = vmul.f32 %v194, %v195
    %v197 = vsub.f32 1.0, %v196
    %v198 = vmul.f32 %v195, %v197
    %v199 = vadd.f32 %v195, %v198
    %vm200 = vweird.f32 %v194
    %vm201 = vweird.f32 %v195
    %vm202 = vmor %vm200, %vm201
    %v203 = vsel %vm202, %v195, %v199
    %v204 = vand.u32 2147483647, %v194
    %vm205 = vcmp.eq.f32.partialorder %v204, 8.507059e+37
    %v206 = vand.u32 %v194, 2147483648
    %v207 = vor.u32 1.1754944e-38, %v206
    %v208 = vsel %vm205, %v207, %v203
    %v209 = vmul.f32 1.0, %v208
    %v210 = vtanh.pop %v185
    %212 = vrot.lane.b32.xlu0 %v190, 32
    %v213 = vpop.permute.xlu0 %212
    %v215 = vmul.f32 %v209, %v213
    %217 = vrot.lane.b32.xlu0 %v210, 64
    %v218 = vpop.permute.xlu0 %217
    %v220 = vmul.f32 %v209, %v218
    %222 = vrot.lane.b32.xlu0 %v220, 32
    %v223 = vpop.permute.xlu0 %222
    %v225 = vadd.f32 %v215, %v223
    %v226 = vtanh.pop %v225
    %228 = vrot.lane.b32.xlu0 %v226, 64
    %v229 = vpop.permute.xlu0 %228
    %v231 = vmul.f32 %v209, %v229
    %v232 = vld [vmem:[#allocation5] sm:$0x3]
    %v233 = vxor.u32 %v189, 2147483648
    %v234 = vmul.f32 %v233, 1.442695
    %v235 = vpow.pop %v234
    %v236 = vadd.f32 %v235, 1.0
    %v237 = vrcp.pop %v236
    %v238 = vmul.f32 %v236, %v237
    %v239 = vsub.f32 1.0, %v238
    %v240 = vmul.f32 %v237, %v239
    %v241 = vadd.f32 %v237, %v240
    %vm242 = vweird.f32 %v236
    %vm243 = vweird.f32 %v237
    %vm244 = vmor %vm242, %vm243
    %v245 = vsel %vm244, %v237, %v241
    %v246 = vand.u32 2147483647, %v236
    %vm247 = vcmp.eq.f32.partialorder %v246, 8.507059e+37
    %v248 = vand.u32 %v236, 2147483648
    %v249 = vor.u32 1.1754944e-38, %v248
    %v250 = vsel %vm247, %v249, %v245
    %v251 = vmul.f32 1.0, %v250
    %v252 = vtanh.pop %v189
    %v254 = vrot.slane %v232, 2
    %255 = vrot.lane.b32.xlu0 %v254, 32
    %v256 = vpop.permute.xlu0 %255
    %v258 = vmul.f32 %v251, %v256
    %260 = vrot.lane.b32.xlu0 %v252, 64
    %v261 = vpop.permute.xlu0 %260
    %v263 = vmul.f32 %v251, %v261
    %265 = vrot.lane.b32.xlu0 %v263, 32
    %v266 = vpop.permute.xlu0 %265
    %v268 = vadd.f32 %v258, %v266
    %v269 = vtanh.pop %v268
    %271 = vrot.lane.b32.xlu0 %v269, 64
    %v272 = vpop.permute.xlu0 %271
    %v274 = vmul.f32 %v251, %v272
    %vm275 = vcmp.gt.s32.totalorder %v122, 0
    %vm276 = vcmp.gt.s32.totalorder %v122, 7
    %v277 = vsel %vm275, 1, 0
    %278 = vset.pattern.permute.xlu0 0
    %279 = vperm.xlu0 %278, %v277
    %v280 = vpop.permute.xlu0 %279
    %vm281 = vcmp.eq.s32.totalorder %v280, 1
    %v282 = vsel %vm281, %v225, %v213
    %284 = vrot.lane.b32.xlu0 %v282, 96
    %v285 = vpop.permute.xlu0 %284
    %287 = vst.msk [vmem:[#allocation4] sm:$0x3] %vm119, %v285
    %v288 = vld [vmem:[#allocation5] sm:$0x3]
    %v289 = vsel %vm276, 1, 0
    %290 = vset.pattern.permute.xlu0 0
    %291 = vperm.xlu0 %290, %v289
    %v292 = vpop.permute.xlu0 %291
    %vm293 = vcmp.eq.s32.totalorder %v292, 1
    %v295 = vrot.slane %v268, 6
    %296 = vrot.lane.b32.xlu0 %v295, 96
    %v297 = vpop.permute.xlu0 %296
    %v299 = vsel %vm293, %v297, %v288
    %300 = vst.msk [vmem:[#allocation5] sm:$0x3] %vm119, %v299
    %v301 = vld [vmem:[#allocation3] sm:$0x3]
    %303 = vrot.lane.b32.xlu0 %v301, 96
    %v304 = vpop.permute.xlu0 %303
    %v306 = vsel %vm281, %v231, %v304
    %v308 = vrot.slane %v274, 6
    %309 = vrot.lane.b32.xlu0 %v308, 32
    %v310 = vpop.permute.xlu0 %309
    %v312 = vsel %vm293, %v310, %v304
    %314 = vrot.lane.b32.xlu0 %v306, 32
    %v315 = vpop.permute.xlu0 %314
    %318 = vrot.lane.b32.xlu0 %v312, 32
    %v319 = vpop.permute.xlu0 %318
    %vm321 = vcmask 261120
    %v322 = vsel %vm321, %v315, %v319
    %323 = vst.msk [vmem:[#allocation3] sm:$0x3] %vm117, %v322
    %v324 = vsel %vm281, %v231, 0.0
    %326 = vrot.lane.b32.xlu0 %v324, 32
    %v327 = vpop.permute.xlu0 %326
    %329 = vst.msk [vmem:[#allocation6] sm:$0x3] %vm119, %v327
    %v330 = vsel %vm293, %v310, 0.0
    %s331 = scalar_lea.vmem [#allocation7], 14
    %332 = vst.msk [vmem:[%s331] sm:$0x3] %vm119, %v330
    %v333 = vld [vmem:[#allocation3] sm:$0x3]
    %v334 = vld [vmem:[#allocation8] sm:$0xff]
    %v335 = vld [vmem:[#allocation8 + $0x8] sm:$0xff]
    %v336 = vld [vmem:[#allocation8 + $0x10] sm:$0xff]
    %v337 = vld [vmem:[#allocation8 + $0x18] sm:$0xff]
    %v338 = vld [vmem:[#allocation8 + $0x20] sm:$0xff]
    %v339 = vld [vmem:[#allocation8 + $0x28] sm:$0xff]
    %v340 = vld [vmem:[#allocation8 + $0x30] sm:$0xff]
    %v341 = vld [vmem:[#allocation8 + $0x38] sm:$0xff]
    %v342 = vld [vmem:[#allocation8 + $0x40] sm:$0xff]
    %v343 = vld [vmem:[#allocation8 + $0x48] sm:$0xff]
    %v344 = vld [vmem:[#allocation8 + $0x50] sm:$0xff]
    %v345 = vld [vmem:[#allocation8 + $0x58] sm:$0xff]
    %v346 = vld [vmem:[#allocation8 + $0x60] sm:$0xff]
    %v347 = vld [vmem:[#allocation8 + $0x68] sm:$0xff]
    %v348 = vld [vmem:[#allocation8 + $0x70] sm:$0xff]
    %v349 = vld [vmem:[#allocation8 + $0x78] sm:$0xff]
    %v351 = vsel %vm60, %v333, 0
    %353 = vmatpush.msra.mxu0 0.0
    %354 = vmatpush.msra.mxu0 0.0
    %355 = vmatpush.msra.mxu0 0.0
    %356 = vmatpush.msra.mxu0 0.0
    %357 = vmatpush.msra.mxu0 0.0
    %358 = vmatpush.msra.mxu0 0.0
    %359 = vmatpush.msra.mxu0 0.0
    %360 = vmatpush.msra.mxu0 0.0
    %361 = vmatpush.msra.mxu0 %v348
    %362 = vmatpush.msra.mxu0 %v346
    %363 = vmatpush.msra.mxu0 %v344
    %364 = vmatpush.msra.mxu0 %v342
    %365 = vmatpush.msra.mxu0 %v340
    %366 = vmatpush.msra.mxu0 %v338
    %367 = vmatpush.msra.mxu0 %v336
    %368 = vmatpush.msra.mxu0 %v334
    %369 = vmatmul.f32.gmra.mxu0 %v351
    %v370 = vpop.f32.mrf.mxu0
    %v371 = vadd.f32 0.0, %v370
    %372 = vdwg.mxu0
    %373 = vmatpush.msra.mxu0 0.0
    %374 = vmatpush.msra.mxu0 0.0
    %375 = vmatpush.msra.mxu0 0.0
    %376 = vmatpush.msra.mxu0 0.0
    %377 = vmatpush.msra.mxu0 0.0
    %378 = vmatpush.msra.mxu0 0.0
    %379 = vmatpush.msra.mxu0 0.0
    %380 = vmatpush.msra.mxu0 0.0
    %381 = vmatpush.msra.mxu0 %v349
    %382 = vmatpush.msra.mxu0 %v347
    %383 = vmatpush.msra.mxu0 %v345
    %384 = vmatpush.msra.mxu0 %v343
    %385 = vmatpush.msra.mxu0 %v341
    %386 = vmatpush.msra.mxu0 %v339
    %387 = vmatpush.msra.mxu0 %v337
    %388 = vmatpush.msra.mxu0 %v335
    %389 = vmatmul.f32.gmra.mxu0 %v351
    %v390 = vpop.f32.mrf.mxu0
    %v391 = vadd.f32 0.0, %v390
    %392 = vdwg.mxu0
    %v393 = vld [vmem:[#allocation2] sm:$0xc]
    %v394 = vld [vmem:[#allocation2 + $0x18] sm:$0x30]
    %v396 = vrot.slane %v371, 6
    %v398 = vadd.f32 %v393, %v396
    %v400 = vrot.slane %v391, 4
    %v402 = vadd.f32 %v394, %v400
    %v403 = vld [vmem:[#allocation4] sm:$0x3]
    %v404 = vxor.u32 %v398, 2147483648
    %v405 = vmul.f32 %v404, 1.442695
    %v406 = vpow.pop %v405
    %v407 = vadd.f32 %v406, 1.0
    %v408 = vrcp.pop %v407
    %v409 = vmul.f32 %v407, %v408
    %v410 = vsub.f32 1.0, %v409
    %v411 = vmul.f32 %v408, %v410
    %v412 = vadd.f32 %v408, %v411
    %vm413 = vweird.f32 %v407
    %vm414 = vweird.f32 %v408
    %vm415 = vmor %vm413, %vm414
    %v416 = vsel %vm415, %v408, %v412
    %v417 = vand.u32 2147483647, %v407
    %vm418 = vcmp.eq.f32.partialorder %v417, 8.507059e+37
    %v419 = vand.u32 %v407, 2147483648
    %v420 = vor.u32 1.1754944e-38, %v419
    %v421 = vsel %vm418, %v420, %v416
    %v422 = vmul.f32 1.0, %v421
    %v423 = vtanh.pop %v398
    %v425 = vrot.slane %v403, 6
    %426 = vrot.lane.b32.xlu0 %v425, 32
    %v427 = vpop.permute.xlu0 %426
    %v429 = vmul.f32 %v422, %v427
    %431 = vrot.lane.b32.xlu0 %v423, 64
    %v432 = vpop.permute.xlu0 %431
    %v434 = vmul.f32 %v422, %v432
    %436 = vrot.lane.b32.xlu0 %v434, 32
    %v437 = vpop.permute.xlu0 %436
    %v439 = vadd.f32 %v429, %v437
    %v440 = vtanh.pop %v439
    %442 = vrot.lane.b32.xlu0 %v440, 64
    %v443 = vpop.permute.xlu0 %442
    %v445 = vmul.f32 %v422, %v443
    %v446 = vld [vmem:[#allocation5] sm:$0x3]
    %v447 = vxor.u32 %v402, 2147483648
    %v448 = vmul.f32 %v447, 1.442695
    %v449 = vpow.pop %v448
    %v450 = vadd.f32 %v449, 1.0
    %v451 = vrcp.pop %v450
    %v452 = vmul.f32 %v450, %v451
    %v453 = vsub.f32 1.0, %v452
    %v454 = vmul.f32 %v451, %v453
    %v455 = vadd.f32 %v451, %v454
    %vm456 = vweird.f32 %v450
    %vm457 = vweird.f32 %v451
    %vm458 = vmor %vm456, %vm457
    %v459 = vsel %vm458, %v451, %v455
    %v460 = vand.u32 2147483647, %v450
    %vm461 = vcmp.eq.f32.partialorder %v460, 8.507059e+37
    %v462 = vand.u32 %v450, 2147483648
    %v463 = vor.u32 1.1754944e-38, %v462
    %v464 = vsel %vm461, %v463, %v459
    %v465 = vmul.f32 1.0, %v464
    %v466 = vtanh.pop %v402
    %v468 = vrot.slane %v446, 4
    %469 = vrot.lane.b32.xlu0 %v468, 32
    %v470 = vpop.permute.xlu0 %469
    %v472 = vmul.f32 %v465, %v470
    %474 = vrot.lane.b32.xlu0 %v466, 64
    %v475 = vpop.permute.xlu0 %474
    %v477 = vmul.f32 %v465, %v475
    %479 = vrot.lane.b32.xlu0 %v477, 32
    %v480 = vpop.permute.xlu0 %479
    %v482 = vadd.f32 %v472, %v480
    %v483 = vtanh.pop %v482
    %485 = vrot.lane.b32.xlu0 %v483, 64
    %v486 = vpop.permute.xlu0 %485
    %v488 = vmul.f32 %v465, %v486
    %vm489 = vcmp.gt.s32.totalorder %v122, 1
    %vm490 = vcmp.gt.s32.totalorder %v122, 6
    %v491 = vsel %vm489, 1, 0
    %492 = vset.pattern.permute.xlu0 0
    %493 = vperm.xlu0 %492, %v491
    %v494 = vpop.permute.xlu0 %493
    %vm495 = vcmp.eq.s32.totalorder %v494, 1
    %v497 = vrot.slane %v439, 2
    %498 = vrot.lane.b32.xlu0 %v497, 96
    %v499 = vpop.permute.xlu0 %498
    %v501 = vsel %vm495, %v499, %v403
    %502 = vst.msk [vmem:[#allocation4] sm:$0x3] %vm119, %v501
    %v503 = vld [vmem:[#allocation5] sm:$0x3]
    %v504 = vsel %vm490, 1, 0
    %505 = vset.pattern.permute.xlu0 0
    %506 = vperm.xlu0 %505, %v504
    %v507 = vpop.permute.xlu0 %506
    %vm508 = vcmp.eq.s32.totalorder %v507, 1
    %v510 = vrot.slane %v482, 4
    %511 = vrot.lane.b32.xlu0 %v510, 96
    %v512 = vpop.permute.xlu0 %511
    %v514 = vsel %vm508, %v512, %v503
    %515 = vst.msk [vmem:[#allocation5] sm:$0x3] %vm119, %v514
    %v516 = vld [vmem:[#allocation3] sm:$0x3]
    %v518 = vrot.slane %v445, 2
    %519 = vrot.lane.b32.xlu0 %v518, 32
    %v520 = vpop.permute.xlu0 %519
    %v522 = vsel %vm495, %v520, %v516
    %v524 = vrot.slane %v488, 4
    %525 = vrot.lane.b32.xlu0 %v524, 32
    %v526 = vpop.permute.xlu0 %525
    %529 = vrot.lane.b32.xlu0 %v516, 96
    %v530 = vpop.permute.xlu0 %529
    %v532 = vsel %vm508, %v526, %v530
    %534 = vrot.lane.b32.xlu0 %v532, 32
    %v535 = vpop.permute.xlu0 %534
    %v537 = vsel %vm321, %v522, %v535
    %538 = vst.msk [vmem:[#allocation3] sm:$0x3] %vm117, %v537
    %v539 = vsel %vm495, %v520, 0.0
    %s540 = scalar_lea.vmem [#allocation6], 2
    %541 = vst.msk [vmem:[%s540] sm:$0x3] %vm119, %v539
    %v542 = vsel %vm508, %v526, 0.0
    %s543 = scalar_lea.vmem [#allocation7], 12
    %544 = vst.msk [vmem:[%s543] sm:$0x3] %vm119, %v542
    %v545 = vld [vmem:[#allocation3] sm:$0x3]
    %v546 = vld [vmem:[#allocation8] sm:$0xff]
    %v547 = vld [vmem:[#allocation8 + $0x8] sm:$0xff]
    %v548 = vld [vmem:[#allocation8 + $0x10] sm:$0xff]
    %v549 = vld [vmem:[#allocation8 + $0x18] sm:$0xff]
    %v550 = vld [vmem:[#allocation8 + $0x20] sm:$0xff]
    %v551 = vld [vmem:[#allocation8 + $0x28] sm:$0xff]
    %v552 = vld [vmem:[#allocation8 + $0x30] sm:$0xff]
    %v553 = vld [vmem:[#allocation8 + $0x38] sm:$0xff]
    %v554 = vld [vmem:[#allocation8 + $0x40] sm:$0xff]
    %v555 = vld [vmem:[#allocation8 + $0x48] sm:$0xff]
    %v556 = vld [vmem:[#allocation8 + $0x50] sm:$0xff]
    %v557 = vld [vmem:[#allocation8 + $0x58] sm:$0xff]
    %v558 = vld [vmem:[#allocation8 + $0x60] sm:$0xff]
    %v559 = vld [vmem:[#allocation8 + $0x68] sm:$0xff]
    %v560 = vld [vmem:[#allocation8 + $0x70] sm:$0xff]
    %v561 = vld [vmem:[#allocation8 + $0x78] sm:$0xff]
    %v563 = vsel %vm60, %v545, 0
    %565 = vmatpush.msra.mxu0 0.0
    %566 = vmatpush.msra.mxu0 0.0
    %567 = vmatpush.msra.mxu0 0.0
    %568 = vmatpush.msra.mxu0 0.0
    %569 = vmatpush.msra.mxu0 0.0
    %570 = vmatpush.msra.mxu0 0.0
    %571 = vmatpush.msra.mxu0 0.0
    %572 = vmatpush.msra.mxu0 0.0
    %573 = vmatpush.msra.mxu0 %v560
    %574 = vmatpush.msra.mxu0 %v558
    %575 = vmatpush.msra.mxu0 %v556
    %576 = vmatpush.msra.mxu0 %v554
    %577 = vmatpush.msra.mxu0 %v552
    %578 = vmatpush.msra.mxu0 %v550
    %579 = vmatpush.msra.mxu0 %v548
    %580 = vmatpush.msra.mxu0 %v546
    %581 = vmatmul.f32.gmra.mxu0 %v563
    %v582 = vpop.f32.mrf.mxu0
    %v583 = vadd.f32 0.0, %v582
    %584 = vdwg.mxu0
    %585 = vmatpush.msra.mxu0 0.0
    %586 = vmatpush.msra.mxu0 0.0
    %587 = vmatpush.msra.mxu0 0.0
    %588 = vmatpush.msra.mxu0 0.0
    %589 = vmatpush.msra.mxu0 0.0
    %590 = vmatpush.msra.mxu0 0.0
    %591 = vmatpush.msra.mxu0 0.0
    %592 = vmatpush.msra.mxu0 0.0
    %593 = vmatpush.msra.mxu0 %v561
    %594 = vmatpush.msra.mxu0 %v559
    %595 = vmatpush.msra.mxu0 %v557
    %596 = vmatpush.msra.mxu0 %v555
    %597 = vmatpush.msra.mxu0 %v553
    %598 = vmatpush.msra.mxu0 %v551
    %599 = vmatpush.msra.mxu0 %v549
    %600 = vmatpush.msra.mxu0 %v547
    %601 = vmatmul.f32.gmra.mxu0 %v563
    %v602 = vpop.f32.mrf.mxu0
    %v603 = vadd.f32 0.0, %v602
    %604 = vdwg.mxu0
    %v605 = vld [vmem:[#allocation2] sm:$0x30]
    %v606 = vld [vmem:[#allocation2 + $0x18] sm:$0xc]
    %v608 = vrot.slane %v583, 4
    %v610 = vadd.f32 %v605, %v608
    %v612 = vrot.slane %v603, 6
    %v614 = vadd.f32 %v606, %v612
    %v615 = vld [vmem:[#allocation4] sm:$0x3]
    %v616 = vxor.u32 %v610, 2147483648
    %v617 = vmul.f32 %v616, 1.442695
    %v618 = vpow.pop %v617
    %v619 = vadd.f32 %v618, 1.0
    %v620 = vrcp.pop %v619
    %v621 = vmul.f32 %v619, %v620
    %v622 = vsub.f32 1.0, %v621
    %v623 = vmul.f32 %v620, %v622
    %v624 = vadd.f32 %v620, %v623
    %vm625 = vweird.f32 %v619
    %vm626 = vweird.f32 %v620
    %vm627 = vmor %vm625, %vm626
    %v628 = vsel %vm627, %v620, %v624
    %v629 = vand.u32 2147483647, %v619
    %vm630 = vcmp.eq.f32.partialorder %v629, 8.507059e+37
    %v631 = vand.u32 %v619, 2147483648
    %v632 = vor.u32 1.1754944e-38, %v631
    %v633 = vsel %vm630, %v632, %v628
    %v634 = vmul.f32 1.0, %v633
    %v635 = vtanh.pop %v610
    %v637 = vrot.slane %v615, 4
    %638 = vrot.lane.b32.xlu0 %v637, 32
    %v639 = vpop.permute.xlu0 %638
    %v641 = vmul.f32 %v634, %v639
    %643 = vrot.lane.b32.xlu0 %v635, 64
    %v644 = vpop.permute.xlu0 %643
    %v646 = vmul.f32 %v634, %v644
    %648 = vrot.lane.b32.xlu0 %v646, 32
    %v649 = vpop.permute.xlu0 %648
    %v651 = vadd.f32 %v641, %v649
    %v652 = vtanh.pop %v651
    %654 = vrot.lane.b32.xlu0 %v652, 64
    %v655 = vpop.permute.xlu0 %654
    %v657 = vmul.f32 %v634, %v655
    %v658 = vld [vmem:[#allocation5] sm:$0x3]
    %v659 = vxor.u32 %v614, 2147483648
    %v660 = vmul.f32 %v659, 1.442695
    %v661 = vpow.pop %v660
    %v662 = vadd.f32 %v661, 1.0
    %v663 = vrcp.pop %v662
    %v664 = vmul.f32 %v662, %v663
    %v665 = vsub.f32 1.0, %v664
    %v666 = vmul.f32 %v663, %v665
    %v667 = vadd.f32 %v663, %v666
    %vm668 = vweird.f32 %v662
    %vm669 = vweird.f32 %v663
    %vm670 = vmor %vm668, %vm669
    %v671 = vsel %vm670, %v663, %v667
    %v672 = vand.u32 2147483647, %v662
    %vm673 = vcmp.eq.f32.partialorder %v672, 8.507059e+37
    %v674 = vand.u32 %v662, 2147483648
    %v675 = vor.u32 1.1754944e-38, %v674
    %v676 = vsel %vm673, %v675, %v671
    %v677 = vmul.f32 1.0, %v676
    %v678 = vtanh.pop %v614
    %v680 = vrot.slane %v658, 6
    %681 = vrot.lane.b32.xlu0 %v680, 32
    %v682 = vpop.permute.xlu0 %681
    %v684 = vmul.f32 %v677, %v682
    %686 = vrot.lane.b32.xlu0 %v678, 64
    %v687 = vpop.permute.xlu0 %686
    %v689 = vmul.f32 %v677, %v687
    %691 = vrot.lane.b32.xlu0 %v689, 32
    %v692 = vpop.permute.xlu0 %691
    %v694 = vadd.f32 %v684, %v692
    %v695 = vtanh.pop %v694
    %697 = vrot.lane.b32.xlu0 %v695, 64
    %v698 = vpop.permute.xlu0 %697
    %v700 = vmul.f32 %v677, %v698
    %vm701 = vcmp.gt.s32.totalorder %v122, 2
    %vm702 = vcmp.gt.s32.totalorder %v122, 5
    %v703 = vsel %vm701, 1, 0
    %704 = vset.pattern.permute.xlu0 0
    %705 = vperm.xlu0 %704, %v703
    %v706 = vpop.permute.xlu0 %705
    %vm707 = vcmp.eq.s32.totalorder %v706, 1
    %v709 = vrot.slane %v651, 4
    %710 = vrot.lane.b32.xlu0 %v709, 96
    %v711 = vpop.permute.xlu0 %710
    %v713 = vsel %vm707, %v711, %v615
    %714 = vst.msk [vmem:[#allocation4] sm:$0x3] %vm119, %v713
    %v715 = vld [vmem:[#allocation5] sm:$0x3]
    %v716 = vsel %vm702, 1, 0
    %717 = vset.pattern.permute.xlu0 0
    %718 = vperm.xlu0 %717, %v716
    %v719 = vpop.permute.xlu0 %718
    %vm720 = vcmp.eq.s32.totalorder %v719, 1
    %v722 = vrot.slane %v694, 2
    %723 = vrot.lane.b32.xlu0 %v722, 96
    %v724 = vpop.permute.xlu0 %723
    %v726 = vsel %vm720, %v724, %v715
    %727 = vst.msk [vmem:[#allocation5] sm:$0x3] %vm119, %v726
    %v728 = vld [vmem:[#allocation3] sm:$0x3]
    %v730 = vrot.slane %v657, 4
    %731 = vrot.lane.b32.xlu0 %v730, 32
    %v732 = vpop.permute.xlu0 %731
    %v734 = vsel %vm707, %v732, %v728
    %v736 = vrot.slane %v700, 2
    %737 = vrot.lane.b32.xlu0 %v736, 32
    %v738 = vpop.permute.xlu0 %737
    %741 = vrot.lane.b32.xlu0 %v728, 96
    %v742 = vpop.permute.xlu0 %741
    %v744 = vsel %vm720, %v738, %v742
    %746 = vrot.lane.b32.xlu0 %v744, 32
    %v747 = vpop.permute.xlu0 %746
    %v749 = vsel %vm321, %v734, %v747
    %750 = vst.msk [vmem:[#allocation3] sm:$0x3] %vm117, %v749
    %v751 = vsel %vm707, %v732, 0.0
    %s752 = scalar_lea.vmem [#allocation6], 4
    %753 = vst.msk [vmem:[%s752] sm:$0x3] %vm119, %v751
    %v754 = vsel %vm720, %v738, 0.0
    %s755 = scalar_lea.vmem [#allocation7], 10
    %756 = vst.msk [vmem:[%s755] sm:$0x3] %vm119, %v754
    %v757 = vld [vmem:[#allocation3] sm:$0x3]
    %v758 = vld [vmem:[#allocation8] sm:$0xff]
    %v759 = vld [vmem:[#allocation8 + $0x8] sm:$0xff]
    %v760 = vld [vmem:[#allocation8 + $0x10] sm:$0xff]
    %v761 = vld [vmem:[#allocation8 + $0x18] sm:$0xff]
    %v762 = vld [vmem:[#allocation8 + $0x20] sm:$0xff]
    %v763 = vld [vmem:[#allocation8 + $0x28] sm:$0xff]
    %v764 = vld [vmem:[#allocation8 + $0x30] sm:$0xff]
    %v765 = vld [vmem:[#allocation8 + $0x38] sm:$0xff]
    %v766 = vld [vmem:[#allocation8 + $0x40] sm:$0xff]
    %v767 = vld [vmem:[#allocation8 + $0x48] sm:$0xff]
    %v768 = vld [vmem:[#allocation8 + $0x50] sm:$0xff]
    %v769 = vld [vmem:[#allocation8 + $0x58] sm:$0xff]
    %v770 = vld [vmem:[#allocation8 + $0x60] sm:$0xff]
    %v771 = vld [vmem:[#allocation8 + $0x68] sm:$0xff]
    %v772 = vld [vmem:[#allocation8 + $0x70] sm:$0xff]
    %v773 = vld [vmem:[#allocation8 + $0x78] sm:$0xff]
    %v775 = vsel %vm60, %v757, 0
    %777 = vmatpush.msra.mxu0 0.0
    %778 = vmatpush.msra.mxu0 0.0
    %779 = vmatpush.msra.mxu0 0.0
    %780 = vmatpush.msra.mxu0 0.0
    %781 = vmatpush.msra.mxu0 0.0
    %782 = vmatpush.msra.mxu0 0.0
    %783 = vmatpush.msra.mxu0 0.0
    %784 = vmatpush.msra.mxu0 0.0
    %785 = vmatpush.msra.mxu0 %v772
    %786 = vmatpush.msra.mxu0 %v770
    %787 = vmatpush.msra.mxu0 %v768
    %788 = vmatpush.msra.mxu0 %v766
    %789 = vmatpush.msra.mxu0 %v764
    %790 = vmatpush.msra.mxu0 %v762
    %791 = vmatpush.msra.mxu0 %v760
    %792 = vmatpush.msra.mxu0 %v758
    %793 = vmatmul.f32.gmra.mxu0 %v775
    %v794 = vpop.f32.mrf.mxu0
    %v795 = vadd.f32 0.0, %v794
    %796 = vdwg.mxu0
    %797 = vmatpush.msra.mxu0 0.0
    %798 = vmatpush.msra.mxu0 0.0
    %799 = vmatpush.msra.mxu0 0.0
    %800 = vmatpush.msra.mxu0 0.0
    %801 = vmatpush.msra.mxu0 0.0
    %802 = vmatpush.msra.mxu0 0.0
    %803 = vmatpush.msra.mxu0 0.0
    %804 = vmatpush.msra.mxu0 0.0
    %805 = vmatpush.msra.mxu0 %v773
    %806 = vmatpush.msra.mxu0 %v771
    %807 = vmatpush.msra.mxu0 %v769
    %808 = vmatpush.msra.mxu0 %v767
    %809 = vmatpush.msra.mxu0 %v765
    %810 = vmatpush.msra.mxu0 %v763
    %811 = vmatpush.msra.mxu0 %v761
    %812 = vmatpush.msra.mxu0 %v759
    %813 = vmatmul.f32.gmra.mxu0 %v775
    %v814 = vpop.f32.mrf.mxu0
    %v815 = vadd.f32 0.0, %v814
    %816 = vdwg.mxu0
    %v817 = vld [vmem:[#allocation2] sm:$0xc0]
    %v818 = vld [vmem:[#allocation2 + $0x18] sm:$0x3]
    %v820 = vrot.slane %v795, 2
    %v822 = vadd.f32 %v817, %v820
    %v823 = vadd.f32 %v818, %v815
    %v824 = vld [vmem:[#allocation4] sm:$0x3]
    %v825 = vxor.u32 %v822, 2147483648
    %v826 = vmul.f32 %v825, 1.442695
    %v827 = vpow.pop %v826
    %v828 = vadd.f32 %v827, 1.0
    %v829 = vrcp.pop %v828
    %v830 = vmul.f32 %v828, %v829
    %v831 = vsub.f32 1.0, %v830
    %v832 = vmul.f32 %v829, %v831
    %v833 = vadd.f32 %v829, %v832
    %vm834 = vweird.f32 %v828
    %vm835 = vweird.f32 %v829
    %vm836 = vmor %vm834, %vm835
    %v837 = vsel %vm836, %v829, %v833
    %v838 = vand.u32 2147483647, %v828
    %vm839 = vcmp.eq.f32.partialorder %v838, 8.507059e+37
    %v840 = vand.u32 %v828, 2147483648
    %v841 = vor.u32 1.1754944e-38, %v840
    %v842 = vsel %vm839, %v841, %v837
    %v843 = vmul.f32 1.0, %v842
    %v844 = vtanh.pop %v822
    %v846 = vrot.slane %v824, 2
    %847 = vrot.lane.b32.xlu0 %v846, 32
    %v848 = vpop.permute.xlu0 %847
    %v850 = vmul.f32 %v843, %v848
    %852 = vrot.lane.b32.xlu0 %v844, 64
    %v853 = vpop.permute.xlu0 %852
    %v855 = vmul.f32 %v843, %v853
    %857 = vrot.lane.b32.xlu0 %v855, 32
    %v858 = vpop.permute.xlu0 %857
    %v860 = vadd.f32 %v850, %v858
    %v861 = vtanh.pop %v860
    %863 = vrot.lane.b32.xlu0 %v861, 64
    %v864 = vpop.permute.xlu0 %863
    %v866 = vmul.f32 %v843, %v864
    %v867 = vld [vmem:[#allocation5] sm:$0x3]
    %v868 = vxor.u32 %v823, 2147483648
    %v869 = vmul.f32 %v868, 1.442695
    %v870 = vpow.pop %v869
    %v871 = vadd.f32 %v870, 1.0
    %v872 = vrcp.pop %v871
    %v873 = vmul.f32 %v871, %v872
    %v874 = vsub.f32 1.0, %v873
    %v875 = vmul.f32 %v872, %v874
    %v876 = vadd.f32 %v872, %v875
    %vm877 = vweird.f32 %v871
    %vm878 = vweird.f32 %v872
    %vm879 = vmor %vm877, %vm878
    %v880 = vsel %vm879, %v872, %v876
    %v881 = vand.u32 2147483647, %v871
    %vm882 = vcmp.eq.f32.partialorder %v881, 8.507059e+37
    %v883 = vand.u32 %v871, 2147483648
    %v884 = vor.u32 1.1754944e-38, %v883
    %v885 = vsel %vm882, %v884, %v880
    %v886 = vmul.f32 1.0, %v885
    %v887 = vtanh.pop %v823
    %889 = vrot.lane.b32.xlu0 %v867, 32
    %v890 = vpop.permute.xlu0 %889
    %v892 = vmul.f32 %v886, %v890
    %894 = vrot.lane.b32.xlu0 %v887, 64
    %v895 = vpop.permute.xlu0 %894
    %v897 = vmul.f32 %v886, %v895
    %899 = vrot.lane.b32.xlu0 %v897, 32
    %v900 = vpop.permute.xlu0 %899
    %v902 = vadd.f32 %v892, %v900
    %v903 = vtanh.pop %v902
    %905 = vrot.lane.b32.xlu0 %v903, 64
    %v906 = vpop.permute.xlu0 %905
    %v908 = vmul.f32 %v886, %v906
    %vm909 = vcmp.gt.s32.totalorder %v122, 3
    %vm910 = vcmp.gt.s32.totalorder %v122, 4
    %v911 = vsel %vm909, 1, 0
    %912 = vset.pattern.permute.xlu0 0
    %913 = vperm.xlu0 %912, %v911
    %v914 = vpop.permute.xlu0 %913
    %vm915 = vcmp.eq.s32.totalorder %v914, 1
    %v917 = vrot.slane %v860, 6
    %918 = vrot.lane.b32.xlu0 %v917, 96
    %v919 = vpop.permute.xlu0 %918
    %v921 = vsel %vm915, %v919, %v824
    %922 = vst.msk [vmem:[#allocation4] sm:$0x3] %vm119, %v921
    %v923 = vld [vmem:[#allocation5] sm:$0x3]
    %v924 = vsel %vm910, 1, 0
    %925 = vset.pattern.permute.xlu0 0
    %926 = vperm.xlu0 %925, %v924
    %v927 = vpop.permute.xlu0 %926
    %vm928 = vcmp.eq.s32.totalorder %v927, 1
    %930 = vrot.lane.b32.xlu0 %v923, 32
    %v931 = vpop.permute.xlu0 %930
    %v933 = vsel %vm928, %v902, %v931
    %935 = vrot.lane.b32.xlu0 %v933, 96
    %v936 = vpop.permute.xlu0 %935
    %938 = vst.msk [vmem:[#allocation5] sm:$0x3] %vm119, %v936
    %v939 = vld [vmem:[#allocation3] sm:$0x3]
    %v941 = vrot.slane %v866, 6
    %942 = vrot.lane.b32.xlu0 %v941, 32
    %v943 = vpop.permute.xlu0 %942
    %v945 = vsel %vm915, %v943, %v939
    %947 = vrot.lane.b32.xlu0 %v939, 64
    %v948 = vpop.permute.xlu0 %947
    %v950 = vsel %vm928, %v908, %v948
    %952 = vrot.lane.b32.xlu0 %v950, 64
    %v953 = vpop.permute.xlu0 %952
    %v955 = vsel %vm321, %v945, %v953
    %956 = vst.msk [vmem:[#allocation3] sm:$0x3] %vm117, %v955
    %v957 = vsel %vm915, %v943, 0.0
    %s958 = scalar_lea.vmem [#allocation6], 6
    %959 = vst.msk [vmem:[%s958] sm:$0x3] %vm119, %v957
    %v960 = vsel %vm928, %v908, 0.0
    %962 = vrot.lane.b32.xlu0 %v960, 32
    %v963 = vpop.permute.xlu0 %962
    %s965 = scalar_lea.vmem [#allocation7], 8
    %966 = vst.msk [vmem:[%s965] sm:$0x3] %vm119, %v963
    %v967 = vld [vmem:[#allocation3] sm:$0x3]
    %v968 = vld [vmem:[#allocation8] sm:$0xff]
    %v969 = vld [vmem:[#allocation8 + $0x8] sm:$0xff]
    %v970 = vld [vmem:[#allocation8 + $0x10] sm:$0xff]
    %v971 = vld [vmem:[#allocation8 + $0x18] sm:$0xff]
    %v972 = vld [vmem:[#allocation8 + $0x20] sm:$0xff]
    %v973 = vld [vmem:[#allocation8 + $0x28] sm:$0xff]
    %v974 = vld [vmem:[#allocation8 + $0x30] sm:$0xff]
    %v975 = vld [vmem:[#allocation8 + $0x38] sm:$0xff]
    %v976 = vld [vmem:[#allocation8 + $0x40] sm:$0xff]
    %v977 = vld [vmem:[#allocation8 + $0x48] sm:$0xff]
    %v978 = vld [vmem:[#allocation8 + $0x50] sm:$0xff]
    %v979 = vld [vmem:[#allocation8 + $0x58] sm:$0xff]
    %v980 = vld [vmem:[#allocation8 + $0x60] sm:$0xff]
    %v981 = vld [vmem:[#allocation8 + $0x68] sm:$0xff]
    %v982 = vld [vmem:[#allocation8 + $0x70] sm:$0xff]
    %v983 = vld [vmem:[#allocation8 + $0x78] sm:$0xff]
    %v985 = vsel %vm60, %v967, 0
    %987 = vmatpush.msra.mxu0 0.0
    %988 = vmatpush.msra.mxu0 0.0
    %989 = vmatpush.msra.mxu0 0.0
    %990 = vmatpush.msra.mxu0 0.0
    %991 = vmatpush.msra.mxu0 0.0
    %992 = vmatpush.msra.mxu0 0.0
    %993 = vmatpush.msra.mxu0 0.0
    %994 = vmatpush.msra.mxu0 0.0
    %995 = vmatpush.msra.mxu0 %v982
    %996 = vmatpush.msra.mxu0 %v980
    %997 = vmatpush.msra.mxu0 %v978
    %998 = vmatpush.msra.mxu0 %v976
    %999 = vmatpush.msra.mxu0 %v974
    %1000 = vmatpush.msra.mxu0 %v972
    %1001 = vmatpush.msra.mxu0 %v970
    %1002 = vmatpush.msra.mxu0 %v968
    %1003 = vmatmul.f32.gmra.mxu0 %v985
    %v1004 = vpop.f32.mrf.mxu0
    %v1005 = vadd.f32 0.0, %v1004
    %1006 = vdwg.mxu0
    %1007 = vmatpush.msra.mxu0 0.0
    %1008 = vmatpush.msra.mxu0 0.0
    %1009 = vmatpush.msra.mxu0 0.0
    %1010 = vmatpush.msra.mxu0 0.0
    %1011 = vmatpush.msra.mxu0 0.0
    %1012 = vmatpush.msra.mxu0 0.0
    %1013 = vmatpush.msra.mxu0 0.0
    %1014 = vmatpush.msra.mxu0 0.0
    %1015 = vmatpush.msra.mxu0 %v983
    %1016 = vmatpush.msra.mxu0 %v981
    %1017 = vmatpush.msra.mxu0 %v979
    %1018 = vmatpush.msra.mxu0 %v977
    %1019 = vmatpush.msra.mxu0 %v975
    %1020 = vmatpush.msra.mxu0 %v973
    %1021 = vmatpush.msra.mxu0 %v971
    %1022 = vmatpush.msra.mxu0 %v969
    %1023 = vmatmul.f32.gmra.mxu0 %v985
    %v1024 = vpop.f32.mrf.mxu0
    %v1025 = vadd.f32 0.0, %v1024
    %1026 = vdwg.mxu0
    %v1027 = vld [vmem:[#allocation2 + $0x10] sm:$0x3]
    %v1028 = vld [vmem:[#allocation2 + $0x8] sm:$0xc0]
    %v1029 = vadd.f32 %v1027, %v1005
    %v1031 = vrot.slane %v1025, 2
    %v1033 = vadd.f32 %v1028, %v1031
    %v1034 = vld [vmem:[#allocation4] sm:$0x3]
    %v1035 = vxor.u32 %v1029, 2147483648
    %v1036 = vmul.f32 %v1035, 1.442695
    %v1037 = vpow.pop %v1036
    %v1038 = vadd.f32 %v1037, 1.0
    %v1039 = vrcp.pop %v1038
    %v1040 = vmul.f32 %v1038, %v1039
    %v1041 = vsub.f32 1.0, %v1040
    %v1042 = vmul.f32 %v1039, %v1041
    %v1043 = vadd.f32 %v1039, %v1042
    %vm1044 = vweird.f32 %v1038
    %vm1045 = vweird.f32 %v1039
    %vm1046 = vmor %vm1044, %vm1045
    %v1047 = vsel %vm1046, %v1039, %v1043
    %v1048 = vand.u32 2147483647, %v1038
    %vm1049 = vcmp.eq.f32.partialorder %v1048, 8.507059e+37
    %v1050 = vand.u32 %v1038, 2147483648
    %v1051 = vor.u32 1.1754944e-38, %v1050
    %v1052 = vsel %vm1049, %v1051, %v1047
    %v1053 = vmul.f32 1.0, %v1052
    %v1054 = vtanh.pop %v1029
    %1056 = vrot.lane.b32.xlu0 %v1034, 32
    %v1057 = vpop.permute.xlu0 %1056
    %v1059 = vmul.f32 %v1053, %v1057
    %1061 = vrot.lane.b32.xlu0 %v1054, 64
    %v1062 = vpop.permute.xlu0 %1061
    %v1064 = vmul.f32 %v1053, %v1062
    %1066 = vrot.lane.b32.xlu0 %v1064, 32
    %v1067 = vpop.permute.xlu0 %1066
    %v1069 = vadd.f32 %v1059, %v1067
    %v1070 = vtanh.pop %v1069
    %1072 = vrot.lane.b32.xlu0 %v1070, 64
    %v1073 = vpop.permute.xlu0 %1072
    %v1075 = vmul.f32 %v1053, %v1073
    %v1076 = vld [vmem:[#allocation5] sm:$0x3]
    %v1077 = vxor.u32 %v1033, 2147483648
    %v1078 = vmul.f32 %v1077, 1.442695
    %v1079 = vpow.pop %v1078
    %v1080 = vadd.f32 %v1079, 1.0
    %v1081 = vrcp.pop %v1080
    %v1082 = vmul.f32 %v1080, %v1081
    %v1083 = vsub.f32 1.0, %v1082
    %v1084 = vmul.f32 %v1081, %v1083
    %v1085 = vadd.f32 %v1081, %v1084
    %vm1086 = vweird.f32 %v1080
    %vm1087 = vweird.f32 %v1081
    %vm1088 = vmor %vm1086, %vm1087
    %v1089 = vsel %vm1088, %v1081, %v1085
    %v1090 = vand.u32 2147483647, %v1080
    %vm1091 = vcmp.eq.f32.partialorder %v1090, 8.507059e+37
    %v1092 = vand.u32 %v1080, 2147483648
    %v1093 = vor.u32 1.1754944e-38, %v1092
    %v1094 = vsel %vm1091, %v1093, %v1089
    %v1095 = vmul.f32 1.0, %v1094
    %v1096 = vtanh.pop %v1033
    %v1098 = vrot.slane %v1076, 2
    %1099 = vrot.lane.b32.xlu0 %v1098, 32
    %v1100 = vpop.permute.xlu0 %1099
    %v1102 = vmul.f32 %v1095, %v1100
    %1104 = vrot.lane.b32.xlu0 %v1096, 64
    %v1105 = vpop.permute.xlu0 %1104
    %v1107 = vmul.f32 %v1095, %v1105
    %1109 = vrot.lane.b32.xlu0 %v1107, 32
    %v1110 = vpop.permute.xlu0 %1109
    %v1112 = vadd.f32 %v1102, %v1110
    %v1113 = vtanh.pop %v1112
    %1115 = vrot.lane.b32.xlu0 %v1113, 64
    %v1116 = vpop.permute.xlu0 %1115
    %v1118 = vmul.f32 %v1095, %v1116
    %v1119 = vsel %vm928, %v1069, %v1057
    %1121 = vrot.lane.b32.xlu0 %v1119, 96
    %v1122 = vpop.permute.xlu0 %1121
    %1124 = vst.msk [vmem:[#allocation4] sm:$0x3] %vm119, %v1122
    %v1125 = vld [vmem:[#allocation5] sm:$0x3]
    %v1127 = vrot.slane %v1112, 6
    %1128 = vrot.lane.b32.xlu0 %v1127, 96
    %v1129 = vpop.permute.xlu0 %1128
    %v1131 = vsel %vm915, %v1129, %v1125
    %1132 = vst.msk [vmem:[#allocation5] sm:$0x3] %vm119, %v1131
    %v1133 = vld [vmem:[#allocation3] sm:$0x3]
    %1135 = vrot.lane.b32.xlu0 %v1133, 96
    %v1136 = vpop.permute.xlu0 %1135
    %v1138 = vsel %vm928, %v1075, %v1136
    %v1140 = vrot.slane %v1118, 6
    %1141 = vrot.lane.b32.xlu0 %v1140, 32
    %v1142 = vpop.permute.xlu0 %1141
    %v1144 = vsel %vm915, %v1142, %v1136
    %1146 = vrot.lane.b32.xlu0 %v1138, 32
    %v1147 = vpop.permute.xlu0 %1146
    %1150 = vrot.lane.b32.xlu0 %v1144, 32
    %v1151 = vpop.permute.xlu0 %1150
    %v1153 = vsel %vm321, %v1147, %v1151
    %1154 = vst.msk [vmem:[#allocation3] sm:$0x3] %vm117, %v1153
    %v1155 = vsel %vm928, %v1075, 0.0
    %1157 = vrot.lane.b32.xlu0 %v1155, 32
    %v1158 = vpop.permute.xlu0 %1157
    %s1160 = scalar_lea.vmem [#allocation6], 8
    %1161 = vst.msk [vmem:[%s1160] sm:$0x3] %vm119, %v1158
    %v1162 = vsel %vm915, %v1142, 0.0
    %s1163 = scalar_lea.vmem [#allocation7], 6
    %1164 = vst.msk [vmem:[%s1163] sm:$0x3] %vm119, %v1162
    %v1165 = vld [vmem:[#allocation3] sm:$0x3]
    %v1166 = vld [vmem:[#allocation8] sm:$0xff]
    %v1167 = vld [vmem:[#allocation8 + $0x8] sm:$0xff]
    %v1168 = vld [vmem:[#allocation8 + $0x10] sm:$0xff]
    %v1169 = vld [vmem:[#allocation8 + $0x18] sm:$0xff]
    %v1170 = vld [vmem:[#allocation8 + $0x20] sm:$0xff]
    %v1171 = vld [vmem:[#allocation8 + $0x28] sm:$0xff]
    %v1172 = vld [vmem:[#allocation8 + $0x30] sm:$0xff]
    %v1173 = vld [vmem:[#allocation8 + $0x38] sm:$0xff]
    %v1174 = vld [vmem:[#allocation8 + $0x40] sm:$0xff]
    %v1175 = vld [vmem:[#allocation8 + $0x48] sm:$0xff]
    %v1176 = vld [vmem:[#allocation8 + $0x50] sm:$0xff]
    %v1177 = vld [vmem:[#allocation8 + $0x58] sm:$0xff]
    %v1178 = vld [vmem:[#allocation8 + $0x60] sm:$0xff]
    %v1179 = vld [vmem:[#allocation8 + $0x68] sm:$0xff]
    %v1180 = vld [vmem:[#allocation8 + $0x70] sm:$0xff]
    %v1181 = vld [vmem:[#allocation8 + $0x78] sm:$0xff]
    %v1183 = vsel %vm60, %v1165, 0
    %1185 = vmatpush.msra.mxu0 0.0
    %1186 = vmatpush.msra.mxu0 0.0
    %1187 = vmatpush.msra.mxu0 0.0
    %1188 = vmatpush.msra.mxu0 0.0
    %1189 = vmatpush.msra.mxu0 0.0
    %1190 = vmatpush.msra.mxu0 0.0
    %1191 = vmatpush.msra.mxu0 0.0
    %1192 = vmatpush.msra.mxu0 0.0
    %1193 = vmatpush.msra.mxu0 %v1180
    %1194 = vmatpush.msra.mxu0 %v1178
    %1195 = vmatpush.msra.mxu0 %v1176
    %1196 = vmatpush.msra.mxu0 %v1174
    %1197 = vmatpush.msra.mxu0 %v1172
    %1198 = vmatpush.msra.mxu0 %v1170
    %1199 = vmatpush.msra.mxu0 %v1168
    %1200 = vmatpush.msra.mxu0 %v1166
    %1201 = vmatmul.f32.gmra.mxu0 %v1183
    %v1202 = vpop.f32.mrf.mxu0
    %v1203 = vadd.f32 0.0, %v1202
    %1204 = vdwg.mxu0
    %1205 = vmatpush.msra.mxu0 0.0
    %1206 = vmatpush.msra.mxu0 0.0
    %1207 = vmatpush.msra.mxu0 0.0
    %1208 = vmatpush.msra.mxu0 0.0
    %1209 = vmatpush.msra.mxu0 0.0
    %1210 = vmatpush.msra.mxu0 0.0
    %1211 = vmatpush.msra.mxu0 0.0
    %1212 = vmatpush.msra.mxu0 0.0
    %1213 = vmatpush.msra.mxu0 %v1181
    %1214 = vmatpush.msra.mxu0 %v1179
    %1215 = vmatpush.msra.mxu0 %v1177
    %1216 = vmatpush.msra.mxu0 %v1175
    %1217 = vmatpush.msra.mxu0 %v1173
    %1218 = vmatpush.msra.mxu0 %v1171
    %1219 = vmatpush.msra.mxu0 %v1169
    %1220 = vmatpush.msra.mxu0 %v1167
    %1221 = vmatmul.f32.gmra.mxu0 %v1183
    %v1222 = vpop.f32.mrf.mxu0
    %v1223 = vadd.f32 0.0, %v1222
    %1224 = vdwg.mxu0
    %v1225 = vld [vmem:[#allocation2 + $0x10] sm:$0xc]
    %v1226 = vld [vmem:[#allocation2 + $0x8] sm:$0x30]
    %v1228 = vrot.slane %v1203, 6
    %v1230 = vadd.f32 %v1225, %v1228
    %v1232 = vrot.slane %v1223, 4
    %v1234 = vadd.f32 %v1226, %v1232
    %v1235 = vld [vmem:[#allocation4] sm:$0x3]
    %v1236 = vxor.u32 %v1230, 2147483648
    %v1237 = vmul.f32 %v1236, 1.442695
    %v1238 = vpow.pop %v1237
    %v1239 = vadd.f32 %v1238, 1.0
    %v1240 = vrcp.pop %v1239
    %v1241 = vmul.f32 %v1239, %v1240
    %v1242 = vsub.f32 1.0, %v1241
    %v1243 = vmul.f32 %v1240, %v1242
    %v1244 = vadd.f32 %v1240, %v1243
    %vm1245 = vweird.f32 %v1239
    %vm1246 = vweird.f32 %v1240
    %vm1247 = vmor %vm1245, %vm1246
    %v1248 = vsel %vm1247, %v1240, %v1244
    %v1249 = vand.u32 2147483647, %v1239
    %vm1250 = vcmp.eq.f32.partialorder %v1249, 8.507059e+37
    %v1251 = vand.u32 %v1239, 2147483648
    %v1252 = vor.u32 1.1754944e-38, %v1251
    %v1253 = vsel %vm1250, %v1252, %v1248
    %v1254 = vmul.f32 1.0, %v1253
    %v1255 = vtanh.pop %v1230
    %v1257 = vrot.slane %v1235, 6
    %1258 = vrot.lane.b32.xlu0 %v1257, 32
    %v1259 = vpop.permute.xlu0 %1258
    %v1261 = vmul.f32 %v1254, %v1259
    %1263 = vrot.lane.b32.xlu0 %v1255, 64
    %v1264 = vpop.permute.xlu0 %1263
    %v1266 = vmul.f32 %v1254, %v1264
    %1268 = vrot.lane.b32.xlu0 %v1266, 32
    %v1269 = vpop.permute.xlu0 %1268
    %v1271 = vadd.f32 %v1261, %v1269
    %v1272 = vtanh.pop %v1271
    %1274 = vrot.lane.b32.xlu0 %v1272, 64
    %v1275 = vpop.permute.xlu0 %1274
    %v1277 = vmul.f32 %v1254, %v1275
    %v1278 = vld [vmem:[#allocation5] sm:$0x3]
    %v1279 = vxor.u32 %v1234, 2147483648
    %v1280 = vmul.f32 %v1279, 1.442695
    %v1281 = vpow.pop %v1280
    %v1282 = vadd.f32 %v1281, 1.0
    %v1283 = vrcp.pop %v1282
    %v1284 = vmul.f32 %v1282, %v1283
    %v1285 = vsub.f32 1.0, %v1284
    %v1286 = vmul.f32 %v1283, %v1285
    %v1287 = vadd.f32 %v1283, %v1286
    %vm1288 = vweird.f32 %v1282
    %vm1289 = vweird.f32 %v1283
    %vm1290 = vmor %vm1288, %vm1289
    %v1291 = vsel %vm1290, %v1283, %v1287
    %v1292 = vand.u32 2147483647, %v1282
    %vm1293 = vcmp.eq.f32.partialorder %v1292, 8.507059e+37
    %v1294 = vand.u32 %v1282, 2147483648
    %v1295 = vor.u32 1.1754944e-38, %v1294
    %v1296 = vsel %vm1293, %v1295, %v1291
    %v1297 = vmul.f32 1.0, %v1296
    %v1298 = vtanh.pop %v1234
    %v1300 = vrot.slane %v1278, 4
    %1301 = vrot.lane.b32.xlu0 %v1300, 32
    %v1302 = vpop.permute.xlu0 %1301
    %v1304 = vmul.f32 %v1297, %v1302
    %1306 = vrot.lane.b32.xlu0 %v1298, 64
    %v1307 = vpop.permute.xlu0 %1306
    %v1309 = vmul.f32 %v1297, %v1307
    %1311 = vrot.lane.b32.xlu0 %v1309, 32
    %v1312 = vpop.permute.xlu0 %1311
    %v1314 = vadd.f32 %v1304, %v1312
    %v1315 = vtanh.pop %v1314
    %1317 = vrot.lane.b32.xlu0 %v1315, 64
    %v1318 = vpop.permute.xlu0 %1317
    %v1320 = vmul.f32 %v1297, %v1318
    %v1322 = vrot.slane %v1271, 2
    %1323 = vrot.lane.b32.xlu0 %v1322, 96
    %v1324 = vpop.permute.xlu0 %1323
    %v1326 = vsel %vm720, %v1324, %v1235
    %1327 = vst.msk [vmem:[#allocation4] sm:$0x3] %vm119, %v1326
    %v1328 = vld [vmem:[#allocation5] sm:$0x3]
    %v1330 = vrot.slane %v1314, 4
    %1331 = vrot.lane.b32.xlu0 %v1330, 96
    %v1332 = vpop.permute.xlu0 %1331
    %v1334 = vsel %vm707, %v1332, %v1328
    %1335 = vst.msk [vmem:[#allocation5] sm:$0x3] %vm119, %v1334
    %v1336 = vld [vmem:[#allocation3] sm:$0x3]
    %v1338 = vrot.slane %v1277, 2
    %1339 = vrot.lane.b32.xlu0 %v1338, 32
    %v1340 = vpop.permute.xlu0 %1339
    %v1342 = vsel %vm720, %v1340, %v1336
    %v1344 = vrot.slane %v1320, 4
    %1345 = vrot.lane.b32.xlu0 %v1344, 32
    %v1346 = vpop.permute.xlu0 %1345
    %1349 = vrot.lane.b32.xlu0 %v1336, 96
    %v1350 = vpop.permute.xlu0 %1349
    %v1352 = vsel %vm707, %v1346, %v1350
    %1354 = vrot.lane.b32.xlu0 %v1352, 32
    %v1355 = vpop.permute.xlu0 %1354
    %v1357 = vsel %vm321, %v1342, %v1355
    %1358 = vst.msk [vmem:[#allocation3] sm:$0x3] %vm117, %v1357
    %v1359 = vsel %vm720, %v1340, 0.0
    %s1360 = scalar_lea.vmem [#allocation6], 10
    %1361 = vst.msk [vmem:[%s1360] sm:$0x3] %vm119, %v1359
    %v1362 = vsel %vm707, %v1346, 0.0
    %s1363 = scalar_lea.vmem [#allocation7], 4
    %1364 = vst.msk [vmem:[%s1363] sm:$0x3] %vm119, %v1362
    %v1365 = vld [vmem:[#allocation3] sm:$0x3]
    %v1366 = vld [vmem:[#allocation8] sm:$0xff]
    %v1367 = vld [vmem:[#allocation8 + $0x8] sm:$0xff]
    %v1368 = vld [vmem:[#allocation8 + $0x10] sm:$0xff]
    %v1369 = vld [vmem:[#allocation8 + $0x18] sm:$0xff]
    %v1370 = vld [vmem:[#allocation8 + $0x20] sm:$0xff]
    %v1371 = vld [vmem:[#allocation8 + $0x28] sm:$0xff]
    %v1372 = vld [vmem:[#allocation8 + $0x30] sm:$0xff]
    %v1373 = vld [vmem:[#allocation8 + $0x38] sm:$0xff]
    %v1374 = vld [vmem:[#allocation8 + $0x40] sm:$0xff]
    %v1375 = vld [vmem:[#allocation8 + $0x48] sm:$0xff]
    %v1376 = vld [vmem:[#allocation8 + $0x50] sm:$0xff]
    %v1377 = vld [vmem:[#allocation8 + $0x58] sm:$0xff]
    %v1378 = vld [vmem:[#allocation8 + $0x60] sm:$0xff]
    %v1379 = vld [vmem:[#allocation8 + $0x68] sm:$0xff]
    %v1380 = vld [vmem:[#allocation8 + $0x70] sm:$0xff]
    %v1381 = vld [vmem:[#allocation8 + $0x78] sm:$0xff]
    %v1383 = vsel %vm60, %v1365, 0
    %1385 = vmatpush.msra.mxu0 0.0
    %1386 = vmatpush.msra.mxu0 0.0
    %1387 = vmatpush.msra.mxu0 0.0
    %1388 = vmatpush.msra.mxu0 0.0
    %1389 = vmatpush.msra.mxu0 0.0
    %1390 = vmatpush.msra.mxu0 0.0
    %1391 = vmatpush.msra.mxu0 0.0
    %1392 = vmatpush.msra.mxu0 0.0
    %1393 = vmatpush.msra.mxu0 %v1380
    %1394 = vmatpush.msra.mxu0 %v1378
    %1395 = vmatpush.msra.mxu0 %v1376
    %1396 = vmatpush.msra.mxu0 %v1374
    %1397 = vmatpush.msra.mxu0 %v1372
    %1398 = vmatpush.msra.mxu0 %v1370
    %1399 = vmatpush.msra.mxu0 %v1368
    %1400 = vmatpush.msra.mxu0 %v1366
    %1401 = vmatmul.f32.gmra.mxu0 %v1383
    %v1402 = vpop.f32.mrf.mxu0
    %v1403 = vadd.f32 0.0, %v1402
    %1404 = vdwg.mxu0
    %1405 = vmatpush.msra.mxu0 0.0
    %1406 = vmatpush.msra.mxu0 0.0
    %1407 = vmatpush.msra.mxu0 0.0
    %1408 = vmatpush.msra.mxu0 0.0
    %1409 = vmatpush.msra.mxu0 0.0
    %1410 = vmatpush.msra.mxu0 0.0
    %1411 = vmatpush.msra.mxu0 0.0
    %1412 = vmatpush.msra.mxu0 0.0
    %1413 = vmatpush.msra.mxu0 %v1381
    %1414 = vmatpush.msra.mxu0 %v1379
    %1415 = vmatpush.msra.mxu0 %v1377
    %1416 = vmatpush.msra.mxu0 %v1375
    %1417 = vmatpush.msra.mxu0 %v1373
    %1418 = vmatpush.msra.mxu0 %v1371
    %1419 = vmatpush.msra.mxu0 %v1369
    %1420 = vmatpush.msra.mxu0 %v1367
    %1421 = vmatmul.f32.gmra.mxu0 %v1383
    %v1422 = vpop.f32.mrf.mxu0
    %v1423 = vadd.f32 0.0, %v1422
    %1424 = vdwg.mxu0
    %v1425 = vld [vmem:[#allocation2 + $0x10] sm:$0x30]
    %v1426 = vld [vmem:[#allocation2 + $0x8] sm:$0xc]
    %v1428 = vrot.slane %v1403, 4
    %v1430 = vadd.f32 %v1425, %v1428
    %v1432 = vrot.slane %v1423, 6
    %v1434 = vadd.f32 %v1426, %v1432
    %v1435 = vld [vmem:[#allocation4] sm:$0x3]
    %v1436 = vxor.u32 %v1430, 2147483648
    %v1437 = vmul.f32 %v1436, 1.442695
    %v1438 = vpow.pop %v1437
    %v1439 = vadd.f32 %v1438, 1.0
    %v1440 = vrcp.pop %v1439
    %v1441 = vmul.f32 %v1439, %v1440
    %v1442 = vsub.f32 1.0, %v1441
    %v1443 = vmul.f32 %v1440, %v1442
    %v1444 = vadd.f32 %v1440, %v1443
    %vm1445 = vweird.f32 %v1439
    %vm1446 = vweird.f32 %v1440
    %vm1447 = vmor %vm1445, %vm1446
    %v1448 = vsel %vm1447, %v1440, %v1444
    %v1449 = vand.u32 2147483647, %v1439
    %vm1450 = vcmp.eq.f32.partialorder %v1449, 8.507059e+37
    %v1451 = vand.u32 %v1439, 2147483648
    %v1452 = vor.u32 1.1754944e-38, %v1451
    %v1453 = vsel %vm1450, %v1452, %v1448
    %v1454 = vmul.f32 1.0, %v1453
    %v1455 = vtanh.pop %v1430
    %v1457 = vrot.slane %v1435, 4
    %1458 = vrot.lane.b32.xlu0 %v1457, 32
    %v1459 = vpop.permute.xlu0 %1458
    %v1461 = vmul.f32 %v1454, %v1459
    %1463 = vrot.lane.b32.xlu0 %v1455, 64
    %v1464 = vpop.permute.xlu0 %1463
    %v1466 = vmul.f32 %v1454, %v1464
    %1468 = vrot.lane.b32.xlu0 %v1466, 32
    %v1469 = vpop.permute.xlu0 %1468
    %v1471 = vadd.f32 %v1461, %v1469
    %v1472 = vtanh.pop %v1471
    %1474 = vrot.lane.b32.xlu0 %v1472, 64
    %v1475 = vpop.permute.xlu0 %1474
    %v1477 = vmul.f32 %v1454, %v1475
    %v1478 = vld [vmem:[#allocation5] sm:$0x3]
    %v1479 = vxor.u32 %v1434, 2147483648
    %v1480 = vmul.f32 %v1479, 1.442695
    %v1481 = vpow.pop %v1480
    %v1482 = vadd.f32 %v1481, 1.0
    %v1483 = vrcp.pop %v1482
    %v1484 = vmul.f32 %v1482, %v1483
    %v1485 = vsub.f32 1.0, %v1484
    %v1486 = vmul.f32 %v1483, %v1485
    %v1487 = vadd.f32 %v1483, %v1486
    %vm1488 = vweird.f32 %v1482
    %vm1489 = vweird.f32 %v1483
    %vm1490 = vmor %vm1488, %vm1489
    %v1491 = vsel %vm1490, %v1483, %v1487
    %v1492 = vand.u32 2147483647, %v1482
    %vm1493 = vcmp.eq.f32.partialorder %v1492, 8.507059e+37
    %v1494 = vand.u32 %v1482, 2147483648
    %v1495 = vor.u32 1.1754944e-38, %v1494
    %v1496 = vsel %vm1493, %v1495, %v1491
    %v1497 = vmul.f32 1.0, %v1496
    %v1498 = vtanh.pop %v1434
    %v1500 = vrot.slane %v1478, 6
    %1501 = vrot.lane.b32.xlu0 %v1500, 32
    %v1502 = vpop.permute.xlu0 %1501
    %v1504 = vmul.f32 %v1497, %v1502
    %1506 = vrot.lane.b32.xlu0 %v1498, 64
    %v1507 = vpop.permute.xlu0 %1506
    %v1509 = vmul.f32 %v1497, %v1507
    %1511 = vrot.lane.b32.xlu0 %v1509, 32
    %v1512 = vpop.permute.xlu0 %1511
    %v1514 = vadd.f32 %v1504, %v1512
    %v1515 = vtanh.pop %v1514
    %1517 = vrot.lane.b32.xlu0 %v1515, 64
    %v1518 = vpop.permute.xlu0 %1517
    %v1520 = vmul.f32 %v1497, %v1518
    %v1522 = vrot.slane %v1471, 4
    %1523 = vrot.lane.b32.xlu0 %v1522, 96
    %v1524 = vpop.permute.xlu0 %1523
    %v1526 = vsel %vm508, %v1524, %v1435
    %1527 = vst.msk [vmem:[#allocation4] sm:$0x3] %vm119, %v1526
    %v1528 = vld [vmem:[#allocation5] sm:$0x3]
    %v1530 = vrot.slane %v1514, 2
    %1531 = vrot.lane.b32.xlu0 %v1530, 96
    %v1532 = vpop.permute.xlu0 %1531
    %v1534 = vsel %vm495, %v1532, %v1528
    %1535 = vst.msk [vmem:[#allocation5] sm:$0x3] %vm119, %v1534
    %v1536 = vld [vmem:[#allocation3] sm:$0x3]
    %v1538 = vrot.slane %v1477, 4
    %1539 = vrot.lane.b32.xlu0 %v1538, 32
    %v1540 = vpop.permute.xlu0 %1539
    %v1542 = vsel %vm508, %v1540, %v1536
    %v1544 = vrot.slane %v1520, 2
    %1545 = vrot.lane.b32.xlu0 %v1544, 32
    %v1546 = vpop.permute.xlu0 %1545
    %1549 = vrot.lane.b32.xlu0 %v1536, 96
    %v1550 = vpop.permute.xlu0 %1549
    %v1552 = vsel %vm495, %v1546, %v1550
    %1554 = vrot.lane.b32.xlu0 %v1552, 32
    %v1555 = vpop.permute.xlu0 %1554
    %v1557 = vsel %vm321, %v1542, %v1555
    %1558 = vst.msk [vmem:[#allocation3] sm:$0x3] %vm117, %v1557
    %v1559 = vsel %vm508, %v1540, 0.0
    %s1560 = scalar_lea.vmem [#allocation6], 12
    %1561 = vst.msk [vmem:[%s1560] sm:$0x3] %vm119, %v1559
    %v1562 = vsel %vm495, %v1546, 0.0
    %s1563 = scalar_lea.vmem [#allocation7], 2
    %1564 = vst.msk [vmem:[%s1563] sm:$0x3] %vm119, %v1562
    %v1565 = vld [vmem:[#allocation3] sm:$0x3]
    %v1566 = vld [vmem:[#allocation8] sm:$0xff]
    %v1567 = vld [vmem:[#allocation8 + $0x8] sm:$0xff]
    %v1568 = vld [vmem:[#allocation8 + $0x10] sm:$0xff]
    %v1569 = vld [vmem:[#allocation8 + $0x18] sm:$0xff]
    %v1570 = vld [vmem:[#allocation8 + $0x20] sm:$0xff]
    %v1571 = vld [vmem:[#allocation8 + $0x28] sm:$0xff]
    %v1572 = vld [vmem:[#allocation8 + $0x30] sm:$0xff]
    %v1573 = vld [vmem:[#allocation8 + $0x38] sm:$0xff]
    %v1574 = vld [vmem:[#allocation8 + $0x40] sm:$0xff]
    %v1575 = vld [vmem:[#allocation8 + $0x48] sm:$0xff]
    %v1576 = vld [vmem:[#allocation8 + $0x50] sm:$0xff]
    %v1577 = vld [vmem:[#allocation8 + $0x58] sm:$0xff]
    %v1578 = vld [vmem:[#allocation8 + $0x60] sm:$0xff]
    %v1579 = vld [vmem:[#allocation8 + $0x68] sm:$0xff]
    %v1580 = vld [vmem:[#allocation8 + $0x70] sm:$0xff]
    %v1581 = vld [vmem:[#allocation8 + $0x78] sm:$0xff]
    %v1583 = vsel %vm60, %v1565, 0
    %1585 = vmatpush.msra.mxu0 0.0
    %1586 = vmatpush.msra.mxu0 0.0
    %1587 = vmatpush.msra.mxu0 0.0
    %1588 = vmatpush.msra.mxu0 0.0
    %1589 = vmatpush.msra.mxu0 0.0
    %1590 = vmatpush.msra.mxu0 0.0
    %1591 = vmatpush.msra.mxu0 0.0
    %1592 = vmatpush.msra.mxu0 0.0
    %1593 = vmatpush.msra.mxu0 %v1580
    %1594 = vmatpush.msra.mxu0 %v1578
    %1595 = vmatpush.msra.mxu0 %v1576
    %1596 = vmatpush.msra.mxu0 %v1574
    %1597 = vmatpush.msra.mxu0 %v1572
    %1598 = vmatpush.msra.mxu0 %v1570
    %1599 = vmatpush.msra.mxu0 %v1568
    %1600 = vmatpush.msra.mxu0 %v1566
    %1601 = vmatmul.f32.gmra.mxu0 %v1583
    %v1602 = vpop.f32.mrf.mxu0
    %v1603 = vadd.f32 0.0, %v1602
    %1604 = vdwg.mxu0
    %1605 = vmatpush.msra.mxu0 0.0
    %1606 = vmatpush.msra.mxu0 0.0
    %1607 = vmatpush.msra.mxu0 0.0
    %1608 = vmatpush.msra.mxu0 0.0
    %1609 = vmatpush.msra.mxu0 0.0
    %1610 = vmatpush.msra.mxu0 0.0
    %1611 = vmatpush.msra.mxu0 0.0
    %1612 = vmatpush.msra.mxu0 0.0
    %1613 = vmatpush.msra.mxu0 %v1581
    %1614 = vmatpush.msra.mxu0 %v1579
    %1615 = vmatpush.msra.mxu0 %v1577
    %1616 = vmatpush.msra.mxu0 %v1575
    %1617 = vmatpush.msra.mxu0 %v1573
    %1618 = vmatpush.msra.mxu0 %v1571
    %1619 = vmatpush.msra.mxu0 %v1569
    %1620 = vmatpush.msra.mxu0 %v1567
    %1621 = vmatmul.f32.gmra.mxu0 %v1583
    %v1622 = vpop.f32.mrf.mxu0
    %v1623 = vadd.f32 0.0, %v1622
    %1624 = vdwg.mxu0
    %v1625 = vld [vmem:[#allocation2 + $0x10] sm:$0xc0]
    %v1626 = vld [vmem:[#allocation2 + $0x8] sm:$0x3]
    %v1628 = vrot.slane %v1603, 2
    %v1630 = vadd.f32 %v1625, %v1628
    %v1631 = vadd.f32 %v1626, %v1623
    %v1632 = vld [vmem:[#allocation4] sm:$0x3]
    %v1633 = vxor.u32 %v1630, 2147483648
    %v1634 = vmul.f32 %v1633, 1.442695
    %v1635 = vpow.pop %v1634
    %v1636 = vadd.f32 %v1635, 1.0
    %v1637 = vrcp.pop %v1636
    %v1638 = vmul.f32 %v1636, %v1637
    %v1639 = vsub.f32 1.0, %v1638
    %v1640 = vmul.f32 %v1637, %v1639
    %v1641 = vadd.f32 %v1637, %v1640
    %vm1642 = vweird.f32 %v1636
    %vm1643 = vweird.f32 %v1637
    %vm1644 = vmor %vm1642, %vm1643
    %v1645 = vsel %vm1644, %v1637, %v1641
    %v1646 = vand.u32 2147483647, %v1636
    %vm1647 = vcmp.eq.f32.partialorder %v1646, 8.507059e+37
    %v1648 = vand.u32 %v1636, 2147483648
    %v1649 = vor.u32 1.1754944e-38, %v1648
    %v1650 = vsel %vm1647, %v1649, %v1645
    %v1651 = vmul.f32 1.0, %v1650
    %v1652 = vtanh.pop %v1630
    %v1654 = vrot.slane %v1632, 2
    %1655 = vrot.lane.b32.xlu0 %v1654, 32
    %v1656 = vpop.permute.xlu0 %1655
    %v1658 = vmul.f32 %v1651, %v1656
    %1660 = vrot.lane.b32.xlu0 %v1652, 64
    %v1661 = vpop.permute.xlu0 %1660
    %v1663 = vmul.f32 %v1651, %v1661
    %1665 = vrot.lane.b32.xlu0 %v1663, 32
    %v1666 = vpop.permute.xlu0 %1665
    %v1668 = vadd.f32 %v1658, %v1666
    %v1669 = vtanh.pop %v1668
    %1671 = vrot.lane.b32.xlu0 %v1669, 64
    %v1672 = vpop.permute.xlu0 %1671
    %v1674 = vmul.f32 %v1651, %v1672
    %v1675 = vld [vmem:[#allocation5] sm:$0x3]
    %v1676 = vxor.u32 %v1631, 2147483648
    %v1677 = vmul.f32 %v1676, 1.442695
    %v1678 = vpow.pop %v1677
    %v1679 = vadd.f32 %v1678, 1.0
    %v1680 = vrcp.pop %v1679
    %v1681 = vmul.f32 %v1679, %v1680
    %v1682 = vsub.f32 1.0, %v1681
    %v1683 = vmul.f32 %v1680, %v1682
    %v1684 = vadd.f32 %v1680, %v1683
    %vm1685 = vweird.f32 %v1679
    %vm1686 = vweird.f32 %v1680
    %vm1687 = vmor %vm1685, %vm1686
    %v1688 = vsel %vm1687, %v1680, %v1684
    %v1689 = vand.u32 2147483647, %v1679
    %vm1690 = vcmp.eq.f32.partialorder %v1689, 8.507059e+37
    %v1691 = vand.u32 %v1679, 2147483648
    %v1692 = vor.u32 1.1754944e-38, %v1691
    %v1693 = vsel %vm1690, %v1692, %v1688
    %v1694 = vmul.f32 1.0, %v1693
    %v1695 = vtanh.pop %v1631
    %1697 = vrot.lane.b32.xlu0 %v1675, 32
    %v1698 = vpop.permute.xlu0 %1697
    %v1700 = vmul.f32 %v1694, %v1698
    %1702 = vrot.lane.b32.xlu0 %v1695, 64
    %v1703 = vpop.permute.xlu0 %1702
    %v1705 = vmul.f32 %v1694, %v1703
    %1707 = vrot.lane.b32.xlu0 %v1705, 32
    %v1708 = vpop.permute.xlu0 %1707
    %v1710 = vadd.f32 %v1700, %v1708
    %v1711 = vtanh.pop %v1710
    %1713 = vrot.lane.b32.xlu0 %v1711, 64
    %v1714 = vpop.permute.xlu0 %1713
    %v1716 = vmul.f32 %v1694, %v1714
    %v1718 = vrot.slane %v1668, 6
    %1719 = vrot.lane.b32.xlu0 %v1718, 96
    %v1720 = vpop.permute.xlu0 %1719
    %v1722 = vsel %vm293, %v1720, %v1632
    %1723 = vst.msk [vmem:[#allocation4] sm:$0x3] %vm119, %v1722
    %v1724 = vld [vmem:[#allocation5] sm:$0x3]
    %1726 = vrot.lane.b32.xlu0 %v1724, 32
    %v1727 = vpop.permute.xlu0 %1726
    %v1729 = vsel %vm281, %v1710, %v1727
    %1731 = vrot.lane.b32.xlu0 %v1729, 96
    %v1732 = vpop.permute.xlu0 %1731
    %1734 = vst.msk [vmem:[#allocation5] sm:$0x3] %vm119, %v1732
    %v1735 = vld [vmem:[#allocation3] sm:$0x3]
    %v1737 = vrot.slane %v1674, 6
    %1738 = vrot.lane.b32.xlu0 %v1737, 32
    %v1739 = vpop.permute.xlu0 %1738
    %v1741 = vsel %vm293, %v1739, %v1735
    %1743 = vrot.lane.b32.xlu0 %v1735, 64
    %v1744 = vpop.permute.xlu0 %1743
    %v1746 = vsel %vm281, %v1716, %v1744
    %1748 = vrot.lane.b32.xlu0 %v1746, 64
    %v1749 = vpop.permute.xlu0 %1748
    %v1751 = vsel %vm321, %v1741, %v1749
    %1752 = vst.msk [vmem:[#allocation3] sm:$0x3] %vm117, %v1751
    %v1753 = vsel %vm293, %v1739, 0.0
    %s1754 = scalar_lea.vmem [#allocation6], 14
    %1755 = vst.msk [vmem:[%s1754] sm:$0x3] %vm119, %v1753
    %v1756 = vsel %vm281, %v1716, 0.0
    %1758 = vrot.lane.b32.xlu0 %v1756, 32
    %v1759 = vpop.permute.xlu0 %1758
    %1761 = vst.msk [vmem:[#allocation7] sm:$0x3] %vm119, %v1759
    %v1762 = vld [vmem:[#allocation6] sm:$0x3]
    %v1763 = vld [vmem:[#allocation6 + $0x2] sm:$0x3]
    %v1764 = vld [vmem:[#allocation6 + $0x4] sm:$0x3]
    %v1765 = vld [vmem:[#allocation6 + $0x6] sm:$0x3]
    %v1766 = vld [vmem:[#allocation6 + $0x8] sm:$0x3]
    %v1767 = vld [vmem:[#allocation6 + $0xa] sm:$0x3]
    %v1768 = vld [vmem:[#allocation6 + $0xc] sm:$0x3]
    %v1769 = vld [vmem:[#allocation6 + $0xe] sm:$0x3]
    %v1770 = vld [vmem:[#allocation7] sm:$0x3]
    %v1771 = vld [vmem:[#allocation7 + $0x2] sm:$0x3]
    %v1772 = vld [vmem:[#allocation7 + $0x4] sm:$0x3]
    %v1773 = vld [vmem:[#allocation7 + $0x6] sm:$0x3]
    %v1774 = vld [vmem:[#allocation7 + $0x8] sm:$0x3]
    %v1775 = vld [vmem:[#allocation7 + $0xa] sm:$0x3]
    %v1776 = vld [vmem:[#allocation7 + $0xc] sm:$0x3]
    %v1777 = vld [vmem:[#allocation7 + $0xe] sm:$0x3]
    %1786 = vrot.lane.b32.xlu0 %v1770, 32
    %v1787 = vpop.permute.xlu0 %1786
    %1788 = vrot.lane.b32.xlu0 %v1771, 32
    %v1789 = vpop.permute.xlu0 %1788
    %1790 = vrot.lane.b32.xlu0 %v1772, 32
    %v1791 = vpop.permute.xlu0 %1790
    %1792 = vrot.lane.b32.xlu0 %v1773, 32
    %v1793 = vpop.permute.xlu0 %1792
    %1794 = vrot.lane.b32.xlu0 %v1774, 32
    %v1795 = vpop.permute.xlu0 %1794
    %1796 = vrot.lane.b32.xlu0 %v1775, 32
    %v1797 = vpop.permute.xlu0 %1796
    %1798 = vrot.lane.b32.xlu0 %v1776, 32
    %v1799 = vpop.permute.xlu0 %1798
    %1800 = vrot.lane.b32.xlu0 %v1777, 32
    %v1801 = vpop.permute.xlu0 %1800
    %v1810 = vsel %vm321, %v1762, %v1787
    %v1811 = vsel %vm321, %v1763, %v1789
    %v1812 = vsel %vm321, %v1764, %v1791
    %v1813 = vsel %vm321, %v1765, %v1793
    %v1814 = vsel %vm321, %v1766, %v1795
    %v1815 = vsel %vm321, %v1767, %v1797
    %v1816 = vsel %vm321, %v1768, %v1799
    %v1817 = vsel %vm321, %v1769, %v1801
    %1818 = vst.msk [vmem:[%s5] sm:$0x3] %vm117, %v1810
    %1819 = vst.msk [vmem:[%s5 + $0x2] sm:$0x3] %vm117, %v1811
    %1820 = vst.msk [vmem:[%s5 + $0x4] sm:$0x3] %vm117, %v1812
    %1821 = vst.msk [vmem:[%s5 + $0x6] sm:$0x3] %vm117, %v1813
    %1822 = vst.msk [vmem:[%s5 + $0x8] sm:$0x3] %vm117, %v1814
    %1823 = vst.msk [vmem:[%s5 + $0xa] sm:$0x3] %vm117, %v1815
    %1824 = vst.msk [vmem:[%s5 + $0xc] sm:$0x3] %vm117, %v1816
    %1825 = vst.msk [vmem:[%s5 + $0xe] sm:$0x3] %vm117, %v1817
    // Predicated region
    $region26: #{bilstm_tagger_forward.4} parent=1 // pred_check
      _
    $region27: #{bilstm_tagger_forward.4} parent=1 // pred_check_branch
      %1827 = sbr.rel (0) target = $region29
    $region28: #{bilstm_tagger_forward.4} parent=1 // pred_region
      _
    $region29: #{bilstm_tagger_forward.4} parent=1 // pred_fallthru
      _
    // Predicated region
    $region30: #{bilstm_tagger_forward.4} parent=1 // pred_check
      _
    $region31: #{bilstm_tagger_forward.4} parent=1 // pred_check_branch
      %1829 = sbr.rel (0) target = $region33
    $region32: #{bilstm_tagger_forward.4} parent=1 // pred_region
      _
    $region33: #{bilstm_tagger_forward.4} parent=1 // pred_fallthru
      _
    %1830 = vsyncpa [#allocation9], 1

// kernel: bilstm_tagger_forward.3
$region0: #{bilstm_tagger_forward.3}
  #allocation0 [shape = 'u32[]', space=smem, size = 0x4, offset = 0x4, fixed_abs, tag = 'smem constant byte address 0x4 - core index']
  #allocation1 [shape = 'u32[72,128]{1,0:T(1,128)}', space=vmem, size = 0x9000, scoped, tag = 'internal scratch']
  #allocation2 [shape = 'f32[16,256]{1,0:T(8,128)}', space=vmem, size = 0x4000, scoped, tag = 'scratch operand']
  #allocation3 [shape = 'f32[2,64]{1,0:T(2,128)}', space=vmem, size = 0x400, scoped, tag = 'scratch operand']
  #allocation4 [shape = 'f32[2,32]{1,0:T(2,128)}', space=vmem, size = 0x400, scoped, tag = 'scratch operand']
  #allocation5 [shape = 'f32[2,32]{1,0:T(2,128)}', space=vmem, size = 0x400, scoped, tag = 'scratch operand']
  #allocation6 [shape = 'f32[8,2,32]{2,1,0:T(2,128)}', space=vmem, size = 0x2000, scoped, tag = 'scratch operand']
  #allocation7 [shape = 'f32[8,2,32]{2,1,0:T(2,128)}', space=vmem, size = 0x2000, scoped, tag = 'scratch operand']
  %s0 = inlined_call_operand.vmem [shape: f32[16,32], index: 0, kind: input, shape index: {}]
  %s1 = inlined_call_operand.vmem [shape: s32[2,1], index: 1, kind: input, shape index: {}]
  %s2 = inlined_call_operand.hbm [shape: f32[32,256], index: 2, kind: input, shape index: {}]
  %s3 = inlined_call_operand.vmem [shape: f32[64,256], index: 3, kind: input, shape index: {}]
  %s4 = inlined_call_operand.vmem [shape: f32[1,256], index: 4, kind: input, shape index: {}]
  %s5 = inlined_call_operand.vmem [shape: f32[8,2,64], index: 5, kind: output, shape index: {}]
  %s6 = sld [smem:[#allocation0]]
  $region34: #{bilstm_tagger_forward.3} parent=0
    _
  %s8 = ssub.s32 1, %s6
  %s9 = scalar_select 0, %s8, %s6
  $region1: #{bilstm_tagger_forward.3} parent=0
    #allocation8 [shape = 'u8[32768]{0}', space=vmem, size = 0x8000, scoped, tag = 'input window, operand 2, single buffered']
    #allocation9 [shape = 's32[1]{0}', space=sflag, size = 0x4, scoped, tag = 'scoped memory for bilstm_tagger_forward.3']
    %10 = vsyncpa [#allocation9], 0
    // Predicated region
    $region2: #{bilstm_tagger_forward.3} parent=1 // pred_check
      _
    $region3: #{bilstm_tagger_forward.3} parent=1 // pred_check_branch
      %12 = sbr.rel (0) target = $region5
    $region4: #{bilstm_tagger_forward.3} parent=1 // pred_region
      _
    $region5: #{bilstm_tagger_forward.3} parent=1 // pred_fallthru
      _
    // Predicated region
    $region6: #{bilstm_tagger_forward.3} parent=1 // pred_check
      _
    $region7: #{bilstm_tagger_forward.3} parent=1 // pred_check_branch
      %14 = sbr.rel (0) target = $region9
    $region8: #{bilstm_tagger_forward.3} parent=1 // pred_region
      _
    $region9: #{bilstm_tagger_forward.3} parent=1 // pred_fallthru
      _
    // Predicated region
    $region10: #{bilstm_tagger_forward.3} parent=1 // pred_check
      _
    $region11: #{bilstm_tagger_forward.3} parent=1 // pred_check_branch
      %16 = sbr.rel (0) target = $region13
    $region12: #{bilstm_tagger_forward.3} parent=1 // pred_region
      %18 = vsyncadd [#allocation9], 0
      %s19 = sshll.u32 %s2, 4
      %s20 = int_to_ptr.hbm [resolvable:$true] %s19
      %s21 = sshll.u32 [#allocation8], 4
      %s22 = int_to_ptr.vmem [resolvable:$true] %s21
      %27 = dma.hbm_to_vmem [thread:$0]  %s20, 1024, %s22, [#allocation9], 256, 256, 16
    $region13: #{bilstm_tagger_forward.3} parent=1 // pred_fallthru
      _
    // Predicated region
    $region14: #{bilstm_tagger_forward.3} parent=1 // pred_check
      _
    $region15: #{bilstm_tagger_forward.3} parent=1 // pred_check_branch
      %29 = sbr.rel (0) target = $region17
    $region16: #{bilstm_tagger_forward.3} parent=1 // pred_region
      _
    $region17: #{bilstm_tagger_forward.3} parent=1 // pred_fallthru
      _
    // Predicated region
    $region18: #{bilstm_tagger_forward.3} parent=1 // pred_check
      _
    $region19: #{bilstm_tagger_forward.3} parent=1 // pred_check_branch
      %31 = sbr.rel (0) target = $region21
    $region20: #{bilstm_tagger_forward.3} parent=1 // pred_region
      _
    $region21: #{bilstm_tagger_forward.3} parent=1 // pred_fallthru
      _
    // Predicated region
    $region22: #{bilstm_tagger_forward.3} parent=1 // pred_check
      _
    $region23: #{bilstm_tagger_forward.3} parent=1 // pred_check_branch
      %33 = sbr.rel (0) target = $region25
    $region24: #{bilstm_tagger_forward.3} parent=1 // pred_region
      %35 = dma.done [#allocation9], 1024
    $region25: #{bilstm_tagger_forward.3} parent=1 // pred_fallthru
      _
    %v36 = vld [vmem:[%s0] sm:$0xff]
    %v37 = vld [vmem:[%s0 + $0x8] sm:$0xff]
    %v38 = vld [vmem:[#allocation8] sm:$0xff]
    %v39 = vld [vmem:[#allocation8 + $0x8] sm:$0xff]
    %v40 = vld [vmem:[#allocation8 + $0x10] sm:$0xff]
    %v41 = vld [vmem:[#allocation8 + $0x18] sm:$0xff]
    %v42 = vld [vmem:[#allocation8 + $0x20] sm:$0xff]
    %v43 = vld [vmem:[#allocation8 + $0x28] sm:$0xff]
    %v44 = vld [vmem:[#allocation8 + $0x30] sm:$0xff]
    %v45 = vld [vmem:[#allocation8 + $0x38] sm:$0xff]
    %v46 = vld [vmem:[%s4] sm:$0x3]
    %v48 = vperm.slane %v46, 0
    %v49 = vperm.slane %v46, 1
    %vm52 = vcmask 261120
    %v54 = vsel %vm52, %v36, 0
    %v57 = vsel %vm52, %v37, 0
    %59 = vmatpush.msra.mxu0 0.0
    %60 = vmatpush.msra.mxu0 0.0
    %61 = vmatpush.msra.mxu0 0.0
    %62 = vmatpush.msra.mxu0 0.0
    %63 = vmatpush.msra.mxu0 0.0
    %64 = vmatpush.msra.mxu0 0.0
    %65 = vmatpush.msra.mxu0 0.0
    %66 = vmatpush.msra.mxu0 0.0
    %67 = vmatpush.msra.mxu0 0.0
    %68 = vmatpush.msra.mxu0 0.0
    %69 = vmatpush.msra.mxu0 0.0
    %70 = vmatpush.msra.mxu0 0.0
    %71 = vmatpush.msra.mxu0 %v44
    %72 = vmatpush.msra.mxu0 %v42
    %73 = vmatpush.msra.mxu0 %v40
    %74 = vmatpush.msra.mxu0 %v38
    %75 = vmatmul.f32.gmra.mxu0 %v54
    %v76 = vpop.f32.mrf.mxu0
    %v77 = vadd.f32 %v48, %v76
    %78 = vmatmul.f32.gmra.mxu0 %v57
    %v79 = vpop.f32.mrf.mxu0
    %v80 = vadd.f32 %v48, %v79
    %81 = vdwg.mxu0
    %82 = vmatpush.msra.mxu0 0.0
    %83 = vmatpush.msra.mxu0 0.0
    %84 = vmatpush.msra.mxu0 0.0
    %85 = vmatpush.msra.mxu0 0.0
    %86 = vmatpush.msra.mxu0 0.0
    %87 = vmatpush.msra.mxu0 0.0
    %88 = vmatpush.msra.mxu0 0.0
    %89 = vmatpush.msra.mxu0 0.0
    %90 = vmatpush.msra.mxu0 0.0
    %91 = vmatpush.msra.mxu0 0.0
    %92 = vmatpush.msra.mxu0 0.0
    %93 = vmatpush.msra.mxu0 0.0
    %94 = vmatpush.msra.mxu0 %v45
    %95 = vmatpush.msra.mxu0 %v43
    %96 = vmatpush.msra.mxu0 %v41
    %97 = vmatpush.msra.mxu0 %v39
    %98 = vmatmul.f32.gmra.mxu0 %v54
    %v99 = vpop.f32.mrf.mxu0
    %v100 = vadd.f32 %v49, %v99
    %101 = vmatmul.f32.gmra.mxu0 %v57
    %v102 = vpop.f32.mrf.mxu0
    %v103 = vadd.f32 %v49, %v102
    %104 = vdwg.mxu0
    %105 = vst [vmem:[#allocation2] sm:$0xff] %v77
    %106 = vst [vmem:[#allocation2 + $0x8] sm:$0xff] %v100
    %107 = vst [vmem:[#allocation2 + $0x10] sm:$0xff] %v80
    %108 = vst [vmem:[#allocation2 + $0x18] sm:$0xff] %v103
    %vm109 = vcmask 517120
    %110 = vst.msk [vmem:[#allocation3] sm:$0x3] %vm109, 0.0
    %vm111 = vcmask 254976
    %112 = vst.msk [vmem:[#allocation4] sm:$0x3] %vm111, 0.0
    %113 = vst.msk [vmem:[#allocation5] sm:$0x3] %vm111, 0.0
    %v114 = vld [vmem:[%s1] sm:$0x3]
    %v115 = vld [vmem:[#allocation3] sm:$0x3]
    %v116 = vld [vmem:[%s3] sm:$0xff]
    %v117 = vld [vmem:[%s3 + $0x8] sm:$0xff]
    %v118 = vld [vmem:[%s3 + $0x10] sm:$0xff]
    %v119 = vld [vmem:[%s3 + $0x18] sm:$0xff]
    %v120 = vld [vmem:[%s3 + $0x20] sm:$0xff]
    %v121 = vld [vmem:[%s3 + $0x28] sm:$0xff]
    %v122 = vld [vmem:[%s3 + $0x30] sm:$0xff]
    %v123 = vld [vmem:[%s3 + $0x38] sm:$0xff]
    %v124 = vld [vmem:[%s3 + $0x40] sm:$0xff]
    %v125 = vld [vmem:[%s3 + $0x48] sm:$0xff]
    %v126 = vld [vmem:[%s3 + $0x50] sm:$0xff]
    %v127 = vld [vmem:[%s3 + $0x58] sm:$0xff]
    %v128 = vld [vmem:[%s3 + $0x60] sm:$0xff]
    %v129 = vld [vmem:[%s3 + $0x68] sm:$0xff]
    %v130 = vld [vmem:[%s3 + $0x70] sm:$0xff]
    %v131 = vld [vmem:[%s3 + $0x78] sm:$0xff]
    %vm132 = vcmask 523264
    %v134 = vsel %vm132, %v115, 0
    %136 = vmatpush.msra.mxu0 0.0
    %137 = vmatpush.msra.mxu0 0.0
    %138 = vmatpush.msra.mxu0 0.0
    %139 = vmatpush.msra.mxu0 0.0
    %140 = vmatpush.msra.mxu0 0.0
    %141 = vmatpush.msra.mxu0 0.0
    %142 = vmatpush.msra.mxu0 0.0
    %143 = vmatpush.msra.mxu0 0.0
    %144 = vmatpush.msra.mxu0 %v130
    %145 = vmatpush.msra.mxu0 %v128
    %146 = vmatpush.msra.mxu0 %v126
    %147 = vmatpush.msra.mxu0 %v124
    %148 = vmatpush.msra.mxu0 %v122
    %149 = vmatpush.msra.mxu0 %v120
    %150 = vmatpush.msra.mxu0 %v118
    %151 = vmatpush.msra.mxu0 %v116
    %152 = vmatmul.f32.gmra.mxu0 %v134
    %v153 = vpop.f32.mrf.mxu0
    %v154 = vadd.f32 0.0, %v153
    %155 = vdwg.mxu0
    %156 = vmatpush.msra.mxu0 0.0
    %157 = vmatpush.msra.mxu0 0.0
    %158 = vmatpush.msra.mxu0 0.0
    %159 = vmatpush.msra.mxu0 0.0
    %160 = vmatpush.msra.mxu0 0.0
    %161 = vmatpush.msra.mxu0 0.0
    %162 = vmatpush.msra.mxu0 0.0
    %163 = vmatpush.msra.mxu0 0.0
    %164 = vmatpush.msra.mxu0 %v131
    %165 = vmatpush.msra.mxu0 %v129
    %166 = vmatpush.msra.mxu0 %v127
    %167 = vmatpush.msra.mxu0 %v125
    %168 = vmatpush.msra.mxu0 %v123
    %169 = vmatpush.msra.mxu0 %v121
    %170 = vmatpush.msra.mxu0 %v119
    %171 = vmatpush.msra.mxu0 %v117
    %172 = vmatmul.f32.gmra.mxu0 %v134
    %v173 = vpop.f32.mrf.mxu0
    %v174 = vadd.f32 0.0, %v173
    %175 = vdwg.mxu0
    %v176 = vld [vmem:[#allocation2] sm:$0x3]
    %v177 = vld [vmem:[#allocation2 + $0x18] sm:$0xc0]
    %v178 = vadd.f32 %v176, %v154
    %v180 = vrot.slane %v174, 2
    %v182 = vadd.f32 %v177, %v180
    %v183 = vld [vmem:[#allocation4] sm:$0x3]
    %v184 = vxor.u32 %v178, 2147483648
    %v185 = vmul.f32 %v184, 1.442695
    %v186 = vpow.pop %v185
    %v187 = vadd.f32 %v186, 1.0
    %v188 = vrcp.pop %v187
    %v189 = vmul.f32 %v187, %v188
    %v190 = vsub.f32 1.0, %v189
    %v191 = vmul.f32 %v188, %v190
    %v192 = vadd.f32 %v188, %v191
    %vm193 = vweird.f32 %v187
    %vm194 = vweird.f32 %v188
    %vm195 = vmor %vm193, %vm194
    %v196 = vsel %vm195, %v188, %v192
    %v197 = vand.u32 2147483647, %v187
    %vm198 = vcmp.eq.f32.partialorder %v197, 8.507059e+37
    %v199 = vand.u32 %v187, 2147483648
    %v200 = vor.u32 1.1754944e-38, %v199
    %v201 = vsel %vm198, %v200, %v196
    %v202 = vmul.f32 1.0, %v201
    %v203 = vtanh.pop %v178
    %205 = vrot.lane.b32.xlu0 %v183, 32
    %v206 = vpop.permute.xlu0 %205
    %v208 = vmul.f32 %v202, %v206
    %210 = vrot.lane.b32.xlu0 %v203, 64
    %v211 = vpop.permute.xlu0 %210
    %v213 = vmul.f32 %v202, %v211
    %215 = vrot.lane.b32.xlu0 %v213, 32
    %v216 = vpop.permute.xlu0 %215
    %v218 = vadd.f32 %v208, %v216
    %v219 = vtanh.pop %v218
    %221 = vrot.lane.b32.xlu0 %v219, 64
    %v222 = vpop.permute.xlu0 %221
    %v224 = vmul.f32 %v202, %v222
    %v225 = vld [vmem:[#allocation5] sm:$0x3]
    %v226 = vxor.u32 %v182, 2147483648
    %v227 = vmul.f32 %v226, 1.442695
    %v228 = vpow.pop %v227
    %v229 = vadd.f32 %v228, 1.0
    %v230 = vrcp.pop %v229
    %v231 = vmul.f32 %v229, %v230
    %v232 = vsub.f32 1.0, %v231
    %v233 = vmul.f32 %v230, %v232
    %v234 = vadd.f32 %v230, %v233
    %vm235 = vweird.f32 %v229
    %vm236 = vweird.f32 %v230
    %vm237 = vmor %vm235, %vm236
    %v238 = vsel %vm237, %v230, %v234
    %v239 = vand.u32 2147483647, %v229
    %vm240 = vcmp.eq.f32.partialorder %v239, 8.507059e+37
    %v241 = vand.u32 %v229, 2147483648
    %v242 = vor.u32 1.1754944e-38, %v241
    %v243 = vsel %vm240, %v242, %v238
    %v244 = vmul.f32 1.0, %v243
    %v245 = vtanh.pop %v182
    %v247 = vrot.slane %v225, 2
    %248 = vrot.lane.b32.xlu0 %v247, 32
    %v249 = vpop.permute.xlu0 %248
    %v251 = vmul.f32 %v244, %v249
    %253 = vrot.lane.b32.xlu0 %v245, 64
    %v254 = vpop.permute.xlu0 %253
    %v256 = vmul.f32 %v244, %v254
    %258 = vrot.lane.b32.xlu0 %v256, 32
    %v259 = vpop.permute.xlu0 %258
    %v261 = vadd.f32 %v251, %v259
    %v262 = vtanh.pop %v261
    %264 = vrot.lane.b32.xlu0 %v262, 64
    %v265 = vpop.permute.xlu0 %264
    %v267 = vmul.f32 %v244, %v265
    %vm268 = vcmp.gt.s32.totalorder %v114, 0
    %vm269 = vcmp.gt.s32.totalorder %v114, 7
    %v270 = vsel %vm268, 1, 0
    %271 = vset.pattern.permute.xlu0 0
    %272 = vperm.xlu0 %271, %v270
    %v273 = vpop.permute.xlu0 %272
    %vm274 = vcmp.eq.s32.totalorder %v273, 1
    %v275 = vsel %vm274, %v218, %v206
    %277 = vrot.lane.b32.xlu0 %v275, 96
    %v278 = vpop.permute.xlu0 %277
    %280 = vst.msk [vmem:[#allocation4] sm:$0x3] %vm111, %v278
    %v281 = vld [vmem:[#allocation5] sm:$0x3]
    %v282 = vsel %vm269, 1, 0
    %283 = vset.pattern.permute.xlu0 0
    %284 = vperm.xlu0 %283, %v282
    %v285 = vpop.permute.xlu0 %284
    %vm286 = vcmp.eq.s32.totalorder %v285, 1
    %v288 = vrot.slane %v261, 6
    %289 = vrot.lane.b32.xlu0 %v288, 96
    %v290 = vpop.permute.xlu0 %289
    %v292 = vsel %vm286, %v290, %v281
    %293 = vst.msk [vmem:[#allocation5] sm:$0x3] %vm111, %v292
    %v294 = vld [vmem:[#allocation3] sm:$0x3]
    %296 = vrot.lane.b32.xlu0 %v294, 96
    %v297 = vpop.permute.xlu0 %296
    %v299 = vsel %vm274, %v224, %v297
    %v301 = vrot.slane %v267, 6
    %302 = vrot.lane.b32.xlu0 %v301, 32
    %v303 = vpop.permute.xlu0 %302
    %v305 = vsel %vm286, %v303, %v297
    %307 = vrot.lane.b32.xlu0 %v299, 32
    %v308 = vpop.permute.xlu0 %307
    %311 = vrot.lane.b32.xlu0 %v305, 32
    %v312 = vpop.permute.xlu0 %311
    %v314 = vsel %vm52, %v308, %v312
    %315 = vst.msk [vmem:[#allocation3] sm:$0x3] %vm109, %v314
    %v316 = vsel %vm274, %v224, 0.0
    %318 = vrot.lane.b32.xlu0 %v316, 32
    %v319 = vpop.permute.xlu0 %318
    %321 = vst.msk [vmem:[#allocation6] sm:$0x3] %vm111, %v319
    %v322 = vsel %vm286, %v303, 0.0
    %s323 = scalar_lea.vmem [#allocation7], 14
    %324 = vst.msk [vmem:[%s323] sm:$0x3] %vm111, %v322
    %v325 = vld [vmem:[#allocation3] sm:$0x3]
    %v326 = vld [vmem:[%s3] sm:$0xff]
    %v327 = vld [vmem:[%s3 + $0x8] sm:$0xff]
    %v328 = vld [vmem:[%s3 + $0x10] sm:$0xff]
    %v329 = vld [vmem:[%s3 + $0x18] sm:$0xff]
    %v330 = vld [vmem:[%s3 + $0x20] sm:$0xff]
    %v331 = vld [vmem:[%s3 + $0x28] sm:$0xff]
    %v332 = vld [vmem:[%s3 + $0x30] sm:$0xff]
    %v333 = vld [vmem:[%s3 + $0x38] sm:$0xff]
    %v334 = vld [vmem:[%s3 + $0x40] sm:$0xff]
    %v335 = vld [vmem:[%s3 + $0x48] sm:$0xff]
    %v336 = vld [vmem:[%s3 + $0x50] sm:$0xff]
    %v337 = vld [vmem:[%s3 + $0x58] sm:$0xff]
    %v338 = vld [vmem:[%s3 + $0x60] sm:$0xff]
    %v339 = vld [vmem:[%s3 + $0x68] sm:$0xff]
    %v340 = vld [vmem:[%s3 + $0x70] sm:$0xff]
    %v341 = vld [vmem:[%s3 + $0x78] sm:$0xff]
    %v343 = vsel %vm132, %v325, 0
    %345 = vmatpush.msra.mxu0 0.0
    %346 = vmatpush.msra.mxu0 0.0
    %347 = vmatpush.msra.mxu0 0.0
    %348 = vmatpush.msra.mxu0 0.0
    %349 = vmatpush.msra.mxu0 0.0
    %350 = vmatpush.msra.mxu0 0.0
    %351 = vmatpush.msra.mxu0 0.0
    %352 = vmatpush.msra.mxu0 0.0
    %353 = vmatpush.msra.mxu0 %v340
    %354 = vmatpush.msra.mxu0 %v338
    %355 = vmatpush.msra.mxu0 %v336
    %356 = vmatpush.msra.mxu0 %v334
    %357 = vmatpush.msra.mxu0 %v332
    %358 = vmatpush.msra.mxu0 %v330
    %359 = vmatpush.msra.mxu0 %v328
    %360 = vmatpush.msra.mxu0 %v326
    %361 = vmatmul.f32.gmra.mxu0 %v343
    %v362 = vpop.f32.mrf.mxu0
    %v363 = vadd.f32 0.0, %v362
    %364 = vdwg.mxu0
    %365 = vmatpush.msra.mxu0 0.0
    %366 = vmatpush.msra.mxu0 0.0
    %367 = vmatpush.msra.mxu0 0.0
    %368 = vmatpush.msra.mxu0 0.0
    %369 = vmatpush.msra.mxu0 0.0
    %370 = vmatpush.msra.mxu0 0.0
    %371 = vmatpush.msra.mxu0 0.0
    %372 = vmatpush.msra.mxu0 0.0
    %373 = vmatpush.msra.mxu0 %v341
    %374 = vmatpush.msra.mxu0 %v339
    %375 = vmatpush.msra.mxu0 %v337
    %376 = vmatpush.msra.mxu0 %v335
    %377 = vmatpush.msra.mxu0 %v333
    %378 = vmatpush.msra.mxu0 %v331
    %379 = vmatpush.msra.mxu0 %v329
    %380 = vmatpush.msra.mxu0 %v327
    %381 = vmatmul.f32.gmra.mxu0 %v343
    %v382 = vpop.f32.mrf.mxu0
    %v383 = vadd.f32 0.0, %v382
    %384 = vdwg.mxu0
    %v385 = vld [vmem:[#allocation2] sm:$0xc]
    %v386 = vld [vmem:[#allocation2 + $0x18] sm:$0x30]
    %v388 = vrot.slane %v363, 6
    %v390 = vadd.f32 %v385, %v388
    %v392 = vrot.slane %v383, 4
    %v394 = vadd.f32 %v386, %v392
    %v395 = vld [vmem:[#allocation4] sm:$0x3]
    %v396 = vxor.u32 %v390, 2147483648
    %v397 = vmul.f32 %v396, 1.442695
    %v398 = vpow.pop %v397
    %v399 = vadd.f32 %v398, 1.0
    %v400 = vrcp.pop %v399
    %v401 = vmul.f32 %v399, %v400
    %v402 = vsub.f32 1.0, %v401
    %v403 = vmul.f32 %v400, %v402
    %v404 = vadd.f32 %v400, %v403
    %vm405 = vweird.f32 %v399
    %vm406 = vweird.f32 %v400
    %vm407 = vmor %vm405, %vm406
    %v408 = vsel %vm407, %v400, %v404
    %v409 = vand.u32 2147483647, %v399
    %vm410 = vcmp.eq.f32.partialorder %v409, 8.507059e+37
    %v411 = vand.u32 %v399, 2147483648
    %v412 = vor.u32 1.1754944e-38, %v411
    %v413 = vsel %vm410, %v412, %v408
    %v414 = vmul.f32 1.0, %v413
    %v415 = vtanh.pop %v390
    %v417 = vrot.slane %v395, 6
    %418 = vrot.lane.b32.xlu0 %v417, 32
    %v419 = vpop.permute.xlu0 %418
    %v421 = vmul.f32 %v414, %v419
    %423 = vrot.lane.b32.xlu0 %v415, 64
    %v424 = vpop.permute.xlu0 %423
    %v426 = vmul.f32 %v414, %v424
    %428 = vrot.lane.b32.xlu0 %v426, 32
    %v429 = vpop.permute.xlu0 %428
    %v431 = vadd.f32 %v421, %v429
    %v432 = vtanh.pop %v431
    %434 = vrot.lane.b32.xlu0 %v432, 64
    %v435 = vpop.permute.xlu0 %434
    %v437 = vmul.f32 %v414, %v435
    %v438 = vld [vmem:[#allocation5] sm:$0x3]
    %v439 = vxor.u32 %v394, 2147483648
    %v440 = vmul.f32 %v439, 1.442695
    %v441 = vpow.pop %v440
    %v442 = vadd.f32 %v441, 1.0
    %v443 = vrcp.pop %v442
    %v444 = vmul.f32 %v442, %v443
    %v445 = vsub.f32 1.0, %v444
    %v446 = vmul.f32 %v443, %v445
    %v447 = vadd.f32 %v443, %v446
    %vm448 = vweird.f32 %v442
    %vm449 = vweird.f32 %v443
    %vm450 = vmor %vm448, %vm449
    %v451 = vsel %vm450, %v443, %v447
    %v452 = vand.u32 2147483647, %v442
    %vm453 = vcmp.eq.f32.partialorder %v452, 8.507059e+37
    %v454 = vand.u32 %v442, 2147483648
    %v455 = vor.u32 1.1754944e-38, %v454
    %v456 = vsel %vm453, %v455, %v451
    %v457 = vmul.f32 1.0, %v456
    %v458 = vtanh.pop %v394
    %v460 = vrot.slane %v438, 4
    %461 = vrot.lane.b32.xlu0 %v460, 32
    %v462 = vpop.permute.xlu0 %461
    %v464 = vmul.f32 %v457, %v462
    %466 = vrot.lane.b32.xlu0 %v458, 64
    %v467 = vpop.permute.xlu0 %466
    %v469 = vmul.f32 %v457, %v467
    %471 = vrot.lane.b32.xlu0 %v469, 32
    %v472 = vpop.permute.xlu0 %471
    %v474 = vadd.f32 %v464, %v472
    %v475 = vtanh.pop %v474
    %477 = vrot.lane.b32.xlu0 %v475, 64
    %v478 = vpop.permute.xlu0 %477
    %v480 = vmul.f32 %v457, %v478
    %vm481 = vcmp.gt.s32.totalorder %v114, 1
    %vm482 = vcmp.gt.s32.totalorder %v114, 6
    %v483 = vsel %vm481, 1, 0
    %484 = vset.pattern.permute.xlu0 0
    %485 = vperm.xlu0 %484, %v483
    %v486 = vpop.permute.xlu0 %485
    %vm487 = vcmp.eq.s32.totalorder %v486, 1
    %v489 = vrot.slane %v431, 2
    %490 = vrot.lane.b32.xlu0 %v489, 96
    %v491 = vpop.permute.xlu0 %490
    %v493 = vsel %vm487, %v491, %v395
    %494 = vst.msk [vmem:[#allocation4] sm:$0x3] %vm111, %v493
    %v495 = vld [vmem:[#allocation5] sm:$0x3]
    %v496 = vsel %vm482, 1, 0
    %497 = vset.pattern.permute.xlu0 0
    %498 = vperm.xlu0 %497, %v496
    %v499 = vpop.permute.xlu0 %498
    %vm500 = vcmp.eq.s32.totalorder %v499, 1
    %v502 = vrot.slane %v474, 4
    %503 = vrot.lane.b32.xlu0 %v502, 96
    %v504 = vpop.permute.xlu0 %503
    %v506 = vsel %vm500, %v504, %v495
    %507 = vst.msk [vmem:[#allocation5] sm:$0x3] %vm111, %v506
    %v508 = vld [vmem:[#allocation3] sm:$0x3]
    %v510 = vrot.slane %v437, 2
    %511 = vrot.lane.b32.xlu0 %v510, 32
    %v512 = vpop.permute.xlu0 %511
    %v514 = vsel %vm487, %v512, %v508
    %v516 = vrot.slane %v480, 4
    %517 = vrot.lane.b32.xlu0 %v516, 32
    %v518 = vpop.permute.xlu0 %517
    %521 = vrot.lane.b32.xlu0 %v508, 96
    %v522 = vpop.permute.xlu0 %521
    %v524 = vsel %vm500, %v518, %v522
    %526 = vrot.lane.b32.xlu0 %v524, 32
    %v527 = vpop.permute.xlu0 %526
    %v529 = vsel %vm52, %v514, %v527
    %530 = vst.msk [vmem:[#allocation3] sm:$0x3] %vm109, %v529
    %v531 = vsel %vm487, %v512, 0.0
    %s532 = scalar_lea.vmem [#allocation6], 2
    %533 = vst.msk [vmem:[%s532] sm:$0x3] %vm111, %v531
    %v534 = vsel %vm500, %v518, 0.0
    %s535 = scalar_lea.vmem [#allocation7], 12
    %536 = vst.msk [vmem:[%s535] sm:$0x3] %vm111, %v534
    %v537 = vld [vmem:[#allocation3] sm:$0x3]
    %v538 = vld [vmem:[%s3] sm:$0xff]
    %v539 = vld [vmem:[%s3 + $0x8] sm:$0xff]
    %v540 = vld [vmem:[%s3 + $0x10] sm:$0xff]
    %v541 = vld [vmem:[%s3 + $0x18] sm:$0xff]
    %v542 = vld [vmem:[%s3 + $0x20] sm:$0xff]
    %v543 = vld [vmem:[%s3 + $0x28] sm:$0xff]
    %v544 = vld [vmem:[%s3 + $0x30] sm:$0xff]
    %v545 = vld [vmem:[%s3 + $0x38] sm:$0xff]
    %v546 = vld [vmem:[%s3 + $0x40] sm:$0xff]
    %v547 = vld [vmem:[%s3 + $0x48] sm:$0xff]
    %v548 = vld [vmem:[%s3 + $0x50] sm:$0xff]
    %v549 = vld [vmem:[%s3 + $0x58] sm:$0xff]
    %v550 = vld [vmem:[%s3 + $0x60] sm:$0xff]
    %v551 = vld [vmem:[%s3 + $0x68] sm:$0xff]
    %v552 = vld [vmem:[%s3 + $0x70] sm:$0xff]
    %v553 = vld [vmem:[%s3 + $0x78] sm:$0xff]
    %v555 = vsel %vm132, %v537, 0
    %557 = vmatpush.msra.mxu0 0.0
    %558 = vmatpush.msra.mxu0 0.0
    %559 = vmatpush.msra.mxu0 0.0
    %560 = vmatpush.msra.mxu0 0.0
    %561 = vmatpush.msra.mxu0 0.0
    %562 = vmatpush.msra.mxu0 0.0
    %563 = vmatpush.msra.mxu0 0.0
    %564 = vmatpush.msra.mxu0 0.0
    %565 = vmatpush.msra.mxu0 %v552
    %566 = vmatpush.msra.mxu0 %v550
    %567 = vmatpush.msra.mxu0 %v548
    %568 = vmatpush.msra.mxu0 %v546
    %569 = vmatpush.msra.mxu0 %v544
    %570 = vmatpush.msra.mxu0 %v542
    %571 = vmatpush.msra.mxu0 %v540
    %572 = vmatpush.msra.mxu0 %v538
    %573 = vmatmul.f32.gmra.mxu0 %v555
    %v574 = vpop.f32.mrf.mxu0
    %v575 = vadd.f32 0.0, %v574
    %576 = vdwg.mxu0
    %577 = vmatpush.msra.mxu0 0.0
    %578 = vmatpush.msra.mxu0 0.0
    %579 = vmatpush.msra.mxu0 0.0
    %580 = vmatpush.msra.mxu0 0.0
    %581 = vmatpush.msra.mxu0 0.0
    %582 = vmatpush.msra.mxu0 0.0
    %583 = vmatpush.msra.mxu0 0.0
    %584 = vmatpush.msra.mxu0 0.0
    %585 = vmatpush.msra.mxu0 %v553
    %586 = vmatpush.msra.mxu0 %v551
    %587 = vmatpush.msra.mxu0 %v549
    %588 = vmatpush.msra.mxu0 %v547
    %589 = vmatpush.msra.mxu0 %v545
    %590 = vmatpush.msra.mxu0 %v543
    %591 = vmatpush.msra.mxu0 %v541
    %592 = vmatpush.msra.mxu0 %v539
    %593 = vmatmul.f32.gmra.mxu0 %v555
    %v594 = vpop.f32.mrf.mxu0
    %v595 = vadd.f32 0.0, %v594
    %596 = vdwg.mxu0
    %v597 = vld [vmem:[#allocation2] sm:$0x30]
    %v598 = vld [vmem:[#allocation2 + $0x18] sm:$0xc]
    %v600 = vrot.slane %v575, 4
    %v602 = vadd.f32 %v597, %v600
    %v604 = vrot.slane %v595, 6
    %v606 = vadd.f32 %v598, %v604
    %v607 = vld [vmem:[#allocation4] sm:$0x3]
    %v608 = vxor.u32 %v602, 2147483648
    %v609 = vmul.f32 %v608, 1.442695
    %v610 = vpow.pop %v609
    %v611 = vadd.f32 %v610, 1.0
    %v612 = vrcp.pop %v611
    %v613 = vmul.f32 %v611, %v612
    %v614 = vsub.f32 1.0, %v613
    %v615 = vmul.f32 %v612, %v614
    %v616 = vadd.f32 %v612, %v615
    %vm617 = vweird.f32 %v611
    %vm618 = vweird.f32 %v612
    %vm619 = vmor %vm617, %vm618
    %v620 = vsel %vm619, %v612, %v616
    %v621 = vand.u32 2147483647, %v611
    %vm622 = vcmp.eq.f32.partialorder %v621, 8.507059e+37
    %v623 = vand.u32 %v611, 2147483648
    %v624 = vor.u32 1.1754944e-38, %v623
    %v625 = vsel %vm622, %v624, %v620
    %v626 = vmul.f32 1.0, %v625
    %v627 = vtanh.pop %v602
    %v629 = vrot.slane %v607, 4
    %630 = vrot.lane.b32.xlu0 %v629, 32
    %v631 = vpop.permute.xlu0 %630
    %v633 = vmul.f32 %v626, %v631
    %635 = vrot.lane.b32.xlu0 %v627, 64
    %v636 = vpop.permute.xlu0 %635
    %v638 = vmul.f32 %v626, %v636
    %640 = vrot.lane.b32.xlu0 %v638, 32
    %v641 = vpop.permute.xlu0 %640
    %v643 = vadd.f32 %v633, %v641
    %v644 = vtanh.pop %v643
    %646 = vrot.lane.b32.xlu0 %v644, 64
    %v647 = vpop.permute.xlu0 %646
    %v649 = vmul.f32 %v626, %v647
    %v650 = vld [vmem:[#allocation5] sm:$0x3]
    %v651 = vxor.u32 %v606, 2147483648
    %v652 = vmul.f32 %v651, 1.442695
    %v653 = vpow.pop %v652
    %v654 = vadd.f32 %v653, 1.0
    %v655 = vrcp.pop %v654
    %v656 = vmul.f32 %v654, %v655
    %v657 = vsub.f32 1.0, %v656
    %v658 = vmul.f32 %v655, %v657
    %v659 = vadd.f32 %v655, %v658
    %vm660 = vweird.f32 %v654
    %vm661 = vweird.f32 %v655
    %vm662 = vmor %vm660, %vm661
    %v663 = vsel %vm662, %v655, %v659
    %v664 = vand.u32 2147483647, %v654
    %vm665 = vcmp.eq.f32.partialorder %v664, 8.507059e+37
    %v666 = vand.u32 %v654, 2147483648
    %v667 = vor.u32 1.1754944e-38, %v666
    %v668 = vsel %vm665, %v667, %v663
    %v669 = vmul.f32 1.0, %v668
    %v670 = vtanh.pop %v606
    %v672 = vrot.slane %v650, 6
    %673 = vrot.lane.b32.xlu0 %v672, 32
    %v674 = vpop.permute.xlu0 %673
    %v676 = vmul.f32 %v669, %v674
    %678 = vrot.lane.b32.xlu0 %v670, 64
    %v679 = vpop.permute.xlu0 %678
    %v681 = vmul.f32 %v669, %v679
    %683 = vrot.lane.b32.xlu0 %v681, 32
    %v684 = vpop.permute.xlu0 %683
    %v686 = vadd.f32 %v676, %v684
    %v687 = vtanh.pop %v686
    %689 = vrot.lane.b32.xlu0 %v687, 64
    %v690 = vpop.permute.xlu0 %689
    %v692 = vmul.f32 %v669, %v690
    %vm693 = vcmp.gt.s32.totalorder %v114, 2
    %vm694 = vcmp.gt.s32.totalorder %v114, 5
    %v695 = vsel %vm693, 1, 0
    %696 = vset.pattern.permute.xlu0 0
    %697 = vperm.xlu0 %696, %v695
    %v698 = vpop.permute.xlu0 %697
    %vm699 = vcmp.eq.s32.totalorder %v698, 1
    %v701 = vrot.slane %v643, 4
    %702 = vrot.lane.b32.xlu0 %v701, 96
    %v703 = vpop.permute.xlu0 %702
    %v705 = vsel %vm699, %v703, %v607
    %706 = vst.msk [vmem:[#allocation4] sm:$0x3] %vm111, %v705
    %v707 = vld [vmem:[#allocation5] sm:$0x3]
    %v708 = vsel %vm694, 1, 0
    %709 = vset.pattern.permute.xlu0 0
    %710 = vperm.xlu0 %709, %v708
    %v711 = vpop.permute.xlu0 %710
    %vm712 = vcmp.eq.s32.totalorder %v711, 1
    %v714 = vrot.slane %v686, 2
    %715 = vrot.lane.b32.xlu0 %v714, 96
    %v716 = vpop.permute.xlu0 %715
    %v718 = vsel %vm712, %v716, %v707
    %719 = vst.msk [vmem:[#allocation5] sm:$0x3] %vm111, %v718
    %v720 = vld [vmem:[#allocation3] sm:$0x3]
    %v722 = vrot.slane %v649, 4
    %723 = vrot.lane.b32.xlu0 %v722, 32
    %v724 = vpop.permute.xlu0 %723
    %v726 = vsel %vm699, %v724, %v720
    %v728 = vrot.slane %v692, 2
    %729 = vrot.lane.b32.xlu0 %v728, 32
    %v730 = vpop.permute.xlu0 %729
    %733 = vrot.lane.b32.xlu0 %v720, 96
    %v734 = vpop.permute.xlu0 %733
    %v736 = vsel %vm712, %v730, %v734
    %738 = vrot.lane.b32.xlu0 %v736, 32
    %v739 = vpop.permute.xlu0 %738
    %v741 = vsel %vm52, %v726, %v739
    %742 = vst.msk [vmem:[#allocation3] sm:$0x3] %vm109, %v741
    %v743 = vsel %vm699, %v724, 0.0
    %s744 = scalar_lea.vmem [#allocation6], 4
    %745 = vst.msk [vmem:[%s744] sm:$0x3] %vm111, %v743
    %v746 = vsel %vm712, %v730, 0.0
    %s747 = scalar_lea.vmem [#allocation7], 10
    %748 = vst.msk [vmem:[%s747] sm:$0x3] %vm111, %v746
    %v749 = vld [vmem:[#allocation3] sm:$0x3]
    %v750 = vld [vmem:[%s3] sm:$0xff]
    %v751 = vld [vmem:[%s3 + $0x8] sm:$0xff]
    %v752 = vld [vmem:[%s3 + $0x10] sm:$0xff]
    %v753 = vld [vmem:[%s3 + $0x18] sm:$0xff]
    %v754 = vld [vmem:[%s3 + $0x20] sm:$0xff]
    %v755 = vld [vmem:[%s3 + $0x28] sm:$0xff]
    %v756 = vld [vmem:[%s3 + $0x30] sm:$0xff]
    %v757 = vld [vmem:[%s3 + $0x38] sm:$0xff]
    %v758 = vld [vmem:[%s3 + $0x40] sm:$0xff]
    %v759 = vld [vmem:[%s3 + $0x48] sm:$0xff]
    %v760 = vld [vmem:[%s3 + $0x50] sm:$0xff]
    %v761 = vld [vmem:[%s3 + $0x58] sm:$0xff]
    %v762 = vld [vmem:[%s3 + $0x60] sm:$0xff]
    %v763 = vld [vmem:[%s3 + $0x68] sm:$0xff]
    %v764 = vld [vmem:[%s3 + $0x70] sm:$0xff]
    %v765 = vld [vmem:[%s3 + $0x78] sm:$0xff]
    %v767 = vsel %vm132, %v749, 0
    %769 = vmatpush.msra.mxu0 0.0
    %770 = vmatpush.msra.mxu0 0.0
    %771 = vmatpush.msra.mxu0 0.0
    %772 = vmatpush.msra.mxu0 0.0
    %773 = vmatpush.msra.mxu0 0.0
    %774 = vmatpush.msra.mxu0 0.0
    %775 = vmatpush.msra.mxu0 0.0
    %776 = vmatpush.msra.mxu0 0.0
    %777 = vmatpush.msra.mxu0 %v764
    %778 = vmatpush.msra.mxu0 %v762
    %779 = vmatpush.msra.mxu0 %v760
    %780 = vmatpush.msra.mxu0 %v758
    %781 = vmatpush.msra.mxu0 %v756
    %782 = vmatpush.msra.mxu0 %v754
    %783 = vmatpush.msra.mxu0 %v752
    %784 = vmatpush.msra.mxu0 %v750
    %785 = vmatmul.f32.gmra.mxu0 %v767
    %v786 = vpop.f32.mrf.mxu0
    %v787 = vadd.f32 0.0, %v786
    %788 = vdwg.mxu0
    %789 = vmatpush.msra.mxu0 0.0
    %790 = vmatpush.msra.mxu0 0.0
    %791 = vmatpush.msra.mxu0 0.0
    %792 = vmatpush.msra.mxu0 0.0
    %793 = vmatpush.msra.mxu0 0.0
    %794 = vmatpush.msra.mxu0 0.0
    %795 = vmatpush.msra.mxu0 0.0
    %796 = vmatpush.msra.mxu0 0.0
    %797 = vmatpush.msra.mxu0 %v765
    %798 = vmatpush.msra.mxu0 %v763
    %799 = vmatpush.msra.mxu0 %v761
    %800 = vmatpush.msra.mxu0 %v759
    %801 = vmatpush.msra.mxu0 %v757
    %802 = vmatpush.msra.mxu0 %v755
    %803 = vmatpush.msra.mxu0 %v753
    %804 = vmatpush.msra.mxu0 %v751
    %805 = vmatmul.f32.gmra.mxu0 %v767
    %v806 = vpop.f32.mrf.mxu0
    %v807 = vadd.f32 0.0, %v806
    %808 = vdwg.mxu0
    %v809 = vld [vmem:[#allocation2] sm:$0xc0]
    %v810 = vld [vmem:[#allocation2 + $0x18] sm:$0x3]
    %v812 = vrot.slane %v787, 2
    %v814 = vadd.f32 %v809, %v812
    %v815 = vadd.f32 %v810, %v807
    %v816 = vld [vmem:[#allocation4] sm:$0x3]
    %v817 = vxor.u32 %v814, 2147483648
    %v818 = vmul.f32 %v817, 1.442695
    %v819 = vpow.pop %v818
    %v820 = vadd.f32 %v819, 1.0
    %v821 = vrcp.pop %v820
    %v822 = vmul.f32 %v820, %v821
    %v823 = vsub.f32 1.0, %v822
    %v824 = vmul.f32 %v821, %v823
    %v825 = vadd.f32 %v821, %v824
    %vm826 = vweird.f32 %v820
    %vm827 = vweird.f32 %v821
    %vm828 = vmor %vm826, %vm827
    %v829 = vsel %vm828, %v821, %v825
    %v830 = vand.u32 2147483647, %v820
    %vm831 = vcmp.eq.f32.partialorder %v830, 8.507059e+37
    %v832 = vand.u32 %v820, 2147483648
    %v833 = vor.u32 1.1754944e-38, %v832
    %v834 = vsel %vm831, %v833, %v829
    %v835 = vmul.f32 1.0, %v834
    %v836 = vtanh.pop %v814
    %v838 = vrot.slane %v816, 2
    %839 = vrot.lane.b32.xlu0 %v838, 32
    %v840 = vpop.permute.xlu0 %839
    %v842 = vmul.f32 %v835, %v840
    %844 = vrot.lane.b32.xlu0 %v836, 64
    %v845 = vpop.permute.xlu0 %844
    %v847 = vmul.f32 %v835, %v845
    %849 = vrot.lane.b32.xlu0 %v847, 32
    %v850 = vpop.permute.xlu0 %849
    %v852 = vadd.f32 %v842, %v850
    %v853 = vtanh.pop %v852
    %855 = vrot.lane.b32.xlu0 %v853, 64
    %v856 = vpop.permute.xlu0 %855
    %v858 = vmul.f32 %v835, %v856
    %v859 = vld [vmem:[#allocation5] sm:$0x3]
    %v860 = vxor.u32 %v815, 2147483648
    %v861 = vmul.f32 %v860, 1.442695
    %v862 = vpow.pop %v861
    %v863 = vadd.f32 %v862, 1.0
    %v864 = vrcp.pop %v863
    %v865 = vmul.f32 %v863, %v864
    %v866 = vsub.f32 1.0, %v865
    %v867 = vmul.f32 %v864, %v866
    %v868 = vadd.f32 %v864, %v867
    %vm869 = vweird.f32 %v863
    %vm870 = vweird.f32 %v864
    %vm871 = vmor %vm869, %vm870
    %v872 = vsel %vm871, %v864, %v868
    %v873 = vand.u32 2147483647, %v863
    %vm874 = vcmp.eq.f32.partialorder %v873, 8.507059e+37
    %v875 = vand.u32 %v863, 2147483648
    %v876 = vor.u32 1.1754944e-38, %v875
    %v877 = vsel %vm874, %v876, %v872
    %v878 = vmul.f32 1.0, %v877
    %v879 = vtanh.pop %v815
    %881 = vrot.lane.b32.xlu0 %v859, 32
    %v882 = vpop.permute.xlu0 %881
    %v884 = vmul.f32 %v878, %v882
    %886 = vrot.lane.b32.xlu0 %v879, 64
    %v887 = vpop.permute.xlu0 %886
    %v889 = vmul.f32 %v878, %v887
    %891 = vrot.lane.b32.xlu0 %v889, 32
    %v892 = vpop.permute.xlu0 %891
    %v894 = vadd.f32 %v884, %v892
    %v895 = vtanh.pop %v894
    %897 = vrot.lane.b32.xlu0 %v895, 64
    %v898 = vpop.permute.xlu0 %897
    %v900 = vmul.f32 %v878, %v898
    %vm901 = vcmp.gt.s32.totalorder %v114, 3
    %vm902 = vcmp.gt.s32.totalorder %v114, 4
    %v903 = vsel %vm901, 1, 0
    %904 = vset.pattern.permute.xlu0 0
    %905 = vperm.xlu0 %904, %v903
    %v906 = vpop.permute.xlu0 %905
    %vm907 = vcmp.eq.s32.totalorder %v906, 1
    %v909 = vrot.slane %v852, 6
    %910 = vrot.lane.b32.xlu0 %v909, 96
    %v911 = vpop.permute.xlu0 %910
    %v913 = vsel %vm907, %v911, %v816
    %914 = vst.msk [vmem:[#allocation4] sm:$0x3] %vm111, %v913
    %v915 = vld [vmem:[#allocation5] sm:$0x3]
    %v916 = vsel %vm902, 1, 0
    %917 = vset.pattern.permute.xlu0 0
    %918 = vperm.xlu0 %917, %v916
    %v919 = vpop.permute.xlu0 %918
    %vm920 = vcmp.eq.s32.totalorder %v919, 1
    %922 = vrot.lane.b32.xlu0 %v915, 32
    %v923 = vpop.permute.xlu0 %922
    %v925 = vsel %vm920, %v894, %v923
    %927 = vrot.lane.b32.xlu0 %v925, 96
    %v928 = vpop.permute.xlu0 %927
    %930 = vst.msk [vmem:[#allocation5] sm:$0x3] %vm111, %v928
    %v931 = vld [vmem:[#allocation3] sm:$0x3]
    %v933 = vrot.slane %v858, 6
    %934 = vrot.lane.b32.xlu0 %v933, 32
    %v935 = vpop.permute.xlu0 %934
    %v937 = vsel %vm907, %v935, %v931
    %939 = vrot.lane.b32.xlu0 %v931, 64
    %v940 = vpop.permute.xlu0 %939
    %v942 = vsel %vm920, %v900, %v940
    %944 = vrot.lane.b32.xlu0 %v942, 64
    %v945 = vpop.permute.xlu0 %944
    %v947 = vsel %vm52, %v937, %v945
    %948 = vst.msk [vmem:[#allocation3] sm:$0x3] %vm109, %v947
    %v949 = vsel %vm907, %v935, 0.0
    %s950 = scalar_lea.vmem [#allocation6], 6
    %951 = vst.msk [vmem:[%s950] sm:$0x3] %vm111, %v949
    %v952 = vsel %vm920, %v900, 0.0
    %954 = vrot.lane.b32.xlu0 %v952, 32
    %v955 = vpop.permute.xlu0 %954
    %s957 = scalar_lea.vmem [#allocation7], 8
    %958 = vst.msk [vmem:[%s957] sm:$0x3] %vm111, %v955
    %v959 = vld [vmem:[#allocation3] sm:$0x3]
    %v960 = vld [vmem:[%s3] sm:$0xff]
    %v961 = vld [vmem:[%s3 + $0x8] sm:$0xff]
    %v962 = vld [vmem:[%s3 + $0x10] sm:$0xff]
    %v963 = vld [vmem:[%s3 + $0x18] sm:$0xff]
    %v964 = vld [vmem:[%s3 + $0x20] sm:$0xff]
    %v965 = vld [vmem:[%s3 + $0x28] sm:$0xff]
    %v966 = vld [vmem:[%s3 + $0x30] sm:$0xff]
    %v967 = vld [vmem:[%s3 + $0x38] sm:$0xff]
    %v968 = vld [vmem:[%s3 + $0x40] sm:$0xff]
    %v969 = vld [vmem:[%s3 + $0x48] sm:$0xff]
    %v970 = vld [vmem:[%s3 + $0x50] sm:$0xff]
    %v971 = vld [vmem:[%s3 + $0x58] sm:$0xff]
    %v972 = vld [vmem:[%s3 + $0x60] sm:$0xff]
    %v973 = vld [vmem:[%s3 + $0x68] sm:$0xff]
    %v974 = vld [vmem:[%s3 + $0x70] sm:$0xff]
    %v975 = vld [vmem:[%s3 + $0x78] sm:$0xff]
    %v977 = vsel %vm132, %v959, 0
    %979 = vmatpush.msra.mxu0 0.0
    %980 = vmatpush.msra.mxu0 0.0
    %981 = vmatpush.msra.mxu0 0.0
    %982 = vmatpush.msra.mxu0 0.0
    %983 = vmatpush.msra.mxu0 0.0
    %984 = vmatpush.msra.mxu0 0.0
    %985 = vmatpush.msra.mxu0 0.0
    %986 = vmatpush.msra.mxu0 0.0
    %987 = vmatpush.msra.mxu0 %v974
    %988 = vmatpush.msra.mxu0 %v972
    %989 = vmatpush.msra.mxu0 %v970
    %990 = vmatpush.msra.mxu0 %v968
    %991 = vmatpush.msra.mxu0 %v966
    %992 = vmatpush.msra.mxu0 %v964
    %993 = vmatpush.msra.mxu0 %v962
    %994 = vmatpush.msra.mxu0 %v960
    %995 = vmatmul.f32.gmra.mxu0 %v977
    %v996 = vpop.f32.mrf.mxu0
    %v997 = vadd.f32 0.0, %v996
    %998 = vdwg.mxu0
    %999 = vmatpush.msra.mxu0 0.0
    %1000 = vmatpush.msra.mxu0 0.0
    %1001 = vmatpush.msra.mxu0 0.0
    %1002 = vmatpush.msra.mxu0 0.0
    %1003 = vmatpush.msra.mxu0 0.0
    %1004 = vmatpush.msra.mxu0 0.0
    %1005 = vmatpush.msra.mxu0 0.0
    %1006 = vmatpush.msra.mxu0 0.0
    %1007 = vmatpush.msra.mxu0 %v975
    %1008 = vmatpush.msra.mxu0 %v973
    %1009 = vmatpush.msra.mxu0 %v971
    %1010 = vmatpush.msra.mxu0 %v969
    %1011 = vmatpush.msra.mxu0 %v967
    %1012 = vmatpush.msra.mxu0 %v965
    %1013 = vmatpush.msra.mxu0 %v963
    %1014 = vmatpush.msra.mxu0 %v961
    %1015 = vmatmul.f32.gmra.mxu0 %v977
    %v1016 = vpop.f32.mrf.mxu0
    %v1017 = vadd.f32 0.0, %v1016
    %1018 = vdwg.mxu0
    %v1019 = vld [vmem:[#allocation2 + $0x10] sm:$0x3]
    %v1020 = vld [vmem:[#allocation2 + $0x8] sm:$0xc0]
    %v1021 = vadd.f32 %v1019, %v997
    %v1023 = vrot.slane %v1017, 2
    %v1025 = vadd.f32 %v1020, %v1023
    %v1026 = vld [vmem:[#allocation4] sm:$0x3]
    %v1027 = vxor.u32 %v1021, 2147483648
    %v1028 = vmul.f32 %v1027, 1.442695
    %v1029 = vpow.pop %v1028
    %v1030 = vadd.f32 %v1029, 1.0
    %v1031 = vrcp.pop %v1030
    %v1032 = vmul.f32 %v1030, %v1031
    %v1033 = vsub.f32 1.0, %v1032
    %v1034 = vmul.f32 %v1031, %v1033
    %v1035 = vadd.f32 %v1031, %v1034
    %vm1036 = vweird.f32 %v1030
    %vm1037 = vweird.f32 %v1031
    %vm1038 = vmor %vm1036, %vm1037
    %v1039 = vsel %vm1038, %v1031, %v1035
    %v1040 = vand.u32 2147483647, %v1030
    %vm1041 = vcmp.eq.f32.partialorder %v1040, 8.507059e+37
    %v1042 = vand.u32 %v1030, 2147483648
    %v1043 = vor.u32 1.1754944e-38, %v1042
    %v1044 = vsel %vm1041, %v1043, %v1039
    %v1045 = vmul.f32 1.0, %v1044
    %v1046 = vtanh.pop %v1021
    %1048 = vrot.lane.b32.xlu0 %v1026, 32
    %v1049 = vpop.permute.xlu0 %1048
    %v1051 = vmul.f32 %v1045, %v1049
    %1053 = vrot.lane.b32.xlu0 %v1046, 64
    %v1054 = vpop.permute.xlu0 %1053
    %v1056 = vmul.f32 %v1045, %v1054
    %1058 = vrot.lane.b32.xlu0 %v1056, 32
    %v1059 = vpop.permute.xlu0 %1058
    %v1061 = vadd.f32 %v1051, %v1059
    %v1062 = vtanh.pop %v1061
    %1064 = vrot.lane.b32.xlu0 %v1062, 64
    %v1065 = vpop.permute.xlu0 %1064
    %v1067 = vmul.f32 %v1045, %v1065
    %v1068 = vld [vmem:[#allocation5] sm:$0x3]
    %v1069 = vxor.u32 %v1025, 2147483648
    %v1070 = vmul.f32 %v1069, 1.442695
    %v1071 = vpow.pop %v1070
    %v1072 = vadd.f32 %v1071, 1.0
    %v1073 = vrcp.pop %v1072
    %v1074 = vmul.f32 %v1072, %v1073
    %v1075 = vsub.f32 1.0, %v1074
    %v1076 = vmul.f32 %v1073, %v1075
    %v1077 = vadd.f32 %v1073, %v1076
    %vm1078 = vweird.f32 %v1072
    %vm1079 = vweird.f32 %v1073
    %vm1080 = vmor %vm1078, %vm1079
    %v1081 = vsel %vm1080, %v1073, %v1077
    %v1082 = vand.u32 2147483647, %v1072
    %vm1083 = vcmp.eq.f32.partialorder %v1082, 8.507059e+37
    %v1084 = vand.u32 %v1072, 2147483648
    %v1085 = vor.u32 1.1754944e-38, %v1084
    %v1086 = vsel %vm1083, %v1085, %v1081
    %v1087 = vmul.f32 1.0, %v1086
    %v1088 = vtanh.pop %v1025
    %v1090 = vrot.slane %v1068, 2
    %1091 = vrot.lane.b32.xlu0 %v1090, 32
    %v1092 = vpop.permute.xlu0 %1091
    %v1094 = vmul.f32 %v1087, %v1092
    %1096 = vrot.lane.b32.xlu0 %v1088, 64
    %v1097 = vpop.permute.xlu0 %1096
    %v1099 = vmul.f32 %v1087, %v1097
    %1101 = vrot.lane.b32.xlu0 %v1099, 32
    %v1102 = vpop.permute.xlu0 %1101
    %v1104 = vadd.f32 %v1094, %v1102
    %v1105 = vtanh.pop %v1104
    %1107 = vrot.lane.b32.xlu0 %v1105, 64
    %v1108 = vpop.permute.xlu0 %1107
    %v1110 = vmul.f32 %v1087, %v1108
    %v1111 = vsel %vm920, %v1061, %v1049
    %1113 = vrot.lane.b32.xlu0 %v1111, 96
    %v1114 = vpop.permute.xlu0 %1113
    %1116 = vst.msk [vmem:[#allocation4] sm:$0x3] %vm111, %v1114
    %v1117 = vld [vmem:[#allocation5] sm:$0x3]
    %v1119 = vrot.slane %v1104, 6
    %1120 = vrot.lane.b32.xlu0 %v1119, 96
    %v1121 = vpop.permute.xlu0 %1120
    %v1123 = vsel %vm907, %v1121, %v1117
    %1124 = vst.msk [vmem:[#allocation5] sm:$0x3] %vm111, %v1123
    %v1125 = vld [vmem:[#allocation3] sm:$0x3]
    %1127 = vrot.lane.b32.xlu0 %v1125, 96
    %v1128 = vpop.permute.xlu0 %1127
    %v1130 = vsel %vm920, %v1067, %v1128
    %v1132 = vrot.slane %v1110, 6
    %1133 = vrot.lane.b32.xlu0 %v1132, 32
    %v1134 = vpop.permute.xlu0 %1133
    %v1136 = vsel %vm907, %v1134, %v1128
    %1138 = vrot.lane.b32.xlu0 %v1130, 32
    %v1139 = vpop.permute.xlu0 %1138
    %1142 = vrot.lane.b32.xlu0 %v1136, 32
    %v1143 = vpop.permute.xlu0 %1142
    %v1145 = vsel %vm52, %v1139, %v1143
    %1146 = vst.msk [vmem:[#allocation3] sm:$0x3] %vm109, %v1145
    %v1147 = vsel %vm920, %v1067, 0.0
    %1149 = vrot.lane.b32.xlu0 %v1147, 32
    %v1150 = vpop.permute.xlu0 %1149
    %s1152 = scalar_lea.vmem [#allocation6], 8
    %1153 = vst.msk [vmem:[%s1152] sm:$0x3] %vm111, %v1150
    %v1154 = vsel %vm907, %v1134, 0.0
    %s1155 = scalar_lea.vmem [#allocation7], 6
    %1156 = vst.msk [vmem:[%s1155] sm:$0x3] %vm111, %v1154
    %v1157 = vld [vmem:[#allocation3] sm:$0x3]
    %v1158 = vld [vmem:[%s3] sm:$0xff]
    %v1159 = vld [vmem:[%s3 + $0x8] sm:$0xff]
    %v1160 = vld [vmem:[%s3 + $0x10] sm:$0xff]
    %v1161 = vld [vmem:[%s3 + $0x18] sm:$0xff]
    %v1162 = vld [vmem:[%s3 + $0x20] sm:$0xff]
    %v1163 = vld [vmem:[%s3 + $0x28] sm:$0xff]
    %v1164 = vld [vmem:[%s3 + $0x30] sm:$0xff]
    %v1165 = vld [vmem:[%s3 + $0x38] sm:$0xff]
    %v1166 = vld [vmem:[%s3 + $0x40] sm:$0xff]
    %v1167 = vld [vmem:[%s3 + $0x48] sm:$0xff]
    %v1168 = vld [vmem:[%s3 + $0x50] sm:$0xff]
    %v1169 = vld [vmem:[%s3 + $0x58] sm:$0xff]
    %v1170 = vld [vmem:[%s3 + $0x60] sm:$0xff]
    %v1171 = vld [vmem:[%s3 + $0x68] sm:$0xff]
    %v1172 = vld [vmem:[%s3 + $0x70] sm:$0xff]
    %v1173 = vld [vmem:[%s3 + $0x78] sm:$0xff]
    %v1175 = vsel %vm132, %v1157, 0
    %1177 = vmatpush.msra.mxu0 0.0
    %1178 = vmatpush.msra.mxu0 0.0
    %1179 = vmatpush.msra.mxu0 0.0
    %1180 = vmatpush.msra.mxu0 0.0
    %1181 = vmatpush.msra.mxu0 0.0
    %1182 = vmatpush.msra.mxu0 0.0
    %1183 = vmatpush.msra.mxu0 0.0
    %1184 = vmatpush.msra.mxu0 0.0
    %1185 = vmatpush.msra.mxu0 %v1172
    %1186 = vmatpush.msra.mxu0 %v1170
    %1187 = vmatpush.msra.mxu0 %v1168
    %1188 = vmatpush.msra.mxu0 %v1166
    %1189 = vmatpush.msra.mxu0 %v1164
    %1190 = vmatpush.msra.mxu0 %v1162
    %1191 = vmatpush.msra.mxu0 %v1160
    %1192 = vmatpush.msra.mxu0 %v1158
    %1193 = vmatmul.f32.gmra.mxu0 %v1175
    %v1194 = vpop.f32.mrf.mxu0
    %v1195 = vadd.f32 0.0, %v1194
    %1196 = vdwg.mxu0
    %1197 = vmatpush.msra.mxu0 0.0
    %1198 = vmatpush.msra.mxu0 0.0
    %1199 = vmatpush.msra.mxu0 0.0
    %1200 = vmatpush.msra.mxu0 0.0
    %1201 = vmatpush.msra.mxu0 0.0
    %1202 = vmatpush.msra.mxu0 0.0
    %1203 = vmatpush.msra.mxu0 0.0
    %1204 = vmatpush.msra.mxu0 0.0
    %1205 = vmatpush.msra.mxu0 %v1173
    %1206 = vmatpush.msra.mxu0 %v1171
    %1207 = vmatpush.msra.mxu0 %v1169
    %1208 = vmatpush.msra.mxu0 %v1167
    %1209 = vmatpush.msra.mxu0 %v1165
    %1210 = vmatpush.msra.mxu0 %v1163
    %1211 = vmatpush.msra.mxu0 %v1161
    %1212 = vmatpush.msra.mxu0 %v1159
    %1213 = vmatmul.f32.gmra.mxu0 %v1175
    %v1214 = vpop.f32.mrf.mxu0
    %v1215 = vadd.f32 0.0, %v1214
    %1216 = vdwg.mxu0
    %v1217 = vld [vmem:[#allocation2 + $0x10] sm:$0xc]
    %v1218 = vld [vmem:[#allocation2 + $0x8] sm:$0x30]
    %v1220 = vrot.slane %v1195, 6
    %v1222 = vadd.f32 %v1217, %v1220
    %v1224 = vrot.slane %v1215, 4
    %v1226 = vadd.f32 %v1218, %v1224
    %v1227 = vld [vmem:[#allocation4] sm:$0x3]
    %v1228 = vxor.u32 %v1222, 2147483648
    %v1229 = vmul.f32 %v1228, 1.442695
    %v1230 = vpow.pop %v1229
    %v1231 = vadd.f32 %v1230, 1.0
    %v1232 = vrcp.pop %v1231
    %v1233 = vmul.f32 %v1231, %v1232
    %v1234 = vsub.f32 1.0, %v1233
    %v1235 = vmul.f32 %v1232, %v1234
    %v1236 = vadd.f32 %v1232, %v1235
    %vm1237 = vweird.f32 %v1231
    %vm1238 = vweird.f32 %v1232
    %vm1239 = vmor %vm1237, %vm1238
    %v1240 = vsel %vm1239, %v1232, %v1236
    %v1241 = vand.u32 2147483647, %v1231
    %vm1242 = vcmp.eq.f32.partialorder %v1241, 8.507059e+37
    %v1243 = vand.u32 %v1231, 2147483648
    %v1244 = vor.u32 1.1754944e-38, %v1243
    %v1245 = vsel %vm1242, %v1244, %v1240
    %v1246 = vmul.f32 1.0, %v1245
    %v1247 = vtanh.pop %v1222
    %v1249 = vrot.slane %v1227, 6
    %1250 = vrot.lane.b32.xlu0 %v1249, 32
    %v1251 = vpop.permute.xlu0 %1250
    %v1253 = vmul.f32 %v1246, %v1251
    %1255 = vrot.lane.b32.xlu0 %v1247, 64
    %v1256 = vpop.permute.xlu0 %1255
    %v1258 = vmul.f32 %v1246, %v1256
    %1260 = vrot.lane.b32.xlu0 %v1258, 32
    %v1261 = vpop.permute.xlu0 %1260
    %v1263 = vadd.f32 %v1253, %v1261
    %v1264 = vtanh.pop %v1263
    %1266 = vrot.lane.b32.xlu0 %v1264, 64
    %v1267 = vpop.permute.xlu0 %1266
    %v1269 = vmul.f32 %v1246, %v1267
    %v1270 = vld [vmem:[#allocation5] sm:$0x3]
    %v1271 = vxor.u32 %v1226, 2147483648
    %v1272 = vmul.f32 %v1271, 1.442695
    %v1273 = vpow.pop %v1272
    %v1274 = vadd.f32 %v1273, 1.0
    %v1275 = vrcp.pop %v1274
    %v1276 = vmul.f32 %v1274, %v1275
    %v1277 = vsub.f32 1.0, %v1276
    %v1278 = vmul.f32 %v1275, %v1277
    %v1279 = vadd.f32 %v1275, %v1278
    %vm1280 = vweird.f32 %v1274
    %vm1281 = vweird.f32 %v1275
    %vm1282 = vmor %vm1280, %vm1281
    %v1283 = vsel %vm1282, %v1275, %v1279
    %v1284 = vand.u32 2147483647, %v1274
    %vm1285 = vcmp.eq.f32.partialorder %v1284, 8.507059e+37
    %v1286 = vand.u32 %v1274, 2147483648
    %v1287 = vor.u32 1.1754944e-38, %v1286
    %v1288 = vsel %vm1285, %v1287, %v1283
    %v1289 = vmul.f32 1.0, %v1288
    %v1290 = vtanh.pop %v1226
    %v1292 = vrot.slane %v1270, 4
    %1293 = vrot.lane.b32.xlu0 %v1292, 32
    %v1294 = vpop.permute.xlu0 %1293
    %v1296 = vmul.f32 %v1289, %v1294
    %1298 = vrot.lane.b32.xlu0 %v1290, 64
    %v1299 = vpop.permute.xlu0 %1298
    %v1301 = vmul.f32 %v1289, %v1299
    %1303 = vrot.lane.b32.xlu0 %v1301, 32
    %v1304 = vpop.permute.xlu0 %1303
    %v1306 = vadd.f32 %v1296, %v1304
    %v1307 = vtanh.pop %v1306
    %1309 = vrot.lane.b32.xlu0 %v1307, 64
    %v1310 = vpop.permute.xlu0 %1309
    %v1312 = vmul.f32 %v1289, %v1310
    %v1314 = vrot.slane %v1263, 2
    %1315 = vrot.lane.b32.xlu0 %v1314, 96
    %v1316 = vpop.permute.xlu0 %1315
    %v1318 = vsel %vm712, %v1316, %v1227
    %1319 = vst.msk [vmem:[#allocation4] sm:$0x3] %vm111, %v1318
    %v1320 = vld [vmem:[#allocation5] sm:$0x3]
    %v1322 = vrot.slane %v1306, 4
    %1323 = vrot.lane.b32.xlu0 %v1322, 96
    %v1324 = vpop.permute.xlu0 %1323
    %v1326 = vsel %vm699, %v1324, %v1320
    %1327 = vst.msk [vmem:[#allocation5] sm:$0x3] %vm111, %v1326
    %v1328 = vld [vmem:[#allocation3] sm:$0x3]
    %v1330 = vrot.slane %v1269, 2
    %1331 = vrot.lane.b32.xlu0 %v1330, 32
    %v1332 = vpop.permute.xlu0 %1331
    %v1334 = vsel %vm712, %v1332, %v1328
    %v1336 = vrot.slane %v1312, 4
    %1337 = vrot.lane.b32.xlu0 %v1336, 32
    %v1338 = vpop.permute.xlu0 %1337
    %1341 = vrot.lane.b32.xlu0 %v1328, 96
    %v1342 = vpop.permute.xlu0 %1341
    %v1344 = vsel %vm699, %v1338, %v1342
    %1346 = vrot.lane.b32.xlu0 %v1344, 32
    %v1347 = vpop.permute.xlu0 %1346
    %v1349 = vsel %vm52, %v1334, %v1347
    %1350 = vst.msk [vmem:[#allocation3] sm:$0x3] %vm109, %v1349
    %v1351 = vsel %vm712, %v1332, 0.0
    %s1352 = scalar_lea.vmem [#allocation6], 10
    %1353 = vst.msk [vmem:[%s1352] sm:$0x3] %vm111, %v1351
    %v1354 = vsel %vm699, %v1338, 0.0
    %s1355 = scalar_lea.vmem [#allocation7], 4
    %1356 = vst.msk [vmem:[%s1355] sm:$0x3] %vm111, %v1354
    %v1357 = vld [vmem:[#allocation3] sm:$0x3]
    %v1358 = vld [vmem:[%s3] sm:$0xff]
    %v1359 = vld [vmem:[%s3 + $0x8] sm:$0xff]
    %v1360 = vld [vmem:[%s3 + $0x10] sm:$0xff]
    %v1361 = vld [vmem:[%s3 + $0x18] sm:$0xff]
    %v1362 = vld [vmem:[%s3 + $0x20] sm:$0xff]
    %v1363 = vld [vmem:[%s3 + $0x28] sm:$0xff]
    %v1364 = vld [vmem:[%s3 + $0x30] sm:$0xff]
    %v1365 = vld [vmem:[%s3 + $0x38] sm:$0xff]
    %v1366 = vld [vmem:[%s3 + $0x40] sm:$0xff]
    %v1367 = vld [vmem:[%s3 + $0x48] sm:$0xff]
    %v1368 = vld [vmem:[%s3 + $0x50] sm:$0xff]
    %v1369 = vld [vmem:[%s3 + $0x58] sm:$0xff]
    %v1370 = vld [vmem:[%s3 + $0x60] sm:$0xff]
    %v1371 = vld [vmem:[%s3 + $0x68] sm:$0xff]
    %v1372 = vld [vmem:[%s3 + $0x70] sm:$0xff]
    %v1373 = vld [vmem:[%s3 + $0x78] sm:$0xff]
    %v1375 = vsel %vm132, %v1357, 0
    %1377 = vmatpush.msra.mxu0 0.0
    %1378 = vmatpush.msra.mxu0 0.0
    %1379 = vmatpush.msra.mxu0 0.0
    %1380 = vmatpush.msra.mxu0 0.0
    %1381 = vmatpush.msra.mxu0 0.0
    %1382 = vmatpush.msra.mxu0 0.0
    %1383 = vmatpush.msra.mxu0 0.0
    %1384 = vmatpush.msra.mxu0 0.0
    %1385 = vmatpush.msra.mxu0 %v1372
    %1386 = vmatpush.msra.mxu0 %v1370
    %1387 = vmatpush.msra.mxu0 %v1368
    %1388 = vmatpush.msra.mxu0 %v1366
    %1389 = vmatpush.msra.mxu0 %v1364
    %1390 = vmatpush.msra.mxu0 %v1362
    %1391 = vmatpush.msra.mxu0 %v1360
    %1392 = vmatpush.msra.mxu0 %v1358
    %1393 = vmatmul.f32.gmra.mxu0 %v1375
    %v1394 = vpop.f32.mrf.mxu0
    %v1395 = vadd.f32 0.0, %v1394
    %1396 = vdwg.mxu0
    %1397 = vmatpush.msra.mxu0 0.0
    %1398 = vmatpush.msra.mxu0 0.0
    %1399 = vmatpush.msra.mxu0 0.0
    %1400 = vmatpush.msra.mxu0 0.0
    %1401 = vmatpush.msra.mxu0 0.0
    %1402 = vmatpush.msra.mxu0 0.0
    %1403 = vmatpush.msra.mxu0 0.0
    %1404 = vmatpush.msra.mxu0 0.0
    %1405 = vmatpush.msra.mxu0 %v1373
    %1406 = vmatpush.msra.mxu0 %v1371
    %1407 = vmatpush.msra.mxu0 %v1369
    %1408 = vmatpush.msra.mxu0 %v1367
    %1409 = vmatpush.msra.mxu0 %v1365
    %1410 = vmatpush.msra.mxu0 %v1363
    %1411 = vmatpush.msra.mxu0 %v1361
    %1412 = vmatpush.msra.mxu0 %v1359
    %1413 = vmatmul.f32.gmra.mxu0 %v1375
    %v1414 = vpop.f32.mrf.mxu0
    %v1415 = vadd.f32 0.0, %v1414
    %1416 = vdwg.mxu0
    %v1417 = vld [vmem:[#allocation2 + $0x10] sm:$0x30]
    %v1418 = vld [vmem:[#allocation2 + $0x8] sm:$0xc]
    %v1420 = vrot.slane %v1395, 4
    %v1422 = vadd.f32 %v1417, %v1420
    %v1424 = vrot.slane %v1415, 6
    %v1426 = vadd.f32 %v1418, %v1424
    %v1427 = vld [vmem:[#allocation4] sm:$0x3]
    %v1428 = vxor.u32 %v1422, 2147483648
    %v1429 = vmul.f32 %v1428, 1.442695
    %v1430 = vpow.pop %v1429
    %v1431 = vadd.f32 %v1430, 1.0
    %v1432 = vrcp.pop %v1431
    %v1433 = vmul.f32 %v1431, %v1432
    %v1434 = vsub.f32 1.0, %v1433
    %v1435 = vmul.f32 %v1432, %v1434
    %v1436 = vadd.f32 %v1432, %v1435
    %vm1437 = vweird.f32 %v1431
    %vm1438 = vweird.f32 %v1432
    %vm1439 = vmor %vm1437, %vm1438
    %v1440 = vsel %vm1439, %v1432, %v1436
    %v1441 = vand.u32 2147483647, %v1431
    %vm1442 = vcmp.eq.f32.partialorder %v1441, 8.507059e+37
    %v1443 = vand.u32 %v1431, 2147483648
    %v1444 = vor.u32 1.1754944e-38, %v1443
    %v1445 = vsel %vm1442, %v1444, %v1440
    %v1446 = vmul.f32 1.0, %v1445
    %v1447 = vtanh.pop %v1422
    %v1449 = vrot.slane %v1427, 4
    %1450 = vrot.lane.b32.xlu0 %v1449, 32
    %v1451 = vpop.permute.xlu0 %1450
    %v1453 = vmul.f32 %v1446, %v1451
    %1455 = vrot.lane.b32.xlu0 %v1447, 64
    %v1456 = vpop.permute.xlu0 %1455
    %v1458 = vmul.f32 %v1446, %v1456
    %1460 = vrot.lane.b32.xlu0 %v1458, 32
    %v1461 = vpop.permute.xlu0 %1460
    %v1463 = vadd.f32 %v1453, %v1461
    %v1464 = vtanh.pop %v1463
    %1466 = vrot.lane.b32.xlu0 %v1464, 64
    %v1467 = vpop.permute.xlu0 %1466
    %v1469 = vmul.f32 %v1446, %v1467
    %v1470 = vld [vmem:[#allocation5] sm:$0x3]
    %v1471 = vxor.u32 %v1426, 2147483648
    %v1472 = vmul.f32 %v1471, 1.442695
    %v1473 = vpow.pop %v1472
    %v1474 = vadd.f32 %v1473, 1.0
    %v1475 = vrcp.pop %v1474
    %v1476 = vmul.f32 %v1474, %v1475
    %v1477 = vsub.f32 1.0, %v1476
    %v1478 = vmul.f32 %v1475, %v1477
    %v1479 = vadd.f32 %v1475, %v1478
    %vm1480 = vweird.f32 %v1474
    %vm1481 = vweird.f32 %v1475
    %vm1482 = vmor %vm1480, %vm1481
    %v1483 = vsel %vm1482, %v1475, %v1479
    %v1484 = vand.u32 2147483647, %v1474
    %vm1485 = vcmp.eq.f32.partialorder %v1484, 8.507059e+37
    %v1486 = vand.u32 %v1474, 2147483648
    %v1487 = vor.u32 1.1754944e-38, %v1486
    %v1488 = vsel %vm1485, %v1487, %v1483
    %v1489 = vmul.f32 1.0, %v1488
    %v1490 = vtanh.pop %v1426
    %v1492 = vrot.slane %v1470, 6
    %1493 = vrot.lane.b32.xlu0 %v1492, 32
    %v1494 = vpop.permute.xlu0 %1493
    %v1496 = vmul.f32 %v1489, %v1494
    %1498 = vrot.lane.b32.xlu0 %v1490, 64
    %v1499 = vpop.permute.xlu0 %1498
    %v1501 = vmul.f32 %v1489, %v1499
    %1503 = vrot.lane.b32.xlu0 %v1501, 32
    %v1504 = vpop.permute.xlu0 %1503
    %v1506 = vadd.f32 %v1496, %v1504
    %v1507 = vtanh.pop %v1506
    %1509 = vrot.lane.b32.xlu0 %v1507, 64
    %v1510 = vpop.permute.xlu0 %1509
    %v1512 = vmul.f32 %v1489, %v1510
    %v1514 = vrot.slane %v1463, 4
    %1515 = vrot.lane.b32.xlu0 %v1514, 96
    %v1516 = vpop.permute.xlu0 %1515
    %v1518 = vsel %vm500, %v1516, %v1427
    %1519 = vst.msk [vmem:[#allocation4] sm:$0x3] %vm111, %v1518
    %v1520 = vld [vmem:[#allocation5] sm:$0x3]
    %v1522 = vrot.slane %v1506, 2
    %1523 = vrot.lane.b32.xlu0 %v1522, 96
    %v1524 = vpop.permute.xlu0 %1523
    %v1526 = vsel %vm487, %v1524, %v1520
    %1527 = vst.msk [vmem:[#allocation5] sm:$0x3] %vm111, %v1526
    %v1528 = vld [vmem:[#allocation3] sm:$0x3]
    %v1530 = vrot.slane %v1469, 4
    %1531 = vrot.lane.b32.xlu0 %v1530, 32
    %v1532 = vpop.permute.xlu0 %1531
    %v1534 = vsel %vm500, %v1532, %v1528
    %v1536 = vrot.slane %v1512, 2
    %1537 = vrot.lane.b32.xlu0 %v1536, 32
    %v1538 = vpop.permute.xlu0 %1537
    %1541 = vrot.lane.b32.xlu0 %v1528, 96
    %v1542 = vpop.permute.xlu0 %1541
    %v1544 = vsel %vm487, %v1538, %v1542
    %1546 = vrot.lane.b32.xlu0 %v1544, 32
    %v1547 = vpop.permute.xlu0 %1546
    %v1549 = vsel %vm52, %v1534, %v1547
    %1550 = vst.msk [vmem:[#allocation3] sm:$0x3] %vm109, %v1549
    %v1551 = vsel %vm500, %v1532, 0.0
    %s1552 = scalar_lea.vmem [#allocation6], 12
    %1553 = vst.msk [vmem:[%s1552] sm:$0x3] %vm111, %v1551
    %v1554 = vsel %vm487, %v1538, 0.0
    %s1555 = scalar_lea.vmem [#allocation7], 2
    %1556 = vst.msk [vmem:[%s1555] sm:$0x3] %vm111, %v1554
    %v1557 = vld [vmem:[#allocation3] sm:$0x3]
    %v1558 = vld [vmem:[%s3] sm:$0xff]
    %v1559 = vld [vmem:[%s3 + $0x8] sm:$0xff]
    %v1560 = vld [vmem:[%s3 + $0x10] sm:$0xff]
    %v1561 = vld [vmem:[%s3 + $0x18] sm:$0xff]
    %v1562 = vld [vmem:[%s3 + $0x20] sm:$0xff]
    %v1563 = vld [vmem:[%s3 + $0x28] sm:$0xff]
    %v1564 = vld [vmem:[%s3 + $0x30] sm:$0xff]
    %v1565 = vld [vmem:[%s3 + $0x38] sm:$0xff]
    %v1566 = vld [vmem:[%s3 + $0x40] sm:$0xff]
    %v1567 = vld [vmem:[%s3 + $0x48] sm:$0xff]
    %v1568 = vld [vmem:[%s3 + $0x50] sm:$0xff]
    %v1569 = vld [vmem:[%s3 + $0x58] sm:$0xff]
    %v1570 = vld [vmem:[%s3 + $0x60] sm:$0xff]
    %v1571 = vld [vmem:[%s3 + $0x68] sm:$0xff]
    %v1572 = vld [vmem:[%s3 + $0x70] sm:$0xff]
    %v1573 = vld [vmem:[%s3 + $0x78] sm:$0xff]
    %v1575 = vsel %vm132, %v1557, 0
    %1577 = vmatpush.msra.mxu0 0.0
    %1578 = vmatpush.msra.mxu0 0.0
    %1579 = vmatpush.msra.mxu0 0.0
    %1580 = vmatpush.msra.mxu0 0.0
    %1581 = vmatpush.msra.mxu0 0.0
    %1582 = vmatpush.msra.mxu0 0.0
    %1583 = vmatpush.msra.mxu0 0.0
    %1584 = vmatpush.msra.mxu0 0.0
    %1585 = vmatpush.msra.mxu0 %v1572
    %1586 = vmatpush.msra.mxu0 %v1570
    %1587 = vmatpush.msra.mxu0 %v1568
    %1588 = vmatpush.msra.mxu0 %v1566
    %1589 = vmatpush.msra.mxu0 %v1564
    %1590 = vmatpush.msra.mxu0 %v1562
    %1591 = vmatpush.msra.mxu0 %v1560
    %1592 = vmatpush.msra.mxu0 %v1558
    %1593 = vmatmul.f32.gmra.mxu0 %v1575
    %v1594 = vpop.f32.mrf.mxu0
    %v1595 = vadd.f32 0.0, %v1594
    %1596 = vdwg.mxu0
    %1597 = vmatpush.msra.mxu0 0.0
    %1598 = vmatpush.msra.mxu0 0.0
    %1599 = vmatpush.msra.mxu0 0.0
    %1600 = vmatpush.msra.mxu0 0.0
    %1601 = vmatpush.msra.mxu0 0.0
    %1602 = vmatpush.msra.mxu0 0.0
    %1603 = vmatpush.msra.mxu0 0.0
    %1604 = vmatpush.msra.mxu0 0.0
    %1605 = vmatpush.msra.mxu0 %v1573
    %1606 = vmatpush.msra.mxu0 %v1571
    %1607 = vmatpush.msra.mxu0 %v1569
    %1608 = vmatpush.msra.mxu0 %v1567
    %1609 = vmatpush.msra.mxu0 %v1565
    %1610 = vmatpush.msra.mxu0 %v1563
    %1611 = vmatpush.msra.mxu0 %v1561
    %1612 = vmatpush.msra.mxu0 %v1559
    %1613 = vmatmul.f32.gmra.mxu0 %v1575
    %v1614 = vpop.f32.mrf.mxu0
    %v1615 = vadd.f32 0.0, %v1614
    %1616 = vdwg.mxu0
    %v1617 = vld [vmem:[#allocation2 + $0x10] sm:$0xc0]
    %v1618 = vld [vmem:[#allocation2 + $0x8] sm:$0x3]
    %v1620 = vrot.slane %v1595, 2
    %v1622 = vadd.f32 %v1617, %v1620
    %v1623 = vadd.f32 %v1618, %v1615
    %v1624 = vld [vmem:[#allocation4] sm:$0x3]
    %v1625 = vxor.u32 %v1622, 2147483648
    %v1626 = vmul.f32 %v1625, 1.442695
    %v1627 = vpow.pop %v1626
    %v1628 = vadd.f32 %v1627, 1.0
    %v1629 = vrcp.pop %v1628
    %v1630 = vmul.f32 %v1628, %v1629
    %v1631 = vsub.f32 1.0, %v1630
    %v1632 = vmul.f32 %v1629, %v1631
    %v1633 = vadd.f32 %v1629, %v1632
    %vm1634 = vweird.f32 %v1628
    %vm1635 = vweird.f32 %v1629
    %vm1636 = vmor %vm1634, %vm1635
    %v1637 = vsel %vm1636, %v1629, %v1633
    %v1638 = vand.u32 2147483647, %v1628
    %vm1639 = vcmp.eq.f32.partialorder %v1638, 8.507059e+37
    %v1640 = vand.u32 %v1628, 2147483648
    %v1641 = vor.u32 1.1754944e-38, %v1640
    %v1642 = vsel %vm1639, %v1641, %v1637
    %v1643 = vmul.f32 1.0, %v1642
    %v1644 = vtanh.pop %v1622
    %v1646 = vrot.slane %v1624, 2
    %1647 = vrot.lane.b32.xlu0 %v1646, 32
    %v1648 = vpop.permute.xlu0 %1647
    %v1650 = vmul.f32 %v1643, %v1648
    %1652 = vrot.lane.b32.xlu0 %v1644, 64
    %v1653 = vpop.permute.xlu0 %1652
    %v1655 = vmul.f32 %v1643, %v1653
    %1657 = vrot.lane.b32.xlu0 %v1655, 32
    %v1658 = vpop.permute.xlu0 %1657
    %v1660 = vadd.f32 %v1650, %v1658
    %v1661 = vtanh.pop %v1660
    %1663 = vrot.lane.b32.xlu0 %v1661, 64
    %v1664 = vpop.permute.xlu0 %1663
    %v1666 = vmul.f32 %v1643, %v1664
    %v1667 = vld [vmem:[#allocation5] sm:$0x3]
    %v1668 = vxor.u32 %v1623, 2147483648
    %v1669 = vmul.f32 %v1668, 1.442695
    %v1670 = vpow.pop %v1669
    %v1671 = vadd.f32 %v1670, 1.0
    %v1672 = vrcp.pop %v1671
    %v1673 = vmul.f32 %v1671, %v1672
    %v1674 = vsub.f32 1.0, %v1673
    %v1675 = vmul.f32 %v1672, %v1674
    %v1676 = vadd.f32 %v1672, %v1675
    %vm1677 = vweird.f32 %v1671
    %vm1678 = vweird.f32 %v1672
    %vm1679 = vmor %vm1677, %vm1678
    %v1680 = vsel %vm1679, %v1672, %v1676
    %v1681 = vand.u32 2147483647, %v1671
    %vm1682 = vcmp.eq.f32.partialorder %v1681, 8.507059e+37
    %v1683 = vand.u32 %v1671, 2147483648
    %v1684 = vor.u32 1.1754944e-38, %v1683
    %v1685 = vsel %vm1682, %v1684, %v1680
    %v1686 = vmul.f32 1.0, %v1685
    %v1687 = vtanh.pop %v1623
    %1689 = vrot.lane.b32.xlu0 %v1667, 32
    %v1690 = vpop.permute.xlu0 %1689
    %v1692 = vmul.f32 %v1686, %v1690
    %1694 = vrot.lane.b32.xlu0 %v1687, 64
    %v1695 = vpop.permute.xlu0 %1694
    %v1697 = vmul.f32 %v1686, %v1695
    %1699 = vrot.lane.b32.xlu0 %v1697, 32
    %v1700 = vpop.permute.xlu0 %1699
    %v1702 = vadd.f32 %v1692, %v1700
    %v1703 = vtanh.pop %v1702
    %1705 = vrot.lane.b32.xlu0 %v1703, 64
    %v1706 = vpop.permute.xlu0 %1705
    %v1708 = vmul.f32 %v1686, %v1706
    %v1710 = vrot.slane %v1660, 6
    %1711 = vrot.lane.b32.xlu0 %v1710, 96
    %v1712 = vpop.permute.xlu0 %1711
    %v1714 = vsel %vm286, %v1712, %v1624
    %1715 = vst.msk [vmem:[#allocation4] sm:$0x3] %vm111, %v1714
    %v1716 = vld [vmem:[#allocation5] sm:$0x3]
    %1718 = vrot.lane.b32.xlu0 %v1716, 32
    %v1719 = vpop.permute.xlu0 %1718
    %v1721 = vsel %vm274, %v1702, %v1719
    %1723 = vrot.lane.b32.xlu0 %v1721, 96
    %v1724 = vpop.permute.xlu0 %1723
    %1726 = vst.msk [vmem:[#allocation5] sm:$0x3] %vm111, %v1724
    %v1727 = vld [vmem:[#allocation3] sm:$0x3]
    %v1729 = vrot.slane %v1666, 6
    %1730 = vrot.lane.b32.xlu0 %v1729, 32
    %v1731 = vpop.permute.xlu0 %1730
    %v1733 = vsel %vm286, %v1731, %v1727
    %1735 = vrot.lane.b32.xlu0 %v1727, 64
    %v1736 = vpop.permute.xlu0 %1735
    %v1738 = vsel %vm274, %v1708, %v1736
    %1740 = vrot.lane.b32.xlu0 %v1738, 64
    %v1741 = vpop.permute.xlu0 %1740
    %v1743 = vsel %vm52, %v1733, %v1741
    %1744 = vst.msk [vmem:[#allocation3] sm:$0x3] %vm109, %v1743
    %v1745 = vsel %vm286, %v1731, 0.0
    %s1746 = scalar_lea.vmem [#allocation6], 14
    %1747 = vst.msk [vmem:[%s1746] sm:$0x3] %vm111, %v1745
    %v1748 = vsel %vm274, %v1708, 0.0
    %1750 = vrot.lane.b32.xlu0 %v1748, 32
    %v1751 = vpop.permute.xlu0 %1750
    %1753 = vst.msk [vmem:[#allocation7] sm:$0x3] %vm111, %v1751
    %v1754 = vld [vmem:[#allocation6] sm:$0x3]
    %v1755 = vld [vmem:[#allocation6 + $0x2] sm:$0x3]
    %v1756 = vld [vmem:[#allocation6 + $0x4] sm:$0x3]
    %v1757 = vld [vmem:[#allocation6 + $0x6] sm:$0x3]
    %v1758 = vld [vmem:[#allocation6 + $0x8] sm:$0x3]
    %v1759 = vld [vmem:[#allocation6 + $0xa] sm:$0x3]
    %v1760 = vld [vmem:[#allocation6 + $0xc] sm:$0x3]
    %v1761 = vld [vmem:[#allocation6 + $0xe] sm:$0x3]
    %v1762 = vld [vmem:[#allocation7] sm:$0x3]
    %v1763 = vld [vmem:[#allocation7 + $0x2] sm:$0x3]
    %v1764 = vld [vmem:[#allocation7 + $0x4] sm:$0x3]
    %v1765 = vld [vmem:[#allocation7 + $0x6] sm:$0x3]
    %v1766 = vld [vmem:[#allocation7 + $0x8] sm:$0x3]
    %v1767 = vld [vmem:[#allocation7 + $0xa] sm:$0x3]
    %v1768 = vld [vmem:[#allocation7 + $0xc] sm:$0x3]
    %v1769 = vld [vmem:[#allocation7 + $0xe] sm:$0x3]
    %1778 = vrot.lane.b32.xlu0 %v1762, 32
    %v1779 = vpop.permute.xlu0 %1778
    %1780 = vrot.lane.b32.xlu0 %v1763, 32
    %v1781 = vpop.permute.xlu0 %1780
    %1782 = vrot.lane.b32.xlu0 %v1764, 32
    %v1783 = vpop.permute.xlu0 %1782
    %1784 = vrot.lane.b32.xlu0 %v1765, 32
    %v1785 = vpop.permute.xlu0 %1784
    %1786 = vrot.lane.b32.xlu0 %v1766, 32
    %v1787 = vpop.permute.xlu0 %1786
    %1788 = vrot.lane.b32.xlu0 %v1767, 32
    %v1789 = vpop.permute.xlu0 %1788
    %1790 = vrot.lane.b32.xlu0 %v1768, 32
    %v1791 = vpop.permute.xlu0 %1790
    %1792 = vrot.lane.b32.xlu0 %v1769, 32
    %v1793 = vpop.permute.xlu0 %1792
    %v1802 = vsel %vm52, %v1754, %v1779
    %v1803 = vsel %vm52, %v1755, %v1781
    %v1804 = vsel %vm52, %v1756, %v1783
    %v1805 = vsel %vm52, %v1757, %v1785
    %v1806 = vsel %vm52, %v1758, %v1787
    %v1807 = vsel %vm52, %v1759, %v1789
    %v1808 = vsel %vm52, %v1760, %v1791
    %v1809 = vsel %vm52, %v1761, %v1793
    %1810 = vst.msk [vmem:[%s5] sm:$0x3] %vm109, %v1802
    %1811 = vst.msk [vmem:[%s5 + $0x2] sm:$0x3] %vm109, %v1803
    %1812 = vst.msk [vmem:[%s5 + $0x4] sm:$0x3] %vm109, %v1804
    %1813 = vst.msk [vmem:[%s5 + $0x6] sm:$0x3] %vm109, %v1805
    %1814 = vst.msk [vmem:[%s5 + $0x8] sm:$0x3] %vm109, %v1806
    %1815 = vst.msk [vmem:[%s5 + $0xa] sm:$0x3] %vm109, %v1807
    %1816 = vst.msk [vmem:[%s5 + $0xc] sm:$0x3] %vm109, %v1808
    %1817 = vst.msk [vmem:[%s5 + $0xe] sm:$0x3] %vm109, %v1809
    // Predicated region
    $region26: #{bilstm_tagger_forward.3} parent=1 // pred_check
      _
    $region27: #{bilstm_tagger_forward.3} parent=1 // pred_check_branch
      %1819 = sbr.rel (0) target = $region29
    $region28: #{bilstm_tagger_forward.3} parent=1 // pred_region
      _
    $region29: #{bilstm_tagger_forward.3} parent=1 // pred_fallthru
      _
    // Predicated region
    $region30: #{bilstm_tagger_forward.3} parent=1 // pred_check
      _
    $region31: #{bilstm_tagger_forward.3} parent=1 // pred_check_branch
      %1821 = sbr.rel (0) target = $region33
    $region32: #{bilstm_tagger_forward.3} parent=1 // pred_region
      _
    $region33: #{bilstm_tagger_forward.3} parent=1 // pred_fallthru
      _
    %1822 = vsyncpa [#allocation9], 1

</llo_original>
